<compile_context>
chip_gen: v5e
topology: v5e:2x2
jax: 0.10.0
libtpu: 0.0.40
codegen_flags: <defaults>
</compile_context>

<pallas_src>
import math
from functools import partial

import jax
import jax.numpy as jnp
from jax.experimental import pallas as pl
from jax.experimental.pallas import tpu as pltpu


# ----------------------------- in-kernel helpers -----------------------------

def _ln(x, g, b, eps=1e-5):
    """LayerNorm over the last axis, f32 statistics."""
    mu = jnp.mean(x, axis=-1, keepdims=True)
    xc = x - mu
    var = jnp.mean(xc * xc, axis=-1, keepdims=True)
    return xc * jax.lax.rsqrt(var + eps) * g + b


def _bdot(a, b):
    """bf16 MXU matmul with f32 accumulation."""
    return jnp.dot(a.astype(jnp.bfloat16), b.astype(jnp.bfloat16),
                   preferred_element_type=jnp.float32)


# ----------------------------- token embedding -----------------------------

def _embed_kernel(xcat_ref, w_ref, pe_ref, o_ref):
    # circular Conv1d(k=3, no bias) expressed as matmul + positional embedding
    o_ref[0] = _bdot(xcat_ref[0], w_ref[...]) + pe_ref[...]


def token_embed(xcat, tok_w, pe):
    B, L, C = xcat.shape
    dm = tok_w.shape[1]
    return pl.pallas_call(
        _embed_kernel,
        grid=(B,),
        in_specs=[
            pl.BlockSpec((1, L, C), lambda b: (b, 0, 0)),
            pl.BlockSpec((C, dm), lambda b: (0, 0)),
            pl.BlockSpec((L, dm), lambda b: (0, 0)),
        ],
        out_specs=pl.BlockSpec((1, L, dm), lambda b: (b, 0, 0)),
        out_shape=jax.ShapeDtypeStruct((B, L, dm), jnp.float32),
        compiler_params=pltpu.CompilerParams(dimension_semantics=("parallel",)),
    )(xcat, tok_w, pe)


# ----------------------------- fused encoder layer -----------------------------

def _make_encoder_layer_kernel(H, E):
    inv_sqrt2pi = 1.0 / math.sqrt(2.0 * math.pi)
    ln3 = math.log(3.0)
    scale = 1.0 / math.sqrt(E)

    def kernel(x_ref, dist_ref, wqkvs_ref, bqkvs_ref, wo_ref, bo_ref,
               wff1_ref, bff1_ref, wff2_ref, bff2_ref,
               n1g_ref, n1b_ref, n2g_ref, n2b_ref,
               out_ref, series_ref, prior_ref, sigma_ref, attn_sc):
        x = x_ref[0]                                      # [L, dm] f32
        L, dm = x.shape
        dist = dist_ref[...]                              # [L, L]

        # fused q/k/v/sigma projection: one wide matmul [L, 3*dm + H]
        qkvs = _bdot(x, wqkvs_ref[...]) + bqkvs_ref[...]

        for h in range(H):                                # static unroll over heads
            qh = qkvs[:, h * E:(h + 1) * E]               # [L, E]
            kh = qkvs[:, dm + h * E:dm + (h + 1) * E]
            vh = qkvs[:, 2 * dm + h * E:2 * dm + (h + 1) * E]
            sig = qkvs[:, 3 * dm + h:3 * dm + h + 1]      # [L, 1]

            scores = jax.lax.dot_general(
                qh.astype(jnp.bfloat16), kh.astype(jnp.bfloat16),
                (((1,), (1,)), ((), ())),
                preferred_element_type=jnp.float32) * scale
            m = jnp.max(scores, axis=-1, keepdims=True)
            e = jnp.exp(scores - m)
            inv_den = pl.reciprocal(jnp.sum(e, axis=-1, keepdims=True), approx=True)
            series_h = e * inv_den                        # softmax association

            # gaussian prior from the (rank-1) learned sigma
            sigma = jax.nn.sigmoid(sig * 5.0) + 1e-5
            sigma = jnp.exp(sigma * ln3) - 1.0            # pow(3, sigma) - 1
            inv_sigma = pl.reciprocal(sigma, approx=True)
            prior_h = (inv_sqrt2pi * inv_sigma
                       * jnp.exp(-(dist * dist) * (0.5 * inv_sigma * inv_sigma)))

            out_h = _bdot(series_h, vh)                   # [L, E]
            attn_sc[:, h * E:(h + 1) * E] = out_h
            series_ref[0, h] = series_h
            prior_ref[0, h] = prior_h
            sigma_ref[0, h] = sigma                       # rank-1, NOT broadcast to LxL

        # output projection + residual + norm1
        new_x = _bdot(attn_sc[...], wo_ref[...]) + bo_ref[...]
        xr = _ln(x + new_x, n1g_ref[...], n1b_ref[...])

        # feed-forward + residual + norm2
        y = _bdot(xr, wff1_ref[...]) + bff1_ref[...]
        # TODO(synk): torch F.gelu is exact erf-GELU; tanh approximation used in-kernel.
        y = jax.nn.gelu(y, approximate=True)
        y = _bdot(y, wff2_ref[...]) + bff2_ref[...]
        out_ref[0] = _ln(xr + y, n2g_ref[...], n2b_ref[...])

    return kernel


def encoder_layer(x, dist, lp, H):
    B, L, dm = x.shape
    E = dm // H
    P = lp["wqkvs"].shape[1]                              # 3*dm + H
    dff = lp["wff1"].shape[1]
    wmap2 = lambda b: (0, 0)
    return pl.pallas_call(
        _make_encoder_layer_kernel(H, E),
        grid=(B,),
        in_specs=[
            pl.BlockSpec((1, L, dm), lambda b: (b, 0, 0)),
            pl.BlockSpec((L, L), wmap2),
            pl.BlockSpec((dm, P), wmap2),
            pl.BlockSpec((1, P), wmap2),
            pl.BlockSpec((dm, dm), wmap2),
            pl.BlockSpec((1, dm), wmap2),
            pl.BlockSpec((dm, dff), wmap2),
            pl.BlockSpec((1, dff), wmap2),
            pl.BlockSpec((dff, dm), wmap2),
            pl.BlockSpec((1, dm), wmap2),
            pl.BlockSpec((1, dm), wmap2),
            pl.BlockSpec((1, dm), wmap2),
            pl.BlockSpec((1, dm), wmap2),
            pl.BlockSpec((1, dm), wmap2),
        ],
        out_specs=(
            pl.BlockSpec((1, L, dm), lambda b: (b, 0, 0)),
            pl.BlockSpec((1, H, L, L), lambda b: (b, 0, 0, 0)),
            pl.BlockSpec((1, H, L, L), lambda b: (b, 0, 0, 0)),
            pl.BlockSpec((1, H, L, 1), lambda b: (b, 0, 0, 0)),
        ),
        out_shape=(
            jax.ShapeDtypeStruct((B, L, dm), jnp.float32),
            jax.ShapeDtypeStruct((B, H, L, L), jnp.float32),
            jax.ShapeDtypeStruct((B, H, L, L), jnp.float32),
            jax.ShapeDtypeStruct((B, H, L, 1), jnp.float32),
        ),
        scratch_shapes=[pltpu.VMEM((L, dm), jnp.float32)],
        compiler_params=pltpu.CompilerParams(dimension_semantics=("parallel",)),
    )(x, dist,
      lp["wqkvs"], lp["bqkvs"].reshape(1, P),
      lp["wo"], lp["bo"].reshape(1, dm),
      lp["wff1"], lp["bff1"].reshape(1, dff),
      lp["wff2"], lp["bff2"].reshape(1, dm),
      lp["n1_g"].reshape(1, dm), lp["n1_b"].reshape(1, dm),
      lp["n2_g"].reshape(1, dm), lp["n2_b"].reshape(1, dm))


# ----------------------------- final norm + projection -----------------------------

def _final_proj_kernel(x_ref, g_ref, b_ref, w_ref, pb_ref, o_ref):
    xn = _ln(x_ref[0], g_ref[...], b_ref[...])
    o_ref[0] = _bdot(xn, w_ref[...]) + pb_ref[...]


def final_norm_proj(x, g, b, w, pb):
    B, L, dm = x.shape
    c_out = w.shape[1]
    wmap2 = lambda b_: (0, 0)
    return pl.pallas_call(
        _final_proj_kernel,
        grid=(B,),
        in_specs=[
            pl.BlockSpec((1, L, dm), lambda b_: (b_, 0, 0)),
            pl.BlockSpec((1, dm), wmap2),
            pl.BlockSpec((1, dm), wmap2),
            pl.BlockSpec((dm, c_out), wmap2),
            pl.BlockSpec((1, c_out), wmap2),
        ],
        out_specs=pl.BlockSpec((1, L, c_out), lambda b_: (b_, 0, 0)),
        out_shape=jax.ShapeDtypeStruct((B, L, c_out), jnp.float32),
        compiler_params=pltpu.CompilerParams(dimension_semantics=("parallel",)),
    )(x, g.reshape(1, dm), b.reshape(1, dm), w, pb.reshape(1, c_out))


# ----------------------------- fused GNN branch -----------------------------

def _make_gnn_kernel(n_layers, k_neighbors):
    def kernel(*refs):
        x_ref = refs[0]
        w_refs = refs[1:1 + 2 * n_layers]
        out_ref = refs[1 + 2 * n_layers]
        negd2_ref = refs[2 + 2 * n_layers]

        x = x_ref[0]                                     # [L, D] f32
        L = x.shape[0]
        ones = jnp.ones((L, 1), jnp.float32)

        # pairwise squared distances (kept f32: drives discrete kNN selection)
        gram = jax.lax.dot_general(x, x, (((1,), (1,)), ((), ())),
                                   preferred_element_type=jnp.float32)
        sq = jnp.sum(x * x, axis=-1, keepdims=True)      # [L, 1]
        sq_cols = jax.lax.dot_general(ones, sq, (((1,), (1,)), ((), ())),
                                      preferred_element_type=jnp.float32)
        d2 = jnp.maximum(sq + sq_cols - 2.0 * gram, 0.0)

        row_i = jax.lax.broadcasted_iota(jnp.int32, (L, L), 0)
        col_i = jax.lax.broadcasted_iota(jnp.int32, (L, L), 1)
        eyef = (row_i == col_i).astype(jnp.float32)
        d2_ns = d2 + eyef * 1e9                          # mask self

        # k-th smallest per row via iterated min (ties negligible on float data)
        remaining = d2_ns
        kth = jnp.min(remaining, axis=-1, keepdims=True)
        for _ in range(k_neighbors - 1):
            remaining = jnp.where(remaining <= kth, 1e9, remaining)
            kth = jnp.min(remaining, axis=-1, keepdims=True)

        A = jnp.where(d2_ns <= kth, jnp.exp(-d2_ns), 0.0)   # exp(-dist^2) edge weight
        # A^T via identity matmul (MXU), then symmetrize + self loops
        At = jax.lax.dot_general(eyef, A, (((1,), (1,)), ((), ())),
                                 preferred_element_type=jnp.float32)
        A = jnp.maximum(A, At) + eyef
        dinv = jax.lax.rsqrt(jnp.sum(A, axis=-1, keepdims=True))
        dinv_cols = jax.lax.dot_general(ones, dinv, (((1,), (1,)), ((), ())),
                                        preferred_element_type=jnp.float32)
        a_norm = A * dinv * dinv_cols                    # D^-1/2 A D^-1/2
        a_bf = a_norm.astype(jnp.bfloat16)

        # GCN layers; A_norm reused from VMEM/vregs across layers
        h = x
        for li in range(n_layers):
            w = w_refs[2 * li][...]
            b = w_refs[2 * li + 1][...]
            hw = _bdot(h, w)
            h = jnp.dot(a_bf, hw.astype(jnp.bfloat16),
                        preferred_element_type=jnp.float32) + b
            if li < n_layers - 1:
                h = jnp.maximum(h, 0.0)

        out_ref[0] = h
        negd2_ref[0] = -d2_ns                            # for edge_index extraction
    return kernel


def gnn_forward(x, gnn_params, k_neighbors):
    B, L, D = x.shape
    n_layers = len(gnn_params)
    c_out = gnn_params[-1][0].shape[1]
    in_specs = [pl.BlockSpec((1, L, D), lambda b: (b, 0, 0))]
    args = [x]
    for (w, bb) in gnn_params:
        din, dout = w.shape
        in_specs.append(pl.BlockSpec((din, dout), lambda b: (0, 0)))
        in_specs.append(pl.BlockSpec((1, dout), lambda b: (0, 0)))
        args.append(w)
        args.append(bb.reshape(1, dout))
    return pl.pallas_call(
        _make_gnn_kernel(n_layers, k_neighbors),
        grid=(B,),
        in_specs=in_specs,
        out_specs=(
            pl.BlockSpec((1, L, c_out), lambda b: (b, 0, 0)),
            pl.BlockSpec((1, L, L), lambda b: (b, 0, 0)),
        ),
        out_shape=(
            jax.ShapeDtypeStruct((B, L, c_out), jnp.float32),
            jax.ShapeDtypeStruct((B, L, L), jnp.float32),
        ),
        compiler_params=pltpu.CompilerParams(dimension_semantics=("parallel",)),
    )(*args)


# ----------------------------- fusion + anomaly head -----------------------------

def _fusion_head_kernel(fin_ref, fw_ref, fb_ref, a1w_ref, a1b_ref, a2w_ref, a2b_ref,
                        fused_ref, score_ref):
    fused = _bdot(fin_ref[0], fw_ref[...]) + fb_ref[...]
    h1 = jnp.maximum(_bdot(fused, a1w_ref[...]) + a1b_ref[...], 0.0)
    score_ref[0] = _bdot(h1, a2w_ref[...]) + a2b_ref[...]
    fused_ref[0] = fused


def fusion_head(fused_in, p):
    B, L, C2 = fused_in.shape
    c_out = p["fusion_w"].shape[1]
    ch = p["an1_w"].shape[1]
    wmap2 = lambda b: (0, 0)
    return pl.pallas_call(
        _fusion_head_kernel,
        grid=(B,),
        in_specs=[
            pl.BlockSpec((1, L, C2), lambda b: (b, 0, 0)),
            pl.BlockSpec((C2, c_out), wmap2),
            pl.BlockSpec((1, c_out), wmap2),
            pl.BlockSpec((c_out, ch), wmap2),
            pl.BlockSpec((1, ch), wmap2),
            pl.BlockSpec((ch, 1), wmap2),
            pl.BlockSpec((1, 1), wmap2),
        ],
        out_specs=(
            pl.BlockSpec((1, L, c_out), lambda b: (b, 0, 0)),
            pl.BlockSpec((1, L, 1), lambda b: (b, 0, 0)),
        ),
        out_shape=(
            jax.ShapeDtypeStruct((B, L, c_out), jnp.float32),
            jax.ShapeDtypeStruct((B, L, 1), jnp.float32),
        ),
        compiler_params=pltpu.CompilerParams(dimension_semantics=("parallel",)),
    )(fused_in, p["fusion_w"], p["fusion_b"].reshape(1, c_out),
      p["an1_w"], p["an1_b"].reshape(1, ch),
      p["an2_w"], p["an2_b"].reshape(1, 1))


# ----------------------------- parameter setup -----------------------------

def _linear_init(key, fan_in, fan_out):
    k1, k2 = jax.random.split(key)
    bound = 1.0 / math.sqrt(fan_in)
    w = jax.random.uniform(k1, (fan_in, fan_out), jnp.float32, -bound, bound)
    b = jax.random.uniform(k2, (fan_out,), jnp.float32, -bound, bound)
    return w, b


def _positional_embedding(L, d_model):
    pos = jnp.arange(L, dtype=jnp.float32)[:, None]
    div = jnp.exp(jnp.arange(0, d_model, 2, dtype=jnp.float32)
                  * (-math.log(10000.0) / d_model))
    pe = jnp.zeros((L, d_model), jnp.float32)
    pe = pe.at[:, 0::2].set(jnp.sin(pos * div))
    pe = pe.at[:, 1::2].set(jnp.cos(pos * div))
    return pe


def init_params(key, cfg):
    # TODO(synk): weights are synthetic; the PyTorch sub-modules were not provided.
    L, D = cfg["win_size"], cfg["enc_in"]
    dm, H, dff = cfg["d_model"], cfg["n_heads"], cfg["d_ff"]
    c_out, ghid = cfg["c_out"], cfg["gnn_hidden"]
    keys = jax.random.split(key, 64)
    ki = iter(keys)
    p = {}
    p["tok_w"] = jax.random.normal(next(ki), (3 * D, dm), jnp.float32) * math.sqrt(1.0 / (3 * D))
    p["pe"] = _positional_embedding(L, dm)
    p["dist"] = jnp.abs(jnp.arange(L, dtype=jnp.float32)[:, None]
                        - jnp.arange(L, dtype=jnp.float32)[None, :])
    layers = []
    for _ in range(cfg["e_layers"]):
        lp = {}
        wq, bq = _linear_init(next(ki), dm, dm)
        wk, bk = _linear_init(next(ki), dm, dm)
        wv, bv = _linear_init(next(ki), dm, dm)
        wsig, bsig = _linear_init(next(ki), dm, H)
        lp["wqkvs"] = jnp.concatenate([wq, wk, wv, wsig], axis=1)   # [dm, 3*dm+H]
        lp["bqkvs"] = jnp.concatenate([bq, bk, bv, bsig], axis=0)
        lp["wo"], lp["bo"] = _linear_init(next(ki), dm, dm)
        lp["wff1"], lp["bff1"] = _linear_init(next(ki), dm, dff)
        lp["wff2"], lp["bff2"] = _linear_init(next(ki), dff, dm)
        lp["n1_g"], lp["n1_b"] = jnp.ones((dm,), jnp.float32), jnp.zeros((dm,), jnp.float32)
        lp["n2_g"], lp["n2_b"] = jnp.ones((dm,), jnp.float32), jnp.zeros((dm,), jnp.float32)
        layers.append(lp)
    p["enc_layers"] = layers
    p["enc_norm_g"] = jnp.ones((dm,), jnp.float32)
    p["enc_norm_b"] = jnp.zeros((dm,), jnp.float32)
    p["proj_w"], p["proj_b"] = _linear_init(next(ki), dm, c_out)
    gdims = [D] + [ghid] * (cfg["gnn_layers"] - 1) + [c_out]
    p["gnn_layers"] = [_linear_init(next(ki), gdims[i], gdims[i + 1])
                       for i in range(cfg["gnn_layers"])]
    p["fusion_w"], p["fusion_b"] = _linear_init(next(ki), 2 * c_out, c_out)
    p["an1_w"], p["an1_b"] = _linear_init(next(ki), c_out, c_out // 2)
    p["an2_w"], p["an2_b"] = _linear_init(next(ki), c_out // 2, 1)
    return p


# ----------------------------- model forward -----------------------------

def anomaly_trans_gnn_forward(params, x, cfg):
    B, L, D = x.shape
    H = cfg["n_heads"]
    k = cfg["k_neighbors"]

    # ---------------- Transformer branch ----------------
    xcat = jnp.concatenate([jnp.roll(x, 1, axis=1), x, jnp.roll(x, -1, axis=1)], axis=-1)
    enc = token_embed(xcat, params["tok_w"], params["pe"])          # [B, L, dm]

    series_list, prior_list, sigma_list = [], [], []
    for lp in params["enc_layers"]:
        enc, s, p_, sg = encoder_layer(enc, params["dist"], lp, H)
        series_list.append(s)
        prior_list.append(p_)
        sigma_list.append(jnp.broadcast_to(sg, (B, H, L, L)))        # rank-1 -> LxL outside kernel
    trans_out = final_norm_proj(enc, params["enc_norm_g"], params["enc_norm_b"],
                                params["proj_w"], params["proj_b"])  # [B, L, c_out]

    # ---------------- GNN branch (fused graph build + GCN stack) ----------------
    gnn_out, neg_d2 = gnn_forward(x, params["gnn_layers"], k)
    vals, idx = jax.lax.top_k(neg_d2, k)                             # batched kNN (glue)
    edge_weight = jnp.exp(vals).reshape(B, L * k)
    rows = jnp.tile(jnp.repeat(jnp.arange(L, dtype=jnp.int32), k)[None, :], (B, 1))
    edge_index = jnp.stack([rows, idx.reshape(B, L * k).astype(jnp.int32)], axis=1)

    # ---------------- fusion (concat) + anomaly head ----------------
    fused_in = jnp.concatenate([trans_out, gnn_out], axis=-1)        # [B, L, 2*c_out]
    fused, anomaly_score = fusion_head(fused_in, params)

    return (fused, anomaly_score, series_list, prior_list, sigma_list,
            edge_index, edge_weight)


# ----------------------------- main -----------------------------

if __name__ == "__main__":
    cfg = dict(win_size=8, enc_in=4, c_out=4, d_model=32, n_heads=4, e_layers=2,
               d_ff=32, gnn_hidden=16, gnn_layers=2, k_neighbors=3,
               fusion_method="concat")

    key = jax.random.PRNGKey(0)
    k_param, k_x = jax.random.split(key)
    params = init_params(k_param, cfg)

    B, L, D = 2, cfg["win_size"], cfg["enc_in"]
    x = jax.random.normal(k_x, (B, L, D), jnp.float32)

    forward = jax.jit(lambda p, xx: anomaly_trans_gnn_forward(p, xx, cfg))
    outputs = forward(params, x)
    outputs = jax.block_until_ready(outputs)

    fused, score, series, prior, sigmas, edge_index, edge_weight = outputs
    assert fused.shape == (B, L, cfg["c_out"])
    assert score.shape == (B, L, 1)
    assert len(series) == cfg["e_layers"] and series[0].shape == (B, cfg["n_heads"], L, L)
    assert prior[0].shape == (B, cfg["n_heads"], L, L)
    assert sigmas[0].shape == (B, cfg["n_heads"], L, L)
    assert edge_index.shape == (B, 2, L * cfg["k_neighbors"])
    assert edge_weight.shape == (B, L * cfg["k_neighbors"])
    assert bool(jnp.all(jnp.isfinite(fused))) and bool(jnp.all(jnp.isfinite(score)))
    print("KERNEL_OK")
</pallas_src>

<mosaic_0001>
module attributes {stable_mosaic.version = 11 : i64} {
  func.func @_embed_kernel(%arg0: i32, %arg1: memref<1x8x12xf32, #tpu.memory_space<vmem>>, %arg2: memref<12x32xf32, #tpu.memory_space<vmem>>, %arg3: memref<8x32xf32, #tpu.memory_space<vmem>>, %arg4: memref<1x8x32xf32, #tpu.memory_space<vmem>>) attributes {dimension_semantics = [#tpu.dimension_semantics<parallel>], iteration_bounds = array<i64: 2>, scalar_prefetch = 0 : i64, scratch_operands = 0 : i64, tpu.core_type = #tpu.core_type<tc>, window_params = [{transform_indices = @transform_0, window_bounds = array<i64: 1, 8, 12>}, {pipeline_mode = #tpu.pipeline_mode<synchronous>, transform_indices = @transform_1, window_bounds = array<i64: 12, 32>}, {pipeline_mode = #tpu.pipeline_mode<synchronous>, transform_indices = @transform_2, window_bounds = array<i64: 8, 32>}, {transform_indices = @transform_3, window_bounds = array<i64: 1, 8, 32>}]} {
    %c0 = arith.constant 0 : index
    %c0_0 = arith.constant 0 : index
    %c0_1 = arith.constant 0 : index
    %0 = vector.load %arg1[%c0, %c0_0, %c0_1] : memref<1x8x12xf32, #tpu.memory_space<vmem>>, vector<1x8x12xf32>
    %1 = vector.shape_cast %0 : vector<1x8x12xf32> to vector<8x12xf32>
    %c0_2 = arith.constant 0 : index
    %c0_3 = arith.constant 0 : index
    %2 = vector.load %arg2[%c0_2, %c0_3] : memref<12x32xf32, #tpu.memory_space<vmem>>, vector<12x32xf32>
    %3 = arith.truncf %1 : vector<8x12xf32> to vector<8x12xbf16>
    %4 = arith.truncf %2 : vector<12x32xf32> to vector<12x32xbf16>
    %cst = arith.constant dense<0.000000e+00> : vector<8x32xf32>
    %5 = tpu.matmul %3, %4, %cst {dimension_numbers = #tpu.dot_dimension_numbers<[1], [0], [0], [1], [0, 0, 1, 1], [], []>} : vector<8x12xbf16>, vector<12x32xbf16>, vector<8x32xf32> -> vector<8x32xf32>
    %c0_4 = arith.constant 0 : index
    %c0_5 = arith.constant 0 : index
    %6 = vector.load %arg3[%c0_4, %c0_5] : memref<8x32xf32, #tpu.memory_space<vmem>>, vector<8x32xf32>
    %7 = arith.addf %5, %6 : vector<8x32xf32>
    %c0_6 = arith.constant 0 : index
    %c0_7 = arith.constant 0 : index
    %c0_8 = arith.constant 0 : index
    %8 = vector.load %arg4[%c0_6, %c0_7, %c0_8] : memref<1x8x32xf32, #tpu.memory_space<vmem>>, vector<1x8x32xf32>
    %9 = vector.shape_cast %8 : vector<1x8x32xf32> to vector<8x32xf32>
    %10 = vector.shape_cast %7 : vector<8x32xf32> to vector<1x8x32xf32>
    tpu.vector_store %arg4[%c0_6, %c0_7, %c0_8], %10 {strides = array<i32>} : memref<1x8x32xf32, #tpu.memory_space<vmem>>, vector<1x8x32xf32>,
    return
  }
  func.func @transform_0(%arg0: i32) -> (i32, i32, i32) {
    %c0_i32 = arith.constant 0 : i32
    %c0_i32_0 = arith.constant 0 : i32
    %c0_i32_1 = arith.constant 0 : i32
    return %arg0, %c0_i32, %c0_i32_0 : i32, i32, i32
  }
  func.func @transform_1(%arg0: i32) -> (i32, i32) {
    %c0_i32 = arith.constant 0 : i32
    %c0_i32_0 = arith.constant 0 : i32
    %c0_i32_1 = arith.constant 0 : i32
    return %c0_i32, %c0_i32_0 : i32, i32
  }
  func.func @transform_2(%arg0: i32) -> (i32, i32) {
    %c0_i32 = arith.constant 0 : i32
    %c0_i32_0 = arith.constant 0 : i32
    %c0_i32_1 = arith.constant 0 : i32
    return %c0_i32, %c0_i32_0 : i32, i32
  }
  func.func @transform_3(%arg0: i32) -> (i32, i32, i32) {
    %c0_i32 = arith.constant 0 : i32
    %c0_i32_0 = arith.constant 0 : i32
    %c0_i32_1 = arith.constant 0 : i32
    return %arg0, %c0_i32, %c0_i32_0 : i32, i32, i32
  }
}

module attributes {stable_mosaic.version = 11 : i64} {
  func.func @kernel(%arg0: i32, %arg1: memref<1x8x32xf32, #tpu.memory_space<vmem>>, %arg2: memref<8x8xf32, #tpu.memory_space<vmem>>, %arg3: memref<32x100xf32, #tpu.memory_space<vmem>>, %arg4: memref<1x100xf32, #tpu.memory_space<vmem>>, %arg5: memref<32x32xf32, #tpu.memory_space<vmem>>, %arg6: memref<1x32xf32, #tpu.memory_space<vmem>>, %arg7: memref<32x32xf32, #tpu.memory_space<vmem>>, %arg8: memref<1x32xf32, #tpu.memory_space<vmem>>, %arg9: memref<32x32xf32, #tpu.memory_space<vmem>>, %arg10: memref<1x32xf32, #tpu.memory_space<vmem>>, %arg11: memref<1x32xf32, #tpu.memory_space<vmem>>, %arg12: memref<1x32xf32, #tpu.memory_space<vmem>>, %arg13: memref<1x32xf32, #tpu.memory_space<vmem>>, %arg14: memref<1x32xf32, #tpu.memory_space<vmem>>, %arg15: memref<1x8x32xf32, #tpu.memory_space<vmem>>, %arg16: memref<1x4x8x8xf32, #tpu.memory_space<vmem>>, %arg17: memref<1x4x8x8xf32, #tpu.memory_space<vmem>>, %arg18: memref<1x4x8x1xf32, #tpu.memory_space<vmem>>, %arg19: memref<8x32xf32, #tpu.memory_space<vmem>>) attributes {dimension_semantics = [#tpu.dimension_semantics<parallel>], iteration_bounds = array<i64: 2>, scalar_prefetch = 0 : i64, scratch_operands = 1 : i64, tpu.core_type = #tpu.core_type<tc>, window_params = [{transform_indices = @transform_0, window_bounds = array<i64: 1, 8, 32>}, {pipeline_mode = #tpu.pipeline_mode<synchronous>, transform_indices = @transform_1, window_bounds = array<i64: 8, 8>}, {pipeline_mode = #tpu.pipeline_mode<synchronous>, transform_indices = @transform_2, window_bounds = array<i64: 32, 100>}, {pipeline_mode = #tpu.pipeline_mode<synchronous>, transform_indices = @transform_3, window_bounds = array<i64: 1, 100>}, {pipeline_mode = #tpu.pipeline_mode<synchronous>, transform_indices = @transform_4, window_bounds = array<i64: 32, 32>}, {pipeline_mode = #tpu.pipeline_mode<synchronous>, transform_indices = @transform_5, window_bounds = array<i64: 1, 32>}, {pipeline_mode = #tpu.pipeline_mode<synchronous>, transform_indices = @transform_6, window_bounds = array<i64: 32, 32>}, {pipeline_mode = #tpu.pipeline_mode<synchronous>, transform_indices = @transform_7, window_bounds = array<i64: 1, 32>}, {pipeline_mode = #tpu.pipeline_mode<synchronous>, transform_indices = @transform_8, window_bounds = array<i64: 32, 32>}, {pipeline_mode = #tpu.pipeline_mode<synchronous>, transform_indices = @transform_9, window_bounds = array<i64: 1, 32>}, {pipeline_mode = #tpu.pipeline_mode<synchronous>, transform_indices = @transform_10, window_bounds = array<i64: 1, 32>}, {pipeline_mode = #tpu.pipeline_mode<synchronous>, transform_indices = @transform_11, window_bounds = array<i64: 1, 32>}, {pipeline_mode = #tpu.pipeline_mode<synchronous>, transform_indices = @transform_12, window_bounds = array<i64: 1, 32>}, {pipeline_mode = #tpu.pipeline_mode<synchronous>, transform_indices = @transform_13, window_bounds = array<i64: 1, 32>}, {transform_indices = @transform_14, window_bounds = array<i64: 1, 8, 32>}, {transform_indices = @transform_15, window_bounds = array<i64: 1, 4, 8, 8>}, {transform_indices = @transform_16, window_bounds = array<i64: 1, 4, 8, 8>}, {transform_indices = @transform_17, window_bounds = array<i64: 1, 4, 8, 1>}]} {
    %c0 = arith.constant 0 : index
    %c0_0 = arith.constant 0 : index
    %c0_1 = arith.constant 0 : index
    %0 = vector.load %arg1[%c0, %c0_0, %c0_1] : memref<1x8x32xf32, #tpu.memory_space<vmem>>, vector<1x8x32xf32>
    %1 = vector.shape_cast %0 : vector<1x8x32xf32> to vector<8x32xf32>
    %c0_2 = arith.constant 0 : index
    %c0_3 = arith.constant 0 : index
    %2 = vector.load %arg2[%c0_2, %c0_3] : memref<8x8xf32, #tpu.memory_space<vmem>>, vector<8x8xf32>
    %c0_4 = arith.constant 0 : index
    %c0_5 = arith.constant 0 : index
    %3 = vector.load %arg3[%c0_4, %c0_5] : memref<32x100xf32, #tpu.memory_space<vmem>>, vector<32x100xf32>
    %4 = arith.truncf %1 : vector<8x32xf32> to vector<8x32xbf16>
    %5 = arith.truncf %3 : vector<32x100xf32> to vector<32x100xbf16>
    %cst = arith.constant dense<0.000000e+00> : vector<8x100xf32>
    %6 = tpu.matmul %4, %5, %cst {dimension_numbers = #tpu.dot_dimension_numbers<[1], [0], [0], [1], [0, 0, 1, 1], [], []>} : vector<8x32xbf16>, vector<32x100xbf16>, vector<8x100xf32> -> vector<8x100xf32>
    %c0_6 = arith.constant 0 : index
    %c0_7 = arith.constant 0 : index
    %7 = vector.load %arg4[%c0_6, %c0_7] : memref<1x100xf32, #tpu.memory_space<vmem>>, vector<1x100xf32>
    %8 = vector.broadcast %7 : vector<1x100xf32> to vector<8x100xf32>
    %9 = arith.addf %6, %8 : vector<8x100xf32>
    %10 = vector.extract_strided_slice %9 {offsets = [0, 0], sizes = [8, 8], strides = [1, 1]} : vector<8x100xf32> to vector<8x8xf32>
    %11 = vector.extract_strided_slice %9 {offsets = [0, 32], sizes = [8, 8], strides = [1, 1]} : vector<8x100xf32> to vector<8x8xf32>
    %12 = vector.extract_strided_slice %9 {offsets = [0, 64], sizes = [8, 8], strides = [1, 1]} : vector<8x100xf32> to vector<8x8xf32>
    %13 = vector.extract_strided_slice %9 {offsets = [0, 96], sizes = [8, 1], strides = [1, 1]} : vector<8x100xf32> to vector<8x1xf32>
    %14 = arith.truncf %10 : vector<8x8xf32> to vector<8x8xbf16>
    %15 = arith.truncf %11 : vector<8x8xf32> to vector<8x8xbf16>
    %cst_8 = arith.constant dense<0.000000e+00> : vector<8x8xf32>
    %16 = tpu.matmul %14, %15, %cst_8 {dimension_numbers = #tpu.dot_dimension_numbers<[1], [1], [0], [0], [0, 0, 1, 0], [], []>} : vector<8x8xbf16>, vector<8x8xbf16>, vector<8x8xf32> -> vector<8x8xf32>
    %cst_9 = arith.constant 0.353553385 : f32
    %17 = vector.broadcast %cst_9 : f32 to vector<8x8xf32>
    %18 = arith.mulf %16, %17 : vector<8x8xf32>
    %cst_10 = arith.constant dense<0xFF800000> : vector<8xf32>
    %19 = vector.multi_reduction <maximumf>, %18, %cst_10 [1] : vector<8x8xf32> to vector<8xf32>
    %20 = vector.shape_cast %19 : vector<8xf32> to vector<8x1xf32>
    %21 = vector.broadcast %20 : vector<8x1xf32> to vector<8x8xf32>
    %22 = arith.subf %18, %21 : vector<8x8xf32>
    %23 = math.exp %22 : vector<8x8xf32>
    %cst_11 = arith.constant dense<0.000000e+00> : vector<8xf32>
    %24 = vector.multi_reduction <add>, %23, %cst_11 [1] : vector<8x8xf32> to vector<8xf32>
    %25 = vector.shape_cast %24 : vector<8xf32> to vector<8x1xf32>
    %26 = tpu.reciprocal %25 {approx = true} : vector<8x1xf32> -> vector<8x1xf32>
    %27 = vector.broadcast %26 : vector<8x1xf32> to vector<8x8xf32>
    %28 = arith.mulf %23, %27 : vector<8x8xf32>
    %cst_12 = arith.constant 5.000000e+00 : f32
    %29 = vector.broadcast %cst_12 : f32 to vector<8x1xf32>
    %30 = arith.mulf %13, %29 : vector<8x1xf32>
    %31 = arith.negf %30 : vector<8x1xf32>
    %32 = math.exp %31 : vector<8x1xf32>
    %cst_13 = arith.constant 1.000000e+00 : f32
    %33 = vector.broadcast %cst_13 : f32 to vector<8x1xf32>
    %34 = arith.addf %33, %32 : vector<8x1xf32>
    %35 = arith.divf %33, %34 : vector<8x1xf32>
    %cst_14 = arith.constant 9.99999974E-6 : f32
    %36 = vector.broadcast %cst_14 : f32 to vector<8x1xf32>
    %37 = arith.addf %35, %36 : vector<8x1xf32>
    %cst_15 = arith.constant 1.09861231 : f32
    %38 = vector.broadcast %cst_15 : f32 to vector<8x1xf32>
    %39 = arith.mulf %37, %38 : vector<8x1xf32>
    %40 = math.exp %39 : vector<8x1xf32>
    %cst_16 = arith.constant 1.000000e+00 : f32
    %41 = vector.broadcast %cst_16 : f32 to vector<8x1xf32>
    %42 = arith.subf %40, %41 : vector<8x1xf32>
    %43 = tpu.reciprocal %42 {approx = true} : vector<8x1xf32> -> vector<8x1xf32>
    %cst_17 = arith.constant 0.398942292 : f32
    %44 = vector.broadcast %cst_17 : f32 to vector<8x1xf32>
    %45 = arith.mulf %44, %43 : vector<8x1xf32>
    %46 = arith.mulf %2, %2 : vector<8x8xf32>
    %cst_18 = arith.constant 0.000000e+00 : f32
    %47 = vector.broadcast %cst_18 : f32 to vector<8x8xf32>
    %48 = arith.subf %47, %46 : vector<8x8xf32>
    %cst_19 = arith.constant 5.000000e-01 : f32
    %49 = vector.broadcast %cst_19 : f32 to vector<8x1xf32>
    %50 = arith.mulf %49, %43 : vector<8x1xf32>
    %51 = arith.mulf %50, %43 : vector<8x1xf32>
    %52 = vector.broadcast %51 : vector<8x1xf32> to vector<8x8xf32>
    %53 = arith.mulf %48, %52 : vector<8x8xf32>
    %54 = math.exp %53 : vector<8x8xf32>
    %55 = vector.broadcast %45 : vector<8x1xf32> to vector<8x8xf32>
    %56 = arith.mulf %55, %54 : vector<8x8xf32>
    %57 = arith.truncf %28 : vector<8x8xf32> to vector<8x8xbf16>
    %58 = arith.truncf %12 : vector<8x8xf32> to vector<8x8xbf16>
    %cst_20 = arith.constant dense<0.000000e+00> : vector<8x8xf32>
    %59 = tpu.matmul %57, %58, %cst_20 {dimension_numbers = #tpu.dot_dimension_numbers<[1], [0], [0], [1], [0, 0, 1, 1], [], []>} : vector<8x8xbf16>, vector<8x8xbf16>, vector<8x8xf32> -> vector<8x8xf32>
    %c0_21 = arith.constant 0 : index
    %c0_22 = arith.constant 0 : index
    %60 = vector.load %arg19[%c0_21, %c0_22] : memref<8x32xf32, #tpu.memory_space<vmem>>, vector<8x8xf32>
    tpu.vector_store %arg19[%c0_21, %c0_22], %59 {strides = array<i32>} : memref<8x32xf32, #tpu.memory_space<vmem>>, vector<8x8xf32>,
    %c0_23 = arith.constant 0 : index
    %c0_24 = arith.constant 0 : index
    %c0_25 = arith.constant 0 : index
    %c0_26 = arith.constant 0 : index
    %61 = vector.load %arg16[%c0_23, %c0_24, %c0_25, %c0_26] : memref<1x4x8x8xf32, #tpu.memory_space<vmem>>, vector<1x1x8x8xf32>
    %62 = vector.shape_cast %61 : vector<1x1x8x8xf32> to vector<8x8xf32>
    %63 = vector.shape_cast %28 : vector<8x8xf32> to vector<1x1x8x8xf32>
    tpu.vector_store %arg16[%c0_23, %c0_24, %c0_25, %c0_26], %63 {strides = array<i32>} : memref<1x4x8x8xf32, #tpu.memory_space<vmem>>, vector<1x1x8x8xf32>,
    %c0_27 = arith.constant 0 : index
    %c0_28 = arith.constant 0 : index
    %c0_29 = arith.constant 0 : index
    %c0_30 = arith.constant 0 : index
    %64 = vector.load %arg17[%c0_27, %c0_28, %c0_29, %c0_30] : memref<1x4x8x8xf32, #tpu.memory_space<vmem>>, vector<1x1x8x8xf32>
    %65 = vector.shape_cast %64 : vector<1x1x8x8xf32> to vector<8x8xf32>
    %66 = vector.shape_cast %56 : vector<8x8xf32> to vector<1x1x8x8xf32>
    tpu.vector_store %arg17[%c0_27, %c0_28, %c0_29, %c0_30], %66 {strides = array<i32>} : memref<1x4x8x8xf32, #tpu.memory_space<vmem>>, vector<1x1x8x8xf32>,
    %c0_31 = arith.constant 0 : index
    %c0_32 = arith.constant 0 : index
    %c0_33 = arith.constant 0 : index
    %c0_34 = arith.constant 0 : index
    %67 = vector.load %arg18[%c0_31, %c0_32, %c0_33, %c0_34] : memref<1x4x8x1xf32, #tpu.memory_space<vmem>>, vector<1x1x8x1xf32>
    %68 = vector.shape_cast %67 : vector<1x1x8x1xf32> to vector<8x1xf32>
    %69 = vector.shape_cast %42 : vector<8x1xf32> to vector<1x1x8x1xf32>
    tpu.vector_store %arg18[%c0_31, %c0_32, %c0_33, %c0_34], %69 {strides = array<i32>} : memref<1x4x8x1xf32, #tpu.memory_space<vmem>>, vector<1x1x8x1xf32>,
    %70 = vector.extract_strided_slice %9 {offsets = [0, 8], sizes = [8, 8], strides = [1, 1]} : vector<8x100xf32> to vector<8x8xf32>
    %71 = vector.extract_strided_slice %9 {offsets = [0, 40], sizes = [8, 8], strides = [1, 1]} : vector<8x100xf32> to vector<8x8xf32>
    %72 = vector.extract_strided_slice %9 {offsets = [0, 72], sizes = [8, 8], strides = [1, 1]} : vector<8x100xf32> to vector<8x8xf32>
    %73 = vector.extract_strided_slice %9 {offsets = [0, 97], sizes = [8, 1], strides = [1, 1]} : vector<8x100xf32> to vector<8x1xf32>
    %74 = arith.truncf %70 : vector<8x8xf32> to vector<8x8xbf16>
    %75 = arith.truncf %71 : vector<8x8xf32> to vector<8x8xbf16>
    %cst_35 = arith.constant dense<0.000000e+00> : vector<8x8xf32>
    %76 = tpu.matmul %74, %75, %cst_35 {dimension_numbers = #tpu.dot_dimension_numbers<[1], [1], [0], [0], [0, 0, 1, 0], [], []>} : vector<8x8xbf16>, vector<8x8xbf16>, vector<8x8xf32> -> vector<8x8xf32>
    %cst_36 = arith.constant 0.353553385 : f32
    %77 = vector.broadcast %cst_36 : f32 to vector<8x8xf32>
    %78 = arith.mulf %76, %77 : vector<8x8xf32>
    %cst_37 = arith.constant dense<0xFF800000> : vector<8xf32>
    %79 = vector.multi_reduction <maximumf>, %78, %cst_37 [1] : vector<8x8xf32> to vector<8xf32>
    %80 = vector.shape_cast %79 : vector<8xf32> to vector<8x1xf32>
    %81 = vector.broadcast %80 : vector<8x1xf32> to vector<8x8xf32>
    %82 = arith.subf %78, %81 : vector<8x8xf32>
    %83 = math.exp %82 : vector<8x8xf32>
    %cst_38 = arith.constant dense<0.000000e+00> : vector<8xf32>
    %84 = vector.multi_reduction <add>, %83, %cst_38 [1] : vector<8x8xf32> to vector<8xf32>
    %85 = vector.shape_cast %84 : vector<8xf32> to vector<8x1xf32>
    %86 = tpu.reciprocal %85 {approx = true} : vector<8x1xf32> -> vector<8x1xf32>
    %87 = vector.broadcast %86 : vector<8x1xf32> to vector<8x8xf32>
    %88 = arith.mulf %83, %87 : vector<8x8xf32>
    %cst_39 = arith.constant 5.000000e+00 : f32
    %89 = vector.broadcast %cst_39 : f32 to vector<8x1xf32>
    %90 = arith.mulf %73, %89 : vector<8x1xf32>
    %91 = arith.negf %90 : vector<8x1xf32>
    %92 = math.exp %91 : vector<8x1xf32>
    %cst_40 = arith.constant 1.000000e+00 : f32
    %93 = vector.broadcast %cst_40 : f32 to vector<8x1xf32>
    %94 = arith.addf %93, %92 : vector<8x1xf32>
    %95 = arith.divf %93, %94 : vector<8x1xf32>
    %cst_41 = arith.constant 9.99999974E-6 : f32
    %96 = vector.broadcast %cst_41 : f32 to vector<8x1xf32>
    %97 = arith.addf %95, %96 : vector<8x1xf32>
    %cst_42 = arith.constant 1.09861231 : f32
    %98 = vector.broadcast %cst_42 : f32 to vector<8x1xf32>
    %99 = arith.mulf %97, %98 : vector<8x1xf32>
    %100 = math.exp %99 : vector<8x1xf32>
    %cst_43 = arith.constant 1.000000e+00 : f32
    %101 = vector.broadcast %cst_43 : f32 to vector<8x1xf32>
    %102 = arith.subf %100, %101 : vector<8x1xf32>
    %103 = tpu.reciprocal %102 {approx = true} : vector<8x1xf32> -> vector<8x1xf32>
    %cst_44 = arith.constant 0.398942292 : f32
    %104 = vector.broadcast %cst_44 : f32 to vector<8x1xf32>
    %105 = arith.mulf %104, %103 : vector<8x1xf32>
    %106 = arith.mulf %2, %2 : vector<8x8xf32>
    %cst_45 = arith.constant 0.000000e+00 : f32
    %107 = vector.broadcast %cst_45 : f32 to vector<8x8xf32>
    %108 = arith.subf %107, %106 : vector<8x8xf32>
    %cst_46 = arith.constant 5.000000e-01 : f32
    %109 = vector.broadcast %cst_46 : f32 to vector<8x1xf32>
    %110 = arith.mulf %109, %103 : vector<8x1xf32>
    %111 = arith.mulf %110, %103 : vector<8x1xf32>
    %112 = vector.broadcast %111 : vector<8x1xf32> to vector<8x8xf32>
    %113 = arith.mulf %108, %112 : vector<8x8xf32>
    %114 = math.exp %113 : vector<8x8xf32>
    %115 = vector.broadcast %105 : vector<8x1xf32> to vector<8x8xf32>
    %116 = arith.mulf %115, %114 : vector<8x8xf32>
    %117 = arith.truncf %88 : vector<8x8xf32> to vector<8x8xbf16>
    %118 = arith.truncf %72 : vector<8x8xf32> to vector<8x8xbf16>
    %cst_47 = arith.constant dense<0.000000e+00> : vector<8x8xf32>
    %119 = tpu.matmul %117, %118, %cst_47 {dimension_numbers = #tpu.dot_dimension_numbers<[1], [0], [0], [1], [0, 0, 1, 1], [], []>} : vector<8x8xbf16>, vector<8x8xbf16>, vector<8x8xf32> -> vector<8x8xf32>
    %c0_48 = arith.constant 0 : index
    %c8 = arith.constant 8 : index
    %120 = vector.load %arg19[%c0_48, %c8] : memref<8x32xf32, #tpu.memory_space<vmem>>, vector<8x8xf32>
    tpu.vector_store %arg19[%c0_48, %c8], %119 {strides = array<i32>} : memref<8x32xf32, #tpu.memory_space<vmem>>, vector<8x8xf32>,
    %c0_49 = arith.constant 0 : index
    %c1 = arith.constant 1 : index
    %c0_50 = arith.constant 0 : index
    %c0_51 = arith.constant 0 : index
    %121 = vector.load %arg16[%c0_49, %c1, %c0_50, %c0_51] : memref<1x4x8x8xf32, #tpu.memory_space<vmem>>, vector<1x1x8x8xf32>
    %122 = vector.shape_cast %121 : vector<1x1x8x8xf32> to vector<8x8xf32>
    %123 = vector.shape_cast %88 : vector<8x8xf32> to vector<1x1x8x8xf32>
    tpu.vector_store %arg16[%c0_49, %c1, %c0_50, %c0_51], %123 {strides = array<i32>} : memref<1x4x8x8xf32, #tpu.memory_space<vmem>>, vector<1x1x8x8xf32>,
    %c0_52 = arith.constant 0 : index
    %c1_53 = arith.constant 1 : index
    %c0_54 = arith.constant 0 : index
    %c0_55 = arith.constant 0 : index
    %124 = vector.load %arg17[%c0_52, %c1_53, %c0_54, %c0_55] : memref<1x4x8x8xf32, #tpu.memory_space<vmem>>, vector<1x1x8x8xf32>
    %125 = vector.shape_cast %124 : vector<1x1x8x8xf32> to vector<8x8xf32>
    %126 = vector.shape_cast %116 : vector<8x8xf32> to vector<1x1x8x8xf32>
    tpu.vector_store %arg17[%c0_52, %c1_53, %c0_54, %c0_55], %126 {strides = array<i32>} : memref<1x4x8x8xf32, #tpu.memory_space<vmem>>, vector<1x1x8x8xf32>,
    %c0_56 = arith.constant 0 : index
    %c1_57 = arith.constant 1 : index
    %c0_58 = arith.constant 0 : index
    %c0_59 = arith.constant 0 : index
    %127 = vector.load %arg18[%c0_56, %c1_57, %c0_58, %c0_59] : memref<1x4x8x1xf32, #tpu.memory_space<vmem>>, vector<1x1x8x1xf32>
    %128 = vector.shape_cast %127 : vector<1x1x8x1xf32> to vector<8x1xf32>
    %129 = vector.shape_cast %102 : vector<8x1xf32> to vector<1x1x8x1xf32>
    tpu.vector_store %arg18[%c0_56, %c1_57, %c0_58, %c0_59], %129 {strides = array<i32>} : memref<1x4x8x1xf32, #tpu.memory_space<vmem>>, vector<1x1x8x1xf32>,
    %130 = vector.extract_strided_slice %9 {offsets = [0, 16], sizes = [8, 8], strides = [1, 1]} : vector<8x100xf32> to vector<8x8xf32>
    %131 = vector.extract_strided_slice %9 {offsets = [0, 48], sizes = [8, 8], strides = [1, 1]} : vector<8x100xf32> to vector<8x8xf32>
    %132 = vector.extract_strided_slice %9 {offsets = [0, 80], sizes = [8, 8], strides = [1, 1]} : vector<8x100xf32> to vector<8x8xf32>
    %133 = vector.extract_strided_slice %9 {offsets = [0, 98], sizes = [8, 1], strides = [1, 1]} : vector<8x100xf32> to vector<8x1xf32>
    %134 = arith.truncf %130 : vector<8x8xf32> to vector<8x8xbf16>
    %135 = arith.truncf %131 : vector<8x8xf32> to vector<8x8xbf16>
    %cst_60 = arith.constant dense<0.000000e+00> : vector<8x8xf32>
    %136 = tpu.matmul %134, %135, %cst_60 {dimension_numbers = #tpu.dot_dimension_numbers<[1], [1], [0], [0], [0, 0, 1, 0], [], []>} : vector<8x8xbf16>, vector<8x8xbf16>, vector<8x8xf32> -> vector<8x8xf32>
    %cst_61 = arith.constant 0.353553385 : f32
    %137 = vector.broadcast %cst_61 : f32 to vector<8x8xf32>
    %138 = arith.mulf %136, %137 : vector<8x8xf32>
    %cst_62 = arith.constant dense<0xFF800000> : vector<8xf32>
    %139 = vector.multi_reduction <maximumf>, %138, %cst_62 [1] : vector<8x8xf32> to vector<8xf32>
    %140 = vector.shape_cast %139 : vector<8xf32> to vector<8x1xf32>
    %141 = vector.broadcast %140 : vector<8x1xf32> to vector<8x8xf32>
    %142 = arith.subf %138, %141 : vector<8x8xf32>
    %143 = math.exp %142 : vector<8x8xf32>
    %cst_63 = arith.constant dense<0.000000e+00> : vector<8xf32>
    %144 = vector.multi_reduction <add>, %143, %cst_63 [1] : vector<8x8xf32> to vector<8xf32>
    %145 = vector.shape_cast %144 : vector<8xf32> to vector<8x1xf32>
    %146 = tpu.reciprocal %145 {approx = true} : vector<8x1xf32> -> vector<8x1xf32>
    %147 = vector.broadcast %146 : vector<8x1xf32> to vector<8x8xf32>
    %148 = arith.mulf %143, %147 : vector<8x8xf32>
    %cst_64 = arith.constant 5.000000e+00 : f32
    %149 = vector.broadcast %cst_64 : f32 to vector<8x1xf32>
    %150 = arith.mulf %133, %149 : vector<8x1xf32>
    %151 = arith.negf %150 : vector<8x1xf32>
    %152 = math.exp %151 : vector<8x1xf32>
    %cst_65 = arith.constant 1.000000e+00 : f32
    %153 = vector.broadcast %cst_65 : f32 to vector<8x1xf32>
    %154 = arith.addf %153, %152 : vector<8x1xf32>
    %155 = arith.divf %153, %154 : vector<8x1xf32>
    %cst_66 = arith.constant 9.99999974E-6 : f32
    %156 = vector.broadcast %cst_66 : f32 to vector<8x1xf32>
    %157 = arith.addf %155, %156 : vector<8x1xf32>
    %cst_67 = arith.constant 1.09861231 : f32
    %158 = vector.broadcast %cst_67 : f32 to vector<8x1xf32>
    %159 = arith.mulf %157, %158 : vector<8x1xf32>
    %160 = math.exp %159 : vector<8x1xf32>
    %cst_68 = arith.constant 1.000000e+00 : f32
    %161 = vector.broadcast %cst_68 : f32 to vector<8x1xf32>
    %162 = arith.subf %160, %161 : vector<8x1xf32>
    %163 = tpu.reciprocal %162 {approx = true} : vector<8x1xf32> -> vector<8x1xf32>
    %cst_69 = arith.constant 0.398942292 : f32
    %164 = vector.broadcast %cst_69 : f32 to vector<8x1xf32>
    %165 = arith.mulf %164, %163 : vector<8x1xf32>
    %166 = arith.mulf %2, %2 : vector<8x8xf32>
    %cst_70 = arith.constant 0.000000e+00 : f32
    %167 = vector.broadcast %cst_70 : f32 to vector<8x8xf32>
    %168 = arith.subf %167, %166 : vector<8x8xf32>
    %cst_71 = arith.constant 5.000000e-01 : f32
    %169 = vector.broadcast %cst_71 : f32 to vector<8x1xf32>
    %170 = arith.mulf %169, %163 : vector<8x1xf32>
    %171 = arith.mulf %170, %163 : vector<8x1xf32>
    %172 = vector.broadcast %171 : vector<8x1xf32> to vector<8x8xf32>
    %173 = arith.mulf %168, %172 : vector<8x8xf32>
    %174 = math.exp %173 : vector<8x8xf32>
    %175 = vector.broadcast %165 : vector<8x1xf32> to vector<8x8xf32>
    %176 = arith.mulf %175, %174 : vector<8x8xf32>
    %177 = arith.truncf %148 : vector<8x8xf32> to vector<8x8xbf16>
    %178 = arith.truncf %132 : vector<8x8xf32> to vector<8x8xbf16>
    %cst_72 = arith.constant dense<0.000000e+00> : vector<8x8xf32>
    %179 = tpu.matmul %177, %178, %cst_72 {dimension_numbers = #tpu.dot_dimension_numbers<[1], [0], [0], [1], [0, 0, 1, 1], [], []>} : vector<8x8xbf16>, vector<8x8xbf16>, vector<8x8xf32> -> vector<8x8xf32>
    %c0_73 = arith.constant 0 : index
    %c16 = arith.constant 16 : index
    %180 = vector.load %arg19[%c0_73, %c16] : memref<8x32xf32, #tpu.memory_space<vmem>>, vector<8x8xf32>
    tpu.vector_store %arg19[%c0_73, %c16], %179 {strides = array<i32>} : memref<8x32xf32, #tpu.memory_space<vmem>>, vector<8x8xf32>,
    %c0_74 = arith.constant 0 : index
    %c2 = arith.constant 2 : index
    %c0_75 = arith.constant 0 : index
    %c0_76 = arith.constant 0 : index
    %181 = vector.load %arg16[%c0_74, %c2, %c0_75, %c0_76] : memref<1x4x8x8xf32, #tpu.memory_space<vmem>>, vector<1x1x8x8xf32>
    %182 = vector.shape_cast %181 : vector<1x1x8x8xf32> to vector<8x8xf32>
    %183 = vector.shape_cast %148 : vector<8x8xf32> to vector<1x1x8x8xf32>
    tpu.vector_store %arg16[%c0_74, %c2, %c0_75, %c0_76], %183 {strides = array<i32>} : memref<1x4x8x8xf32, #tpu.memory_space<vmem>>, vector<1x1x8x8xf32>,
    %c0_77 = arith.constant 0 : index
    %c2_78 = arith.constant 2 : index
    %c0_79 = arith.constant 0 : index
    %c0_80 = arith.constant 0 : index
    %184 = vector.load %arg17[%c0_77, %c2_78, %c0_79, %c0_80] : memref<1x4x8x8xf32, #tpu.memory_space<vmem>>, vector<1x1x8x8xf32>
    %185 = vector.shape_cast %184 : vector<1x1x8x8xf32> to vector<8x8xf32>
    %186 = vector.shape_cast %176 : vector<8x8xf32> to vector<1x1x8x8xf32>
    tpu.vector_store %arg17[%c0_77, %c2_78, %c0_79, %c0_80], %186 {strides = array<i32>} : memref<1x4x8x8xf32, #tpu.memory_space<vmem>>, vector<1x1x8x8xf32>,
    %c0_81 = arith.constant 0 : index
    %c2_82 = arith.constant 2 : index
    %c0_83 = arith.constant 0 : index
    %c0_84 = arith.constant 0 : index
    %187 = vector.load %arg18[%c0_81, %c2_82, %c0_83, %c0_84] : memref<1x4x8x1xf32, #tpu.memory_space<vmem>>, vector<1x1x8x1xf32>
    %188 = vector.shape_cast %187 : vector<1x1x8x1xf32> to vector<8x1xf32>
    %189 = vector.shape_cast %162 : vector<8x1xf32> to vector<1x1x8x1xf32>
    tpu.vector_store %arg18[%c0_81, %c2_82, %c0_83, %c0_84], %189 {strides = array<i32>} : memref<1x4x8x1xf32, #tpu.memory_space<vmem>>, vector<1x1x8x1xf32>,
    %190 = vector.extract_strided_slice %9 {offsets = [0, 24], sizes = [8, 8], strides = [1, 1]} : vector<8x100xf32> to vector<8x8xf32>
    %191 = vector.extract_strided_slice %9 {offsets = [0, 56], sizes = [8, 8], strides = [1, 1]} : vector<8x100xf32> to vector<8x8xf32>
    %192 = vector.extract_strided_slice %9 {offsets = [0, 88], sizes = [8, 8], strides = [1, 1]} : vector<8x100xf32> to vector<8x8xf32>
    %193 = vector.extract_strided_slice %9 {offsets = [0, 99], sizes = [8, 1], strides = [1, 1]} : vector<8x100xf32> to vector<8x1xf32>
    %194 = arith.truncf %190 : vector<8x8xf32> to vector<8x8xbf16>
    %195 = arith.truncf %191 : vector<8x8xf32> to vector<8x8xbf16>
    %cst_85 = arith.constant dense<0.000000e+00> : vector<8x8xf32>
    %196 = tpu.matmul %194, %195, %cst_85 {dimension_numbers = #tpu.dot_dimension_numbers<[1], [1], [0], [0], [0, 0, 1, 0], [], []>} : vector<8x8xbf16>, vector<8x8xbf16>, vector<8x8xf32> -> vector<8x8xf32>
    %cst_86 = arith.constant 0.353553385 : f32
    %197 = vector.broadcast %cst_86 : f32 to vector<8x8xf32>
    %198 = arith.mulf %196, %197 : vector<8x8xf32>
    %cst_87 = arith.constant dense<0xFF800000> : vector<8xf32>
    %199 = vector.multi_reduction <maximumf>, %198, %cst_87 [1] : vector<8x8xf32> to vector<8xf32>
    %200 = vector.shape_cast %199 : vector<8xf32> to vector<8x1xf32>
    %201 = vector.broadcast %200 : vector<8x1xf32> to vector<8x8xf32>
    %202 = arith.subf %198, %201 : vector<8x8xf32>
    %203 = math.exp %202 : vector<8x8xf32>
    %cst_88 = arith.constant dense<0.000000e+00> : vector<8xf32>
    %204 = vector.multi_reduction <add>, %203, %cst_88 [1] : vector<8x8xf32> to vector<8xf32>
    %205 = vector.shape_cast %204 : vector<8xf32> to vector<8x1xf32>
    %206 = tpu.reciprocal %205 {approx = true} : vector<8x1xf32> -> vector<8x1xf32>
    %207 = vector.broadcast %206 : vector<8x1xf32> to vector<8x8xf32>
    %208 = arith.mulf %203, %207 : vector<8x8xf32>
    %cst_89 = arith.constant 5.000000e+00 : f32
    %209 = vector.broadcast %cst_89 : f32 to vector<8x1xf32>
    %210 = arith.mulf %193, %209 : vector<8x1xf32>
    %211 = arith.negf %210 : vector<8x1xf32>
    %212 = math.exp %211 : vector<8x1xf32>
    %cst_90 = arith.constant 1.000000e+00 : f32
    %213 = vector.broadcast %cst_90 : f32 to vector<8x1xf32>
    %214 = arith.addf %213, %212 : vector<8x1xf32>
    %215 = arith.divf %213, %214 : vector<8x1xf32>
    %cst_91 = arith.constant 9.99999974E-6 : f32
    %216 = vector.broadcast %cst_91 : f32 to vector<8x1xf32>
    %217 = arith.addf %215, %216 : vector<8x1xf32>
    %cst_92 = arith.constant 1.09861231 : f32
    %218 = vector.broadcast %cst_92 : f32 to vector<8x1xf32>
    %219 = arith.mulf %217, %218 : vector<8x1xf32>
    %220 = math.exp %219 : vector<8x1xf32>
    %cst_93 = arith.constant 1.000000e+00 : f32
    %221 = vector.broadcast %cst_93 : f32 to vector<8x1xf32>
    %222 = arith.subf %220, %221 : vector<8x1xf32>
    %223 = tpu.reciprocal %222 {approx = true} : vector<8x1xf32> -> vector<8x1xf32>
    %cst_94 = arith.constant 0.398942292 : f32
    %224 = vector.broadcast %cst_94 : f32 to vector<8x1xf32>
    %225 = arith.mulf %224, %223 : vector<8x1xf32>
    %226 = arith.mulf %2, %2 : vector<8x8xf32>
    %cst_95 = arith.constant 0.000000e+00 : f32
    %227 = vector.broadcast %cst_95 : f32 to vector<8x8xf32>
    %228 = arith.subf %227, %226 : vector<8x8xf32>
    %cst_96 = arith.constant 5.000000e-01 : f32
    %229 = vector.broadcast %cst_96 : f32 to vector<8x1xf32>
    %230 = arith.mulf %229, %223 : vector<8x1xf32>
    %231 = arith.mulf %230, %223 : vector<8x1xf32>
    %232 = vector.broadcast %231 : vector<8x1xf32> to vector<8x8xf32>
    %233 = arith.mulf %228, %232 : vector<8x8xf32>
    %234 = math.exp %233 : vector<8x8xf32>
    %235 = vector.broadcast %225 : vector<8x1xf32> to vector<8x8xf32>
    %236 = arith.mulf %235, %234 : vector<8x8xf32>
    %237 = arith.truncf %208 : vector<8x8xf32> to vector<8x8xbf16>
    %238 = arith.truncf %192 : vector<8x8xf32> to vector<8x8xbf16>
    %cst_97 = arith.constant dense<0.000000e+00> : vector<8x8xf32>
    %239 = tpu.matmul %237, %238, %cst_97 {dimension_numbers = #tpu.dot_dimension_numbers<[1], [0], [0], [1], [0, 0, 1, 1], [], []>} : vector<8x8xbf16>, vector<8x8xbf16>, vector<8x8xf32> -> vector<8x8xf32>
    %c0_98 = arith.constant 0 : index
    %c24 = arith.constant 24 : index
    %240 = vector.load %arg19[%c0_98, %c24] : memref<8x32xf32, #tpu.memory_space<vmem>>, vector<8x8xf32>
    tpu.vector_store %arg19[%c0_98, %c24], %239 {strides = array<i32>} : memref<8x32xf32, #tpu.memory_space<vmem>>, vector<8x8xf32>,
    %c0_99 = arith.constant 0 : index
    %c3 = arith.constant 3 : index
    %c0_100 = arith.constant 0 : index
    %c0_101 = arith.constant 0 : index
    %241 = vector.load %arg16[%c0_99, %c3, %c0_100, %c0_101] : memref<1x4x8x8xf32, #tpu.memory_space<vmem>>, vector<1x1x8x8xf32>
    %242 = vector.shape_cast %241 : vector<1x1x8x8xf32> to vector<8x8xf32>
    %243 = vector.shape_cast %208 : vector<8x8xf32> to vector<1x1x8x8xf32>
    tpu.vector_store %arg16[%c0_99, %c3, %c0_100, %c0_101], %243 {strides = array<i32>} : memref<1x4x8x8xf32, #tpu.memory_space<vmem>>, vector<1x1x8x8xf32>,
    %c0_102 = arith.constant 0 : index
    %c3_103 = arith.constant 3 : index
    %c0_104 = arith.constant 0 : index
    %c0_105 = arith.constant 0 : index
    %244 = vector.load %arg17[%c0_102, %c3_103, %c0_104, %c0_105] : memref<1x4x8x8xf32, #tpu.memory_space<vmem>>, vector<1x1x8x8xf32>
    %245 = vector.shape_cast %244 : vector<1x1x8x8xf32> to vector<8x8xf32>
    %246 = vector.shape_cast %236 : vector<8x8xf32> to vector<1x1x8x8xf32>
    tpu.vector_store %arg17[%c0_102, %c3_103, %c0_104, %c0_105], %246 {strides = array<i32>} : memref<1x4x8x8xf32, #tpu.memory_space<vmem>>, vector<1x1x8x8xf32>,
    %c0_106 = arith.constant 0 : index
    %c3_107 = arith.constant 3 : index
    %c0_108 = arith.constant 0 : index
    %c0_109 = arith.constant 0 : index
    %247 = vector.load %arg18[%c0_106, %c3_107, %c0_108, %c0_109] : memref<1x4x8x1xf32, #tpu.memory_space<vmem>>, vector<1x1x8x1xf32>
    %248 = vector.shape_cast %247 : vector<1x1x8x1xf32> to vector<8x1xf32>
    %249 = vector.shape_cast %222 : vector<8x1xf32> to vector<1x1x8x1xf32>
    tpu.vector_store %arg18[%c0_106, %c3_107, %c0_108, %c0_109], %249 {strides = array<i32>} : memref<1x4x8x1xf32, #tpu.memory_space<vmem>>, vector<1x1x8x1xf32>,
    %c0_110 = arith.constant 0 : index
    %c0_111 = arith.constant 0 : index
    %250 = vector.load %arg19[%c0_110, %c0_111] : memref<8x32xf32, #tpu.memory_space<vmem>>, vector<8x32xf32>
    %c0_112 = arith.constant 0 : index
    %c0_113 = arith.constant 0 : index
    %251 = vector.load %arg5[%c0_112, %c0_113] : memref<32x32xf32, #tpu.memory_space<vmem>>, vector<32x32xf32>
    %252 = arith.truncf %250 : vector<8x32xf32> to vector<8x32xbf16>
    %253 = arith.truncf %251 : vector<32x32xf32> to vector<32x32xbf16>
    %cst_114 = arith.constant dense<0.000000e+00> : vector<8x32xf32>
    %254 = tpu.matmul %252, %253, %cst_114 {dimension_numbers = #tpu.dot_dimension_numbers<[1], [0], [0], [1], [0, 0, 1, 1], [], []>} : vector<8x32xbf16>, vector<32x32xbf16>, vector<8x32xf32> -> vector<8x32xf32>
    %c0_115 = arith.constant 0 : index
    %c0_116 = arith.constant 0 : index
    %255 = vector.load %arg6[%c0_115, %c0_116] : memref<1x32xf32, #tpu.memory_space<vmem>>, vector<1x32xf32>
    %256 = vector.broadcast %255 : vector<1x32xf32> to vector<8x32xf32>
    %257 = arith.addf %254, %256 : vector<8x32xf32>
    %258 = arith.addf %1, %257 : vector<8x32xf32>
    %c0_117 = arith.constant 0 : index
    %c0_118 = arith.constant 0 : index
    %259 = vector.load %arg11[%c0_117, %c0_118] : memref<1x32xf32, #tpu.memory_space<vmem>>, vector<1x32xf32>
    %c0_119 = arith.constant 0 : index
    %c0_120 = arith.constant 0 : index
    %260 = vector.load %arg12[%c0_119, %c0_120] : memref<1x32xf32, #tpu.memory_space<vmem>>, vector<1x32xf32>
    %cst_121 = arith.constant dense<0.000000e+00> : vector<8xf32>
    %261 = vector.multi_reduction <add>, %258, %cst_121 [1] : vector<8x32xf32> to vector<8xf32>
    %262 = vector.shape_cast %261 : vector<8xf32> to vector<8x1xf32>
    %cst_122 = arith.constant 3.200000e+01 : f32
    %263 = vector.broadcast %cst_122 : f32 to vector<8x1xf32>
    %264 = arith.divf %262, %263 : vector<8x1xf32>
    %265 = vector.broadcast %264 : vector<8x1xf32> to vector<8x32xf32>
    %266 = arith.subf %258, %265 : vector<8x32xf32>
    %267 = arith.mulf %266, %266 : vector<8x32xf32>
    %cst_123 = arith.constant dense<0.000000e+00> : vector<8xf32>
    %268 = vector.multi_reduction <add>, %267, %cst_123 [1] : vector<8x32xf32> to vector<8xf32>
    %269 = vector.shape_cast %268 : vector<8xf32> to vector<8x1xf32>
    %cst_124 = arith.constant 3.200000e+01 : f32
    %270 = vector.broadcast %cst_124 : f32 to vector<8x1xf32>
    %271 = arith.divf %269, %270 : vector<8x1xf32>
    %cst_125 = arith.constant 9.99999974E-6 : f32
    %272 = vector.broadcast %cst_125 : f32 to vector<8x1xf32>
    %273 = arith.addf %271, %272 : vector<8x1xf32>
    %274 = math.rsqrt %273 : vector<8x1xf32>
    %275 = vector.broadcast %274 : vector<8x1xf32> to vector<8x32xf32>
    %276 = arith.mulf %266, %275 : vector<8x32xf32>
    %277 = vector.broadcast %259 : vector<1x32xf32> to vector<8x32xf32>
    %278 = arith.mulf %276, %277 : vector<8x32xf32>
    %279 = vector.broadcast %260 : vector<1x32xf32> to vector<8x32xf32>
    %280 = arith.addf %278, %279 : vector<8x32xf32>
    %c0_126 = arith.constant 0 : index
    %c0_127 = arith.constant 0 : index
    %281 = vector.load %arg7[%c0_126, %c0_127] : memref<32x32xf32, #tpu.memory_space<vmem>>, vector<32x32xf32>
    %282 = arith.truncf %280 : vector<8x32xf32> to vector<8x32xbf16>
    %283 = arith.truncf %281 : vector<32x32xf32> to vector<32x32xbf16>
    %cst_128 = arith.constant dense<0.000000e+00> : vector<8x32xf32>
    %284 = tpu.matmul %282, %283, %cst_128 {dimension_numbers = #tpu.dot_dimension_numbers<[1], [0], [0], [1], [0, 0, 1, 1], [], []>} : vector<8x32xbf16>, vector<32x32xbf16>, vector<8x32xf32> -> vector<8x32xf32>
    %c0_129 = arith.constant 0 : index
    %c0_130 = arith.constant 0 : index
    %285 = vector.load %arg8[%c0_129, %c0_130] : memref<1x32xf32, #tpu.memory_space<vmem>>, vector<1x32xf32>
    %286 = vector.broadcast %285 : vector<1x32xf32> to vector<8x32xf32>
    %287 = arith.addf %284, %286 : vector<8x32xf32>
    %288 = arith.mulf %287, %287 : vector<8x32xf32>
    %289 = arith.mulf %287, %288 : vector<8x32xf32>
    %cst_131 = arith.constant 4.471500e-02 : f32
    %290 = vector.broadcast %cst_131 : f32 to vector<8x32xf32>
    %291 = arith.mulf %290, %289 : vector<8x32xf32>
    %292 = arith.addf %287, %291 : vector<8x32xf32>
    %cst_132 = arith.constant 0.797884583 : f32
    %293 = vector.broadcast %cst_132 : f32 to vector<8x32xf32>
    %294 = arith.mulf %293, %292 : vector<8x32xf32>
    %295 = math.tanh %294 : vector<8x32xf32>
    %cst_133 = arith.constant 1.000000e+00 : f32
    %296 = vector.broadcast %cst_133 : f32 to vector<8x32xf32>
    %297 = arith.addf %296, %295 : vector<8x32xf32>
    %cst_134 = arith.constant 5.000000e-01 : f32
    %298 = vector.broadcast %cst_134 : f32 to vector<8x32xf32>
    %299 = arith.mulf %298, %297 : vector<8x32xf32>
    %300 = arith.mulf %287, %299 : vector<8x32xf32>
    %c0_135 = arith.constant 0 : index
    %c0_136 = arith.constant 0 : index
    %301 = vector.load %arg9[%c0_135, %c0_136] : memref<32x32xf32, #tpu.memory_space<vmem>>, vector<32x32xf32>
    %302 = arith.truncf %300 : vector<8x32xf32> to vector<8x32xbf16>
    %303 = arith.truncf %301 : vector<32x32xf32> to vector<32x32xbf16>
    %cst_137 = arith.constant dense<0.000000e+00> : vector<8x32xf32>
    %304 = tpu.matmul %302, %303, %cst_137 {dimension_numbers = #tpu.dot_dimension_numbers<[1], [0], [0], [1], [0, 0, 1, 1], [], []>} : vector<8x32xbf16>, vector<32x32xbf16>, vector<8x32xf32> -> vector<8x32xf32>
    %c0_138 = arith.constant 0 : index
    %c0_139 = arith.constant 0 : index
    %305 = vector.load %arg10[%c0_138, %c0_139] : memref<1x32xf32, #tpu.memory_space<vmem>>, vector<1x32xf32>
    %306 = vector.broadcast %305 : vector<1x32xf32> to vector<8x32xf32>
    %307 = arith.addf %304, %306 : vector<8x32xf32>
    %308 = arith.addf %280, %307 : vector<8x32xf32>
    %c0_140 = arith.constant 0 : index
    %c0_141 = arith.constant 0 : index
    %309 = vector.load %arg13[%c0_140, %c0_141] : memref<1x32xf32, #tpu.memory_space<vmem>>, vector<1x32xf32>
    %c0_142 = arith.constant 0 : index
    %c0_143 = arith.constant 0 : index
    %310 = vector.load %arg14[%c0_142, %c0_143] : memref<1x32xf32, #tpu.memory_space<vmem>>, vector<1x32xf32>
    %cst_144 = arith.constant dense<0.000000e+00> : vector<8xf32>
    %311 = vector.multi_reduction <add>, %308, %cst_144 [1] : vector<8x32xf32> to vector<8xf32>
    %312 = vector.shape_cast %311 : vector<8xf32> to vector<8x1xf32>
    %cst_145 = arith.constant 3.200000e+01 : f32
    %313 = vector.broadcast %cst_145 : f32 to vector<8x1xf32>
    %314 = arith.divf %312, %313 : vector<8x1xf32>
    %315 = vector.broadcast %314 : vector<8x1xf32> to vector<8x32xf32>
    %316 = arith.subf %308, %315 : vector<8x32xf32>
    %317 = arith.mulf %316, %316 : vector<8x32xf32>
    %cst_146 = arith.constant dense<0.000000e+00> : vector<8xf32>
    %318 = vector.multi_reduction <add>, %317, %cst_146 [1] : vector<8x32xf32> to vector<8xf32>
    %319 = vector.shape_cast %318 : vector<8xf32> to vector<8x1xf32>
    %cst_147 = arith.constant 3.200000e+01 : f32
    %320 = vector.broadcast %cst_147 : f32 to vector<8x1xf32>
    %321 = arith.divf %319, %320 : vector<8x1xf32>
    %cst_148 = arith.constant 9.99999974E-6 : f32
    %322 = vector.broadcast %cst_148 : f32 to vector<8x1xf32>
    %323 = arith.addf %321, %322 : vector<8x1xf32>
    %324 = math.rsqrt %323 : vector<8x1xf32>
    %325 = vector.broadcast %324 : vector<8x1xf32> to vector<8x32xf32>
    %326 = arith.mulf %316, %325 : vector<8x32xf32>
    %327 = vector.broadcast %309 : vector<1x32xf32> to vector<8x32xf32>
    %328 = arith.mulf %326, %327 : vector<8x32xf32>
    %329 = vector.broadcast %310 : vector<1x32xf32> to vector<8x32xf32>
    %330 = arith.addf %328, %329 : vector<8x32xf32>
    %c0_149 = arith.constant 0 : index
    %c0_150 = arith.constant 0 : index
    %c0_151 = arith.constant 0 : index
    %331 = vector.load %arg15[%c0_149, %c0_150, %c0_151] : memref<1x8x32xf32, #tpu.memory_space<vmem>>, vector<1x8x32xf32>
    %332 = vector.shape_cast %331 : vector<1x8x32xf32> to vector<8x32xf32>
    %333 = vector.shape_cast %330 : vector<8x32xf32> to vector<1x8x32xf32>
    tpu.vector_store %arg15[%c0_149, %c0_150, %c0_151], %333 {strides = array<i32>} : memref<1x8x32xf32, #tpu.memory_space<vmem>>, vector<1x8x32xf32>,
    return
  }
  func.func @transform_0(%arg0: i32) -> (i32, i32, i32) {
    %c0_i32 = arith.constant 0 : i32
    %c0_i32_0 = arith.constant 0 : i32
    %c0_i32_1 = arith.constant 0 : i32
    return %arg0, %c0_i32, %c0_i32_0 : i32, i32, i32
  }
  func.func @transform_1(%arg0: i32) -> (i32, i32) {
    %c0_i32 = arith.constant 0 : i32
    %c0_i32_0 = arith.constant 0 : i32
    %c0_i32_1 = arith.constant 0 : i32
    return %c0_i32, %c0_i32_0 : i32, i32
  }
  func.func @transform_2(%arg0: i32) -> (i32, i32) {
    %c0_i32 = arith.constant 0 : i32
    %c0_i32_0 = arith.constant 0 : i32
    %c0_i32_1 = arith.constant 0 : i32
    return %c0_i32, %c0_i32_0 : i32, i32
  }
  func.func @transform_3(%arg0: i32) -> (i32, i32) {
    %c0_i32 = arith.constant 0 : i32
    %c0_i32_0 = arith.constant 0 : i32
    %c0_i32_1 = arith.constant 0 : i32
    return %c0_i32, %c0_i32_0 : i32, i32
  }
  func.func @transform_4(%arg0: i32) -> (i32, i32) {
    %c0_i32 = arith.constant 0 : i32
    %c0_i32_0 = arith.constant 0 : i32
    %c0_i32_1 = arith.constant 0 : i32
    return %c0_i32, %c0_i32_0 : i32, i32
  }
  func.func @transform_5(%arg0: i32) -> (i32, i32) {
    %c0_i32 = arith.constant 0 : i32
    %c0_i32_0 = arith.constant 0 : i32
    %c0_i32_1 = arith.constant 0 : i32
    return %c0_i32, %c0_i32_0 : i32, i32
  }
  func.func @transform_6(%arg0: i32) -> (i32, i32) {
    %c0_i32 = arith.constant 0 : i32
    %c0_i32_0 = arith.constant 0 : i32
    %c0_i32_1 = arith.constant 0 : i32
    return %c0_i32, %c0_i32_0 : i32, i32
  }
  func.func @transform_7(%arg0: i32) -> (i32, i32) {
    %c0_i32 = arith.constant 0 : i32
    %c0_i32_0 = arith.constant 0 : i32
    %c0_i32_1 = arith.constant 0 : i32
    return %c0_i32, %c0_i32_0 : i32, i32
  }
  func.func @transform_8(%arg0: i32) -> (i32, i32) {
    %c0_i32 = arith.constant 0 : i32
    %c0_i32_0 = arith.constant 0 : i32
    %c0_i32_1 = arith.constant 0 : i32
    return %c0_i32, %c0_i32_0 : i32, i32
  }
  func.func @transform_9(%arg0: i32) -> (i32, i32) {
    %c0_i32 = arith.constant 0 : i32
    %c0_i32_0 = arith.constant 0 : i32
    %c0_i32_1 = arith.constant 0 : i32
    return %c0_i32, %c0_i32_0 : i32, i32
  }
  func.func @transform_10(%arg0: i32) -> (i32, i32) {
    %c0_i32 = arith.constant 0 : i32
    %c0_i32_0 = arith.constant 0 : i32
    %c0_i32_1 = arith.constant 0 : i32
    return %c0_i32, %c0_i32_0 : i32, i32
  }
  func.func @transform_11(%arg0: i32) -> (i32, i32) {
    %c0_i32 = arith.constant 0 : i32
    %c0_i32_0 = arith.constant 0 : i32
    %c0_i32_1 = arith.constant 0 : i32
    return %c0_i32, %c0_i32_0 : i32, i32
  }
  func.func @transform_12(%arg0: i32) -> (i32, i32) {
    %c0_i32 = arith.constant 0 : i32
    %c0_i32_0 = arith.constant 0 : i32
    %c0_i32_1 = arith.constant 0 : i32
    return %c0_i32, %c0_i32_0 : i32, i32
  }
  func.func @transform_13(%arg0: i32) -> (i32, i32) {
    %c0_i32 = arith.constant 0 : i32
    %c0_i32_0 = arith.constant 0 : i32
    %c0_i32_1 = arith.constant 0 : i32
    return %c0_i32, %c0_i32_0 : i32, i32
  }
  func.func @transform_14(%arg0: i32) -> (i32, i32, i32) {
    %c0_i32 = arith.constant 0 : i32
    %c0_i32_0 = arith.constant 0 : i32
    %c0_i32_1 = arith.constant 0 : i32
    return %arg0, %c0_i32, %c0_i32_0 : i32, i32, i32
  }
  func.func @transform_15(%arg0: i32) -> (i32, i32, i32, i32) {
    %c0_i32 = arith.constant 0 : i32
    %c0_i32_0 = arith.constant 0 : i32
    %c0_i32_1 = arith.constant 0 : i32
    %c0_i32_2 = arith.constant 0 : i32
    return %arg0, %c0_i32, %c0_i32_0, %c0_i32_1 : i32, i32, i32, i32
  }
  func.func @transform_16(%arg0: i32) -> (i32, i32, i32, i32) {
    %c0_i32 = arith.constant 0 : i32
    %c0_i32_0 = arith.constant 0 : i32
    %c0_i32_1 = arith.constant 0 : i32
    %c0_i32_2 = arith.constant 0 : i32
    return %arg0, %c0_i32, %c0_i32_0, %c0_i32_1 : i32, i32, i32, i32
  }
  func.func @transform_17(%arg0: i32) -> (i32, i32, i32, i32) {
    %c0_i32 = arith.constant 0 : i32
    %c0_i32_0 = arith.constant 0 : i32
    %c0_i32_1 = arith.constant 0 : i32
    %c0_i32_2 = arith.constant 0 : i32
    return %arg0, %c0_i32, %c0_i32_0, %c0_i32_1 : i32, i32, i32, i32
  }
}

module attributes {stable_mosaic.version = 11 : i64} {
  func.func @kernel(%arg0: i32, %arg1: memref<1x8x32xf32, #tpu.memory_space<vmem>>, %arg2: memref<8x8xf32, #tpu.memory_space<vmem>>, %arg3: memref<32x100xf32, #tpu.memory_space<vmem>>, %arg4: memref<1x100xf32, #tpu.memory_space<vmem>>, %arg5: memref<32x32xf32, #tpu.memory_space<vmem>>, %arg6: memref<1x32xf32, #tpu.memory_space<vmem>>, %arg7: memref<32x32xf32, #tpu.memory_space<vmem>>, %arg8: memref<1x32xf32, #tpu.memory_space<vmem>>, %arg9: memref<32x32xf32, #tpu.memory_space<vmem>>, %arg10: memref<1x32xf32, #tpu.memory_space<vmem>>, %arg11: memref<1x32xf32, #tpu.memory_space<vmem>>, %arg12: memref<1x32xf32, #tpu.memory_space<vmem>>, %arg13: memref<1x32xf32, #tpu.memory_space<vmem>>, %arg14: memref<1x32xf32, #tpu.memory_space<vmem>>, %arg15: memref<1x8x32xf32, #tpu.memory_space<vmem>>, %arg16: memref<1x4x8x8xf32, #tpu.memory_space<vmem>>, %arg17: memref<1x4x8x8xf32, #tpu.memory_space<vmem>>, %arg18: memref<1x4x8x1xf32, #tpu.memory_space<vmem>>, %arg19: memref<8x32xf32, #tpu.memory_space<vmem>>) attributes {dimension_semantics = [#tpu.dimension_semantics<parallel>], iteration_bounds = array<i64: 2>, scalar_prefetch = 0 : i64, scratch_operands = 1 : i64, tpu.core_type = #tpu.core_type<tc>, window_params = [{transform_indices = @transform_0, window_bounds = array<i64: 1, 8, 32>}, {pipeline_mode = #tpu.pipeline_mode<synchronous>, transform_indices = @transform_1, window_bounds = array<i64: 8, 8>}, {pipeline_mode = #tpu.pipeline_mode<synchronous>, transform_indices = @transform_2, window_bounds = array<i64: 32, 100>}, {pipeline_mode = #tpu.pipeline_mode<synchronous>, transform_indices = @transform_3, window_bounds = array<i64: 1, 100>}, {pipeline_mode = #tpu.pipeline_mode<synchronous>, transform_indices = @transform_4, window_bounds = array<i64: 32, 32>}, {pipeline_mode = #tpu.pipeline_mode<synchronous>, transform_indices = @transform_5, window_bounds = array<i64: 1, 32>}, {pipeline_mode = #tpu.pipeline_mode<synchronous>, transform_indices = @transform_6, window_bounds = array<i64: 32, 32>}, {pipeline_mode = #tpu.pipeline_mode<synchronous>, transform_indices = @transform_7, window_bounds = array<i64: 1, 32>}, {pipeline_mode = #tpu.pipeline_mode<synchronous>, transform_indices = @transform_8, window_bounds = array<i64: 32, 32>}, {pipeline_mode = #tpu.pipeline_mode<synchronous>, transform_indices = @transform_9, window_bounds = array<i64: 1, 32>}, {pipeline_mode = #tpu.pipeline_mode<synchronous>, transform_indices = @transform_10, window_bounds = array<i64: 1, 32>}, {pipeline_mode = #tpu.pipeline_mode<synchronous>, transform_indices = @transform_11, window_bounds = array<i64: 1, 32>}, {pipeline_mode = #tpu.pipeline_mode<synchronous>, transform_indices = @transform_12, window_bounds = array<i64: 1, 32>}, {pipeline_mode = #tpu.pipeline_mode<synchronous>, transform_indices = @transform_13, window_bounds = array<i64: 1, 32>}, {transform_indices = @transform_14, window_bounds = array<i64: 1, 8, 32>}, {transform_indices = @transform_15, window_bounds = array<i64: 1, 4, 8, 8>}, {transform_indices = @transform_16, window_bounds = array<i64: 1, 4, 8, 8>}, {transform_indices = @transform_17, window_bounds = array<i64: 1, 4, 8, 1>}]} {
    %c0 = arith.constant 0 : index
    %c0_0 = arith.constant 0 : index
    %c0_1 = arith.constant 0 : index
    %0 = vector.load %arg1[%c0, %c0_0, %c0_1] : memref<1x8x32xf32, #tpu.memory_space<vmem>>, vector<1x8x32xf32>
    %1 = vector.shape_cast %0 : vector<1x8x32xf32> to vector<8x32xf32>
    %c0_2 = arith.constant 0 : index
    %c0_3 = arith.constant 0 : index
    %2 = vector.load %arg2[%c0_2, %c0_3] : memref<8x8xf32, #tpu.memory_space<vmem>>, vector<8x8xf32>
    %c0_4 = arith.constant 0 : index
    %c0_5 = arith.constant 0 : index
    %3 = vector.load %arg3[%c0_4, %c0_5] : memref<32x100xf32, #tpu.memory_space<vmem>>, vector<32x100xf32>
    %4 = arith.truncf %1 : vector<8x32xf32> to vector<8x32xbf16>
    %5 = arith.truncf %3 : vector<32x100xf32> to vector<32x100xbf16>
    %cst = arith.constant dense<0.000000e+00> : vector<8x100xf32>
    %6 = tpu.matmul %4, %5, %cst {dimension_numbers = #tpu.dot_dimension_numbers<[1], [0], [0], [1], [0, 0, 1, 1], [], []>} : vector<8x32xbf16>, vector<32x100xbf16>, vector<8x100xf32> -> vector<8x100xf32>
    %c0_6 = arith.constant 0 : index
    %c0_7 = arith.constant 0 : index
    %7 = vector.load %arg4[%c0_6, %c0_7] : memref<1x100xf32, #tpu.memory_space<vmem>>, vector<1x100xf32>
    %8 = vector.broadcast %7 : vector<1x100xf32> to vector<8x100xf32>
    %9 = arith.addf %6, %8 : vector<8x100xf32>
    %10 = vector.extract_strided_slice %9 {offsets = [0, 0], sizes = [8, 8], strides = [1, 1]} : vector<8x100xf32> to vector<8x8xf32>
    %11 = vector.extract_strided_slice %9 {offsets = [0, 32], sizes = [8, 8], strides = [1, 1]} : vector<8x100xf32> to vector<8x8xf32>
    %12 = vector.extract_strided_slice %9 {offsets = [0, 64], sizes = [8, 8], strides = [1, 1]} : vector<8x100xf32> to vector<8x8xf32>
    %13 = vector.extract_strided_slice %9 {offsets = [0, 96], sizes = [8, 1], strides = [1, 1]} : vector<8x100xf32> to vector<8x1xf32>
    %14 = arith.truncf %10 : vector<8x8xf32> to vector<8x8xbf16>
    %15 = arith.truncf %11 : vector<8x8xf32> to vector<8x8xbf16>
    %cst_8 = arith.constant dense<0.000000e+00> : vector<8x8xf32>
    %16 = tpu.matmul %14, %15, %cst_8 {dimension_numbers = #tpu.dot_dimension_numbers<[1], [1], [0], [0], [0, 0, 1, 0], [], []>} : vector<8x8xbf16>, vector<8x8xbf16>, vector<8x8xf32> -> vector<8x8xf32>
    %cst_9 = arith.constant 0.353553385 : f32
    %17 = vector.broadcast %cst_9 : f32 to vector<8x8xf32>
    %18 = arith.mulf %16, %17 : vector<8x8xf32>
    %cst_10 = arith.constant dense<0xFF800000> : vector<8xf32>
    %19 = vector.multi_reduction <maximumf>, %18, %cst_10 [1] : vector<8x8xf32> to vector<8xf32>
    %20 = vector.shape_cast %19 : vector<8xf32> to vector<8x1xf32>
    %21 = vector.broadcast %20 : vector<8x1xf32> to vector<8x8xf32>
    %22 = arith.subf %18, %21 : vector<8x8xf32>
    %23 = math.exp %22 : vector<8x8xf32>
    %cst_11 = arith.constant dense<0.000000e+00> : vector<8xf32>
    %24 = vector.multi_reduction <add>, %23, %cst_11 [1] : vector<8x8xf32> to vector<8xf32>
    %25 = vector.shape_cast %24 : vector<8xf32> to vector<8x1xf32>
    %26 = tpu.reciprocal %25 {approx = true} : vector<8x1xf32> -> vector<8x1xf32>
    %27 = vector.broadcast %26 : vector<8x1xf32> to vector<8x8xf32>
    %28 = arith.mulf %23, %27 : vector<8x8xf32>
    %cst_12 = arith.constant 5.000000e+00 : f32
    %29 = vector.broadcast %cst_12 : f32 to vector<8x1xf32>
    %30 = arith.mulf %13, %29 : vector<8x1xf32>
    %31 = arith.negf %30 : vector<8x1xf32>
    %32 = math.exp %31 : vector<8x1xf32>
    %cst_13 = arith.constant 1.000000e+00 : f32
    %33 = vector.broadcast %cst_13 : f32 to vector<8x1xf32>
    %34 = arith.addf %33, %32 : vector<8x1xf32>
    %35 = arith.divf %33, %34 : vector<8x1xf32>
    %cst_14 = arith.constant 9.99999974E-6 : f32
    %36 = vector.broadcast %cst_14 : f32 to vector<8x1xf32>
    %37 = arith.addf %35, %36 : vector<8x1xf32>
    %cst_15 = arith.constant 1.09861231 : f32
    %38 = vector.broadcast %cst_15 : f32 to vector<8x1xf32>
    %39 = arith.mulf %37, %38 : vector<8x1xf32>
    %40 = math.exp %39 : vector<8x1xf32>
    %cst_16 = arith.constant 1.000000e+00 : f32
    %41 = vector.broadcast %cst_16 : f32 to vector<8x1xf32>
    %42 = arith.subf %40, %41 : vector<8x1xf32>
    %43 = tpu.reciprocal %42 {approx = true} : vector<8x1xf32> -> vector<8x1xf32>
    %cst_17 = arith.constant 0.398942292 : f32
    %44 = vector.broadcast %cst_17 : f32 to vector<8x1xf32>
    %45 = arith.mulf %44, %43 : vector<8x1xf32>
    %46 = arith.mulf %2, %2 : vector<8x8xf32>
    %cst_18 = arith.constant 0.000000e+00 : f32
    %47 = vector.broadcast %cst_18 : f32 to vector<8x8xf32>
    %48 = arith.subf %47, %46 : vector<8x8xf32>
    %cst_19 = arith.constant 5.000000e-01 : f32
    %49 = vector.broadcast %cst_19 : f32 to vector<8x1xf32>
    %50 = arith.mulf %49, %43 : vector<8x1xf32>
    %51 = arith.mulf %50, %43 : vector<8x1xf32>
    %52 = vector.broadcast %51 : vector<8x1xf32> to vector<8x8xf32>
    %53 = arith.mulf %48, %52 : vector<8x8xf32>
    %54 = math.exp %53 : vector<8x8xf32>
    %55 = vector.broadcast %45 : vector<8x1xf32> to vector<8x8xf32>
    %56 = arith.mulf %55, %54 : vector<8x8xf32>
    %57 = arith.truncf %28 : vector<8x8xf32> to vector<8x8xbf16>
    %58 = arith.truncf %12 : vector<8x8xf32> to vector<8x8xbf16>
    %cst_20 = arith.constant dense<0.000000e+00> : vector<8x8xf32>
    %59 = tpu.matmul %57, %58, %cst_20 {dimension_numbers = #tpu.dot_dimension_numbers<[1], [0], [0], [1], [0, 0, 1, 1], [], []>} : vector<8x8xbf16>, vector<8x8xbf16>, vector<8x8xf32> -> vector<8x8xf32>
    %c0_21 = arith.constant 0 : index
    %c0_22 = arith.constant 0 : index
    %60 = vector.load %arg19[%c0_21, %c0_22] : memref<8x32xf32, #tpu.memory_space<vmem>>, vector<8x8xf32>
    tpu.vector_store %arg19[%c0_21, %c0_22], %59 {strides = array<i32>} : memref<8x32xf32, #tpu.memory_space<vmem>>, vector<8x8xf32>,
    %c0_23 = arith.constant 0 : index
    %c0_24 = arith.constant 0 : index
    %c0_25 = arith.constant 0 : index
    %c0_26 = arith.constant 0 : index
    %61 = vector.load %arg16[%c0_23, %c0_24, %c0_25, %c0_26] : memref<1x4x8x8xf32, #tpu.memory_space<vmem>>, vector<1x1x8x8xf32>
    %62 = vector.shape_cast %61 : vector<1x1x8x8xf32> to vector<8x8xf32>
    %63 = vector.shape_cast %28 : vector<8x8xf32> to vector<1x1x8x8xf32>
    tpu.vector_store %arg16[%c0_23, %c0_24, %c0_25, %c0_26], %63 {strides = array<i32>} : memref<1x4x8x8xf32, #tpu.memory_space<vmem>>, vector<1x1x8x8xf32>,
    %c0_27 = arith.constant 0 : index
    %c0_28 = arith.constant 0 : index
    %c0_29 = arith.constant 0 : index
    %c0_30 = arith.constant 0 : index
    %64 = vector.load %arg17[%c0_27, %c0_28, %c0_29, %c0_30] : memref<1x4x8x8xf32, #tpu.memory_space<vmem>>, vector<1x1x8x8xf32>
    %65 = vector.shape_cast %64 : vector<1x1x8x8xf32> to vector<8x8xf32>
    %66 = vector.shape_cast %56 : vector<8x8xf32> to vector<1x1x8x8xf32>
    tpu.vector_store %arg17[%c0_27, %c0_28, %c0_29, %c0_30], %66 {strides = array<i32>} : memref<1x4x8x8xf32, #tpu.memory_space<vmem>>, vector<1x1x8x8xf32>,
    %c0_31 = arith.constant 0 : index
    %c0_32 = arith.constant 0 : index
    %c0_33 = arith.constant 0 : index
    %c0_34 = arith.constant 0 : index
    %67 = vector.load %arg18[%c0_31, %c0_32, %c0_33, %c0_34] : memref<1x4x8x1xf32, #tpu.memory_space<vmem>>, vector<1x1x8x1xf32>
    %68 = vector.shape_cast %67 : vector<1x1x8x1xf32> to vector<8x1xf32>
    %69 = vector.shape_cast %42 : vector<8x1xf32> to vector<1x1x8x1xf32>
    tpu.vector_store %arg18[%c0_31, %c0_32, %c0_33, %c0_34], %69 {strides = array<i32>} : memref<1x4x8x1xf32, #tpu.memory_space<vmem>>, vector<1x1x8x1xf32>,
    %70 = vector.extract_strided_slice %9 {offsets = [0, 8], sizes = [8, 8], strides = [1, 1]} : vector<8x100xf32> to vector<8x8xf32>
    %71 = vector.extract_strided_slice %9 {offsets = [0, 40], sizes = [8, 8], strides = [1, 1]} : vector<8x100xf32> to vector<8x8xf32>
    %72 = vector.extract_strided_slice %9 {offsets = [0, 72], sizes = [8, 8], strides = [1, 1]} : vector<8x100xf32> to vector<8x8xf32>
    %73 = vector.extract_strided_slice %9 {offsets = [0, 97], sizes = [8, 1], strides = [1, 1]} : vector<8x100xf32> to vector<8x1xf32>
    %74 = arith.truncf %70 : vector<8x8xf32> to vector<8x8xbf16>
    %75 = arith.truncf %71 : vector<8x8xf32> to vector<8x8xbf16>
    %cst_35 = arith.constant dense<0.000000e+00> : vector<8x8xf32>
    %76 = tpu.matmul %74, %75, %cst_35 {dimension_numbers = #tpu.dot_dimension_numbers<[1], [1], [0], [0], [0, 0, 1, 0], [], []>} : vector<8x8xbf16>, vector<8x8xbf16>, vector<8x8xf32> -> vector<8x8xf32>
    %cst_36 = arith.constant 0.353553385 : f32
    %77 = vector.broadcast %cst_36 : f32 to vector<8x8xf32>
    %78 = arith.mulf %76, %77 : vector<8x8xf32>
    %cst_37 = arith.constant dense<0xFF800000> : vector<8xf32>
    %79 = vector.multi_reduction <maximumf>, %78, %cst_37 [1] : vector<8x8xf32> to vector<8xf32>
    %80 = vector.shape_cast %79 : vector<8xf32> to vector<8x1xf32>
    %81 = vector.broadcast %80 : vector<8x1xf32> to vector<8x8xf32>
    %82 = arith.subf %78, %81 : vector<8x8xf32>
    %83 = math.exp %82 : vector<8x8xf32>
    %cst_38 = arith.constant dense<0.000000e+00> : vector<8xf32>
    %84 = vector.multi_reduction <add>, %83, %cst_38 [1] : vector<8x8xf32> to vector<8xf32>
    %85 = vector.shape_cast %84 : vector<8xf32> to vector<8x1xf32>
    %86 = tpu.reciprocal %85 {approx = true} : vector<8x1xf32> -> vector<8x1xf32>
    %87 = vector.broadcast %86 : vector<8x1xf32> to vector<8x8xf32>
    %88 = arith.mulf %83, %87 : vector<8x8xf32>
    %cst_39 = arith.constant 5.000000e+00 : f32
    %89 = vector.broadcast %cst_39 : f32 to vector<8x1xf32>
    %90 = arith.mulf %73, %89 : vector<8x1xf32>
    %91 = arith.negf %90 : vector<8x1xf32>
    %92 = math.exp %91 : vector<8x1xf32>
    %cst_40 = arith.constant 1.000000e+00 : f32
    %93 = vector.broadcast %cst_40 : f32 to vector<8x1xf32>
    %94 = arith.addf %93, %92 : vector<8x1xf32>
    %95 = arith.divf %93, %94 : vector<8x1xf32>
    %cst_41 = arith.constant 9.99999974E-6 : f32
    %96 = vector.broadcast %cst_41 : f32 to vector<8x1xf32>
    %97 = arith.addf %95, %96 : vector<8x1xf32>
    %cst_42 = arith.constant 1.09861231 : f32
    %98 = vector.broadcast %cst_42 : f32 to vector<8x1xf32>
    %99 = arith.mulf %97, %98 : vector<8x1xf32>
    %100 = math.exp %99 : vector<8x1xf32>
    %cst_43 = arith.constant 1.000000e+00 : f32
    %101 = vector.broadcast %cst_43 : f32 to vector<8x1xf32>
    %102 = arith.subf %100, %101 : vector<8x1xf32>
    %103 = tpu.reciprocal %102 {approx = true} : vector<8x1xf32> -> vector<8x1xf32>
    %cst_44 = arith.constant 0.398942292 : f32
    %104 = vector.broadcast %cst_44 : f32 to vector<8x1xf32>
    %105 = arith.mulf %104, %103 : vector<8x1xf32>
    %106 = arith.mulf %2, %2 : vector<8x8xf32>
    %cst_45 = arith.constant 0.000000e+00 : f32
    %107 = vector.broadcast %cst_45 : f32 to vector<8x8xf32>
    %108 = arith.subf %107, %106 : vector<8x8xf32>
    %cst_46 = arith.constant 5.000000e-01 : f32
    %109 = vector.broadcast %cst_46 : f32 to vector<8x1xf32>
    %110 = arith.mulf %109, %103 : vector<8x1xf32>
    %111 = arith.mulf %110, %103 : vector<8x1xf32>
    %112 = vector.broadcast %111 : vector<8x1xf32> to vector<8x8xf32>
    %113 = arith.mulf %108, %112 : vector<8x8xf32>
    %114 = math.exp %113 : vector<8x8xf32>
    %115 = vector.broadcast %105 : vector<8x1xf32> to vector<8x8xf32>
    %116 = arith.mulf %115, %114 : vector<8x8xf32>
    %117 = arith.truncf %88 : vector<8x8xf32> to vector<8x8xbf16>
    %118 = arith.truncf %72 : vector<8x8xf32> to vector<8x8xbf16>
    %cst_47 = arith.constant dense<0.000000e+00> : vector<8x8xf32>
    %119 = tpu.matmul %117, %118, %cst_47 {dimension_numbers = #tpu.dot_dimension_numbers<[1], [0], [0], [1], [0, 0, 1, 1], [], []>} : vector<8x8xbf16>, vector<8x8xbf16>, vector<8x8xf32> -> vector<8x8xf32>
    %c0_48 = arith.constant 0 : index
    %c8 = arith.constant 8 : index
    %120 = vector.load %arg19[%c0_48, %c8] : memref<8x32xf32, #tpu.memory_space<vmem>>, vector<8x8xf32>
    tpu.vector_store %arg19[%c0_48, %c8], %119 {strides = array<i32>} : memref<8x32xf32, #tpu.memory_space<vmem>>, vector<8x8xf32>,
    %c0_49 = arith.constant 0 : index
    %c1 = arith.constant 1 : index
    %c0_50 = arith.constant 0 : index
    %c0_51 = arith.constant 0 : index
    %121 = vector.load %arg16[%c0_49, %c1, %c0_50, %c0_51] : memref<1x4x8x8xf32, #tpu.memory_space<vmem>>, vector<1x1x8x8xf32>
    %122 = vector.shape_cast %121 : vector<1x1x8x8xf32> to vector<8x8xf32>
    %123 = vector.shape_cast %88 : vector<8x8xf32> to vector<1x1x8x8xf32>
    tpu.vector_store %arg16[%c0_49, %c1, %c0_50, %c0_51], %123 {strides = array<i32>} : memref<1x4x8x8xf32, #tpu.memory_space<vmem>>, vector<1x1x8x8xf32>,
    %c0_52 = arith.constant 0 : index
    %c1_53 = arith.constant 1 : index
    %c0_54 = arith.constant 0 : index
    %c0_55 = arith.constant 0 : index
    %124 = vector.load %arg17[%c0_52, %c1_53, %c0_54, %c0_55] : memref<1x4x8x8xf32, #tpu.memory_space<vmem>>, vector<1x1x8x8xf32>
    %125 = vector.shape_cast %124 : vector<1x1x8x8xf32> to vector<8x8xf32>
    %126 = vector.shape_cast %116 : vector<8x8xf32> to vector<1x1x8x8xf32>
    tpu.vector_store %arg17[%c0_52, %c1_53, %c0_54, %c0_55], %126 {strides = array<i32>} : memref<1x4x8x8xf32, #tpu.memory_space<vmem>>, vector<1x1x8x8xf32>,
    %c0_56 = arith.constant 0 : index
    %c1_57 = arith.constant 1 : index
    %c0_58 = arith.constant 0 : index
    %c0_59 = arith.constant 0 : index
    %127 = vector.load %arg18[%c0_56, %c1_57, %c0_58, %c0_59] : memref<1x4x8x1xf32, #tpu.memory_space<vmem>>, vector<1x1x8x1xf32>
    %128 = vector.shape_cast %127 : vector<1x1x8x1xf32> to vector<8x1xf32>
    %129 = vector.shape_cast %102 : vector<8x1xf32> to vector<1x1x8x1xf32>
    tpu.vector_store %arg18[%c0_56, %c1_57, %c0_58, %c0_59], %129 {strides = array<i32>} : memref<1x4x8x1xf32, #tpu.memory_space<vmem>>, vector<1x1x8x1xf32>,
    %130 = vector.extract_strided_slice %9 {offsets = [0, 16], sizes = [8, 8], strides = [1, 1]} : vector<8x100xf32> to vector<8x8xf32>
    %131 = vector.extract_strided_slice %9 {offsets = [0, 48], sizes = [8, 8], strides = [1, 1]} : vector<8x100xf32> to vector<8x8xf32>
    %132 = vector.extract_strided_slice %9 {offsets = [0, 80], sizes = [8, 8], strides = [1, 1]} : vector<8x100xf32> to vector<8x8xf32>
    %133 = vector.extract_strided_slice %9 {offsets = [0, 98], sizes = [8, 1], strides = [1, 1]} : vector<8x100xf32> to vector<8x1xf32>
    %134 = arith.truncf %130 : vector<8x8xf32> to vector<8x8xbf16>
    %135 = arith.truncf %131 : vector<8x8xf32> to vector<8x8xbf16>
    %cst_60 = arith.constant dense<0.000000e+00> : vector<8x8xf32>
    %136 = tpu.matmul %134, %135, %cst_60 {dimension_numbers = #tpu.dot_dimension_numbers<[1], [1], [0], [0], [0, 0, 1, 0], [], []>} : vector<8x8xbf16>, vector<8x8xbf16>, vector<8x8xf32> -> vector<8x8xf32>
    %cst_61 = arith.constant 0.353553385 : f32
    %137 = vector.broadcast %cst_61 : f32 to vector<8x8xf32>
    %138 = arith.mulf %136, %137 : vector<8x8xf32>
    %cst_62 = arith.constant dense<0xFF800000> : vector<8xf32>
    %139 = vector.multi_reduction <maximumf>, %138, %cst_62 [1] : vector<8x8xf32> to vector<8xf32>
    %140 = vector.shape_cast %139 : vector<8xf32> to vector<8x1xf32>
    %141 = vector.broadcast %140 : vector<8x1xf32> to vector<8x8xf32>
    %142 = arith.subf %138, %141 : vector<8x8xf32>
    %143 = math.exp %142 : vector<8x8xf32>
    %cst_63 = arith.constant dense<0.000000e+00> : vector<8xf32>
    %144 = vector.multi_reduction <add>, %143, %cst_63 [1] : vector<8x8xf32> to vector<8xf32>
    %145 = vector.shape_cast %144 : vector<8xf32> to vector<8x1xf32>
    %146 = tpu.reciprocal %145 {approx = true} : vector<8x1xf32> -> vector<8x1xf32>
    %147 = vector.broadcast %146 : vector<8x1xf32> to vector<8x8xf32>
    %148 = arith.mulf %143, %147 : vector<8x8xf32>
    %cst_64 = arith.constant 5.000000e+00 : f32
    %149 = vector.broadcast %cst_64 : f32 to vector<8x1xf32>
    %150 = arith.mulf %133, %149 : vector<8x1xf32>
    %151 = arith.negf %150 : vector<8x1xf32>
    %152 = math.exp %151 : vector<8x1xf32>
    %cst_65 = arith.constant 1.000000e+00 : f32
    %153 = vector.broadcast %cst_65 : f32 to vector<8x1xf32>
    %154 = arith.addf %153, %152 : vector<8x1xf32>
    %155 = arith.divf %153, %154 : vector<8x1xf32>
    %cst_66 = arith.constant 9.99999974E-6 : f32
    %156 = vector.broadcast %cst_66 : f32 to vector<8x1xf32>
    %157 = arith.addf %155, %156 : vector<8x1xf32>
    %cst_67 = arith.constant 1.09861231 : f32
    %158 = vector.broadcast %cst_67 : f32 to vector<8x1xf32>
    %159 = arith.mulf %157, %158 : vector<8x1xf32>
    %160 = math.exp %159 : vector<8x1xf32>
    %cst_68 = arith.constant 1.000000e+00 : f32
    %161 = vector.broadcast %cst_68 : f32 to vector<8x1xf32>
    %162 = arith.subf %160, %161 : vector<8x1xf32>
    %163 = tpu.reciprocal %162 {approx = true} : vector<8x1xf32> -> vector<8x1xf32>
    %cst_69 = arith.constant 0.398942292 : f32
    %164 = vector.broadcast %cst_69 : f32 to vector<8x1xf32>
    %165 = arith.mulf %164, %163 : vector<8x1xf32>
    %166 = arith.mulf %2, %2 : vector<8x8xf32>
    %cst_70 = arith.constant 0.000000e+00 : f32
    %167 = vector.broadcast %cst_70 : f32 to vector<8x8xf32>
    %168 = arith.subf %167, %166 : vector<8x8xf32>
    %cst_71 = arith.constant 5.000000e-01 : f32
    %169 = vector.broadcast %cst_71 : f32 to vector<8x1xf32>
    %170 = arith.mulf %169, %163 : vector<8x1xf32>
    %171 = arith.mulf %170, %163 : vector<8x1xf32>
    %172 = vector.broadcast %171 : vector<8x1xf32> to vector<8x8xf32>
    %173 = arith.mulf %168, %172 : vector<8x8xf32>
    %174 = math.exp %173 : vector<8x8xf32>
    %175 = vector.broadcast %165 : vector<8x1xf32> to vector<8x8xf32>
    %176 = arith.mulf %175, %174 : vector<8x8xf32>
    %177 = arith.truncf %148 : vector<8x8xf32> to vector<8x8xbf16>
    %178 = arith.truncf %132 : vector<8x8xf32> to vector<8x8xbf16>
    %cst_72 = arith.constant dense<0.000000e+00> : vector<8x8xf32>
    %179 = tpu.matmul %177, %178, %cst_72 {dimension_numbers = #tpu.dot_dimension_numbers<[1], [0], [0], [1], [0, 0, 1, 1], [], []>} : vector<8x8xbf16>, vector<8x8xbf16>, vector<8x8xf32> -> vector<8x8xf32>
    %c0_73 = arith.constant 0 : index
    %c16 = arith.constant 16 : index
    %180 = vector.load %arg19[%c0_73, %c16] : memref<8x32xf32, #tpu.memory_space<vmem>>, vector<8x8xf32>
    tpu.vector_store %arg19[%c0_73, %c16], %179 {strides = array<i32>} : memref<8x32xf32, #tpu.memory_space<vmem>>, vector<8x8xf32>,
    %c0_74 = arith.constant 0 : index
    %c2 = arith.constant 2 : index
    %c0_75 = arith.constant 0 : index
    %c0_76 = arith.constant 0 : index
    %181 = vector.load %arg16[%c0_74, %c2, %c0_75, %c0_76] : memref<1x4x8x8xf32, #tpu.memory_space<vmem>>, vector<1x1x8x8xf32>
    %182 = vector.shape_cast %181 : vector<1x1x8x8xf32> to vector<8x8xf32>
    %183 = vector.shape_cast %148 : vector<8x8xf32> to vector<1x1x8x8xf32>
    tpu.vector_store %arg16[%c0_74, %c2, %c0_75, %c0_76], %183 {strides = array<i32>} : memref<1x4x8x8xf32, #tpu.memory_space<vmem>>, vector<1x1x8x8xf32>,
    %c0_77 = arith.constant 0 : index
    %c2_78 = arith.constant 2 : index
    %c0_79 = arith.constant 0 : index
    %c0_80 = arith.constant 0 : index
    %184 = vector.load %arg17[%c0_77, %c2_78, %c0_79, %c0_80] : memref<1x4x8x8xf32, #tpu.memory_space<vmem>>, vector<1x1x8x8xf32>
    %185 = vector.shape_cast %184 : vector<1x1x8x8xf32> to vector<8x8xf32>
    %186 = vector.shape_cast %176 : vector<8x8xf32> to vector<1x1x8x8xf32>
    tpu.vector_store %arg17[%c0_77, %c2_78, %c0_79, %c0_80], %186 {strides = array<i32>} : memref<1x4x8x8xf32, #tpu.memory_space<vmem>>, vector<1x1x8x8xf32>,
    %c0_81 = arith.constant 0 : index
    %c2_82 = arith.constant 2 : index
    %c0_83 = arith.constant 0 : index
    %c0_84 = arith.constant 0 : index
    %187 = vector.load %arg18[%c0_81, %c2_82, %c0_83, %c0_84] : memref<1x4x8x1xf32, #tpu.memory_space<vmem>>, vector<1x1x8x1xf32>
    %188 = vector.shape_cast %187 : vector<1x1x8x1xf32> to vector<8x1xf32>
    %189 = vector.shape_cast %162 : vector<8x1xf32> to vector<1x1x8x1xf32>
    tpu.vector_store %arg18[%c0_81, %c2_82, %c0_83, %c0_84], %189 {strides = array<i32>} : memref<1x4x8x1xf32, #tpu.memory_space<vmem>>, vector<1x1x8x1xf32>,
    %190 = vector.extract_strided_slice %9 {offsets = [0, 24], sizes = [8, 8], strides = [1, 1]} : vector<8x100xf32> to vector<8x8xf32>
    %191 = vector.extract_strided_slice %9 {offsets = [0, 56], sizes = [8, 8], strides = [1, 1]} : vector<8x100xf32> to vector<8x8xf32>
    %192 = vector.extract_strided_slice %9 {offsets = [0, 88], sizes = [8, 8], strides = [1, 1]} : vector<8x100xf32> to vector<8x8xf32>
    %193 = vector.extract_strided_slice %9 {offsets = [0, 99], sizes = [8, 1], strides = [1, 1]} : vector<8x100xf32> to vector<8x1xf32>
    %194 = arith.truncf %190 : vector<8x8xf32> to vector<8x8xbf16>
    %195 = arith.truncf %191 : vector<8x8xf32> to vector<8x8xbf16>
    %cst_85 = arith.constant dense<0.000000e+00> : vector<8x8xf32>
    %196 = tpu.matmul %194, %195, %cst_85 {dimension_numbers = #tpu.dot_dimension_numbers<[1], [1], [0], [0], [0, 0, 1, 0], [], []>} : vector<8x8xbf16>, vector<8x8xbf16>, vector<8x8xf32> -> vector<8x8xf32>
    %cst_86 = arith.constant 0.353553385 : f32
    %197 = vector.broadcast %cst_86 : f32 to vector<8x8xf32>
    %198 = arith.mulf %196, %197 : vector<8x8xf32>
    %cst_87 = arith.constant dense<0xFF800000> : vector<8xf32>
    %199 = vector.multi_reduction <maximumf>, %198, %cst_87 [1] : vector<8x8xf32> to vector<8xf32>
    %200 = vector.shape_cast %199 : vector<8xf32> to vector<8x1xf32>
    %201 = vector.broadcast %200 : vector<8x1xf32> to vector<8x8xf32>
    %202 = arith.subf %198, %201 : vector<8x8xf32>
    %203 = math.exp %202 : vector<8x8xf32>
    %cst_88 = arith.constant dense<0.000000e+00> : vector<8xf32>
    %204 = vector.multi_reduction <add>, %203, %cst_88 [1] : vector<8x8xf32> to vector<8xf32>
    %205 = vector.shape_cast %204 : vector<8xf32> to vector<8x1xf32>
    %206 = tpu.reciprocal %205 {approx = true} : vector<8x1xf32> -> vector<8x1xf32>
    %207 = vector.broadcast %206 : vector<8x1xf32> to vector<8x8xf32>
    %208 = arith.mulf %203, %207 : vector<8x8xf32>
    %cst_89 = arith.constant 5.000000e+00 : f32
    %209 = vector.broadcast %cst_89 : f32 to vector<8x1xf32>
    %210 = arith.mulf %193, %209 : vector<8x1xf32>
    %211 = arith.negf %210 : vector<8x1xf32>
    %212 = math.exp %211 : vector<8x1xf32>
    %cst_90 = arith.constant 1.000000e+00 : f32
    %213 = vector.broadcast %cst_90 : f32 to vector<8x1xf32>
    %214 = arith.addf %213, %212 : vector<8x1xf32>
    %215 = arith.divf %213, %214 : vector<8x1xf32>
    %cst_91 = arith.constant 9.99999974E-6 : f32
    %216 = vector.broadcast %cst_91 : f32 to vector<8x1xf32>
    %217 = arith.addf %215, %216 : vector<8x1xf32>
    %cst_92 = arith.constant 1.09861231 : f32
    %218 = vector.broadcast %cst_92 : f32 to vector<8x1xf32>
    %219 = arith.mulf %217, %218 : vector<8x1xf32>
    %220 = math.exp %219 : vector<8x1xf32>
    %cst_93 = arith.constant 1.000000e+00 : f32
    %221 = vector.broadcast %cst_93 : f32 to vector<8x1xf32>
    %222 = arith.subf %220, %221 : vector<8x1xf32>
    %223 = tpu.reciprocal %222 {approx = true} : vector<8x1xf32> -> vector<8x1xf32>
    %cst_94 = arith.constant 0.398942292 : f32
    %224 = vector.broadcast %cst_94 : f32 to vector<8x1xf32>
    %225 = arith.mulf %224, %223 : vector<8x1xf32>
    %226 = arith.mulf %2, %2 : vector<8x8xf32>
    %cst_95 = arith.constant 0.000000e+00 : f32
    %227 = vector.broadcast %cst_95 : f32 to vector<8x8xf32>
    %228 = arith.subf %227, %226 : vector<8x8xf32>
    %cst_96 = arith.constant 5.000000e-01 : f32
    %229 = vector.broadcast %cst_96 : f32 to vector<8x1xf32>
    %230 = arith.mulf %229, %223 : vector<8x1xf32>
    %231 = arith.mulf %230, %223 : vector<8x1xf32>
    %232 = vector.broadcast %231 : vector<8x1xf32> to vector<8x8xf32>
    %233 = arith.mulf %228, %232 : vector<8x8xf32>
    %234 = math.exp %233 : vector<8x8xf32>
    %235 = vector.broadcast %225 : vector<8x1xf32> to vector<8x8xf32>
    %236 = arith.mulf %235, %234 : vector<8x8xf32>
    %237 = arith.truncf %208 : vector<8x8xf32> to vector<8x8xbf16>
    %238 = arith.truncf %192 : vector<8x8xf32> to vector<8x8xbf16>
    %cst_97 = arith.constant dense<0.000000e+00> : vector<8x8xf32>
    %239 = tpu.matmul %237, %238, %cst_97 {dimension_numbers = #tpu.dot_dimension_numbers<[1], [0], [0], [1], [0, 0, 1, 1], [], []>} : vector<8x8xbf16>, vector<8x8xbf16>, vector<8x8xf32> -> vector<8x8xf32>
    %c0_98 = arith.constant 0 : index
    %c24 = arith.constant 24 : index
    %240 = vector.load %arg19[%c0_98, %c24] : memref<8x32xf32, #tpu.memory_space<vmem>>, vector<8x8xf32>
    tpu.vector_store %arg19[%c0_98, %c24], %239 {strides = array<i32>} : memref<8x32xf32, #tpu.memory_space<vmem>>, vector<8x8xf32>,
    %c0_99 = arith.constant 0 : index
    %c3 = arith.constant 3 : index
    %c0_100 = arith.constant 0 : index
    %c0_101 = arith.constant 0 : index
    %241 = vector.load %arg16[%c0_99, %c3, %c0_100, %c0_101] : memref<1x4x8x8xf32, #tpu.memory_space<vmem>>, vector<1x1x8x8xf32>
    %242 = vector.shape_cast %241 : vector<1x1x8x8xf32> to vector<8x8xf32>
    %243 = vector.shape_cast %208 : vector<8x8xf32> to vector<1x1x8x8xf32>
    tpu.vector_store %arg16[%c0_99, %c3, %c0_100, %c0_101], %243 {strides = array<i32>} : memref<1x4x8x8xf32, #tpu.memory_space<vmem>>, vector<1x1x8x8xf32>,
    %c0_102 = arith.constant 0 : index
    %c3_103 = arith.constant 3 : index
    %c0_104 = arith.constant 0 : index
    %c0_105 = arith.constant 0 : index
    %244 = vector.load %arg17[%c0_102, %c3_103, %c0_104, %c0_105] : memref<1x4x8x8xf32, #tpu.memory_space<vmem>>, vector<1x1x8x8xf32>
    %245 = vector.shape_cast %244 : vector<1x1x8x8xf32> to vector<8x8xf32>
    %246 = vector.shape_cast %236 : vector<8x8xf32> to vector<1x1x8x8xf32>
    tpu.vector_store %arg17[%c0_102, %c3_103, %c0_104, %c0_105], %246 {strides = array<i32>} : memref<1x4x8x8xf32, #tpu.memory_space<vmem>>, vector<1x1x8x8xf32>,
    %c0_106 = arith.constant 0 : index
    %c3_107 = arith.constant 3 : index
    %c0_108 = arith.constant 0 : index
    %c0_109 = arith.constant 0 : index
    %247 = vector.load %arg18[%c0_106, %c3_107, %c0_108, %c0_109] : memref<1x4x8x1xf32, #tpu.memory_space<vmem>>, vector<1x1x8x1xf32>
    %248 = vector.shape_cast %247 : vector<1x1x8x1xf32> to vector<8x1xf32>
    %249 = vector.shape_cast %222 : vector<8x1xf32> to vector<1x1x8x1xf32>
    tpu.vector_store %arg18[%c0_106, %c3_107, %c0_108, %c0_109], %249 {strides = array<i32>} : memref<1x4x8x1xf32, #tpu.memory_space<vmem>>, vector<1x1x8x1xf32>,
    %c0_110 = arith.constant 0 : index
    %c0_111 = arith.constant 0 : index
    %250 = vector.load %arg19[%c0_110, %c0_111] : memref<8x32xf32, #tpu.memory_space<vmem>>, vector<8x32xf32>
    %c0_112 = arith.constant 0 : index
    %c0_113 = arith.constant 0 : index
    %251 = vector.load %arg5[%c0_112, %c0_113] : memref<32x32xf32, #tpu.memory_space<vmem>>, vector<32x32xf32>
    %252 = arith.truncf %250 : vector<8x32xf32> to vector<8x32xbf16>
    %253 = arith.truncf %251 : vector<32x32xf32> to vector<32x32xbf16>
    %cst_114 = arith.constant dense<0.000000e+00> : vector<8x32xf32>
    %254 = tpu.matmul %252, %253, %cst_114 {dimension_numbers = #tpu.dot_dimension_numbers<[1], [0], [0], [1], [0, 0, 1, 1], [], []>} : vector<8x32xbf16>, vector<32x32xbf16>, vector<8x32xf32> -> vector<8x32xf32>
    %c0_115 = arith.constant 0 : index
    %c0_116 = arith.constant 0 : index
    %255 = vector.load %arg6[%c0_115, %c0_116] : memref<1x32xf32, #tpu.memory_space<vmem>>, vector<1x32xf32>
    %256 = vector.broadcast %255 : vector<1x32xf32> to vector<8x32xf32>
    %257 = arith.addf %254, %256 : vector<8x32xf32>
    %258 = arith.addf %1, %257 : vector<8x32xf32>
    %c0_117 = arith.constant 0 : index
    %c0_118 = arith.constant 0 : index
    %259 = vector.load %arg11[%c0_117, %c0_118] : memref<1x32xf32, #tpu.memory_space<vmem>>, vector<1x32xf32>
    %c0_119 = arith.constant 0 : index
    %c0_120 = arith.constant 0 : index
    %260 = vector.load %arg12[%c0_119, %c0_120] : memref<1x32xf32, #tpu.memory_space<vmem>>, vector<1x32xf32>
    %cst_121 = arith.constant dense<0.000000e+00> : vector<8xf32>
    %261 = vector.multi_reduction <add>, %258, %cst_121 [1] : vector<8x32xf32> to vector<8xf32>
    %262 = vector.shape_cast %261 : vector<8xf32> to vector<8x1xf32>
    %cst_122 = arith.constant 3.200000e+01 : f32
    %263 = vector.broadcast %cst_122 : f32 to vector<8x1xf32>
    %264 = arith.divf %262, %263 : vector<8x1xf32>
    %265 = vector.broadcast %264 : vector<8x1xf32> to vector<8x32xf32>
    %266 = arith.subf %258, %265 : vector<8x32xf32>
    %267 = arith.mulf %266, %266 : vector<8x32xf32>
    %cst_123 = arith.constant dense<0.000000e+00> : vector<8xf32>
    %268 = vector.multi_reduction <add>, %267, %cst_123 [1] : vector<8x32xf32> to vector<8xf32>
    %269 = vector.shape_cast %268 : vector<8xf32> to vector<8x1xf32>
    %cst_124 = arith.constant 3.200000e+01 : f32
    %270 = vector.broadcast %cst_124 : f32 to vector<8x1xf32>
    %271 = arith.divf %269, %270 : vector<8x1xf32>
    %cst_125 = arith.constant 9.99999974E-6 : f32
    %272 = vector.broadcast %cst_125 : f32 to vector<8x1xf32>
    %273 = arith.addf %271, %272 : vector<8x1xf32>
    %274 = math.rsqrt %273 : vector<8x1xf32>
    %275 = vector.broadcast %274 : vector<8x1xf32> to vector<8x32xf32>
    %276 = arith.mulf %266, %275 : vector<8x32xf32>
    %277 = vector.broadcast %259 : vector<1x32xf32> to vector<8x32xf32>
    %278 = arith.mulf %276, %277 : vector<8x32xf32>
    %279 = vector.broadcast %260 : vector<1x32xf32> to vector<8x32xf32>
    %280 = arith.addf %278, %279 : vector<8x32xf32>
    %c0_126 = arith.constant 0 : index
    %c0_127 = arith.constant 0 : index
    %281 = vector.load %arg7[%c0_126, %c0_127] : memref<32x32xf32, #tpu.memory_space<vmem>>, vector<32x32xf32>
    %282 = arith.truncf %280 : vector<8x32xf32> to vector<8x32xbf16>
    %283 = arith.truncf %281 : vector<32x32xf32> to vector<32x32xbf16>
    %cst_128 = arith.constant dense<0.000000e+00> : vector<8x32xf32>
    %284 = tpu.matmul %282, %283, %cst_128 {dimension_numbers = #tpu.dot_dimension_numbers<[1], [0], [0], [1], [0, 0, 1, 1], [], []>} : vector<8x32xbf16>, vector<32x32xbf16>, vector<8x32xf32> -> vector<8x32xf32>
    %c0_129 = arith.constant 0 : index
    %c0_130 = arith.constant 0 : index
    %285 = vector.load %arg8[%c0_129, %c0_130] : memref<1x32xf32, #tpu.memory_space<vmem>>, vector<1x32xf32>
    %286 = vector.broadcast %285 : vector<1x32xf32> to vector<8x32xf32>
    %287 = arith.addf %284, %286 : vector<8x32xf32>
    %288 = arith.mulf %287, %287 : vector<8x32xf32>
    %289 = arith.mulf %287, %288 : vector<8x32xf32>
    %cst_131 = arith.constant 4.471500e-02 : f32
    %290 = vector.broadcast %cst_131 : f32 to vector<8x32xf32>
    %291 = arith.mulf %290, %289 : vector<8x32xf32>
    %292 = arith.addf %287, %291 : vector<8x32xf32>
    %cst_132 = arith.constant 0.797884583 : f32
    %293 = vector.broadcast %cst_132 : f32 to vector<8x32xf32>
    %294 = arith.mulf %293, %292 : vector<8x32xf32>
    %295 = math.tanh %294 : vector<8x32xf32>
    %cst_133 = arith.constant 1.000000e+00 : f32
    %296 = vector.broadcast %cst_133 : f32 to vector<8x32xf32>
    %297 = arith.addf %296, %295 : vector<8x32xf32>
    %cst_134 = arith.constant 5.000000e-01 : f32
    %298 = vector.broadcast %cst_134 : f32 to vector<8x32xf32>
    %299 = arith.mulf %298, %297 : vector<8x32xf32>
    %300 = arith.mulf %287, %299 : vector<8x32xf32>
    %c0_135 = arith.constant 0 : index
    %c0_136 = arith.constant 0 : index
    %301 = vector.load %arg9[%c0_135, %c0_136] : memref<32x32xf32, #tpu.memory_space<vmem>>, vector<32x32xf32>
    %302 = arith.truncf %300 : vector<8x32xf32> to vector<8x32xbf16>
    %303 = arith.truncf %301 : vector<32x32xf32> to vector<32x32xbf16>
    %cst_137 = arith.constant dense<0.000000e+00> : vector<8x32xf32>
    %304 = tpu.matmul %302, %303, %cst_137 {dimension_numbers = #tpu.dot_dimension_numbers<[1], [0], [0], [1], [0, 0, 1, 1], [], []>} : vector<8x32xbf16>, vector<32x32xbf16>, vector<8x32xf32> -> vector<8x32xf32>
    %c0_138 = arith.constant 0 : index
    %c0_139 = arith.constant 0 : index
    %305 = vector.load %arg10[%c0_138, %c0_139] : memref<1x32xf32, #tpu.memory_space<vmem>>, vector<1x32xf32>
    %306 = vector.broadcast %305 : vector<1x32xf32> to vector<8x32xf32>
    %307 = arith.addf %304, %306 : vector<8x32xf32>
    %308 = arith.addf %280, %307 : vector<8x32xf32>
    %c0_140 = arith.constant 0 : index
    %c0_141 = arith.constant 0 : index
    %309 = vector.load %arg13[%c0_140, %c0_141] : memref<1x32xf32, #tpu.memory_space<vmem>>, vector<1x32xf32>
    %c0_142 = arith.constant 0 : index
    %c0_143 = arith.constant 0 : index
    %310 = vector.load %arg14[%c0_142, %c0_143] : memref<1x32xf32, #tpu.memory_space<vmem>>, vector<1x32xf32>
    %cst_144 = arith.constant dense<0.000000e+00> : vector<8xf32>
    %311 = vector.multi_reduction <add>, %308, %cst_144 [1] : vector<8x32xf32> to vector<8xf32>
    %312 = vector.shape_cast %311 : vector<8xf32> to vector<8x1xf32>
    %cst_145 = arith.constant 3.200000e+01 : f32
    %313 = vector.broadcast %cst_145 : f32 to vector<8x1xf32>
    %314 = arith.divf %312, %313 : vector<8x1xf32>
    %315 = vector.broadcast %314 : vector<8x1xf32> to vector<8x32xf32>
    %316 = arith.subf %308, %315 : vector<8x32xf32>
    %317 = arith.mulf %316, %316 : vector<8x32xf32>
    %cst_146 = arith.constant dense<0.000000e+00> : vector<8xf32>
    %318 = vector.multi_reduction <add>, %317, %cst_146 [1] : vector<8x32xf32> to vector<8xf32>
    %319 = vector.shape_cast %318 : vector<8xf32> to vector<8x1xf32>
    %cst_147 = arith.constant 3.200000e+01 : f32
    %320 = vector.broadcast %cst_147 : f32 to vector<8x1xf32>
    %321 = arith.divf %319, %320 : vector<8x1xf32>
    %cst_148 = arith.constant 9.99999974E-6 : f32
    %322 = vector.broadcast %cst_148 : f32 to vector<8x1xf32>
    %323 = arith.addf %321, %322 : vector<8x1xf32>
    %324 = math.rsqrt %323 : vector<8x1xf32>
    %325 = vector.broadcast %324 : vector<8x1xf32> to vector<8x32xf32>
    %326 = arith.mulf %316, %325 : vector<8x32xf32>
    %327 = vector.broadcast %309 : vector<1x32xf32> to vector<8x32xf32>
    %328 = arith.mulf %326, %327 : vector<8x32xf32>
    %329 = vector.broadcast %310 : vector<1x32xf32> to vector<8x32xf32>
    %330 = arith.addf %328, %329 : vector<8x32xf32>
    %c0_149 = arith.constant 0 : index
    %c0_150 = arith.constant 0 : index
    %c0_151 = arith.constant 0 : index
    %331 = vector.load %arg15[%c0_149, %c0_150, %c0_151] : memref<1x8x32xf32, #tpu.memory_space<vmem>>, vector<1x8x32xf32>
    %332 = vector.shape_cast %331 : vector<1x8x32xf32> to vector<8x32xf32>
    %333 = vector.shape_cast %330 : vector<8x32xf32> to vector<1x8x32xf32>
    tpu.vector_store %arg15[%c0_149, %c0_150, %c0_151], %333 {strides = array<i32>} : memref<1x8x32xf32, #tpu.memory_space<vmem>>, vector<1x8x32xf32>,
    return
  }
  func.func @transform_0(%arg0: i32) -> (i32, i32, i32) {
    %c0_i32 = arith.constant 0 : i32
    %c0_i32_0 = arith.constant 0 : i32
    %c0_i32_1 = arith.constant 0 : i32
    return %arg0, %c0_i32, %c0_i32_0 : i32, i32, i32
  }
  func.func @transform_1(%arg0: i32) -> (i32, i32) {
    %c0_i32 = arith.constant 0 : i32
    %c0_i32_0 = arith.constant 0 : i32
    %c0_i32_1 = arith.constant 0 : i32
    return %c0_i32, %c0_i32_0 : i32, i32
  }
  func.func @transform_2(%arg0: i32) -> (i32, i32) {
    %c0_i32 = arith.constant 0 : i32
    %c0_i32_0 = arith.constant 0 : i32
    %c0_i32_1 = arith.constant 0 : i32
    return %c0_i32, %c0_i32_0 : i32, i32
  }
  func.func @transform_3(%arg0: i32) -> (i32, i32) {
    %c0_i32 = arith.constant 0 : i32
    %c0_i32_0 = arith.constant 0 : i32
    %c0_i32_1 = arith.constant 0 : i32
    return %c0_i32, %c0_i32_0 : i32, i32
  }
  func.func @transform_4(%arg0: i32) -> (i32, i32) {
    %c0_i32 = arith.constant 0 : i32
    %c0_i32_0 = arith.constant 0 : i32
    %c0_i32_1 = arith.constant 0 : i32
    return %c0_i32, %c0_i32_0 : i32, i32
  }
  func.func @transform_5(%arg0: i32) -> (i32, i32) {
    %c0_i32 = arith.constant 0 : i32
    %c0_i32_0 = arith.constant 0 : i32
    %c0_i32_1 = arith.constant 0 : i32
    return %c0_i32, %c0_i32_0 : i32, i32
  }
  func.func @transform_6(%arg0: i32) -> (i32, i32) {
    %c0_i32 = arith.constant 0 : i32
    %c0_i32_0 = arith.constant 0 : i32
    %c0_i32_1 = arith.constant 0 : i32
    return %c0_i32, %c0_i32_0 : i32, i32
  }
  func.func @transform_7(%arg0: i32) -> (i32, i32) {
    %c0_i32 = arith.constant 0 : i32
    %c0_i32_0 = arith.constant 0 : i32
    %c0_i32_1 = arith.constant 0 : i32
    return %c0_i32, %c0_i32_0 : i32, i32
  }
  func.func @transform_8(%arg0: i32) -> (i32, i32) {
    %c0_i32 = arith.constant 0 : i32
    %c0_i32_0 = arith.constant 0 : i32
    %c0_i32_1 = arith.constant 0 : i32
    return %c0_i32, %c0_i32_0 : i32, i32
  }
  func.func @transform_9(%arg0: i32) -> (i32, i32) {
    %c0_i32 = arith.constant 0 : i32
    %c0_i32_0 = arith.constant 0 : i32
    %c0_i32_1 = arith.constant 0 : i32
    return %c0_i32, %c0_i32_0 : i32, i32
  }
  func.func @transform_10(%arg0: i32) -> (i32, i32) {
    %c0_i32 = arith.constant 0 : i32
    %c0_i32_0 = arith.constant 0 : i32
    %c0_i32_1 = arith.constant 0 : i32
    return %c0_i32, %c0_i32_0 : i32, i32
  }
  func.func @transform_11(%arg0: i32) -> (i32, i32) {
    %c0_i32 = arith.constant 0 : i32
    %c0_i32_0 = arith.constant 0 : i32
    %c0_i32_1 = arith.constant 0 : i32
    return %c0_i32, %c0_i32_0 : i32, i32
  }
  func.func @transform_12(%arg0: i32) -> (i32, i32) {
    %c0_i32 = arith.constant 0 : i32
    %c0_i32_0 = arith.constant 0 : i32
    %c0_i32_1 = arith.constant 0 : i32
    return %c0_i32, %c0_i32_0 : i32, i32
  }
  func.func @transform_13(%arg0: i32) -> (i32, i32) {
    %c0_i32 = arith.constant 0 : i32
    %c0_i32_0 = arith.constant 0 : i32
    %c0_i32_1 = arith.constant 0 : i32
    return %c0_i32, %c0_i32_0 : i32, i32
  }
  func.func @transform_14(%arg0: i32) -> (i32, i32, i32) {
    %c0_i32 = arith.constant 0 : i32
    %c0_i32_0 = arith.constant 0 : i32
    %c0_i32_1 = arith.constant 0 : i32
    return %arg0, %c0_i32, %c0_i32_0 : i32, i32, i32
  }
  func.func @transform_15(%arg0: i32) -> (i32, i32, i32, i32) {
    %c0_i32 = arith.constant 0 : i32
    %c0_i32_0 = arith.constant 0 : i32
    %c0_i32_1 = arith.constant 0 : i32
    %c0_i32_2 = arith.constant 0 : i32
    return %arg0, %c0_i32, %c0_i32_0, %c0_i32_1 : i32, i32, i32, i32
  }
  func.func @transform_16(%arg0: i32) -> (i32, i32, i32, i32) {
    %c0_i32 = arith.constant 0 : i32
    %c0_i32_0 = arith.constant 0 : i32
    %c0_i32_1 = arith.constant 0 : i32
    %c0_i32_2 = arith.constant 0 : i32
    return %arg0, %c0_i32, %c0_i32_0, %c0_i32_1 : i32, i32, i32, i32
  }
  func.func @transform_17(%arg0: i32) -> (i32, i32, i32, i32) {
    %c0_i32 = arith.constant 0 : i32
    %c0_i32_0 = arith.constant 0 : i32
    %c0_i32_1 = arith.constant 0 : i32
    %c0_i32_2 = arith.constant 0 : i32
    return %arg0, %c0_i32, %c0_i32_0, %c0_i32_1 : i32, i32, i32, i32
  }
}

module attributes {stable_mosaic.version = 11 : i64} {
  func.func @_final_proj_kernel(%arg0: i32, %arg1: memref<1x8x32xf32, #tpu.memory_space<vmem>>, %arg2: memref<1x32xf32, #tpu.memory_space<vmem>>, %arg3: memref<1x32xf32, #tpu.memory_space<vmem>>, %arg4: memref<32x4xf32, #tpu.memory_space<vmem>>, %arg5: memref<1x4xf32, #tpu.memory_space<vmem>>, %arg6: memref<1x8x4xf32, #tpu.memory_space<vmem>>) attributes {dimension_semantics = [#tpu.dimension_semantics<parallel>], iteration_bounds = array<i64: 2>, scalar_prefetch = 0 : i64, scratch_operands = 0 : i64, tpu.core_type = #tpu.core_type<tc>, window_params = [{transform_indices = @transform_0, window_bounds = array<i64: 1, 8, 32>}, {pipeline_mode = #tpu.pipeline_mode<synchronous>, transform_indices = @transform_1, window_bounds = array<i64: 1, 32>}, {pipeline_mode = #tpu.pipeline_mode<synchronous>, transform_indices = @transform_2, window_bounds = array<i64: 1, 32>}, {pipeline_mode = #tpu.pipeline_mode<synchronous>, transform_indices = @transform_3, window_bounds = array<i64: 32, 4>}, {pipeline_mode = #tpu.pipeline_mode<synchronous>, transform_indices = @transform_4, window_bounds = array<i64: 1, 4>}, {transform_indices = @transform_5, window_bounds = array<i64: 1, 8, 4>}]} {
    %c0 = arith.constant 0 : index
    %c0_0 = arith.constant 0 : index
    %c0_1 = arith.constant 0 : index
    %0 = vector.load %arg1[%c0, %c0_0, %c0_1] : memref<1x8x32xf32, #tpu.memory_space<vmem>>, vector<1x8x32xf32>
    %1 = vector.shape_cast %0 : vector<1x8x32xf32> to vector<8x32xf32>
    %c0_2 = arith.constant 0 : index
    %c0_3 = arith.constant 0 : index
    %2 = vector.load %arg2[%c0_2, %c0_3] : memref<1x32xf32, #tpu.memory_space<vmem>>, vector<1x32xf32>
    %c0_4 = arith.constant 0 : index
    %c0_5 = arith.constant 0 : index
    %3 = vector.load %arg3[%c0_4, %c0_5] : memref<1x32xf32, #tpu.memory_space<vmem>>, vector<1x32xf32>
    %cst = arith.constant dense<0.000000e+00> : vector<8xf32>
    %4 = vector.multi_reduction <add>, %1, %cst [1] : vector<8x32xf32> to vector<8xf32>
    %5 = vector.shape_cast %4 : vector<8xf32> to vector<8x1xf32>
    %cst_6 = arith.constant 3.200000e+01 : f32
    %6 = vector.broadcast %cst_6 : f32 to vector<8x1xf32>
    %7 = arith.divf %5, %6 : vector<8x1xf32>
    %8 = vector.broadcast %7 : vector<8x1xf32> to vector<8x32xf32>
    %9 = arith.subf %1, %8 : vector<8x32xf32>
    %10 = arith.mulf %9, %9 : vector<8x32xf32>
    %cst_7 = arith.constant dense<0.000000e+00> : vector<8xf32>
    %11 = vector.multi_reduction <add>, %10, %cst_7 [1] : vector<8x32xf32> to vector<8xf32>
    %12 = vector.shape_cast %11 : vector<8xf32> to vector<8x1xf32>
    %cst_8 = arith.constant 3.200000e+01 : f32
    %13 = vector.broadcast %cst_8 : f32 to vector<8x1xf32>
    %14 = arith.divf %12, %13 : vector<8x1xf32>
    %cst_9 = arith.constant 9.99999974E-6 : f32
    %15 = vector.broadcast %cst_9 : f32 to vector<8x1xf32>
    %16 = arith.addf %14, %15 : vector<8x1xf32>
    %17 = math.rsqrt %16 : vector<8x1xf32>
    %18 = vector.broadcast %17 : vector<8x1xf32> to vector<8x32xf32>
    %19 = arith.mulf %9, %18 : vector<8x32xf32>
    %20 = vector.broadcast %2 : vector<1x32xf32> to vector<8x32xf32>
    %21 = arith.mulf %19, %20 : vector<8x32xf32>
    %22 = vector.broadcast %3 : vector<1x32xf32> to vector<8x32xf32>
    %23 = arith.addf %21, %22 : vector<8x32xf32>
    %c0_10 = arith.constant 0 : index
    %c0_11 = arith.constant 0 : index
    %24 = vector.load %arg4[%c0_10, %c0_11] : memref<32x4xf32, #tpu.memory_space<vmem>>, vector<32x4xf32>
    %25 = arith.truncf %23 : vector<8x32xf32> to vector<8x32xbf16>
    %26 = arith.truncf %24 : vector<32x4xf32> to vector<32x4xbf16>
    %cst_12 = arith.constant dense<0.000000e+00> : vector<8x4xf32>
    %27 = tpu.matmul %25, %26, %cst_12 {dimension_numbers = #tpu.dot_dimension_numbers<[1], [0], [0], [1], [0, 0, 1, 1], [], []>} : vector<8x32xbf16>, vector<32x4xbf16>, vector<8x4xf32> -> vector<8x4xf32>
    %c0_13 = arith.constant 0 : index
    %c0_14 = arith.constant 0 : index
    %28 = vector.load %arg5[%c0_13, %c0_14] : memref<1x4xf32, #tpu.memory_space<vmem>>, vector<1x4xf32>
    %29 = vector.broadcast %28 : vector<1x4xf32> to vector<8x4xf32>
    %30 = arith.addf %27, %29 : vector<8x4xf32>
    %c0_15 = arith.constant 0 : index
    %c0_16 = arith.constant 0 : index
    %c0_17 = arith.constant 0 : index
    %31 = vector.load %arg6[%c0_15, %c0_16, %c0_17] : memref<1x8x4xf32, #tpu.memory_space<vmem>>, vector<1x8x4xf32>
    %32 = vector.shape_cast %31 : vector<1x8x4xf32> to vector<8x4xf32>
    %33 = vector.shape_cast %30 : vector<8x4xf32> to vector<1x8x4xf32>
    tpu.vector_store %arg6[%c0_15, %c0_16, %c0_17], %33 {strides = array<i32>} : memref<1x8x4xf32, #tpu.memory_space<vmem>>, vector<1x8x4xf32>,
    return
  }
  func.func @transform_0(%arg0: i32) -> (i32, i32, i32) {
    %c0_i32 = arith.constant 0 : i32
    %c0_i32_0 = arith.constant 0 : i32
    %c0_i32_1 = arith.constant 0 : i32
    return %arg0, %c0_i32, %c0_i32_0 : i32, i32, i32
  }
  func.func @transform_1(%arg0: i32) -> (i32, i32) {
    %c0_i32 = arith.constant 0 : i32
    %c0_i32_0 = arith.constant 0 : i32
    %c0_i32_1 = arith.constant 0 : i32
    return %c0_i32, %c0_i32_0 : i32, i32
  }
  func.func @transform_2(%arg0: i32) -> (i32, i32) {
    %c0_i32 = arith.constant 0 : i32
    %c0_i32_0 = arith.constant 0 : i32
    %c0_i32_1 = arith.constant 0 : i32
    return %c0_i32, %c0_i32_0 : i32, i32
  }
  func.func @transform_3(%arg0: i32) -> (i32, i32) {
    %c0_i32 = arith.constant 0 : i32
    %c0_i32_0 = arith.constant 0 : i32
    %c0_i32_1 = arith.constant 0 : i32
    return %c0_i32, %c0_i32_0 : i32, i32
  }
  func.func @transform_4(%arg0: i32) -> (i32, i32) {
    %c0_i32 = arith.constant 0 : i32
    %c0_i32_0 = arith.constant 0 : i32
    %c0_i32_1 = arith.constant 0 : i32
    return %c0_i32, %c0_i32_0 : i32, i32
  }
  func.func @transform_5(%arg0: i32) -> (i32, i32, i32) {
    %c0_i32 = arith.constant 0 : i32
    %c0_i32_0 = arith.constant 0 : i32
    %c0_i32_1 = arith.constant 0 : i32
    return %arg0, %c0_i32, %c0_i32_0 : i32, i32, i32
  }
}

module attributes {stable_mosaic.version = 11 : i64} {
  func.func @kernel(%arg0: i32, %arg1: memref<1x8x4xf32, #tpu.memory_space<vmem>>, %arg2: memref<4x16xf32, #tpu.memory_space<vmem>>, %arg3: memref<1x16xf32, #tpu.memory_space<vmem>>, %arg4: memref<16x4xf32, #tpu.memory_space<vmem>>, %arg5: memref<1x4xf32, #tpu.memory_space<vmem>>, %arg6: memref<1x8x4xf32, #tpu.memory_space<vmem>>, %arg7: memref<1x8x8xf32, #tpu.memory_space<vmem>>) attributes {dimension_semantics = [#tpu.dimension_semantics<parallel>], iteration_bounds = array<i64: 2>, scalar_prefetch = 0 : i64, scratch_operands = 0 : i64, tpu.core_type = #tpu.core_type<tc>, window_params = [{transform_indices = @transform_0, window_bounds = array<i64: 1, 8, 4>}, {pipeline_mode = #tpu.pipeline_mode<synchronous>, transform_indices = @transform_1, window_bounds = array<i64: 4, 16>}, {pipeline_mode = #tpu.pipeline_mode<synchronous>, transform_indices = @transform_2, window_bounds = array<i64: 1, 16>}, {pipeline_mode = #tpu.pipeline_mode<synchronous>, transform_indices = @transform_3, window_bounds = array<i64: 16, 4>}, {pipeline_mode = #tpu.pipeline_mode<synchronous>, transform_indices = @transform_4, window_bounds = array<i64: 1, 4>}, {transform_indices = @transform_5, window_bounds = array<i64: 1, 8, 4>}, {transform_indices = @transform_6, window_bounds = array<i64: 1, 8, 8>}]} {
    %c0 = arith.constant 0 : index
    %c0_0 = arith.constant 0 : index
    %c0_1 = arith.constant 0 : index
    %0 = vector.load %arg1[%c0, %c0_0, %c0_1] : memref<1x8x4xf32, #tpu.memory_space<vmem>>, vector<1x8x4xf32>
    %1 = vector.shape_cast %0 : vector<1x8x4xf32> to vector<8x4xf32>
    %cst = arith.constant 1.000000e+00 : f32
    %2 = vector.broadcast %cst : f32 to vector<8x1xf32>
    %cst_2 = arith.constant dense<0.000000e+00> : vector<8x8xf32>
    %3 = tpu.matmul %1, %1, %cst_2 {dimension_numbers = #tpu.dot_dimension_numbers<[1], [1], [0], [0], [0, 0, 1, 0], [], []>} : vector<8x4xf32>, vector<8x4xf32>, vector<8x8xf32> -> vector<8x8xf32>
    %4 = arith.mulf %1, %1 : vector<8x4xf32>
    %cst_3 = arith.constant dense<0.000000e+00> : vector<8xf32>
    %5 = vector.multi_reduction <add>, %4, %cst_3 [1] : vector<8x4xf32> to vector<8xf32>
    %6 = vector.shape_cast %5 : vector<8xf32> to vector<8x1xf32>
    %cst_4 = arith.constant dense<0.000000e+00> : vector<8x8xf32>
    %7 = tpu.matmul %2, %6, %cst_4 {dimension_numbers = #tpu.dot_dimension_numbers<[1], [1], [0], [0], [0, 0, 1, 0], [], []>} : vector<8x1xf32>, vector<8x1xf32>, vector<8x8xf32> -> vector<8x8xf32>
    %8 = vector.broadcast %6 : vector<8x1xf32> to vector<8x8xf32>
    %9 = arith.addf %8, %7 : vector<8x8xf32>
    %cst_5 = arith.constant 2.000000e+00 : f32
    %10 = vector.broadcast %cst_5 : f32 to vector<8x8xf32>
    %11 = arith.mulf %10, %3 : vector<8x8xf32>
    %12 = arith.subf %9, %11 : vector<8x8xf32>
    %cst_6 = arith.constant 0.000000e+00 : f32
    %13 = vector.broadcast %cst_6 : f32 to vector<8x8xf32>
    %14 = arith.maximumf %12, %13 : vector<8x8xf32>
    %15 = tpu.iota {dimensions = array<i32: 0>} : vector<8x8xi32>
    %16 = tpu.iota {dimensions = array<i32: 1>} : vector<8x8xi32>
    %17 = arith.cmpi eq, %15, %16 : vector<8x8xi32>
    %18 = arith.extui %17 : vector<8x8xi1> to vector<8x8xi32>
    %19 = arith.sitofp %18 : vector<8x8xi32> to vector<8x8xf32>
    %cst_7 = arith.constant 1.000000e+09 : f32
    %20 = vector.broadcast %cst_7 : f32 to vector<8x8xf32>
    %21 = arith.mulf %19, %20 : vector<8x8xf32>
    %22 = arith.addf %14, %21 : vector<8x8xf32>
    %cst_8 = arith.constant dense<0x7F800000> : vector<8xf32>
    %23 = vector.multi_reduction <minimumf>, %22, %cst_8 [1] : vector<8x8xf32> to vector<8xf32>
    %24 = vector.shape_cast %23 : vector<8xf32> to vector<8x1xf32>
    %25 = vector.broadcast %24 : vector<8x1xf32> to vector<8x8xf32>
    %26 = arith.cmpf ole, %22, %25 : vector<8x8xf32>
    %cst_9 = arith.constant 1.000000e+09 : f32
    %27 = vector.broadcast %cst_9 : f32 to vector<8x8xf32>
    %28 = arith.select %26, %27, %22 : vector<8x8xi1>, vector<8x8xf32>
    %cst_10 = arith.constant dense<0x7F800000> : vector<8xf32>
    %29 = vector.multi_reduction <minimumf>, %28, %cst_10 [1] : vector<8x8xf32> to vector<8xf32>
    %30 = vector.shape_cast %29 : vector<8xf32> to vector<8x1xf32>
    %31 = vector.broadcast %30 : vector<8x1xf32> to vector<8x8xf32>
    %32 = arith.cmpf ole, %28, %31 : vector<8x8xf32>
    %cst_11 = arith.constant 1.000000e+09 : f32
    %33 = vector.broadcast %cst_11 : f32 to vector<8x8xf32>
    %34 = arith.select %32, %33, %28 : vector<8x8xi1>, vector<8x8xf32>
    %cst_12 = arith.constant dense<0x7F800000> : vector<8xf32>
    %35 = vector.multi_reduction <minimumf>, %34, %cst_12 [1] : vector<8x8xf32> to vector<8xf32>
    %36 = vector.shape_cast %35 : vector<8xf32> to vector<8x1xf32>
    %37 = vector.broadcast %36 : vector<8x1xf32> to vector<8x8xf32>
    %38 = arith.cmpf ole, %22, %37 : vector<8x8xf32>
    %cst_13 = arith.constant 0.000000e+00 : f32
    %39 = vector.broadcast %cst_13 : f32 to vector<8x8xf32>
    %40 = arith.subf %39, %22 : vector<8x8xf32>
    %41 = math.exp %40 : vector<8x8xf32>
    %cst_14 = arith.constant 0.000000e+00 : f32
    %42 = vector.broadcast %cst_14 : f32 to vector<8x8xf32>
    %43 = arith.select %38, %41, %42 : vector<8x8xi1>, vector<8x8xf32>
    %cst_15 = arith.constant dense<0.000000e+00> : vector<8x8xf32>
    %44 = tpu.matmul %19, %43, %cst_15 {dimension_numbers = #tpu.dot_dimension_numbers<[1], [1], [0], [0], [0, 0, 1, 0], [], []>} : vector<8x8xf32>, vector<8x8xf32>, vector<8x8xf32> -> vector<8x8xf32>
    %45 = arith.maximumf %43, %44 : vector<8x8xf32>
    %46 = arith.addf %45, %19 : vector<8x8xf32>
    %cst_16 = arith.constant dense<0.000000e+00> : vector<8xf32>
    %47 = vector.multi_reduction <add>, %46, %cst_16 [1] : vector<8x8xf32> to vector<8xf32>
    %48 = vector.shape_cast %47 : vector<8xf32> to vector<8x1xf32>
    %49 = math.rsqrt %48 : vector<8x1xf32>
    %cst_17 = arith.constant dense<0.000000e+00> : vector<8x8xf32>
    %50 = tpu.matmul %2, %49, %cst_17 {dimension_numbers = #tpu.dot_dimension_numbers<[1], [1], [0], [0], [0, 0, 1, 0], [], []>} : vector<8x1xf32>, vector<8x1xf32>, vector<8x8xf32> -> vector<8x8xf32>
    %51 = vector.broadcast %49 : vector<8x1xf32> to vector<8x8xf32>
    %52 = arith.mulf %46, %51 : vector<8x8xf32>
    %53 = arith.mulf %52, %50 : vector<8x8xf32>
    %54 = arith.truncf %53 : vector<8x8xf32> to vector<8x8xbf16>
    %c0_18 = arith.constant 0 : index
    %c0_19 = arith.constant 0 : index
    %55 = vector.load %arg2[%c0_18, %c0_19] : memref<4x16xf32, #tpu.memory_space<vmem>>, vector<4x16xf32>
    %c0_20 = arith.constant 0 : index
    %c0_21 = arith.constant 0 : index
    %56 = vector.load %arg3[%c0_20, %c0_21] : memref<1x16xf32, #tpu.memory_space<vmem>>, vector<1x16xf32>
    %57 = arith.truncf %1 : vector<8x4xf32> to vector<8x4xbf16>
    %58 = arith.truncf %55 : vector<4x16xf32> to vector<4x16xbf16>
    %cst_22 = arith.constant dense<0.000000e+00> : vector<8x16xf32>
    %59 = tpu.matmul %57, %58, %cst_22 {dimension_numbers = #tpu.dot_dimension_numbers<[1], [0], [0], [1], [0, 0, 1, 1], [], []>} : vector<8x4xbf16>, vector<4x16xbf16>, vector<8x16xf32> -> vector<8x16xf32>
    %60 = arith.truncf %59 : vector<8x16xf32> to vector<8x16xbf16>
    %cst_23 = arith.constant dense<0.000000e+00> : vector<8x16xf32>
    %61 = tpu.matmul %54, %60, %cst_23 {dimension_numbers = #tpu.dot_dimension_numbers<[1], [0], [0], [1], [0, 0, 1, 1], [], []>} : vector<8x8xbf16>, vector<8x16xbf16>, vector<8x16xf32> -> vector<8x16xf32>
    %62 = vector.broadcast %56 : vector<1x16xf32> to vector<8x16xf32>
    %63 = arith.addf %61, %62 : vector<8x16xf32>
    %cst_24 = arith.constant 0.000000e+00 : f32
    %64 = vector.broadcast %cst_24 : f32 to vector<8x16xf32>
    %65 = arith.maximumf %63, %64 : vector<8x16xf32>
    %c0_25 = arith.constant 0 : index
    %c0_26 = arith.constant 0 : index
    %66 = vector.load %arg4[%c0_25, %c0_26] : memref<16x4xf32, #tpu.memory_space<vmem>>, vector<16x4xf32>
    %c0_27 = arith.constant 0 : index
    %c0_28 = arith.constant 0 : index
    %67 = vector.load %arg5[%c0_27, %c0_28] : memref<1x4xf32, #tpu.memory_space<vmem>>, vector<1x4xf32>
    %68 = arith.truncf %65 : vector<8x16xf32> to vector<8x16xbf16>
    %69 = arith.truncf %66 : vector<16x4xf32> to vector<16x4xbf16>
    %cst_29 = arith.constant dense<0.000000e+00> : vector<8x4xf32>
    %70 = tpu.matmul %68, %69, %cst_29 {dimension_numbers = #tpu.dot_dimension_numbers<[1], [0], [0], [1], [0, 0, 1, 1], [], []>} : vector<8x16xbf16>, vector<16x4xbf16>, vector<8x4xf32> -> vector<8x4xf32>
    %71 = arith.truncf %70 : vector<8x4xf32> to vector<8x4xbf16>
    %cst_30 = arith.constant dense<0.000000e+00> : vector<8x4xf32>
    %72 = tpu.matmul %54, %71, %cst_30 {dimension_numbers = #tpu.dot_dimension_numbers<[1], [0], [0], [1], [0, 0, 1, 1], [], []>} : vector<8x8xbf16>, vector<8x4xbf16>, vector<8x4xf32> -> vector<8x4xf32>
    %73 = vector.broadcast %67 : vector<1x4xf32> to vector<8x4xf32>
    %74 = arith.addf %72, %73 : vector<8x4xf32>
    %c0_31 = arith.constant 0 : index
    %c0_32 = arith.constant 0 : index
    %c0_33 = arith.constant 0 : index
    %75 = vector.load %arg6[%c0_31, %c0_32, %c0_33] : memref<1x8x4xf32, #tpu.memory_space<vmem>>, vector<1x8x4xf32>
    %76 = vector.shape_cast %75 : vector<1x8x4xf32> to vector<8x4xf32>
    %77 = vector.shape_cast %74 : vector<8x4xf32> to vector<1x8x4xf32>
    tpu.vector_store %arg6[%c0_31, %c0_32, %c0_33], %77 {strides = array<i32>} : memref<1x8x4xf32, #tpu.memory_space<vmem>>, vector<1x8x4xf32>,
    %cst_34 = arith.constant 0.000000e+00 : f32
    %78 = vector.broadcast %cst_34 : f32 to vector<8x8xf32>
    %79 = arith.subf %78, %22 : vector<8x8xf32>
    %c0_35 = arith.constant 0 : index
    %c0_36 = arith.constant 0 : index
    %c0_37 = arith.constant 0 : index
    %80 = vector.load %arg7[%c0_35, %c0_36, %c0_37] : memref<1x8x8xf32, #tpu.memory_space<vmem>>, vector<1x8x8xf32>
    %81 = vector.shape_cast %80 : vector<1x8x8xf32> to vector<8x8xf32>
    %82 = vector.shape_cast %79 : vector<8x8xf32> to vector<1x8x8xf32>
    tpu.vector_store %arg7[%c0_35, %c0_36, %c0_37], %82 {strides = array<i32>} : memref<1x8x8xf32, #tpu.memory_space<vmem>>, vector<1x8x8xf32>,
    return
  }
  func.func @transform_0(%arg0: i32) -> (i32, i32, i32) {
    %c0_i32 = arith.constant 0 : i32
    %c0_i32_0 = arith.constant 0 : i32
    %c0_i32_1 = arith.constant 0 : i32
    return %arg0, %c0_i32, %c0_i32_0 : i32, i32, i32
  }
  func.func @transform_1(%arg0: i32) -> (i32, i32) {
    %c0_i32 = arith.constant 0 : i32
    %c0_i32_0 = arith.constant 0 : i32
    %c0_i32_1 = arith.constant 0 : i32
    return %c0_i32, %c0_i32_0 : i32, i32
  }
  func.func @transform_2(%arg0: i32) -> (i32, i32) {
    %c0_i32 = arith.constant 0 : i32
    %c0_i32_0 = arith.constant 0 : i32
    %c0_i32_1 = arith.constant 0 : i32
    return %c0_i32, %c0_i32_0 : i32, i32
  }
  func.func @transform_3(%arg0: i32) -> (i32, i32) {
    %c0_i32 = arith.constant 0 : i32
    %c0_i32_0 = arith.constant 0 : i32
    %c0_i32_1 = arith.constant 0 : i32
    return %c0_i32, %c0_i32_0 : i32, i32
  }
  func.func @transform_4(%arg0: i32) -> (i32, i32) {
    %c0_i32 = arith.constant 0 : i32
    %c0_i32_0 = arith.constant 0 : i32
    %c0_i32_1 = arith.constant 0 : i32
    return %c0_i32, %c0_i32_0 : i32, i32
  }
  func.func @transform_5(%arg0: i32) -> (i32, i32, i32) {
    %c0_i32 = arith.constant 0 : i32
    %c0_i32_0 = arith.constant 0 : i32
    %c0_i32_1 = arith.constant 0 : i32
    return %arg0, %c0_i32, %c0_i32_0 : i32, i32, i32
  }
  func.func @transform_6(%arg0: i32) -> (i32, i32, i32) {
    %c0_i32 = arith.constant 0 : i32
    %c0_i32_0 = arith.constant 0 : i32
    %c0_i32_1 = arith.constant 0 : i32
    return %arg0, %c0_i32, %c0_i32_0 : i32, i32, i32
  }
}

module attributes {stable_mosaic.version = 11 : i64} {
  func.func @_fusion_head_kernel(%arg0: i32, %arg1: memref<1x8x8xf32, #tpu.memory_space<vmem>>, %arg2: memref<8x4xf32, #tpu.memory_space<vmem>>, %arg3: memref<1x4xf32, #tpu.memory_space<vmem>>, %arg4: memref<4x2xf32, #tpu.memory_space<vmem>>, %arg5: memref<1x2xf32, #tpu.memory_space<vmem>>, %arg6: memref<2x1xf32, #tpu.memory_space<vmem>>, %arg7: memref<1x1xf32, #tpu.memory_space<vmem>>, %arg8: memref<1x8x4xf32, #tpu.memory_space<vmem>>, %arg9: memref<1x8x1xf32, #tpu.memory_space<vmem>>) attributes {dimension_semantics = [#tpu.dimension_semantics<parallel>], iteration_bounds = array<i64: 2>, scalar_prefetch = 0 : i64, scratch_operands = 0 : i64, tpu.core_type = #tpu.core_type<tc>, window_params = [{transform_indices = @transform_0, window_bounds = array<i64: 1, 8, 8>}, {pipeline_mode = #tpu.pipeline_mode<synchronous>, transform_indices = @transform_1, window_bounds = array<i64: 8, 4>}, {pipeline_mode = #tpu.pipeline_mode<synchronous>, transform_indices = @transform_2, window_bounds = array<i64: 1, 4>}, {pipeline_mode = #tpu.pipeline_mode<synchronous>, transform_indices = @transform_3, window_bounds = array<i64: 4, 2>}, {pipeline_mode = #tpu.pipeline_mode<synchronous>, transform_indices = @transform_4, window_bounds = array<i64: 1, 2>}, {pipeline_mode = #tpu.pipeline_mode<synchronous>, transform_indices = @transform_5, window_bounds = array<i64: 2, 1>}, {pipeline_mode = #tpu.pipeline_mode<synchronous>, transform_indices = @transform_6, window_bounds = array<i64: 1, 1>}, {transform_indices = @transform_7, window_bounds = array<i64: 1, 8, 4>}, {transform_indices = @transform_8, window_bounds = array<i64: 1, 8, 1>}]} {
    %c0 = arith.constant 0 : index
    %c0_0 = arith.constant 0 : index
    %c0_1 = arith.constant 0 : index
    %0 = vector.load %arg1[%c0, %c0_0, %c0_1] : memref<1x8x8xf32, #tpu.memory_space<vmem>>, vector<1x8x8xf32>
    %1 = vector.shape_cast %0 : vector<1x8x8xf32> to vector<8x8xf32>
    %c0_2 = arith.constant 0 : index
    %c0_3 = arith.constant 0 : index
    %2 = vector.load %arg2[%c0_2, %c0_3] : memref<8x4xf32, #tpu.memory_space<vmem>>, vector<8x4xf32>
    %3 = arith.truncf %1 : vector<8x8xf32> to vector<8x8xbf16>
    %4 = arith.truncf %2 : vector<8x4xf32> to vector<8x4xbf16>
    %cst = arith.constant dense<0.000000e+00> : vector<8x4xf32>
    %5 = tpu.matmul %3, %4, %cst {dimension_numbers = #tpu.dot_dimension_numbers<[1], [0], [0], [1], [0, 0, 1, 1], [], []>} : vector<8x8xbf16>, vector<8x4xbf16>, vector<8x4xf32> -> vector<8x4xf32>
    %c0_4 = arith.constant 0 : index
    %c0_5 = arith.constant 0 : index
    %6 = vector.load %arg3[%c0_4, %c0_5] : memref<1x4xf32, #tpu.memory_space<vmem>>, vector<1x4xf32>
    %7 = vector.broadcast %6 : vector<1x4xf32> to vector<8x4xf32>
    %8 = arith.addf %5, %7 : vector<8x4xf32>
    %c0_6 = arith.constant 0 : index
    %c0_7 = arith.constant 0 : index
    %9 = vector.load %arg4[%c0_6, %c0_7] : memref<4x2xf32, #tpu.memory_space<vmem>>, vector<4x2xf32>
    %10 = arith.truncf %8 : vector<8x4xf32> to vector<8x4xbf16>
    %11 = arith.truncf %9 : vector<4x2xf32> to vector<4x2xbf16>
    %cst_8 = arith.constant dense<0.000000e+00> : vector<8x2xf32>
    %12 = tpu.matmul %10, %11, %cst_8 {dimension_numbers = #tpu.dot_dimension_numbers<[1], [0], [0], [1], [0, 0, 1, 1], [], []>} : vector<8x4xbf16>, vector<4x2xbf16>, vector<8x2xf32> -> vector<8x2xf32>
    %c0_9 = arith.constant 0 : index
    %c0_10 = arith.constant 0 : index
    %13 = vector.load %arg5[%c0_9, %c0_10] : memref<1x2xf32, #tpu.memory_space<vmem>>, vector<1x2xf32>
    %14 = vector.broadcast %13 : vector<1x2xf32> to vector<8x2xf32>
    %15 = arith.addf %12, %14 : vector<8x2xf32>
    %cst_11 = arith.constant 0.000000e+00 : f32
    %16 = vector.broadcast %cst_11 : f32 to vector<8x2xf32>
    %17 = arith.maximumf %15, %16 : vector<8x2xf32>
    %c0_12 = arith.constant 0 : index
    %c0_13 = arith.constant 0 : index
    %18 = vector.load %arg6[%c0_12, %c0_13] : memref<2x1xf32, #tpu.memory_space<vmem>>, vector<2x1xf32>
    %19 = arith.truncf %17 : vector<8x2xf32> to vector<8x2xbf16>
    %20 = arith.truncf %18 : vector<2x1xf32> to vector<2x1xbf16>
    %cst_14 = arith.constant dense<0.000000e+00> : vector<8x1xf32>
    %21 = tpu.matmul %19, %20, %cst_14 {dimension_numbers = #tpu.dot_dimension_numbers<[1], [0], [0], [1], [0, 0, 1, 1], [], []>} : vector<8x2xbf16>, vector<2x1xbf16>, vector<8x1xf32> -> vector<8x1xf32>
    %c0_15 = arith.constant 0 : index
    %c0_16 = arith.constant 0 : index
    %22 = vector.load %arg7[%c0_15, %c0_16] : memref<1x1xf32, #tpu.memory_space<vmem>>, vector<1x1xf32>
    %23 = vector.broadcast %22 : vector<1x1xf32> to vector<8x1xf32>
    %24 = arith.addf %21, %23 : vector<8x1xf32>
    %c0_17 = arith.constant 0 : index
    %c0_18 = arith.constant 0 : index
    %c0_19 = arith.constant 0 : index
    %25 = vector.load %arg9[%c0_17, %c0_18, %c0_19] : memref<1x8x1xf32, #tpu.memory_space<vmem>>, vector<1x8x1xf32>
    %26 = vector.shape_cast %25 : vector<1x8x1xf32> to vector<8x1xf32>
    %27 = vector.shape_cast %24 : vector<8x1xf32> to vector<1x8x1xf32>
    tpu.vector_store %arg9[%c0_17, %c0_18, %c0_19], %27 {strides = array<i32>} : memref<1x8x1xf32, #tpu.memory_space<vmem>>, vector<1x8x1xf32>,
    %c0_20 = arith.constant 0 : index
    %c0_21 = arith.constant 0 : index
    %c0_22 = arith.constant 0 : index
    %28 = vector.load %arg8[%c0_20, %c0_21, %c0_22] : memref<1x8x4xf32, #tpu.memory_space<vmem>>, vector<1x8x4xf32>
    %29 = vector.shape_cast %28 : vector<1x8x4xf32> to vector<8x4xf32>
    %30 = vector.shape_cast %8 : vector<8x4xf32> to vector<1x8x4xf32>
    tpu.vector_store %arg8[%c0_20, %c0_21, %c0_22], %30 {strides = array<i32>} : memref<1x8x4xf32, #tpu.memory_space<vmem>>, vector<1x8x4xf32>,
    return
  }
  func.func @transform_0(%arg0: i32) -> (i32, i32, i32) {
    %c0_i32 = arith.constant 0 : i32
    %c0_i32_0 = arith.constant 0 : i32
    %c0_i32_1 = arith.constant 0 : i32
    return %arg0, %c0_i32, %c0_i32_0 : i32, i32, i32
  }
  func.func @transform_1(%arg0: i32) -> (i32, i32) {
    %c0_i32 = arith.constant 0 : i32
    %c0_i32_0 = arith.constant 0 : i32
    %c0_i32_1 = arith.constant 0 : i32
    return %c0_i32, %c0_i32_0 : i32, i32
  }
  func.func @transform_2(%arg0: i32) -> (i32, i32) {
    %c0_i32 = arith.constant 0 : i32
    %c0_i32_0 = arith.constant 0 : i32
    %c0_i32_1 = arith.constant 0 : i32
    return %c0_i32, %c0_i32_0 : i32, i32
  }
  func.func @transform_3(%arg0: i32) -> (i32, i32) {
    %c0_i32 = arith.constant 0 : i32
    %c0_i32_0 = arith.constant 0 : i32
    %c0_i32_1 = arith.constant 0 : i32
    return %c0_i32, %c0_i32_0 : i32, i32
  }
  func.func @transform_4(%arg0: i32) -> (i32, i32) {
    %c0_i32 = arith.constant 0 : i32
    %c0_i32_0 = arith.constant 0 : i32
    %c0_i32_1 = arith.constant 0 : i32
    return %c0_i32, %c0_i32_0 : i32, i32
  }
  func.func @transform_5(%arg0: i32) -> (i32, i32) {
    %c0_i32 = arith.constant 0 : i32
    %c0_i32_0 = arith.constant 0 : i32
    %c0_i32_1 = arith.constant 0 : i32
    return %c0_i32, %c0_i32_0 : i32, i32
  }
  func.func @transform_6(%arg0: i32) -> (i32, i32) {
    %c0_i32 = arith.constant 0 : i32
    %c0_i32_0 = arith.constant 0 : i32
    %c0_i32_1 = arith.constant 0 : i32
    return %c0_i32, %c0_i32_0 : i32, i32
  }
  func.func @transform_7(%arg0: i32) -> (i32, i32, i32) {
    %c0_i32 = arith.constant 0 : i32
    %c0_i32_0 = arith.constant 0 : i32
    %c0_i32_1 = arith.constant 0 : i32
    return %arg0, %c0_i32, %c0_i32_0 : i32, i32, i32
  }
  func.func @transform_8(%arg0: i32) -> (i32, i32, i32) {
    %c0_i32 = arith.constant 0 : i32
    %c0_i32_0 = arith.constant 0 : i32
    %c0_i32_1 = arith.constant 0 : i32
    return %arg0, %c0_i32, %c0_i32_0 : i32, i32, i32
  }
}

</mosaic_0001>

<llo_original>
// kernel: _lambda_.6
$region0: #{_lambda_.6}
  #allocation0 [shape = 'u32[]', space=smem, size = 0x4, offset = 0x4, fixed_abs, tag = 'smem constant byte address 0x4 - core index']
  #allocation1 [shape = 'u32[72,128]{1,0:T(1,128)}', space=vmem, size = 0x9000, scoped, tag = 'internal scratch']
  %s0 = inlined_call_operand.vmem [shape: f32[2,8,12], index: 0, kind: input, shape index: {}]
  %s1 = inlined_call_operand.vmem [shape: f32[12,32], index: 1, kind: input, shape index: {}]
  %s2 = inlined_call_operand.vmem [shape: f32[8,32], index: 2, kind: input, shape index: {}]
  %s3 = inlined_call_operand.vmem [shape: f32[2,8,32], index: 3, kind: output, shape index: {}]
  %s4 = sld [smem:[#allocation0]]
  $region45: #{_lambda_.6} parent=0
    _
  %s6 = ssub.s32 1, %s4
  %s7 = scalar_select 0, %s6, %s4
  loop: start=0, step=1, limit=4
  $region2: #{_lambda_.6} parent=0 // loop_pre_header
    _
  $region3: #{_lambda_.6} parent=0 // loop_header
    %s9 = sphi 0, %s13
    %p10 = scmp.ge.s32.totalorder %s9, 4
    %s19 = sphi 0, %s21
    %s22 = sphi 0, %s19
    %s23 = sphi 0, %s22
    %s39 = sphi 0, %s23
    %s43 = sphi 0, %s43
    %s45 = sphi 0, %s43
    %s46 = sphi 0, %s45
    %s60 = sphi 0, %s46
    %s64 = sphi 0, %s64
    %s66 = sphi 0, %s64
    %s67 = sphi 0, %s66
    %s81 = sphi 0, %s67
    %s87 = sphi 0, %s89
    %s90 = sphi 0, %s87
    %s91 = sphi 0, %s90
    %s107 = sphi 0, %s91
  $region4: #{_lambda_.6} parent=0 // loop_header_branch
    %12 = sbr.rel (%p10) target = $region8
  $region5: #{_lambda_.6} parent=0 // loop_body
    %s14 = ssub.s32 %s9, 1
    %s15 = ssub.s32 %s9, 2
    %s16 = sadd.s32 %s9, 1
    %s17 = ssub.s32 %s9, %s16
    %p18 = scmp.eq.s32.totalorder %s17, 0
    %s20 = sadd.s32 %s19, 1
    %s21 = scalar_select %p18, %s19, %s20
    %p24 = pneg %p18
    %p25 = scmp.eq.s32.totalorder %s9, 1
    %p26 = por %p24, %p25
    %p27 = scmp.ne.s32.totalorder %s19, %s22
    %p28 = scmp.eq.s32.totalorder %s9, 0
    %p29 = por %p27, %p28
    %p30 = scmp.ne.s32.totalorder %s19, %s22
    %p31 = scmp.eq.s32.totalorder %s14, 1
    %p32 = por %p30, %p31
    %p33 = scmp.ne.s32.totalorder %s22, %s23
    %p34 = scmp.eq.s32.totalorder %s14, 0
    %p35 = por %p33, %p34
    %p36 = scmp.ne.s32.totalorder %s22, %s23
    %p37 = scmp.eq.s32.totalorder %s15, 1
    %p38 = por %p36, %p37
    %p40 = scmp.ne.s32.totalorder %s23, %s39
    %p41 = scmp.eq.s32.totalorder %s15, 0
    %p42 = por %p40, %p41
    %s44 = sadd.s32 %s43, 1
    %p47 = scmp.eq.s32.totalorder %s9, 1
    %p48 = scmp.ne.s32.totalorder %s43, %s45
    %p49 = scmp.eq.s32.totalorder %s9, 0
    %p50 = por %p48, %p49
    %p51 = scmp.ne.s32.totalorder %s43, %s45
    %p52 = scmp.eq.s32.totalorder %s14, 1
    %p53 = por %p51, %p52
    %p54 = scmp.ne.s32.totalorder %s45, %s46
    %p55 = scmp.eq.s32.totalorder %s14, 0
    %p56 = por %p54, %p55
    %p57 = scmp.ne.s32.totalorder %s45, %s46
    %p58 = scmp.eq.s32.totalorder %s15, 1
    %p59 = por %p57, %p58
    %p61 = scmp.ne.s32.totalorder %s46, %s60
    %p62 = scmp.eq.s32.totalorder %s15, 0
    %p63 = por %p61, %p62
    %s65 = sadd.s32 %s64, 1
    %p68 = scmp.eq.s32.totalorder %s9, 1
    %p69 = scmp.ne.s32.totalorder %s64, %s66
    %p70 = scmp.eq.s32.totalorder %s9, 0
    %p71 = por %p69, %p70
    %p72 = scmp.ne.s32.totalorder %s64, %s66
    %p73 = scmp.eq.s32.totalorder %s14, 1
    %p74 = por %p72, %p73
    %p75 = scmp.ne.s32.totalorder %s66, %s67
    %p76 = scmp.eq.s32.totalorder %s14, 0
    %p77 = por %p75, %p76
    %p78 = scmp.ne.s32.totalorder %s66, %s67
    %p79 = scmp.eq.s32.totalorder %s15, 1
    %p80 = por %p78, %p79
    %p82 = scmp.ne.s32.totalorder %s67, %s81
    %p83 = scmp.eq.s32.totalorder %s15, 0
    %p84 = por %p82, %p83
    %s85 = ssub.s32 %s9, %s16
    %p86 = scmp.eq.s32.totalorder %s85, 0
    %s88 = sadd.s32 %s87, 1
    %s89 = scalar_select %p86, %s87, %s88
    %p92 = pneg %p86
    %p93 = scmp.eq.s32.totalorder %s9, 1
    %p94 = por %p92, %p93
    %p95 = scmp.ne.s32.totalorder %s87, %s90
    %p96 = scmp.eq.s32.totalorder %s9, 0
    %p97 = por %p95, %p96
    %p98 = scmp.ne.s32.totalorder %s87, %s90
    %p99 = scmp.eq.s32.totalorder %s14, 1
    %p100 = por %p98, %p99
    %p101 = scmp.ne.s32.totalorder %s90, %s91
    %p102 = scmp.eq.s32.totalorder %s14, 0
    %p103 = por %p101, %p102
    %p104 = scmp.ne.s32.totalorder %s90, %s91
    %p105 = scmp.eq.s32.totalorder %s15, 1
    %p106 = por %p104, %p105
    %p108 = scmp.ne.s32.totalorder %s91, %s107
    %p109 = scmp.eq.s32.totalorder %s15, 0
    %p110 = por %p108, %p109
    %p111 = scmp.le.s32.totalorder 1, %s9
    %p112 = scmp.lt.s32.totalorder %s9, 3
    %p113 = pnand %p111, %p112
    %p114 = pneg %p113
    // Predicated region
    $region9: #{_lambda_.6} parent=5 // pred_check
      _
    $region10: #{_lambda_.6} parent=5 // pred_check_branch
      %116 = sbr.rel (%p113) target = $region12
    $region11: #{_lambda_.6} parent=5 // pred_region
      %s117 = ssub.s32 %s9, 1
      // Predicated region
      $region13: #{_lambda_.6} parent=11 // pred_check
        %p118 = pneg %p56
      $region14: #{_lambda_.6} parent=11 // pred_check_branch
        %120 = sbr.rel (%p118) target = $region16
      $region15: #{_lambda_.6} parent=11 // pred_region
        _
      $region16: #{_lambda_.6} parent=11 // pred_fallthru
        _
      // Predicated region
      $region17: #{_lambda_.6} parent=11 // pred_check
        %p121 = pneg %p77
      $region18: #{_lambda_.6} parent=11 // pred_check_branch
        %123 = sbr.rel (%p121) target = $region20
      $region19: #{_lambda_.6} parent=11 // pred_region
        _
      $region20: #{_lambda_.6} parent=11 // pred_fallthru
        _
    $region12: #{_lambda_.6} parent=5 // pred_fallthru
      _
    %p124 = scmp.lt.s32.totalorder %s9, 2
    // Predicated region
    $region21: #{_lambda_.6} parent=5 // pred_check
      %p125 = pneg %p124
    $region22: #{_lambda_.6} parent=5 // pred_check_branch
      %127 = sbr.rel (%p125) target = $region24
    $region23: #{_lambda_.6} parent=5 // pred_region
      // Predicated region
      $region25: #{_lambda_.6} parent=23 // pred_check
        %p128 = pneg %p29
      $region26: #{_lambda_.6} parent=23 // pred_check_branch
        %130 = sbr.rel (%p128) target = $region28
      $region27: #{_lambda_.6} parent=23 // pred_region
        %p131 = scmp.lt.s32.totalorder %s9, 1
        %s132 = scalar_select %p131, %s9, 1
        %s133 = smul.addr %s132, 8
        %s134 = scalar_lea.vmem %s0, %s133
      $region28: #{_lambda_.6} parent=23 // pred_fallthru
        _
    $region24: #{_lambda_.6} parent=5 // pred_fallthru
      _
    %p135 = scmp.le.s32.totalorder 1, %s9
    %p136 = scmp.lt.s32.totalorder %s9, 3
    %p137 = pnand %p135, %p136
    %p138 = pneg %p137
    // Predicated region
    $region29: #{_lambda_.6} parent=5 // pred_check
      _
    $region30: #{_lambda_.6} parent=5 // pred_check_branch
      %140 = sbr.rel (%p137) target = $region32
    $region31: #{_lambda_.6} parent=5 // pred_region
      %s141 = ssub.s32 %s9, 1
      %p142 = scmp.lt.s32.totalorder %s14, 1
      %s143 = scalar_select %p142, %s14, 1
      %s144 = smul.addr %s143, 8
      %s145 = scalar_lea.vmem %s0, %s144
      %p146 = pneg %p35
      %p147 = pneg %p32
      %p148 = pneg %p56
      %p149 = pneg %p53
      %p150 = pneg %p77
      %p151 = pneg %p74
      %p152 = pneg %p103
      %p153 = pneg %p100
      %p154 = scmp.lt.s32.totalorder %s14, 1
      %s155 = scalar_select %p154, %s14, 1
      %s156 = smul.addr %s155, 8
      %s157 = scalar_lea.vmem %s3, %s156
      %p158 = scmp.lt.s32.totalorder %s14, 1
      %s159 = scalar_select %p158, %s14, 1
      %s160 = smul.addr %s159, 8
      %s161 = scalar_lea.vmem %s0, %s160
      %p162 = scmp.lt.s32.totalorder %s14, 1
      %s163 = scalar_select %p162, %s14, 1
      %s164 = smul.addr %s163, 8
      %s165 = scalar_lea.vmem %s3, %s164
      %v167 = vld [vmem:[%s161] sm:$0xff]
      %v168 = vld [vmem:[%s1] sm:$0xff]
      %v169 = vld [vmem:[%s1 + $0x8] sm:$0xf]
      %v170 = vpack.c.bf16 %v167, %v167
      %v171 = vpack.c.bf16 %v169, %v168
      %v172 = vld [vmem:[%s2] sm:$0xff]
      %vm173 = vcmask 97280
      %v175 = vsel %vm173, %v170, 0
      %vm177 = vcmask 1045504
      %v179 = vsel %vm177, %v171, 0
      %181 = vmatpush.bf16.msra.mxu0 0
      %182 = vmatpush.bf16.msra.mxu0 0
      %183 = vmatpush.bf16.msra.mxu0 0
      %184 = vmatpush.bf16.msra.mxu0 0
      %185 = vmatpush.bf16.msra.mxu0 0
      %186 = vmatpush.bf16.msra.mxu0 0
      %187 = vmatpush.bf16.msra.mxu0 0
      %188 = vmatpush.bf16.msra.mxu0 %v179
      %189 = vmatmul.bf16.gmra.mxu0 %v175
      %v190 = vpop.f32.mrf.mxu0
      %v191 = vadd.f32 %v172, %v190
      %v192 = vpop.f32.mrf.mxu0
      %193 = vdwg.mxu0
      %vm194 = vcmask 261120
      %195 = vst.msk [vmem:[%s165] sm:$0xff] %vm194, %v191
      %p196 = scmp.lt.s32.totalorder %s14, 1
      %s197 = scalar_select %p196, %s14, 1
      %s198 = smul.addr %s197, 8
      %s199 = scalar_lea.vmem %s3, %s198
      // Predicated region
      $region33: #{_lambda_.6} parent=31 // pred_check
        %p200 = pneg %p100
      $region34: #{_lambda_.6} parent=31 // pred_check_branch
        %202 = sbr.rel (%p200) target = $region36
      $region35: #{_lambda_.6} parent=31 // pred_region
        _
      $region36: #{_lambda_.6} parent=31 // pred_fallthru
        _
    $region32: #{_lambda_.6} parent=5 // pred_fallthru
      _
    %p203 = scmp.le.s32.totalorder 2, %s9
    // Predicated region
    $region37: #{_lambda_.6} parent=5 // pred_check
      %p204 = pneg %p203
    $region38: #{_lambda_.6} parent=5 // pred_check_branch
      %206 = sbr.rel (%p204) target = $region40
    $region39: #{_lambda_.6} parent=5 // pred_region
      %s207 = ssub.s32 %s9, 2
      // Predicated region
      $region41: #{_lambda_.6} parent=39 // pred_check
        %p208 = pneg %p106
      $region42: #{_lambda_.6} parent=39 // pred_check_branch
        %210 = sbr.rel (%p208) target = $region44
      $region43: #{_lambda_.6} parent=39 // pred_region
        %p211 = scmp.lt.s32.totalorder %s15, 1
        %s212 = scalar_select %p211, %s15, 1
        %s213 = smul.addr %s212, 8
        %s214 = scalar_lea.vmem %s3, %s213
      $region44: #{_lambda_.6} parent=39 // pred_fallthru
        _
    $region40: #{_lambda_.6} parent=5 // pred_fallthru
      _
  $region6: #{_lambda_.6} parent=0 // loop_footer
    %s13 = sadd.s32 1, %s9
  $region7: #{_lambda_.6} parent=0 // loop_footer_branch
    %8 = sbr.rel target = $region3
  $region8: #{_lambda_.6} parent=0 // loop_exit
    _

// kernel: _lambda_.9
$region0: #{_lambda_.9}
  #allocation0 [shape = 'u32[]', space=smem, size = 0x4, offset = 0x4, fixed_abs, tag = 'smem constant byte address 0x4 - core index']
  #allocation1 [shape = 'u32[72,128]{1,0:T(1,128)}', space=vmem, size = 0x9000, scoped, tag = 'internal scratch']
  %s0 = inlined_call_operand.vmem [shape: f32[2,8,32], index: 0, kind: input, shape index: {}]
  %s1 = inlined_call_operand.vmem [shape: f32[1,32], index: 1, kind: input, shape index: {}]
  %s2 = inlined_call_operand.vmem [shape: f32[1,32], index: 2, kind: input, shape index: {}]
  %s3 = inlined_call_operand.vmem [shape: f32[32,4], index: 3, kind: input, shape index: {}]
  %s4 = inlined_call_operand.vmem [shape: f32[1,4], index: 4, kind: input, shape index: {}]
  %s5 = inlined_call_operand.vmem [shape: f32[2,8,4], index: 5, kind: output, shape index: {}]
  %s6 = sld [smem:[#allocation0]]
  $region53: #{_lambda_.9} parent=0
    _
  %s8 = ssub.s32 1, %s6
  %s9 = scalar_select 0, %s8, %s6
  loop: start=0, step=1, limit=4
  $region2: #{_lambda_.9} parent=0 // loop_pre_header
    _
  $region3: #{_lambda_.9} parent=0 // loop_header
    %s11 = sphi 0, %s15
    %p12 = scmp.ge.s32.totalorder %s11, 4
    %s21 = sphi 0, %s23
    %s24 = sphi 0, %s21
    %s25 = sphi 0, %s24
    %s41 = sphi 0, %s25
    %s45 = sphi 0, %s45
    %s47 = sphi 0, %s45
    %s48 = sphi 0, %s47
    %s62 = sphi 0, %s48
    %s66 = sphi 0, %s66
    %s68 = sphi 0, %s66
    %s69 = sphi 0, %s68
    %s83 = sphi 0, %s69
    %s87 = sphi 0, %s87
    %s89 = sphi 0, %s87
    %s90 = sphi 0, %s89
    %s104 = sphi 0, %s90
    %s108 = sphi 0, %s108
    %s110 = sphi 0, %s108
    %s111 = sphi 0, %s110
    %s125 = sphi 0, %s111
    %s131 = sphi 0, %s133
    %s134 = sphi 0, %s131
    %s135 = sphi 0, %s134
    %s151 = sphi 0, %s135
  $region4: #{_lambda_.9} parent=0 // loop_header_branch
    %14 = sbr.rel (%p12) target = $region8
  $region5: #{_lambda_.9} parent=0 // loop_body
    %s16 = ssub.s32 %s11, 1
    %s17 = ssub.s32 %s11, 2
    %s18 = sadd.s32 %s11, 1
    %s19 = ssub.s32 %s11, %s18
    %p20 = scmp.eq.s32.totalorder %s19, 0
    %s22 = sadd.s32 %s21, 1
    %s23 = scalar_select %p20, %s21, %s22
    %p26 = pneg %p20
    %p27 = scmp.eq.s32.totalorder %s11, 1
    %p28 = por %p26, %p27
    %p29 = scmp.ne.s32.totalorder %s21, %s24
    %p30 = scmp.eq.s32.totalorder %s11, 0
    %p31 = por %p29, %p30
    %p32 = scmp.ne.s32.totalorder %s21, %s24
    %p33 = scmp.eq.s32.totalorder %s16, 1
    %p34 = por %p32, %p33
    %p35 = scmp.ne.s32.totalorder %s24, %s25
    %p36 = scmp.eq.s32.totalorder %s16, 0
    %p37 = por %p35, %p36
    %p38 = scmp.ne.s32.totalorder %s24, %s25
    %p39 = scmp.eq.s32.totalorder %s17, 1
    %p40 = por %p38, %p39
    %p42 = scmp.ne.s32.totalorder %s25, %s41
    %p43 = scmp.eq.s32.totalorder %s17, 0
    %p44 = por %p42, %p43
    %s46 = sadd.s32 %s45, 1
    %p49 = scmp.eq.s32.totalorder %s11, 1
    %p50 = scmp.ne.s32.totalorder %s45, %s47
    %p51 = scmp.eq.s32.totalorder %s11, 0
    %p52 = por %p50, %p51
    %p53 = scmp.ne.s32.totalorder %s45, %s47
    %p54 = scmp.eq.s32.totalorder %s16, 1
    %p55 = por %p53, %p54
    %p56 = scmp.ne.s32.totalorder %s47, %s48
    %p57 = scmp.eq.s32.totalorder %s16, 0
    %p58 = por %p56, %p57
    %p59 = scmp.ne.s32.totalorder %s47, %s48
    %p60 = scmp.eq.s32.totalorder %s17, 1
    %p61 = por %p59, %p60
    %p63 = scmp.ne.s32.totalorder %s48, %s62
    %p64 = scmp.eq.s32.totalorder %s17, 0
    %p65 = por %p63, %p64
    %s67 = sadd.s32 %s66, 1
    %p70 = scmp.eq.s32.totalorder %s11, 1
    %p71 = scmp.ne.s32.totalorder %s66, %s68
    %p72 = scmp.eq.s32.totalorder %s11, 0
    %p73 = por %p71, %p72
    %p74 = scmp.ne.s32.totalorder %s66, %s68
    %p75 = scmp.eq.s32.totalorder %s16, 1
    %p76 = por %p74, %p75
    %p77 = scmp.ne.s32.totalorder %s68, %s69
    %p78 = scmp.eq.s32.totalorder %s16, 0
    %p79 = por %p77, %p78
    %p80 = scmp.ne.s32.totalorder %s68, %s69
    %p81 = scmp.eq.s32.totalorder %s17, 1
    %p82 = por %p80, %p81
    %p84 = scmp.ne.s32.totalorder %s69, %s83
    %p85 = scmp.eq.s32.totalorder %s17, 0
    %p86 = por %p84, %p85
    %s88 = sadd.s32 %s87, 1
    %p91 = scmp.eq.s32.totalorder %s11, 1
    %p92 = scmp.ne.s32.totalorder %s87, %s89
    %p93 = scmp.eq.s32.totalorder %s11, 0
    %p94 = por %p92, %p93
    %p95 = scmp.ne.s32.totalorder %s87, %s89
    %p96 = scmp.eq.s32.totalorder %s16, 1
    %p97 = por %p95, %p96
    %p98 = scmp.ne.s32.totalorder %s89, %s90
    %p99 = scmp.eq.s32.totalorder %s16, 0
    %p100 = por %p98, %p99
    %p101 = scmp.ne.s32.totalorder %s89, %s90
    %p102 = scmp.eq.s32.totalorder %s17, 1
    %p103 = por %p101, %p102
    %p105 = scmp.ne.s32.totalorder %s90, %s104
    %p106 = scmp.eq.s32.totalorder %s17, 0
    %p107 = por %p105, %p106
    %s109 = sadd.s32 %s108, 1
    %p112 = scmp.eq.s32.totalorder %s11, 1
    %p113 = scmp.ne.s32.totalorder %s108, %s110
    %p114 = scmp.eq.s32.totalorder %s11, 0
    %p115 = por %p113, %p114
    %p116 = scmp.ne.s32.totalorder %s108, %s110
    %p117 = scmp.eq.s32.totalorder %s16, 1
    %p118 = por %p116, %p117
    %p119 = scmp.ne.s32.totalorder %s110, %s111
    %p120 = scmp.eq.s32.totalorder %s16, 0
    %p121 = por %p119, %p120
    %p122 = scmp.ne.s32.totalorder %s110, %s111
    %p123 = scmp.eq.s32.totalorder %s17, 1
    %p124 = por %p122, %p123
    %p126 = scmp.ne.s32.totalorder %s111, %s125
    %p127 = scmp.eq.s32.totalorder %s17, 0
    %p128 = por %p126, %p127
    %s129 = ssub.s32 %s11, %s18
    %p130 = scmp.eq.s32.totalorder %s129, 0
    %s132 = sadd.s32 %s131, 1
    %s133 = scalar_select %p130, %s131, %s132
    %p136 = pneg %p130
    %p137 = scmp.eq.s32.totalorder %s11, 1
    %p138 = por %p136, %p137
    %p139 = scmp.ne.s32.totalorder %s131, %s134
    %p140 = scmp.eq.s32.totalorder %s11, 0
    %p141 = por %p139, %p140
    %p142 = scmp.ne.s32.totalorder %s131, %s134
    %p143 = scmp.eq.s32.totalorder %s16, 1
    %p144 = por %p142, %p143
    %p145 = scmp.ne.s32.totalorder %s134, %s135
    %p146 = scmp.eq.s32.totalorder %s16, 0
    %p147 = por %p145, %p146
    %p148 = scmp.ne.s32.totalorder %s134, %s135
    %p149 = scmp.eq.s32.totalorder %s17, 1
    %p150 = por %p148, %p149
    %p152 = scmp.ne.s32.totalorder %s135, %s151
    %p153 = scmp.eq.s32.totalorder %s17, 0
    %p154 = por %p152, %p153
    %p155 = scmp.le.s32.totalorder 1, %s11
    %p156 = scmp.lt.s32.totalorder %s11, 3
    %p157 = pnand %p155, %p156
    %p158 = pneg %p157
    // Predicated region
    $region9: #{_lambda_.9} parent=5 // pred_check
      _
    $region10: #{_lambda_.9} parent=5 // pred_check_branch
      %160 = sbr.rel (%p157) target = $region12
    $region11: #{_lambda_.9} parent=5 // pred_region
      %s161 = ssub.s32 %s11, 1
      // Predicated region
      $region13: #{_lambda_.9} parent=11 // pred_check
        %p162 = pneg %p58
      $region14: #{_lambda_.9} parent=11 // pred_check_branch
        %164 = sbr.rel (%p162) target = $region16
      $region15: #{_lambda_.9} parent=11 // pred_region
        _
      $region16: #{_lambda_.9} parent=11 // pred_fallthru
        _
      // Predicated region
      $region17: #{_lambda_.9} parent=11 // pred_check
        %p165 = pneg %p79
      $region18: #{_lambda_.9} parent=11 // pred_check_branch
        %167 = sbr.rel (%p165) target = $region20
      $region19: #{_lambda_.9} parent=11 // pred_region
        _
      $region20: #{_lambda_.9} parent=11 // pred_fallthru
        _
      // Predicated region
      $region21: #{_lambda_.9} parent=11 // pred_check
        %p168 = pneg %p100
      $region22: #{_lambda_.9} parent=11 // pred_check_branch
        %170 = sbr.rel (%p168) target = $region24
      $region23: #{_lambda_.9} parent=11 // pred_region
        _
      $region24: #{_lambda_.9} parent=11 // pred_fallthru
        _
      // Predicated region
      $region25: #{_lambda_.9} parent=11 // pred_check
        %p171 = pneg %p121
      $region26: #{_lambda_.9} parent=11 // pred_check_branch
        %173 = sbr.rel (%p171) target = $region28
      $region27: #{_lambda_.9} parent=11 // pred_region
        _
      $region28: #{_lambda_.9} parent=11 // pred_fallthru
        _
    $region12: #{_lambda_.9} parent=5 // pred_fallthru
      _
    %p174 = scmp.lt.s32.totalorder %s11, 2
    // Predicated region
    $region29: #{_lambda_.9} parent=5 // pred_check
      %p175 = pneg %p174
    $region30: #{_lambda_.9} parent=5 // pred_check_branch
      %177 = sbr.rel (%p175) target = $region32
    $region31: #{_lambda_.9} parent=5 // pred_region
      // Predicated region
      $region33: #{_lambda_.9} parent=31 // pred_check
        %p178 = pneg %p31
      $region34: #{_lambda_.9} parent=31 // pred_check_branch
        %180 = sbr.rel (%p178) target = $region36
      $region35: #{_lambda_.9} parent=31 // pred_region
        %p181 = scmp.lt.s32.totalorder %s11, 1
        %s182 = scalar_select %p181, %s11, 1
        %s183 = smul.addr %s182, 8
        %s184 = scalar_lea.vmem %s0, %s183
      $region36: #{_lambda_.9} parent=31 // pred_fallthru
        _
    $region32: #{_lambda_.9} parent=5 // pred_fallthru
      _
    %p185 = scmp.le.s32.totalorder 1, %s11
    %p186 = scmp.lt.s32.totalorder %s11, 3
    %p187 = pnand %p185, %p186
    %p188 = pneg %p187
    // Predicated region
    $region37: #{_lambda_.9} parent=5 // pred_check
      _
    $region38: #{_lambda_.9} parent=5 // pred_check_branch
      %190 = sbr.rel (%p187) target = $region40
    $region39: #{_lambda_.9} parent=5 // pred_region
      %s191 = ssub.s32 %s11, 1
      %p192 = scmp.lt.s32.totalorder %s16, 1
      %s193 = scalar_select %p192, %s16, 1
      %s194 = smul.addr %s193, 8
      %s195 = scalar_lea.vmem %s0, %s194
      %p196 = pneg %p37
      %p197 = pneg %p34
      %p198 = pneg %p58
      %p199 = pneg %p55
      %p200 = pneg %p79
      %p201 = pneg %p76
      %p202 = pneg %p100
      %p203 = pneg %p97
      %p204 = pneg %p121
      %p205 = pneg %p118
      %p206 = pneg %p147
      %p207 = pneg %p144
      %p208 = scmp.lt.s32.totalorder %s16, 1
      %s209 = scalar_select %p208, %s16, 1
      %s210 = smul.addr %s209, 8
      %s211 = scalar_lea.vmem %s5, %s210
      %p212 = scmp.lt.s32.totalorder %s16, 1
      %s213 = scalar_select %p212, %s16, 1
      %s214 = smul.addr %s213, 8
      %s215 = scalar_lea.vmem %s0, %s214
      %p216 = scmp.lt.s32.totalorder %s16, 1
      %s217 = scalar_select %p216, %s16, 1
      %s218 = smul.addr %s217, 8
      %s219 = scalar_lea.vmem %s5, %s218
      %v221 = vld [vmem:[%s215] sm:$0xff]
      %v222 = vld [vmem:[%s1] sm:$0x1]
      %v223 = vld [vmem:[%s2] sm:$0x1]
      %vm224 = vcmask 261120
      %v225 = vsel %vm224, %v221, 0.0
      %226 = vadd.xlane.f32.xlu0 %v225
      %v227 = vpop.xlane.xlu0 %226
      %v228 = vrcp.pop 32.0
      %v229 = vmul.f32 32.0, %v228
      %v230 = vsub.f32 1.0, %v229
      %v231 = vmul.f32 %v228, %v230
      %v232 = vadd.f32 %v228, %v231
      %vm233 = vweird.f32 %v228
      %v234 = vsel %vm233, %v228, %v232
      %v235 = vmul.f32 %v227, %v234
      %v236 = vsub.f32 %v221, %v235
      %v237 = vmul.f32 %v236, %v236
      %v238 = vsel %vm224, %v237, 0.0
      %239 = vadd.xlane.f32.xlu0 %v238
      %v240 = vpop.xlane.xlu0 %239
      %v241 = vmul.f32 %v240, %v234
      %v242 = vadd.f32 %v241, 1e-05
      %v243 = vrsqrt.pop %v242
      %v244 = vmul.f32 %v243, %v242
      %v245 = vmul.f32 %v244, %v243
      %v246 = vmul.f32 0.5, %v245
      %v247 = vsub.f32 1.5, %v246
      %v248 = vmul.f32 %v243, %v247
      %vm249 = vweird.f32 %v242
      %vm250 = vweird.f32 %v243
      %vm251 = vmor %vm249, %vm250
      %v252 = vsel %vm251, %v243, %v248
      %v253 = vmul.f32 %v236, %v252
      %v255 = vperm.slane %v222, 0
      %v257 = vmul.f32 %v253, %v255
      %v259 = vperm.slane %v223, 0
      %v261 = vadd.f32 %v257, %v259
      %v262 = vld [vmem:[%s3] sm:$0xff]
      %v263 = vld [vmem:[%s3 + $0x8] sm:$0xff]
      %v264 = vld [vmem:[%s3 + $0x10] sm:$0xff]
      %v265 = vld [vmem:[%s3 + $0x18] sm:$0xff]
      %v266 = vpack.c.bf16 %v261, %v261
      %v267 = vpack.c.bf16 %v263, %v262
      %v268 = vpack.c.bf16 %v265, %v264
      %v269 = vld [vmem:[%s4] sm:$0x1]
      %v271 = vperm.slane %v269, 0
      %v274 = vsel %vm224, %v266, 0
      %276 = vmatpush.bf16.msra.mxu0 0
      %277 = vmatpush.bf16.msra.mxu0 0
      %278 = vmatpush.bf16.msra.mxu0 0
      %279 = vmatpush.bf16.msra.mxu0 0
      %280 = vmatpush.bf16.msra.mxu0 0
      %281 = vmatpush.bf16.msra.mxu0 0
      %282 = vmatpush.bf16.msra.mxu0 %v268
      %283 = vmatpush.bf16.msra.mxu0 %v267
      %284 = vmatmul.bf16.gmra.mxu0 %v274
      %v285 = vpop.f32.mrf.mxu0
      %v286 = vadd.f32 %v271, %v285
      %v287 = vpop.f32.mrf.mxu0
      %288 = vdwg.mxu0
      %vm289 = vcmask 31744
      %290 = vst.msk [vmem:[%s219] sm:$0xff] %vm289, %v286
      %p291 = scmp.lt.s32.totalorder %s16, 1
      %s292 = scalar_select %p291, %s16, 1
      %s293 = smul.addr %s292, 8
      %s294 = scalar_lea.vmem %s5, %s293
      // Predicated region
      $region41: #{_lambda_.9} parent=39 // pred_check
        %p295 = pneg %p144
      $region42: #{_lambda_.9} parent=39 // pred_check_branch
        %297 = sbr.rel (%p295) target = $region44
      $region43: #{_lambda_.9} parent=39 // pred_region
        _
      $region44: #{_lambda_.9} parent=39 // pred_fallthru
        _
    $region40: #{_lambda_.9} parent=5 // pred_fallthru
      _
    %p298 = scmp.le.s32.totalorder 2, %s11
    // Predicated region
    $region45: #{_lambda_.9} parent=5 // pred_check
      %p299 = pneg %p298
    $region46: #{_lambda_.9} parent=5 // pred_check_branch
      %301 = sbr.rel (%p299) target = $region48
    $region47: #{_lambda_.9} parent=5 // pred_region
      %s302 = ssub.s32 %s11, 2
      // Predicated region
      $region49: #{_lambda_.9} parent=47 // pred_check
        %p303 = pneg %p150
      $region50: #{_lambda_.9} parent=47 // pred_check_branch
        %305 = sbr.rel (%p303) target = $region52
      $region51: #{_lambda_.9} parent=47 // pred_region
        %p306 = scmp.lt.s32.totalorder %s17, 1
        %s307 = scalar_select %p306, %s17, 1
        %s308 = smul.addr %s307, 8
        %s309 = scalar_lea.vmem %s5, %s308
      $region52: #{_lambda_.9} parent=47 // pred_fallthru
        _
    $region48: #{_lambda_.9} parent=5 // pred_fallthru
      _
  $region6: #{_lambda_.9} parent=0 // loop_footer
    %s15 = sadd.s32 1, %s11
  $region7: #{_lambda_.9} parent=0 // loop_footer_branch
    %10 = sbr.rel target = $region3
  $region8: #{_lambda_.9} parent=0 // loop_exit
    _

// kernel: _lambda_.7
$region0: #{_lambda_.7}
  #allocation0 [shape = 'u32[]', space=smem, size = 0x4, offset = 0x4, fixed_abs, tag = 'smem constant byte address 0x4 - core index']
  #allocation1 [shape = 'u32[72,128]{1,0:T(1,128)}', space=vmem, size = 0x9000, scoped, tag = 'internal scratch']
  #allocation2 [shape = 'f32[8,32]{1,0:T(8,128)}', space=vmem, size = 0x1000, scoped, tag = 'scratch operand']
  %s0 = inlined_call_operand.vmem [shape: f32[2,8,32], index: 0, kind: input, shape index: {}]
  %s1 = inlined_call_operand.vmem [shape: f32[8,8], index: 1, kind: input, shape index: {}]
  %s2 = inlined_call_operand.vmem [shape: f32[32,100], index: 2, kind: input, shape index: {}]
  %s3 = inlined_call_operand.vmem [shape: f32[1,100], index: 3, kind: input, shape index: {}]
  %s4 = inlined_call_operand.vmem [shape: f32[32,32], index: 4, kind: input, shape index: {}]
  %s5 = inlined_call_operand.vmem [shape: f32[1,32], index: 5, kind: input, shape index: {}]
  %s6 = inlined_call_operand.vmem [shape: f32[32,32], index: 6, kind: input, shape index: {}]
  %s7 = inlined_call_operand.vmem [shape: f32[1,32], index: 7, kind: input, shape index: {}]
  %s8 = inlined_call_operand.vmem [shape: f32[32,32], index: 8, kind: input, shape index: {}]
  %s9 = inlined_call_operand.vmem [shape: f32[1,32], index: 9, kind: input, shape index: {}]
  %s10 = inlined_call_operand.vmem [shape: f32[1,32], index: 10, kind: input, shape index: {}]
  %s11 = inlined_call_operand.hbm [shape: f32[1,32], index: 11, kind: input, shape index: {}]
  %s12 = inlined_call_operand.hbm [shape: f32[1,32], index: 12, kind: input, shape index: {}]
  %s13 = inlined_call_operand.hbm [shape: f32[1,32], index: 13, kind: input, shape index: {}]
  %s14 = inlined_call_operand.vmem [shape: f32[2,8,32], index: 14, kind: output, shape index: {0}]
  %s15 = inlined_call_operand.hbm [shape: f32[2,4,8,8], index: 15, kind: output, shape index: {1}]
  %s16 = inlined_call_operand.hbm [shape: f32[2,4,8,8], index: 16, kind: output, shape index: {2}]
  %s17 = inlined_call_operand.vmem [shape: f32[2,4,8,1], index: 17, kind: output, shape index: {3}]
  %18 = xla_tuple %s14, %s15, %s16, %s17
  %s19 = sld [smem:[#allocation0]]
  $region125: #{_lambda_.7} parent=0
    _
  %s21 = ssub.s32 1, %s19
  %s22 = scalar_select 0, %s21, %s19
  $region1: #{_lambda_.7} parent=0
    #allocation3 [shape = 'u8[512]{0}', space=vmem, size = 0x400, scoped, tag = 'input window, operand 11, single buffered']
    #allocation4 [shape = 's32[2]{0}', space=sflag, size = 0x8, scoped, tag = 'scoped memory for _lambda_.7']
    #allocation5 [shape = 's32[2]{0}', space=sflag, size = 0x8, scoped, tag = 'scoped memory for _lambda_.7']
    #allocation6 [shape = 'u8[512]{0}', space=vmem, size = 0x400, scoped, tag = 'input window, operand 12, single buffered']
    #allocation7 [shape = 's32[1]{0}', space=sflag, size = 0x4, scoped, tag = 'scoped memory for _lambda_.7']
    #allocation8 [shape = 'u8[512]{0}', space=vmem, size = 0x400, scoped, tag = 'input window, operand 13, single buffered']
    #allocation9 [shape = 'u8[32768]{0}', space=vmem, size = 0x8000, scoped, tag = 'output window, operand 1']
    #allocation10 [shape = 'u8[32768]{0}', space=vmem, size = 0x8000, scoped, tag = 'output window, operand 2']
    #allocation11 [shape = 's32[2]{0}', space=sflag, size = 0x8, scoped, tag = 'scoped memory for _lambda_.7']
    %23 = vsyncpa [#allocation4], 0
    %24 = vsyncpa [#allocation7], 0
    %25 = vsyncpa [#allocation5], 0
    %s26 = scalar_lea.sflag [#allocation5], 1
    %27 = vsyncpa %s26, 0
    %28 = vsyncpa [#allocation11], 0
    %s29 = scalar_lea.sflag [#allocation11], 1
    %30 = vsyncpa %s29, 0
    loop: start=0, step=1, limit=4
    $region2: #{_lambda_.7} parent=1 // loop_pre_header
      _
    $region3: #{_lambda_.7} parent=1 // loop_header
      %s32 = sphi 0, %s36
      %p33 = scmp.ge.s32.totalorder %s32, 4
      %s42 = sphi 0, %s44
      %s45 = sphi 0, %s42
      %s46 = sphi 0, %s45
      %s62 = sphi 0, %s46
      %s66 = sphi 0, %s66
      %s68 = sphi 0, %s66
      %s69 = sphi 0, %s68
      %s83 = sphi 0, %s69
      %s87 = sphi 0, %s87
      %s89 = sphi 0, %s87
      %s90 = sphi 0, %s89
      %s104 = sphi 0, %s90
      %s108 = sphi 0, %s108
      %s110 = sphi 0, %s108
      %s111 = sphi 0, %s110
      %s125 = sphi 0, %s111
      %s129 = sphi 0, %s129
      %s131 = sphi 0, %s129
      %s132 = sphi 0, %s131
      %s146 = sphi 0, %s132
      %s150 = sphi 0, %s150
      %s152 = sphi 0, %s150
      %s153 = sphi 0, %s152
      %s167 = sphi 0, %s153
      %s171 = sphi 0, %s171
      %s173 = sphi 0, %s171
      %s174 = sphi 0, %s173
      %s188 = sphi 0, %s174
      %s192 = sphi 0, %s192
      %s194 = sphi 0, %s192
      %s195 = sphi 0, %s194
      %s209 = sphi 0, %s195
      %s213 = sphi 0, %s213
      %s215 = sphi 0, %s213
      %s216 = sphi 0, %s215
      %s230 = sphi 0, %s216
      %s234 = sphi 0, %s234
      %s236 = sphi 0, %s234
      %s237 = sphi 0, %s236
      %s251 = sphi 0, %s237
      %s255 = sphi 0, %s255
      %s257 = sphi 0, %s255
      %s258 = sphi 0, %s257
      %s272 = sphi 0, %s258
      %s276 = sphi 0, %s276
      %s278 = sphi 0, %s276
      %s279 = sphi 0, %s278
      %s293 = sphi 0, %s279
      %s297 = sphi 0, %s297
      %s299 = sphi 0, %s297
      %s300 = sphi 0, %s299
      %s314 = sphi 0, %s300
      %s318 = sphi 0, %s318
      %s320 = sphi 0, %s318
      %s321 = sphi 0, %s320
      %s335 = sphi 0, %s321
      %s341 = sphi 0, %s343
      %s344 = sphi 0, %s341
      %s345 = sphi 0, %s344
      %s361 = sphi 0, %s345
      %s367 = sphi 0, %s369
      %s370 = sphi 0, %s367
      %s371 = sphi 0, %s370
      %s387 = sphi 0, %s371
      %s393 = sphi 0, %s395
      %s396 = sphi 0, %s393
      %s397 = sphi 0, %s396
      %s413 = sphi 0, %s397
      %s419 = sphi 0, %s421
      %s422 = sphi 0, %s419
      %s423 = sphi 0, %s422
      %s439 = sphi 0, %s423
    $region4: #{_lambda_.7} parent=1 // loop_header_branch
      %35 = sbr.rel (%p33) target = $region8
    $region5: #{_lambda_.7} parent=1 // loop_body
      %s37 = ssub.s32 %s32, 1
      %s38 = ssub.s32 %s32, 2
      %s39 = sadd.s32 %s32, 1
      %s40 = ssub.s32 %s32, %s39
      %p41 = scmp.eq.s32.totalorder %s40, 0
      %s43 = sadd.s32 %s42, 1
      %s44 = scalar_select %p41, %s42, %s43
      %p47 = pneg %p41
      %p48 = scmp.eq.s32.totalorder %s32, 1
      %p49 = por %p47, %p48
      %p50 = scmp.ne.s32.totalorder %s42, %s45
      %p51 = scmp.eq.s32.totalorder %s32, 0
      %p52 = por %p50, %p51
      %p53 = scmp.ne.s32.totalorder %s42, %s45
      %p54 = scmp.eq.s32.totalorder %s37, 1
      %p55 = por %p53, %p54
      %p56 = scmp.ne.s32.totalorder %s45, %s46
      %p57 = scmp.eq.s32.totalorder %s37, 0
      %p58 = por %p56, %p57
      %p59 = scmp.ne.s32.totalorder %s45, %s46
      %p60 = scmp.eq.s32.totalorder %s38, 1
      %p61 = por %p59, %p60
      %p63 = scmp.ne.s32.totalorder %s46, %s62
      %p64 = scmp.eq.s32.totalorder %s38, 0
      %p65 = por %p63, %p64
      %s67 = sadd.s32 %s66, 1
      %p70 = scmp.eq.s32.totalorder %s32, 1
      %p71 = scmp.ne.s32.totalorder %s66, %s68
      %p72 = scmp.eq.s32.totalorder %s32, 0
      %p73 = por %p71, %p72
      %p74 = scmp.ne.s32.totalorder %s66, %s68
      %p75 = scmp.eq.s32.totalorder %s37, 1
      %p76 = por %p74, %p75
      %p77 = scmp.ne.s32.totalorder %s68, %s69
      %p78 = scmp.eq.s32.totalorder %s37, 0
      %p79 = por %p77, %p78
      %p80 = scmp.ne.s32.totalorder %s68, %s69
      %p81 = scmp.eq.s32.totalorder %s38, 1
      %p82 = por %p80, %p81
      %p84 = scmp.ne.s32.totalorder %s69, %s83
      %p85 = scmp.eq.s32.totalorder %s38, 0
      %p86 = por %p84, %p85
      %s88 = sadd.s32 %s87, 1
      %p91 = scmp.eq.s32.totalorder %s32, 1
      %p92 = scmp.ne.s32.totalorder %s87, %s89
      %p93 = scmp.eq.s32.totalorder %s32, 0
      %p94 = por %p92, %p93
      %p95 = scmp.ne.s32.totalorder %s87, %s89
      %p96 = scmp.eq.s32.totalorder %s37, 1
      %p97 = por %p95, %p96
      %p98 = scmp.ne.s32.totalorder %s89, %s90
      %p99 = scmp.eq.s32.totalorder %s37, 0
      %p100 = por %p98, %p99
      %p101 = scmp.ne.s32.totalorder %s89, %s90
      %p102 = scmp.eq.s32.totalorder %s38, 1
      %p103 = por %p101, %p102
      %p105 = scmp.ne.s32.totalorder %s90, %s104
      %p106 = scmp.eq.s32.totalorder %s38, 0
      %p107 = por %p105, %p106
      %s109 = sadd.s32 %s108, 1
      %p112 = scmp.eq.s32.totalorder %s32, 1
      %p113 = scmp.ne.s32.totalorder %s108, %s110
      %p114 = scmp.eq.s32.totalorder %s32, 0
      %p115 = por %p113, %p114
      %p116 = scmp.ne.s32.totalorder %s108, %s110
      %p117 = scmp.eq.s32.totalorder %s37, 1
      %p118 = por %p116, %p117
      %p119 = scmp.ne.s32.totalorder %s110, %s111
      %p120 = scmp.eq.s32.totalorder %s37, 0
      %p121 = por %p119, %p120
      %p122 = scmp.ne.s32.totalorder %s110, %s111
      %p123 = scmp.eq.s32.totalorder %s38, 1
      %p124 = por %p122, %p123
      %p126 = scmp.ne.s32.totalorder %s111, %s125
      %p127 = scmp.eq.s32.totalorder %s38, 0
      %p128 = por %p126, %p127
      %s130 = sadd.s32 %s129, 1
      %p133 = scmp.eq.s32.totalorder %s32, 1
      %p134 = scmp.ne.s32.totalorder %s129, %s131
      %p135 = scmp.eq.s32.totalorder %s32, 0
      %p136 = por %p134, %p135
      %p137 = scmp.ne.s32.totalorder %s129, %s131
      %p138 = scmp.eq.s32.totalorder %s37, 1
      %p139 = por %p137, %p138
      %p140 = scmp.ne.s32.totalorder %s131, %s132
      %p141 = scmp.eq.s32.totalorder %s37, 0
      %p142 = por %p140, %p141
      %p143 = scmp.ne.s32.totalorder %s131, %s132
      %p144 = scmp.eq.s32.totalorder %s38, 1
      %p145 = por %p143, %p144
      %p147 = scmp.ne.s32.totalorder %s132, %s146
      %p148 = scmp.eq.s32.totalorder %s38, 0
      %p149 = por %p147, %p148
      %s151 = sadd.s32 %s150, 1
      %p154 = scmp.eq.s32.totalorder %s32, 1
      %p155 = scmp.ne.s32.totalorder %s150, %s152
      %p156 = scmp.eq.s32.totalorder %s32, 0
      %p157 = por %p155, %p156
      %p158 = scmp.ne.s32.totalorder %s150, %s152
      %p159 = scmp.eq.s32.totalorder %s37, 1
      %p160 = por %p158, %p159
      %p161 = scmp.ne.s32.totalorder %s152, %s153
      %p162 = scmp.eq.s32.totalorder %s37, 0
      %p163 = por %p161, %p162
      %p164 = scmp.ne.s32.totalorder %s152, %s153
      %p165 = scmp.eq.s32.totalorder %s38, 1
      %p166 = por %p164, %p165
      %p168 = scmp.ne.s32.totalorder %s153, %s167
      %p169 = scmp.eq.s32.totalorder %s38, 0
      %p170 = por %p168, %p169
      %s172 = sadd.s32 %s171, 1
      %p175 = scmp.eq.s32.totalorder %s32, 1
      %p176 = scmp.ne.s32.totalorder %s171, %s173
      %p177 = scmp.eq.s32.totalorder %s32, 0
      %p178 = por %p176, %p177
      %p179 = scmp.ne.s32.totalorder %s171, %s173
      %p180 = scmp.eq.s32.totalorder %s37, 1
      %p181 = por %p179, %p180
      %p182 = scmp.ne.s32.totalorder %s173, %s174
      %p183 = scmp.eq.s32.totalorder %s37, 0
      %p184 = por %p182, %p183
      %p185 = scmp.ne.s32.totalorder %s173, %s174
      %p186 = scmp.eq.s32.totalorder %s38, 1
      %p187 = por %p185, %p186
      %p189 = scmp.ne.s32.totalorder %s174, %s188
      %p190 = scmp.eq.s32.totalorder %s38, 0
      %p191 = por %p189, %p190
      %s193 = sadd.s32 %s192, 1
      %p196 = scmp.eq.s32.totalorder %s32, 1
      %p197 = scmp.ne.s32.totalorder %s192, %s194
      %p198 = scmp.eq.s32.totalorder %s32, 0
      %p199 = por %p197, %p198
      %p200 = scmp.ne.s32.totalorder %s192, %s194
      %p201 = scmp.eq.s32.totalorder %s37, 1
      %p202 = por %p200, %p201
      %p203 = scmp.ne.s32.totalorder %s194, %s195
      %p204 = scmp.eq.s32.totalorder %s37, 0
      %p205 = por %p203, %p204
      %p206 = scmp.ne.s32.totalorder %s194, %s195
      %p207 = scmp.eq.s32.totalorder %s38, 1
      %p208 = por %p206, %p207
      %p210 = scmp.ne.s32.totalorder %s195, %s209
      %p211 = scmp.eq.s32.totalorder %s38, 0
      %p212 = por %p210, %p211
      %s214 = sadd.s32 %s213, 1
      %p217 = scmp.eq.s32.totalorder %s32, 1
      %p218 = scmp.ne.s32.totalorder %s213, %s215
      %p219 = scmp.eq.s32.totalorder %s32, 0
      %p220 = por %p218, %p219
      %p221 = scmp.ne.s32.totalorder %s213, %s215
      %p222 = scmp.eq.s32.totalorder %s37, 1
      %p223 = por %p221, %p222
      %p224 = scmp.ne.s32.totalorder %s215, %s216
      %p225 = scmp.eq.s32.totalorder %s37, 0
      %p226 = por %p224, %p225
      %p227 = scmp.ne.s32.totalorder %s215, %s216
      %p228 = scmp.eq.s32.totalorder %s38, 1
      %p229 = por %p227, %p228
      %p231 = scmp.ne.s32.totalorder %s216, %s230
      %p232 = scmp.eq.s32.totalorder %s38, 0
      %p233 = por %p231, %p232
      %s235 = sadd.s32 %s234, 1
      %p238 = scmp.eq.s32.totalorder %s32, 1
      %p239 = scmp.ne.s32.totalorder %s234, %s236
      %p240 = scmp.eq.s32.totalorder %s32, 0
      %p241 = por %p239, %p240
      %p242 = scmp.ne.s32.totalorder %s234, %s236
      %p243 = scmp.eq.s32.totalorder %s37, 1
      %p244 = por %p242, %p243
      %p245 = scmp.ne.s32.totalorder %s236, %s237
      %p246 = scmp.eq.s32.totalorder %s37, 0
      %p247 = por %p245, %p246
      %p248 = scmp.ne.s32.totalorder %s236, %s237
      %p249 = scmp.eq.s32.totalorder %s38, 1
      %p250 = por %p248, %p249
      %p252 = scmp.ne.s32.totalorder %s237, %s251
      %p253 = scmp.eq.s32.totalorder %s38, 0
      %p254 = por %p252, %p253
      %s256 = sadd.s32 %s255, 1
      %p259 = scmp.eq.s32.totalorder %s32, 1
      %p260 = scmp.ne.s32.totalorder %s255, %s257
      %p261 = scmp.eq.s32.totalorder %s32, 0
      %p262 = por %p260, %p261
      %p263 = scmp.ne.s32.totalorder %s255, %s257
      %p264 = scmp.eq.s32.totalorder %s37, 1
      %p265 = por %p263, %p264
      %p266 = scmp.ne.s32.totalorder %s257, %s258
      %p267 = scmp.eq.s32.totalorder %s37, 0
      %p268 = por %p266, %p267
      %p269 = scmp.ne.s32.totalorder %s257, %s258
      %p270 = scmp.eq.s32.totalorder %s38, 1
      %p271 = por %p269, %p270
      %p273 = scmp.ne.s32.totalorder %s258, %s272
      %p274 = scmp.eq.s32.totalorder %s38, 0
      %p275 = por %p273, %p274
      %s277 = sadd.s32 %s276, 1
      %p280 = scmp.eq.s32.totalorder %s32, 1
      %p281 = scmp.ne.s32.totalorder %s276, %s278
      %p282 = scmp.eq.s32.totalorder %s32, 0
      %p283 = por %p281, %p282
      %p284 = scmp.ne.s32.totalorder %s276, %s278
      %p285 = scmp.eq.s32.totalorder %s37, 1
      %p286 = por %p284, %p285
      %p287 = scmp.ne.s32.totalorder %s278, %s279
      %p288 = scmp.eq.s32.totalorder %s37, 0
      %p289 = por %p287, %p288
      %p290 = scmp.ne.s32.totalorder %s278, %s279
      %p291 = scmp.eq.s32.totalorder %s38, 1
      %p292 = por %p290, %p291
      %p294 = scmp.ne.s32.totalorder %s279, %s293
      %p295 = scmp.eq.s32.totalorder %s38, 0
      %p296 = por %p294, %p295
      %s298 = sadd.s32 %s297, 1
      %p301 = scmp.eq.s32.totalorder %s32, 1
      %p302 = scmp.ne.s32.totalorder %s297, %s299
      %p303 = scmp.eq.s32.totalorder %s32, 0
      %p304 = por %p302, %p303
      %p305 = scmp.ne.s32.totalorder %s297, %s299
      %p306 = scmp.eq.s32.totalorder %s37, 1
      %p307 = por %p305, %p306
      %p308 = scmp.ne.s32.totalorder %s299, %s300
      %p309 = scmp.eq.s32.totalorder %s37, 0
      %p310 = por %p308, %p309
      %p311 = scmp.ne.s32.totalorder %s299, %s300
      %p312 = scmp.eq.s32.totalorder %s38, 1
      %p313 = por %p311, %p312
      %p315 = scmp.ne.s32.totalorder %s300, %s314
      %p316 = scmp.eq.s32.totalorder %s38, 0
      %p317 = por %p315, %p316
      %s319 = sadd.s32 %s318, 1
      %p322 = scmp.eq.s32.totalorder %s32, 1
      %p323 = scmp.ne.s32.totalorder %s318, %s320
      %p324 = scmp.eq.s32.totalorder %s32, 0
      %p325 = por %p323, %p324
      %p326 = scmp.ne.s32.totalorder %s318, %s320
      %p327 = scmp.eq.s32.totalorder %s37, 1
      %p328 = por %p326, %p327
      %p329 = scmp.ne.s32.totalorder %s320, %s321
      %p330 = scmp.eq.s32.totalorder %s37, 0
      %p331 = por %p329, %p330
      %p332 = scmp.ne.s32.totalorder %s320, %s321
      %p333 = scmp.eq.s32.totalorder %s38, 1
      %p334 = por %p332, %p333
      %p336 = scmp.ne.s32.totalorder %s321, %s335
      %p337 = scmp.eq.s32.totalorder %s38, 0
      %p338 = por %p336, %p337
      %s339 = ssub.s32 %s32, %s39
      %p340 = scmp.eq.s32.totalorder %s339, 0
      %s342 = sadd.s32 %s341, 1
      %s343 = scalar_select %p340, %s341, %s342
      %p346 = pneg %p340
      %p347 = scmp.eq.s32.totalorder %s32, 1
      %p348 = por %p346, %p347
      %p349 = scmp.ne.s32.totalorder %s341, %s344
      %p350 = scmp.eq.s32.totalorder %s32, 0
      %p351 = por %p349, %p350
      %p352 = scmp.ne.s32.totalorder %s341, %s344
      %p353 = scmp.eq.s32.totalorder %s37, 1
      %p354 = por %p352, %p353
      %p355 = scmp.ne.s32.totalorder %s344, %s345
      %p356 = scmp.eq.s32.totalorder %s37, 0
      %p357 = por %p355, %p356
      %p358 = scmp.ne.s32.totalorder %s344, %s345
      %p359 = scmp.eq.s32.totalorder %s38, 1
      %p360 = por %p358, %p359
      %p362 = scmp.ne.s32.totalorder %s345, %s361
      %p363 = scmp.eq.s32.totalorder %s38, 0
      %p364 = por %p362, %p363
      %s365 = ssub.s32 %s32, %s39
      %p366 = scmp.eq.s32.totalorder %s365, 0
      %s368 = sadd.s32 %s367, 1
      %s369 = scalar_select %p366, %s367, %s368
      %p372 = pneg %p366
      %p373 = scmp.eq.s32.totalorder %s32, 1
      %p374 = por %p372, %p373
      %p375 = scmp.ne.s32.totalorder %s367, %s370
      %p376 = scmp.eq.s32.totalorder %s32, 0
      %p377 = por %p375, %p376
      %p378 = scmp.ne.s32.totalorder %s367, %s370
      %p379 = scmp.eq.s32.totalorder %s37, 1
      %p380 = por %p378, %p379
      %p381 = scmp.ne.s32.totalorder %s370, %s371
      %p382 = scmp.eq.s32.totalorder %s37, 0
      %p383 = por %p381, %p382
      %p384 = scmp.ne.s32.totalorder %s370, %s371
      %p385 = scmp.eq.s32.totalorder %s38, 1
      %p386 = por %p384, %p385
      %p388 = scmp.ne.s32.totalorder %s371, %s387
      %p389 = scmp.eq.s32.totalorder %s38, 0
      %p390 = por %p388, %p389
      %s391 = ssub.s32 %s32, %s39
      %p392 = scmp.eq.s32.totalorder %s391, 0
      %s394 = sadd.s32 %s393, 1
      %s395 = scalar_select %p392, %s393, %s394
      %p398 = pneg %p392
      %p399 = scmp.eq.s32.totalorder %s32, 1
      %p400 = por %p398, %p399
      %p401 = scmp.ne.s32.totalorder %s393, %s396
      %p402 = scmp.eq.s32.totalorder %s32, 0
      %p403 = por %p401, %p402
      %p404 = scmp.ne.s32.totalorder %s393, %s396
      %p405 = scmp.eq.s32.totalorder %s37, 1
      %p406 = por %p404, %p405
      %p407 = scmp.ne.s32.totalorder %s396, %s397
      %p408 = scmp.eq.s32.totalorder %s37, 0
      %p409 = por %p407, %p408
      %p410 = scmp.ne.s32.totalorder %s396, %s397
      %p411 = scmp.eq.s32.totalorder %s38, 1
      %p412 = por %p410, %p411
      %p414 = scmp.ne.s32.totalorder %s397, %s413
      %p415 = scmp.eq.s32.totalorder %s38, 0
      %p416 = por %p414, %p415
      %s417 = ssub.s32 %s32, %s39
      %p418 = scmp.eq.s32.totalorder %s417, 0
      %s420 = sadd.s32 %s419, 1
      %s421 = scalar_select %p418, %s419, %s420
      %p424 = pneg %p418
      %p425 = scmp.eq.s32.totalorder %s32, 1
      %p426 = por %p424, %p425
      %p427 = scmp.ne.s32.totalorder %s419, %s422
      %p428 = scmp.eq.s32.totalorder %s32, 0
      %p429 = por %p427, %p428
      %p430 = scmp.ne.s32.totalorder %s419, %s422
      %p431 = scmp.eq.s32.totalorder %s37, 1
      %p432 = por %p430, %p431
      %p433 = scmp.ne.s32.totalorder %s422, %s423
      %p434 = scmp.eq.s32.totalorder %s37, 0
      %p435 = por %p433, %p434
      %p436 = scmp.ne.s32.totalorder %s422, %s423
      %p437 = scmp.eq.s32.totalorder %s38, 1
      %p438 = por %p436, %p437
      %p440 = scmp.ne.s32.totalorder %s423, %s439
      %p441 = scmp.eq.s32.totalorder %s38, 0
      %p442 = por %p440, %p441
      %p443 = scmp.le.s32.totalorder 1, %s32
      %p444 = scmp.lt.s32.totalorder %s32, 3
      %p445 = pnand %p443, %p444
      %p446 = pneg %p445
      // Predicated region
      $region9: #{_lambda_.7} parent=5 // pred_check
        _
      $region10: #{_lambda_.7} parent=5 // pred_check_branch
        %448 = sbr.rel (%p445) target = $region12
      $region11: #{_lambda_.7} parent=5 // pred_region
        %s449 = ssub.s32 %s32, 1
        // Predicated region
        $region13: #{_lambda_.7} parent=11 // pred_check
          %p450 = pneg %p79
        $region14: #{_lambda_.7} parent=11 // pred_check_branch
          %452 = sbr.rel (%p450) target = $region16
        $region15: #{_lambda_.7} parent=11 // pred_region
          _
        $region16: #{_lambda_.7} parent=11 // pred_fallthru
          _
        // Predicated region
        $region17: #{_lambda_.7} parent=11 // pred_check
          %p453 = pneg %p100
        $region18: #{_lambda_.7} parent=11 // pred_check_branch
          %455 = sbr.rel (%p453) target = $region20
        $region19: #{_lambda_.7} parent=11 // pred_region
          _
        $region20: #{_lambda_.7} parent=11 // pred_fallthru
          _
        // Predicated region
        $region21: #{_lambda_.7} parent=11 // pred_check
          %p456 = pneg %p121
        $region22: #{_lambda_.7} parent=11 // pred_check_branch
          %458 = sbr.rel (%p456) target = $region24
        $region23: #{_lambda_.7} parent=11 // pred_region
          _
        $region24: #{_lambda_.7} parent=11 // pred_fallthru
          _
        // Predicated region
        $region25: #{_lambda_.7} parent=11 // pred_check
          %p459 = pneg %p142
        $region26: #{_lambda_.7} parent=11 // pred_check_branch
          %461 = sbr.rel (%p459) target = $region28
        $region27: #{_lambda_.7} parent=11 // pred_region
          _
        $region28: #{_lambda_.7} parent=11 // pred_fallthru
          _
        // Predicated region
        $region29: #{_lambda_.7} parent=11 // pred_check
          %p462 = pneg %p163
        $region30: #{_lambda_.7} parent=11 // pred_check_branch
          %464 = sbr.rel (%p462) target = $region32
        $region31: #{_lambda_.7} parent=11 // pred_region
          _
        $region32: #{_lambda_.7} parent=11 // pred_fallthru
          _
        // Predicated region
        $region33: #{_lambda_.7} parent=11 // pred_check
          %p465 = pneg %p184
        $region34: #{_lambda_.7} parent=11 // pred_check_branch
          %467 = sbr.rel (%p465) target = $region36
        $region35: #{_lambda_.7} parent=11 // pred_region
          _
        $region36: #{_lambda_.7} parent=11 // pred_fallthru
          _
        // Predicated region
        $region37: #{_lambda_.7} parent=11 // pred_check
          %p468 = pneg %p205
        $region38: #{_lambda_.7} parent=11 // pred_check_branch
          %470 = sbr.rel (%p468) target = $region40
        $region39: #{_lambda_.7} parent=11 // pred_region
          _
        $region40: #{_lambda_.7} parent=11 // pred_fallthru
          _
        // Predicated region
        $region41: #{_lambda_.7} parent=11 // pred_check
          %p471 = pneg %p226
        $region42: #{_lambda_.7} parent=11 // pred_check_branch
          %473 = sbr.rel (%p471) target = $region44
        $region43: #{_lambda_.7} parent=11 // pred_region
          _
        $region44: #{_lambda_.7} parent=11 // pred_fallthru
          _
        // Predicated region
        $region45: #{_lambda_.7} parent=11 // pred_check
          %p474 = pneg %p247
        $region46: #{_lambda_.7} parent=11 // pred_check_branch
          %476 = sbr.rel (%p474) target = $region48
        $region47: #{_lambda_.7} parent=11 // pred_region
          _
        $region48: #{_lambda_.7} parent=11 // pred_fallthru
          _
        // Predicated region
        $region49: #{_lambda_.7} parent=11 // pred_check
          %p477 = pneg %p268
        $region50: #{_lambda_.7} parent=11 // pred_check_branch
          %479 = sbr.rel (%p477) target = $region52
        $region51: #{_lambda_.7} parent=11 // pred_region
          _
        $region52: #{_lambda_.7} parent=11 // pred_fallthru
          _
        // Predicated region
        $region53: #{_lambda_.7} parent=11 // pred_check
          %p480 = pneg %p289
        $region54: #{_lambda_.7} parent=11 // pred_check_branch
          %482 = sbr.rel (%p480) target = $region56
        $region55: #{_lambda_.7} parent=11 // pred_region
          %484 = vsyncadd [#allocation4], 0
          %s486 = sshll.u32 %s11, 4
          %s487 = int_to_ptr.hbm [resolvable:$true] %s486
          %s488 = sshll.u32 [#allocation3], 4
          %s489 = int_to_ptr.vmem [resolvable:$true] %s488
          %491 = dma.hbm_to_vmem [thread:$0]  %s487, 16, %s489, [#allocation4]
        $region56: #{_lambda_.7} parent=11 // pred_fallthru
          _
        // Predicated region
        $region57: #{_lambda_.7} parent=11 // pred_check
          %p492 = pneg %p310
        $region58: #{_lambda_.7} parent=11 // pred_check_branch
          %494 = sbr.rel (%p492) target = $region60
        $region59: #{_lambda_.7} parent=11 // pred_region
          %496 = vsyncadd [#allocation7], 0
          %s498 = sshll.u32 %s12, 4
          %s499 = int_to_ptr.hbm [resolvable:$true] %s498
          %s500 = sshll.u32 [#allocation6], 4
          %s501 = int_to_ptr.vmem [resolvable:$true] %s500
          %503 = dma.hbm_to_vmem [thread:$0]  %s499, 16, %s501, [#allocation7]
        $region60: #{_lambda_.7} parent=11 // pred_fallthru
          _
        // Predicated region
        $region61: #{_lambda_.7} parent=11 // pred_check
          %p504 = pneg %p331
        $region62: #{_lambda_.7} parent=11 // pred_check_branch
          %506 = sbr.rel (%p504) target = $region64
        $region63: #{_lambda_.7} parent=11 // pred_region
          %508 = vsyncadd [#allocation7], 0
          %s510 = sshll.u32 %s13, 4
          %s511 = int_to_ptr.hbm [resolvable:$true] %s510
          %s512 = sshll.u32 [#allocation8], 4
          %s513 = int_to_ptr.vmem [resolvable:$true] %s512
          %515 = dma.hbm_to_vmem [thread:$0]  %s511, 16, %s513, [#allocation7]
        $region64: #{_lambda_.7} parent=11 // pred_fallthru
          _
      $region12: #{_lambda_.7} parent=5 // pred_fallthru
        _
      %p516 = scmp.lt.s32.totalorder %s32, 2
      // Predicated region
      $region65: #{_lambda_.7} parent=5 // pred_check
        %p517 = pneg %p516
      $region66: #{_lambda_.7} parent=5 // pred_check_branch
        %519 = sbr.rel (%p517) target = $region68
      $region67: #{_lambda_.7} parent=5 // pred_region
        // Predicated region
        $region69: #{_lambda_.7} parent=67 // pred_check
          %p520 = pneg %p52
        $region70: #{_lambda_.7} parent=67 // pred_check_branch
          %522 = sbr.rel (%p520) target = $region72
        $region71: #{_lambda_.7} parent=67 // pred_region
          %p523 = scmp.lt.s32.totalorder %s32, 1
          %s524 = scalar_select %p523, %s32, 1
          %s525 = smul.addr %s524, 8
          %s526 = scalar_lea.vmem %s0, %s525
        $region72: #{_lambda_.7} parent=67 // pred_fallthru
          _
      $region68: #{_lambda_.7} parent=5 // pred_fallthru
        _
      %p527 = scmp.le.s32.totalorder 1, %s32
      %p528 = scmp.lt.s32.totalorder %s32, 3
      %p529 = pnand %p527, %p528
      %p530 = pneg %p529
      // Predicated region
      $region73: #{_lambda_.7} parent=5 // pred_check
        _
      $region74: #{_lambda_.7} parent=5 // pred_check_branch
        %532 = sbr.rel (%p529) target = $region76
      $region75: #{_lambda_.7} parent=5 // pred_region
        %s533 = ssub.s32 %s32, 1
        // Predicated region
        $region77: #{_lambda_.7} parent=75 // pred_check
          %p534 = pneg %p289
        $region78: #{_lambda_.7} parent=75 // pred_check_branch
          %536 = sbr.rel (%p534) target = $region80
        $region79: #{_lambda_.7} parent=75 // pred_region
          %538 = dma.done [#allocation4], 16
        $region80: #{_lambda_.7} parent=75 // pred_fallthru
          _
        // Predicated region
        $region81: #{_lambda_.7} parent=75 // pred_check
          %p539 = pneg %p310
        $region82: #{_lambda_.7} parent=75 // pred_check_branch
          %541 = sbr.rel (%p539) target = $region84
        $region83: #{_lambda_.7} parent=75 // pred_region
          %543 = dma.done [#allocation7], 16
        $region84: #{_lambda_.7} parent=75 // pred_fallthru
          _
        // Predicated region
        $region85: #{_lambda_.7} parent=75 // pred_check
          %p544 = pneg %p331
        $region86: #{_lambda_.7} parent=75 // pred_check_branch
          %546 = sbr.rel (%p544) target = $region88
        $region87: #{_lambda_.7} parent=75 // pred_region
          %548 = dma.done [#allocation7], 16
        $region88: #{_lambda_.7} parent=75 // pred_fallthru
          _
        %p549 = scmp.lt.s32.totalorder %s37, 1
        %s550 = scalar_select %p549, %s37, 1
        %s551 = smul.addr %s550, 8
        %s552 = scalar_lea.vmem %s0, %s551
        %p553 = pneg %p58
        %p554 = pneg %p55
        %p555 = pneg %p79
        %p556 = pneg %p76
        %p557 = pneg %p100
        %p558 = pneg %p97
        %p559 = pneg %p121
        %p560 = pneg %p118
        %p561 = pneg %p142
        %p562 = pneg %p139
        %p563 = pneg %p163
        %p564 = pneg %p160
        %p565 = pneg %p184
        %p566 = pneg %p181
        %p567 = pneg %p205
        %p568 = pneg %p202
        %p569 = pneg %p226
        %p570 = pneg %p223
        %p571 = pneg %p247
        %p572 = pneg %p244
        %p573 = pneg %p268
        %p574 = pneg %p265
        %p575 = pneg %p289
        %p576 = pneg %p286
        %p577 = pneg %p310
        %p578 = pneg %p307
        %p579 = pneg %p331
        %p580 = pneg %p328
        %p581 = pneg %p357
        %p582 = pneg %p354
        %p583 = scmp.lt.s32.totalorder %s37, 1
        %s584 = scalar_select %p583, %s37, 1
        %s585 = smul.addr %s584, 8
        %s586 = scalar_lea.vmem %s14, %s585
        %p587 = pneg %p383
        %p588 = pneg %p380
        %s589 = sand.u32 %s370, 1
        %s590 = scalar_lea.sflag [#allocation5], %s589
        %s591 = sand.u32 %s370, 1
        %s592 = smul.addr %s591, 32
        %s593 = scalar_lea.vmem [#allocation9], %s592
        %p594 = pneg %p409
        %p595 = pneg %p406
        %s596 = sand.u32 %s396, 1
        %s597 = scalar_lea.sflag [#allocation11], %s596
        %s598 = sand.u32 %s396, 1
        %s599 = smul.addr %s598, 32
        %s600 = scalar_lea.vmem [#allocation10], %s599
        %p601 = pneg %p435
        %p602 = pneg %p432
        %p603 = scmp.lt.s32.totalorder %s37, 1
        %s604 = scalar_select %p603, %s37, 1
        %s605 = smul.addr %s604, 4
        %s606 = smul.addr %s605, 8
        %s607 = scalar_lea.vmem %s17, %s606
        %p608 = scmp.lt.s32.totalorder %s37, 1
        %s609 = scalar_select %p608, %s37, 1
        %s610 = smul.addr %s609, 8
        %s611 = scalar_lea.vmem %s0, %s610
        %p612 = scmp.lt.s32.totalorder %s37, 1
        %s613 = scalar_select %p612, %s37, 1
        %s614 = smul.addr %s613, 8
        %s615 = scalar_lea.vmem %s14, %s614
        %p616 = scmp.lt.s32.totalorder %s37, 1
        %s617 = scalar_select %p616, %s37, 1
        %s618 = smul.addr %s617, 4
        %s619 = smul.addr %s618, 8
        %s620 = scalar_lea.vmem %s17, %s619
        %v622 = vld [vmem:[%s611] sm:$0xff]
        %v623 = vld [vmem:[%s1] sm:$0xff]
        %v624 = vld [vmem:[%s2] sm:$0xff]
        %v625 = vld [vmem:[%s2 + $0x8] sm:$0xff]
        %v626 = vld [vmem:[%s2 + $0x10] sm:$0xff]
        %v627 = vld [vmem:[%s2 + $0x18] sm:$0xff]
        %v628 = vpack.c.bf16 %v622, %v622
        %v629 = vpack.c.bf16 %v625, %v624
        %v630 = vpack.c.bf16 %v627, %v626
        %v631 = vld [vmem:[%s3] sm:$0x1]
        %v633 = vperm.slane %v631, 0
        %vm635 = vcmask 261120
        %v637 = vsel %vm635, %v628, 0
        %639 = vmatpush.bf16.msra.mxu0 0
        %640 = vmatpush.bf16.msra.mxu0 0
        %641 = vmatpush.bf16.msra.mxu0 0
        %642 = vmatpush.bf16.msra.mxu0 0
        %643 = vmatpush.bf16.msra.mxu0 0
        %644 = vmatpush.bf16.msra.mxu0 0
        %645 = vmatpush.bf16.msra.mxu0 %v630
        %646 = vmatpush.bf16.msra.mxu0 %v629
        %647 = vmatmul.bf16.gmra.mxu0 %v637
        %v648 = vpop.f32.mrf.mxu0
        %v649 = vadd.f32 %v633, %v648
        %v650 = vpop.f32.mrf.mxu0
        %651 = vdwg.mxu0
        %v652 = vpack.c.bf16 %v649, %v649
        %654 = vrot.lane.b32.xlu0 %v652, 96
        %v655 = vpop.permute.xlu0 %654
        %vm656 = vcmask 64512
        %v658 = vsel %vm656, %v652, 0
        %v661 = vsel %vm656, %v655, 0
        %663 = vmatpush.bf16.xpose.msra.mxu0 0
        %664 = vmatpush.bf16.xpose.msra.mxu0 0
        %665 = vmatpush.bf16.xpose.msra.mxu0 0
        %666 = vmatpush.bf16.xpose.msra.mxu0 0
        %667 = vmatpush.bf16.xpose.msra.mxu0 0
        %668 = vmatpush.bf16.xpose.msra.mxu0 0
        %669 = vmatpush.bf16.xpose.msra.mxu0 0
        %670 = vmatpush.bf16.xpose.msra.mxu0 %v661
        %671 = vmatmul.bf16.gmra.mxu0 %v658
        %v672 = vpop.f32.mrf.mxu0
        %v673 = vadd.f32 0.0, %v672
        %v674 = vpop.f32.mrf.mxu0
        %675 = vdwg.mxu0
        %v676 = vmul.f32 %v673, 0.35355338
        %v677 = vsel %vm656, %v676, -inf
        %678 = vmax.xlane.f32.xlu0 %v677
        %v679 = vpop.xlane.xlu0 %678
        %v680 = vsub.f32 %v676, %v679
        %v681 = vmul.f32 %v680, 1.442695
        %v682 = vpow.pop %v681
        %v683 = vsel %vm656, %v682, 0.0
        %684 = vadd.xlane.f32.xlu0 %v683
        %v685 = vpop.xlane.xlu0 %684
        %v686 = vrcp.pop %v685
        %v687 = vmul.f32 %v682, %v686
        %v688 = vmul.f32 %v649, 5.0
        %v689 = vxor.u32 %v688, 2147483648
        %v690 = vmul.f32 %v689, 1.442695
        %v691 = vpow.pop %v690
        %v692 = vadd.f32 %v691, 1.0
        %v693 = vrcp.pop %v692
        %v694 = vmul.f32 %v692, %v693
        %v695 = vsub.f32 1.0, %v694
        %v696 = vmul.f32 %v693, %v695
        %v697 = vadd.f32 %v693, %v696
        %vm698 = vweird.f32 %v692
        %vm699 = vweird.f32 %v693
        %vm700 = vmor %vm698, %vm699
        %v701 = vsel %vm700, %v693, %v697
        %v702 = vand.u32 2147483647, %v692
        %vm703 = vcmp.eq.f32.partialorder %v702, 8.507059e+37
        %v704 = vand.u32 %v692, 2147483648
        %v705 = vor.u32 1.1754944e-38, %v704
        %v706 = vsel %vm703, %v705, %v701
        %v707 = vmul.f32 1.0, %v706
        %v708 = vadd.f32 %v707, 1e-05
        %v709 = vmul.f32 %v708, 1.0986123
        %v710 = vmul.f32 %v709, 1.442695
        %v711 = vpow.pop %v710
        %v712 = vsub.f32 %v711, 1.0
        %v713 = vrcp.pop %v712
        %v714 = vmul.f32 %v713, 0.3989423
        %v715 = vmul.f32 %v623, %v623
        %v716 = vsub.f32 0.0, %v715
        %v717 = vmul.f32 %v713, 0.5
        %v718 = vmul.f32 %v717, %v713
        %720 = vset.pattern.permute.xlu0 96
        %721 = vperm.xlu0 %720, %v718
        %v722 = vpop.permute.xlu0 %721
        %v724 = vmul.f32 %v716, %v722
        %v725 = vmul.f32 %v724, 1.442695
        %v726 = vpow.pop %v725
        %728 = vset.pattern.permute.xlu0 96
        %729 = vperm.xlu0 %728, %v714
        %v730 = vpop.permute.xlu0 %729
        %v732 = vmul.f32 %v730, %v726
        %v733 = vpack.c.bf16 %v687, %v687
        %734 = vrot.lane.b32.xlu0 %v652, 64
        %v735 = vpop.permute.xlu0 %734
        %v737 = vsel %vm656, %v733, 0
        %vm739 = vcmask 1043456
        %v741 = vsel %vm739, %v735, 0
        %743 = vmatpush.bf16.msra.mxu0 0
        %744 = vmatpush.bf16.msra.mxu0 0
        %745 = vmatpush.bf16.msra.mxu0 0
        %746 = vmatpush.bf16.msra.mxu0 0
        %747 = vmatpush.bf16.msra.mxu0 0
        %748 = vmatpush.bf16.msra.mxu0 0
        %749 = vmatpush.bf16.msra.mxu0 0
        %750 = vmatpush.bf16.msra.mxu0 %v741
        %751 = vmatmul.bf16.gmra.mxu0 %v737
        %v752 = vpop.f32.mrf.mxu0
        %v753 = vadd.f32 0.0, %v752
        %v754 = vpop.f32.mrf.mxu0
        %755 = vdwg.mxu0
        %756 = vst.msk [vmem:[#allocation2] sm:$0xff] %vm656, %v753
        %757 = vst.msk [vmem:[%s593] sm:$0xff] %vm656, %v687
        %758 = vst.msk [vmem:[%s600] sm:$0xff] %vm656, %v732
        %760 = vrot.lane.b32.xlu0 %v712, 32
        %v761 = vpop.permute.xlu0 %760
        %vm763 = vcmask 7168
        %764 = vst.msk [vmem:[%s620] sm:$0xff] %vm763, %v761
        %765 = vrot.lane.b32.xlu0 %v652, 120
        %v766 = vpop.permute.xlu0 %765
        %767 = vrot.lane.b32.xlu0 %v652, 88
        %v768 = vpop.permute.xlu0 %767
        %v770 = vsel %vm656, %v766, 0
        %v773 = vsel %vm656, %v768, 0
        %775 = vmatpush.bf16.xpose.msra.mxu0 0
        %776 = vmatpush.bf16.xpose.msra.mxu0 0
        %777 = vmatpush.bf16.xpose.msra.mxu0 0
        %778 = vmatpush.bf16.xpose.msra.mxu0 0
        %779 = vmatpush.bf16.xpose.msra.mxu0 0
        %780 = vmatpush.bf16.xpose.msra.mxu0 0
        %781 = vmatpush.bf16.xpose.msra.mxu0 0
        %782 = vmatpush.bf16.xpose.msra.mxu0 %v773
        %783 = vmatmul.bf16.gmra.mxu0 %v770
        %v784 = vpop.f32.mrf.mxu0
        %v785 = vadd.f32 0.0, %v784
        %v786 = vpop.f32.mrf.mxu0
        %787 = vdwg.mxu0
        %v788 = vmul.f32 %v785, 0.35355338
        %v789 = vsel %vm656, %v788, -inf
        %790 = vmax.xlane.f32.xlu0 %v789
        %v791 = vpop.xlane.xlu0 %790
        %v792 = vsub.f32 %v788, %v791
        %v793 = vmul.f32 %v792, 1.442695
        %v794 = vpow.pop %v793
        %v795 = vsel %vm656, %v794, 0.0
        %796 = vadd.xlane.f32.xlu0 %v795
        %v797 = vpop.xlane.xlu0 %796
        %v798 = vrcp.pop %v797
        %v799 = vmul.f32 %v794, %v798
        %800 = vset.pattern.permute.xlu0 97
        %801 = vperm.xlu0 %800, %v718
        %v802 = vpop.permute.xlu0 %801
        %v804 = vmul.f32 %v716, %v802
        %v805 = vmul.f32 %v804, 1.442695
        %v806 = vpow.pop %v805
        %807 = vset.pattern.permute.xlu0 97
        %808 = vperm.xlu0 %807, %v714
        %v809 = vpop.permute.xlu0 %808
        %v811 = vmul.f32 %v809, %v806
        %v812 = vpack.c.bf16 %v799, %v799
        %813 = vrot.lane.b32.xlu0 %v652, 56
        %v814 = vpop.permute.xlu0 %813
        %v816 = vsel %vm656, %v812, 0
        %v819 = vsel %vm739, %v814, 0
        %821 = vmatpush.bf16.msra.mxu0 0
        %822 = vmatpush.bf16.msra.mxu0 0
        %823 = vmatpush.bf16.msra.mxu0 0
        %824 = vmatpush.bf16.msra.mxu0 0
        %825 = vmatpush.bf16.msra.mxu0 0
        %826 = vmatpush.bf16.msra.mxu0 0
        %827 = vmatpush.bf16.msra.mxu0 0
        %828 = vmatpush.bf16.msra.mxu0 %v819
        %829 = vmatmul.bf16.gmra.mxu0 %v816
        %v830 = vpop.f32.mrf.mxu0
        %v831 = vadd.f32 0.0, %v830
        %v832 = vpop.f32.mrf.mxu0
        %833 = vdwg.mxu0
        %835 = vrot.lane.b32.xlu0 %v831, 8
        %v836 = vpop.permute.xlu0 %835
        %vm838 = vcmask 130112
        %839 = vst.msk [vmem:[#allocation2] sm:$0xff] %vm838, %v836
        %s840 = scalar_lea.vmem %s593, 8 [#allocation9]
        %841 = vst.msk [vmem:[%s840] sm:$0xff] %vm656, %v799
        %s842 = scalar_lea.vmem %s600, 8 [#allocation10]
        %843 = vst.msk [vmem:[%s842] sm:$0xff] %vm656, %v811
        %844 = vrot.lane.b32.xlu0 %v712, 31
        %v845 = vpop.permute.xlu0 %844
        %s847 = scalar_lea.vmem %s620, 8
        %848 = vst.msk [vmem:[%s847] sm:$0xff] %vm763, %v845
        %849 = vrot.lane.b32.xlu0 %v652, 112
        %v850 = vpop.permute.xlu0 %849
        %851 = vrot.lane.b32.xlu0 %v652, 80
        %v852 = vpop.permute.xlu0 %851
        %v854 = vsel %vm656, %v850, 0
        %v857 = vsel %vm656, %v852, 0
        %859 = vmatpush.bf16.xpose.msra.mxu0 0
        %860 = vmatpush.bf16.xpose.msra.mxu0 0
        %861 = vmatpush.bf16.xpose.msra.mxu0 0
        %862 = vmatpush.bf16.xpose.msra.mxu0 0
        %863 = vmatpush.bf16.xpose.msra.mxu0 0
        %864 = vmatpush.bf16.xpose.msra.mxu0 0
        %865 = vmatpush.bf16.xpose.msra.mxu0 0
        %866 = vmatpush.bf16.xpose.msra.mxu0 %v857
        %867 = vmatmul.bf16.gmra.mxu0 %v854
        %v868 = vpop.f32.mrf.mxu0
        %v869 = vadd.f32 0.0, %v868
        %v870 = vpop.f32.mrf.mxu0
        %871 = vdwg.mxu0
        %v872 = vmul.f32 %v869, 0.35355338
        %v873 = vsel %vm656, %v872, -inf
        %874 = vmax.xlane.f32.xlu0 %v873
        %v875 = vpop.xlane.xlu0 %874
        %v876 = vsub.f32 %v872, %v875
        %v877 = vmul.f32 %v876, 1.442695
        %v878 = vpow.pop %v877
        %v879 = vsel %vm656, %v878, 0.0
        %880 = vadd.xlane.f32.xlu0 %v879
        %v881 = vpop.xlane.xlu0 %880
        %v882 = vrcp.pop %v881
        %v883 = vmul.f32 %v878, %v882
        %884 = vset.pattern.permute.xlu0 98
        %885 = vperm.xlu0 %884, %v718
        %v886 = vpop.permute.xlu0 %885
        %v888 = vmul.f32 %v716, %v886
        %v889 = vmul.f32 %v888, 1.442695
        %v890 = vpow.pop %v889
        %891 = vset.pattern.permute.xlu0 98
        %892 = vperm.xlu0 %891, %v714
        %v893 = vpop.permute.xlu0 %892
        %v895 = vmul.f32 %v893, %v890
        %v896 = vpack.c.bf16 %v883, %v883
        %897 = vrot.lane.b32.xlu0 %v652, 48
        %v898 = vpop.permute.xlu0 %897
        %v900 = vsel %vm656, %v896, 0
        %v903 = vsel %vm739, %v898, 0
        %905 = vmatpush.bf16.msra.mxu0 0
        %906 = vmatpush.bf16.msra.mxu0 0
        %907 = vmatpush.bf16.msra.mxu0 0
        %908 = vmatpush.bf16.msra.mxu0 0
        %909 = vmatpush.bf16.msra.mxu0 0
        %910 = vmatpush.bf16.msra.mxu0 0
        %911 = vmatpush.bf16.msra.mxu0 0
        %912 = vmatpush.bf16.msra.mxu0 %v903
        %913 = vmatmul.bf16.gmra.mxu0 %v900
        %v914 = vpop.f32.mrf.mxu0
        %v915 = vadd.f32 0.0, %v914
        %v916 = vpop.f32.mrf.mxu0
        %917 = vdwg.mxu0
        %919 = vrot.lane.b32.xlu0 %v915, 16
        %v920 = vpop.permute.xlu0 %919
        %vm922 = vcmask 195712
        %923 = vst.msk [vmem:[#allocation2] sm:$0xff] %vm922, %v920
        %s924 = scalar_lea.vmem %s593, 16 [#allocation9]
        %925 = vst.msk [vmem:[%s924] sm:$0xff] %vm656, %v883
        %s926 = scalar_lea.vmem %s600, 16 [#allocation10]
        %927 = vst.msk [vmem:[%s926] sm:$0xff] %vm656, %v895
        %928 = vrot.lane.b32.xlu0 %v712, 30
        %v929 = vpop.permute.xlu0 %928
        %s931 = scalar_lea.vmem %s620, 16
        %932 = vst.msk [vmem:[%s931] sm:$0xff] %vm763, %v929
        %933 = vrot.lane.b32.xlu0 %v652, 104
        %v934 = vpop.permute.xlu0 %933
        %935 = vrot.lane.b32.xlu0 %v652, 72
        %v936 = vpop.permute.xlu0 %935
        %v938 = vsel %vm656, %v934, 0
        %v941 = vsel %vm656, %v936, 0
        %943 = vmatpush.bf16.xpose.msra.mxu0 0
        %944 = vmatpush.bf16.xpose.msra.mxu0 0
        %945 = vmatpush.bf16.xpose.msra.mxu0 0
        %946 = vmatpush.bf16.xpose.msra.mxu0 0
        %947 = vmatpush.bf16.xpose.msra.mxu0 0
        %948 = vmatpush.bf16.xpose.msra.mxu0 0
        %949 = vmatpush.bf16.xpose.msra.mxu0 0
        %950 = vmatpush.bf16.xpose.msra.mxu0 %v941
        %951 = vmatmul.bf16.gmra.mxu0 %v938
        %v952 = vpop.f32.mrf.mxu0
        %v953 = vadd.f32 0.0, %v952
        %v954 = vpop.f32.mrf.mxu0
        %955 = vdwg.mxu0
        %v956 = vmul.f32 %v953, 0.35355338
        %v957 = vsel %vm656, %v956, -inf
        %958 = vmax.xlane.f32.xlu0 %v957
        %v959 = vpop.xlane.xlu0 %958
        %v960 = vsub.f32 %v956, %v959
        %v961 = vmul.f32 %v960, 1.442695
        %v962 = vpow.pop %v961
        %v963 = vsel %vm656, %v962, 0.0
        %964 = vadd.xlane.f32.xlu0 %v963
        %v965 = vpop.xlane.xlu0 %964
        %v966 = vrcp.pop %v965
        %v967 = vmul.f32 %v962, %v966
        %968 = vset.pattern.permute.xlu0 99
        %969 = vperm.xlu0 %968, %v718
        %v970 = vpop.permute.xlu0 %969
        %v972 = vmul.f32 %v716, %v970
        %v973 = vmul.f32 %v972, 1.442695
        %v974 = vpow.pop %v973
        %975 = vset.pattern.permute.xlu0 99
        %976 = vperm.xlu0 %975, %v714
        %v977 = vpop.permute.xlu0 %976
        %v979 = vmul.f32 %v977, %v974
        %v980 = vpack.c.bf16 %v967, %v967
        %981 = vrot.lane.b32.xlu0 %v652, 40
        %v982 = vpop.permute.xlu0 %981
        %v984 = vsel %vm656, %v980, 0
        %v987 = vsel %vm739, %v982, 0
        %989 = vmatpush.bf16.msra.mxu0 0
        %990 = vmatpush.bf16.msra.mxu0 0
        %991 = vmatpush.bf16.msra.mxu0 0
        %992 = vmatpush.bf16.msra.mxu0 0
        %993 = vmatpush.bf16.msra.mxu0 0
        %994 = vmatpush.bf16.msra.mxu0 0
        %995 = vmatpush.bf16.msra.mxu0 0
        %996 = vmatpush.bf16.msra.mxu0 %v987
        %997 = vmatmul.bf16.gmra.mxu0 %v984
        %v998 = vpop.f32.mrf.mxu0
        %v999 = vadd.f32 0.0, %v998
        %v1000 = vpop.f32.mrf.mxu0
        %1001 = vdwg.mxu0
        %1003 = vrot.lane.b32.xlu0 %v999, 24
        %v1004 = vpop.permute.xlu0 %1003
        %vm1006 = vcmask 261312
        %1007 = vst.msk [vmem:[#allocation2] sm:$0xff] %vm1006, %v1004
        %s1008 = scalar_lea.vmem %s593, 24 [#allocation9]
        %1009 = vst.msk [vmem:[%s1008] sm:$0xff] %vm656, %v967
        %s1010 = scalar_lea.vmem %s600, 24 [#allocation10]
        %1011 = vst.msk [vmem:[%s1010] sm:$0xff] %vm656, %v979
        %1012 = vrot.lane.b32.xlu0 %v712, 29
        %v1013 = vpop.permute.xlu0 %1012
        %s1015 = scalar_lea.vmem %s620, 24
        %1016 = vst.msk [vmem:[%s1015] sm:$0xff] %vm763, %v1013
        %v1017 = vld [vmem:[#allocation2] sm:$0xff]
        %v1018 = vld [vmem:[%s4] sm:$0xff]
        %v1019 = vld [vmem:[%s4 + $0x8] sm:$0xff]
        %v1020 = vld [vmem:[%s4 + $0x10] sm:$0xff]
        %v1021 = vld [vmem:[%s4 + $0x18] sm:$0xff]
        %v1022 = vpack.c.bf16 %v1017, %v1017
        %v1023 = vpack.c.bf16 %v1019, %v1018
        %v1024 = vpack.c.bf16 %v1021, %v1020
        %v1025 = vld [vmem:[%s5] sm:$0x1]
        %v1027 = vperm.slane %v1025, 0
        %v1030 = vsel %vm635, %v1022, 0
        %1032 = vmatpush.bf16.msra.mxu0 0
        %1033 = vmatpush.bf16.msra.mxu0 0
        %1034 = vmatpush.bf16.msra.mxu0 0
        %1035 = vmatpush.bf16.msra.mxu0 0
        %1036 = vmatpush.bf16.msra.mxu0 0
        %1037 = vmatpush.bf16.msra.mxu0 0
        %1038 = vmatpush.bf16.msra.mxu0 %v1024
        %1039 = vmatpush.bf16.msra.mxu0 %v1023
        %1040 = vmatmul.bf16.gmra.mxu0 %v1030
        %v1041 = vpop.f32.mrf.mxu0
        %v1042 = vadd.f32 %v1027, %v1041
        %v1043 = vpop.f32.mrf.mxu0
        %1044 = vdwg.mxu0
        %v1045 = vadd.f32 %v622, %v1042
        %v1046 = vld [vmem:[%s10] sm:$0x1]
        %v1047 = vld [vmem:[#allocation3] sm:$0x1]
        %v1048 = vsel %vm635, %v1045, 0.0
        %1049 = vadd.xlane.f32.xlu0 %v1048
        %v1050 = vpop.xlane.xlu0 %1049
        %v1051 = vrcp.pop 32.0
        %v1052 = vmul.f32 32.0, %v1051
        %v1053 = vsub.f32 1.0, %v1052
        %v1054 = vmul.f32 %v1051, %v1053
        %v1055 = vadd.f32 %v1051, %v1054
        %vm1056 = vweird.f32 %v1051
        %v1057 = vsel %vm1056, %v1051, %v1055
        %v1058 = vmul.f32 %v1050, %v1057
        %v1059 = vsub.f32 %v1045, %v1058
        %v1060 = vmul.f32 %v1059, %v1059
        %v1061 = vsel %vm635, %v1060, 0.0
        %1062 = vadd.xlane.f32.xlu0 %v1061
        %v1063 = vpop.xlane.xlu0 %1062
        %v1064 = vmul.f32 %v1063, %v1057
        %v1065 = vadd.f32 %v1064, 1e-05
        %v1066 = vrsqrt.pop %v1065
        %v1067 = vmul.f32 %v1066, %v1065
        %v1068 = vmul.f32 %v1067, %v1066
        %v1069 = vmul.f32 0.5, %v1068
        %v1070 = vsub.f32 1.5, %v1069
        %v1071 = vmul.f32 %v1066, %v1070
        %vm1072 = vweird.f32 %v1065
        %vm1073 = vweird.f32 %v1066
        %vm1074 = vmor %vm1072, %vm1073
        %v1075 = vsel %vm1074, %v1066, %v1071
        %v1076 = vmul.f32 %v1059, %v1075
        %v1078 = vperm.slane %v1046, 0
        %v1080 = vmul.f32 %v1076, %v1078
        %v1082 = vperm.slane %v1047, 0
        %v1084 = vadd.f32 %v1080, %v1082
        %v1085 = vld [vmem:[%s6] sm:$0xff]
        %v1086 = vld [vmem:[%s6 + $0x8] sm:$0xff]
        %v1087 = vld [vmem:[%s6 + $0x10] sm:$0xff]
        %v1088 = vld [vmem:[%s6 + $0x18] sm:$0xff]
        %v1089 = vpack.c.bf16 %v1084, %v1084
        %v1090 = vpack.c.bf16 %v1086, %v1085
        %v1091 = vpack.c.bf16 %v1088, %v1087
        %v1092 = vld [vmem:[%s7] sm:$0x1]
        %v1094 = vperm.slane %v1092, 0
        %v1097 = vsel %vm635, %v1089, 0
        %1099 = vmatpush.bf16.msra.mxu0 0
        %1100 = vmatpush.bf16.msra.mxu0 0
        %1101 = vmatpush.bf16.msra.mxu0 0
        %1102 = vmatpush.bf16.msra.mxu0 0
        %1103 = vmatpush.bf16.msra.mxu0 0
        %1104 = vmatpush.bf16.msra.mxu0 0
        %1105 = vmatpush.bf16.msra.mxu0 %v1091
        %1106 = vmatpush.bf16.msra.mxu0 %v1090
        %1107 = vmatmul.bf16.gmra.mxu0 %v1097
        %v1108 = vpop.f32.mrf.mxu0
        %v1109 = vadd.f32 %v1094, %v1108
        %v1110 = vpop.f32.mrf.mxu0
        %1111 = vdwg.mxu0
        %v1112 = vmul.f32 %v1109, %v1109
        %v1113 = vmul.f32 %v1109, %v1112
        %v1114 = vmul.f32 %v1113, 0.044715
        %v1115 = vadd.f32 %v1109, %v1114
        %v1116 = vmul.f32 %v1115, 0.7978846
        %v1117 = vtanh.pop %v1116
        %v1118 = vadd.f32 %v1117, 1.0
        %v1119 = vmul.f32 %v1118, 0.5
        %v1120 = vmul.f32 %v1109, %v1119
        %v1121 = vld [vmem:[%s8] sm:$0xff]
        %v1122 = vld [vmem:[%s8 + $0x8] sm:$0xff]
        %v1123 = vld [vmem:[%s8 + $0x10] sm:$0xff]
        %v1124 = vld [vmem:[%s8 + $0x18] sm:$0xff]
        %v1125 = vpack.c.bf16 %v1120, %v1120
        %v1126 = vpack.c.bf16 %v1122, %v1121
        %v1127 = vpack.c.bf16 %v1124, %v1123
        %v1128 = vld [vmem:[%s9] sm:$0x1]
        %v1130 = vperm.slane %v1128, 0
        %v1133 = vsel %vm635, %v1125, 0
        %1135 = vmatpush.bf16.msra.mxu0 0
        %1136 = vmatpush.bf16.msra.mxu0 0
        %1137 = vmatpush.bf16.msra.mxu0 0
        %1138 = vmatpush.bf16.msra.mxu0 0
        %1139 = vmatpush.bf16.msra.mxu0 0
        %1140 = vmatpush.bf16.msra.mxu0 0
        %1141 = vmatpush.bf16.msra.mxu0 %v1127
        %1142 = vmatpush.bf16.msra.mxu0 %v1126
        %1143 = vmatmul.bf16.gmra.mxu0 %v1133
        %v1144 = vpop.f32.mrf.mxu0
        %v1145 = vadd.f32 %v1130, %v1144
        %v1146 = vpop.f32.mrf.mxu0
        %1147 = vdwg.mxu0
        %v1148 = vadd.f32 %v1084, %v1145
        %v1149 = vld [vmem:[#allocation6] sm:$0x1]
        %v1150 = vld [vmem:[#allocation8] sm:$0x1]
        %v1151 = vsel %vm635, %v1148, 0.0
        %1152 = vadd.xlane.f32.xlu0 %v1151
        %v1153 = vpop.xlane.xlu0 %1152
        %v1154 = vmul.f32 %v1153, %v1057
        %v1155 = vsub.f32 %v1148, %v1154
        %v1156 = vmul.f32 %v1155, %v1155
        %v1157 = vsel %vm635, %v1156, 0.0
        %1158 = vadd.xlane.f32.xlu0 %v1157
        %v1159 = vpop.xlane.xlu0 %1158
        %v1160 = vmul.f32 %v1159, %v1057
        %v1161 = vadd.f32 %v1160, 1e-05
        %v1162 = vrsqrt.pop %v1161
        %v1163 = vmul.f32 %v1162, %v1161
        %v1164 = vmul.f32 %v1163, %v1162
        %v1165 = vmul.f32 0.5, %v1164
        %v1166 = vsub.f32 1.5, %v1165
        %v1167 = vmul.f32 %v1162, %v1166
        %vm1168 = vweird.f32 %v1161
        %vm1169 = vweird.f32 %v1162
        %vm1170 = vmor %vm1168, %vm1169
        %v1171 = vsel %vm1170, %v1162, %v1167
        %v1172 = vmul.f32 %v1155, %v1171
        %v1174 = vperm.slane %v1149, 0
        %v1176 = vmul.f32 %v1172, %v1174
        %v1178 = vperm.slane %v1150, 0
        %v1180 = vadd.f32 %v1176, %v1178
        %1181 = vst.msk [vmem:[%s615] sm:$0xff] %vm635, %v1180
        %p1182 = scmp.lt.s32.totalorder %s37, 1
        %s1183 = scalar_select %p1182, %s37, 1
        %s1184 = smul.addr %s1183, 8
        %s1185 = scalar_lea.vmem %s14, %s1184
        %s1186 = sand.u32 %s370, 1
        %s1187 = scalar_lea.sflag [#allocation5], %s1186
        %s1188 = sand.u32 %s370, 1
        %s1189 = smul.addr %s1188, 32
        %s1190 = scalar_lea.vmem [#allocation9], %s1189
        %s1191 = sand.u32 %s396, 1
        %s1192 = scalar_lea.sflag [#allocation11], %s1191
        %s1193 = sand.u32 %s396, 1
        %s1194 = smul.addr %s1193, 32
        %s1195 = scalar_lea.vmem [#allocation10], %s1194
        %p1196 = scmp.lt.s32.totalorder %s37, 1
        %s1197 = scalar_select %p1196, %s37, 1
        %s1198 = smul.addr %s1197, 4
        %s1199 = smul.addr %s1198, 8
        %s1200 = scalar_lea.vmem %s17, %s1199
        // Predicated region
        $region89: #{_lambda_.7} parent=75 // pred_check
          %p1201 = pneg %p354
        $region90: #{_lambda_.7} parent=75 // pred_check_branch
          %1203 = sbr.rel (%p1201) target = $region92
        $region91: #{_lambda_.7} parent=75 // pred_region
          _
        $region92: #{_lambda_.7} parent=75 // pred_fallthru
          _
        // Predicated region
        $region93: #{_lambda_.7} parent=75 // pred_check
          %p1204 = pneg %p380
        $region94: #{_lambda_.7} parent=75 // pred_check_branch
          %1206 = sbr.rel (%p1204) target = $region96
        $region95: #{_lambda_.7} parent=75 // pred_region
          %1208 = vsyncadd %s1187, 0
          %s1209 = smul.addr %s37, 4
          %s1210 = smul.addr %s1209, 8
          %s1211 = scalar_lea.hbm %s15, %s1210
          %s1212 = sshll.u32 %s1190, 4
          %s1213 = int_to_ptr.vmem [resolvable:$true] %s1212
          %s1214 = sshll.u32 %s1211, 4
          %s1215 = int_to_ptr.hbm [resolvable:$true] %s1214
          %1220 = dma.vmem_to_hbm [thread:$0]  %s1213, 512, %s1215, %s1187, 128, 128, 8
        $region96: #{_lambda_.7} parent=75 // pred_fallthru
          _
        // Predicated region
        $region97: #{_lambda_.7} parent=75 // pred_check
          %p1221 = pneg %p406
        $region98: #{_lambda_.7} parent=75 // pred_check_branch
          %1223 = sbr.rel (%p1221) target = $region100
        $region99: #{_lambda_.7} parent=75 // pred_region
          %1225 = vsyncadd %s1192, 0
          %s1226 = smul.addr %s37, 4
          %s1227 = smul.addr %s1226, 8
          %s1228 = scalar_lea.hbm %s16, %s1227
          %s1229 = sshll.u32 %s1195, 4
          %s1230 = int_to_ptr.vmem [resolvable:$true] %s1229
          %s1231 = sshll.u32 %s1228, 4
          %s1232 = int_to_ptr.hbm [resolvable:$true] %s1231
          %1237 = dma.vmem_to_hbm [thread:$0]  %s1230, 512, %s1232, %s1192, 128, 128, 8
        $region100: #{_lambda_.7} parent=75 // pred_fallthru
          _
        // Predicated region
        $region101: #{_lambda_.7} parent=75 // pred_check
          %p1238 = pneg %p432
        $region102: #{_lambda_.7} parent=75 // pred_check_branch
          %1240 = sbr.rel (%p1238) target = $region104
        $region103: #{_lambda_.7} parent=75 // pred_region
          _
        $region104: #{_lambda_.7} parent=75 // pred_fallthru
          _
      $region76: #{_lambda_.7} parent=5 // pred_fallthru
        _
      %p1241 = scmp.le.s32.totalorder 2, %s32
      // Predicated region
      $region105: #{_lambda_.7} parent=5 // pred_check
        %p1242 = pneg %p1241
      $region106: #{_lambda_.7} parent=5 // pred_check_branch
        %1244 = sbr.rel (%p1242) target = $region108
      $region107: #{_lambda_.7} parent=5 // pred_region
        %s1245 = ssub.s32 %s32, 2
        // Predicated region
        $region109: #{_lambda_.7} parent=107 // pred_check
          %p1246 = pneg %p360
        $region110: #{_lambda_.7} parent=107 // pred_check_branch
          %1248 = sbr.rel (%p1246) target = $region112
        $region111: #{_lambda_.7} parent=107 // pred_region
          %p1249 = scmp.lt.s32.totalorder %s38, 1
          %s1250 = scalar_select %p1249, %s38, 1
          %s1251 = smul.addr %s1250, 8
          %s1252 = scalar_lea.vmem %s14, %s1251
        $region112: #{_lambda_.7} parent=107 // pred_fallthru
          _
        // Predicated region
        $region113: #{_lambda_.7} parent=107 // pred_check
          %p1253 = pneg %p386
        $region114: #{_lambda_.7} parent=107 // pred_check_branch
          %1255 = sbr.rel (%p1253) target = $region116
        $region115: #{_lambda_.7} parent=107 // pred_region
          %s1256 = sand.u32 %s371, 1
          %s1257 = scalar_lea.sflag [#allocation5], %s1256
          %s1258 = sand.u32 %s371, 1
          %s1259 = smul.addr %s1258, 32
          %s1260 = scalar_lea.vmem [#allocation9], %s1259
          %1262 = dma.done %s1257, 512
        $region116: #{_lambda_.7} parent=107 // pred_fallthru
          _
        // Predicated region
        $region117: #{_lambda_.7} parent=107 // pred_check
          %p1263 = pneg %p412
        $region118: #{_lambda_.7} parent=107 // pred_check_branch
          %1265 = sbr.rel (%p1263) target = $region120
        $region119: #{_lambda_.7} parent=107 // pred_region
          %s1266 = sand.u32 %s397, 1
          %s1267 = scalar_lea.sflag [#allocation11], %s1266
          %s1268 = sand.u32 %s397, 1
          %s1269 = smul.addr %s1268, 32
          %s1270 = scalar_lea.vmem [#allocation10], %s1269
          %1272 = dma.done %s1267, 512
        $region120: #{_lambda_.7} parent=107 // pred_fallthru
          _
        // Predicated region
        $region121: #{_lambda_.7} parent=107 // pred_check
          %p1273 = pneg %p438
        $region122: #{_lambda_.7} parent=107 // pred_check_branch
          %1275 = sbr.rel (%p1273) target = $region124
        $region123: #{_lambda_.7} parent=107 // pred_region
          %p1276 = scmp.lt.s32.totalorder %s38, 1
          %s1277 = scalar_select %p1276, %s38, 1
          %s1278 = smul.addr %s1277, 4
          %s1279 = smul.addr %s1278, 8
          %s1280 = scalar_lea.vmem %s17, %s1279
        $region124: #{_lambda_.7} parent=107 // pred_fallthru
          _
      $region108: #{_lambda_.7} parent=5 // pred_fallthru
        _
    $region6: #{_lambda_.7} parent=1 // loop_footer
      %s36 = sadd.s32 1, %s32
    $region7: #{_lambda_.7} parent=1 // loop_footer_branch
      %31 = sbr.rel target = $region3
    $region8: #{_lambda_.7} parent=1 // loop_exit
      _
    %1281 = vsyncpa [#allocation4], 1
    %s1282 = scalar_lea.sflag [#allocation4], 1
    %1283 = vsyncpa %s1282, 1
    %1284 = vsyncpa [#allocation7], 1
    %1285 = vsyncpa [#allocation5], 1
    %s1286 = scalar_lea.sflag [#allocation5], 1
    %1287 = vsyncpa %s1286, 1
    %1288 = vsyncpa [#allocation11], 1
    %s1289 = scalar_lea.sflag [#allocation11], 1
    %1290 = vsyncpa %s1289, 1

// kernel: _lambda_.8
$region0: #{_lambda_.8}
  #allocation0 [shape = 'u32[]', space=smem, size = 0x4, offset = 0x4, fixed_abs, tag = 'smem constant byte address 0x4 - core index']
  #allocation1 [shape = 'u32[72,128]{1,0:T(1,128)}', space=vmem, size = 0x9000, scoped, tag = 'internal scratch']
  #allocation2 [shape = 'f32[8,32]{1,0:T(8,128)}', space=vmem, size = 0x1000, scoped, tag = 'scratch operand']
  %s0 = inlined_call_operand.vmem [shape: f32[2,8,32], index: 0, kind: input, shape index: {}]
  %s1 = inlined_call_operand.vmem [shape: f32[8,8], index: 1, kind: input, shape index: {}]
  %s2 = inlined_call_operand.vmem [shape: f32[32,100], index: 2, kind: input, shape index: {}]
  %s3 = inlined_call_operand.vmem [shape: f32[1,100], index: 3, kind: input, shape index: {}]
  %s4 = inlined_call_operand.hbm [shape: f32[32,32], index: 4, kind: input, shape index: {}]
  %s5 = inlined_call_operand.vmem [shape: f32[1,32], index: 5, kind: input, shape index: {}]
  %s6 = inlined_call_operand.hbm [shape: f32[32,32], index: 6, kind: input, shape index: {}]
  %s7 = inlined_call_operand.vmem [shape: f32[1,32], index: 7, kind: input, shape index: {}]
  %s8 = inlined_call_operand.hbm [shape: f32[32,32], index: 8, kind: input, shape index: {}]
  %s9 = inlined_call_operand.vmem [shape: f32[1,32], index: 9, kind: input, shape index: {}]
  %s10 = inlined_call_operand.vmem [shape: f32[1,32], index: 10, kind: input, shape index: {}]
  %s11 = inlined_call_operand.hbm [shape: f32[1,32], index: 11, kind: input, shape index: {}]
  %s12 = inlined_call_operand.hbm [shape: f32[1,32], index: 12, kind: input, shape index: {}]
  %s13 = inlined_call_operand.hbm [shape: f32[1,32], index: 13, kind: input, shape index: {}]
  %s14 = inlined_call_operand.vmem [shape: f32[2,8,32], index: 14, kind: output, shape index: {0}]
  %s15 = inlined_call_operand.hbm [shape: f32[2,4,8,8], index: 15, kind: output, shape index: {1}]
  %s16 = inlined_call_operand.hbm [shape: f32[2,4,8,8], index: 16, kind: output, shape index: {2}]
  %s17 = inlined_call_operand.vmem [shape: f32[2,4,8,1], index: 17, kind: output, shape index: {3}]
  %18 = xla_tuple %s14, %s15, %s16, %s17
  %s19 = sld [smem:[#allocation0]]
  $region137: #{_lambda_.8} parent=0
    _
  %s21 = ssub.s32 1, %s19
  %s22 = scalar_select 0, %s21, %s19
  $region1: #{_lambda_.8} parent=0
    #allocation3 [shape = 'u8[16384]{0}', space=vmem, size = 0x4000, scoped, tag = 'input window, operand 4, single buffered']
    #allocation4 [shape = 's32[2]{0}', space=sflag, size = 0x8, scoped, tag = 'scoped memory for _lambda_.8']
    #allocation5 [shape = 's32[2]{0}', space=sflag, size = 0x8, scoped, tag = 'scoped memory for _lambda_.8']
    #allocation6 [shape = 'u8[16384]{0}', space=vmem, size = 0x4000, scoped, tag = 'input window, operand 6, single buffered']
    #allocation7 [shape = 's32[1]{0}', space=sflag, size = 0x4, scoped, tag = 'scoped memory for _lambda_.8']
    #allocation8 [shape = 'u8[16384]{0}', space=vmem, size = 0x4000, scoped, tag = 'input window, operand 8, single buffered']
    #allocation9 [shape = 'u8[512]{0}', space=vmem, size = 0x400, scoped, tag = 'input window, operand 11, single buffered']
    #allocation10 [shape = 's32[1]{0}', space=sflag, size = 0x4, scoped, tag = 'scoped memory for _lambda_.8']
    #allocation11 [shape = 'u8[512]{0}', space=vmem, size = 0x400, scoped, tag = 'input window, operand 12, single buffered']
    #allocation12 [shape = 'u8[512]{0}', space=vmem, size = 0x400, scoped, tag = 'input window, operand 13, single buffered']
    #allocation13 [shape = 's32[1]{0}', space=sflag, size = 0x4, scoped, tag = 'scoped memory for _lambda_.8']
    #allocation14 [shape = 'u8[32768]{0}', space=vmem, size = 0x8000, scoped, tag = 'output window, operand 1']
    #allocation15 [shape = 'u8[32768]{0}', space=vmem, size = 0x8000, scoped, tag = 'output window, operand 2']
    #allocation16 [shape = 's32[2]{0}', space=sflag, size = 0x8, scoped, tag = 'scoped memory for _lambda_.8']
    %23 = vsyncpa [#allocation4], 0
    %24 = vsyncpa [#allocation7], 0
    %25 = vsyncpa [#allocation10], 0
    %26 = vsyncpa [#allocation13], 0
    %27 = vsyncpa [#allocation5], 0
    %s28 = scalar_lea.sflag [#allocation5], 1
    %29 = vsyncpa %s28, 0
    %30 = vsyncpa [#allocation16], 0
    %s31 = scalar_lea.sflag [#allocation16], 1
    %32 = vsyncpa %s31, 0
    loop: start=0, step=1, limit=4
    $region2: #{_lambda_.8} parent=1 // loop_pre_header
      _
    $region3: #{_lambda_.8} parent=1 // loop_header
      %s34 = sphi 0, %s38
      %p35 = scmp.ge.s32.totalorder %s34, 4
      %s44 = sphi 0, %s46
      %s47 = sphi 0, %s44
      %s48 = sphi 0, %s47
      %s64 = sphi 0, %s48
      %s68 = sphi 0, %s68
      %s70 = sphi 0, %s68
      %s71 = sphi 0, %s70
      %s85 = sphi 0, %s71
      %s89 = sphi 0, %s89
      %s91 = sphi 0, %s89
      %s92 = sphi 0, %s91
      %s106 = sphi 0, %s92
      %s110 = sphi 0, %s110
      %s112 = sphi 0, %s110
      %s113 = sphi 0, %s112
      %s127 = sphi 0, %s113
      %s131 = sphi 0, %s131
      %s133 = sphi 0, %s131
      %s134 = sphi 0, %s133
      %s148 = sphi 0, %s134
      %s152 = sphi 0, %s152
      %s154 = sphi 0, %s152
      %s155 = sphi 0, %s154
      %s169 = sphi 0, %s155
      %s173 = sphi 0, %s173
      %s175 = sphi 0, %s173
      %s176 = sphi 0, %s175
      %s190 = sphi 0, %s176
      %s194 = sphi 0, %s194
      %s196 = sphi 0, %s194
      %s197 = sphi 0, %s196
      %s211 = sphi 0, %s197
      %s215 = sphi 0, %s215
      %s217 = sphi 0, %s215
      %s218 = sphi 0, %s217
      %s232 = sphi 0, %s218
      %s236 = sphi 0, %s236
      %s238 = sphi 0, %s236
      %s239 = sphi 0, %s238
      %s253 = sphi 0, %s239
      %s257 = sphi 0, %s257
      %s259 = sphi 0, %s257
      %s260 = sphi 0, %s259
      %s274 = sphi 0, %s260
      %s278 = sphi 0, %s278
      %s280 = sphi 0, %s278
      %s281 = sphi 0, %s280
      %s295 = sphi 0, %s281
      %s299 = sphi 0, %s299
      %s301 = sphi 0, %s299
      %s302 = sphi 0, %s301
      %s316 = sphi 0, %s302
      %s320 = sphi 0, %s320
      %s322 = sphi 0, %s320
      %s323 = sphi 0, %s322
      %s337 = sphi 0, %s323
      %s343 = sphi 0, %s345
      %s346 = sphi 0, %s343
      %s347 = sphi 0, %s346
      %s363 = sphi 0, %s347
      %s369 = sphi 0, %s371
      %s372 = sphi 0, %s369
      %s373 = sphi 0, %s372
      %s389 = sphi 0, %s373
      %s395 = sphi 0, %s397
      %s398 = sphi 0, %s395
      %s399 = sphi 0, %s398
      %s415 = sphi 0, %s399
      %s421 = sphi 0, %s423
      %s424 = sphi 0, %s421
      %s425 = sphi 0, %s424
      %s441 = sphi 0, %s425
    $region4: #{_lambda_.8} parent=1 // loop_header_branch
      %37 = sbr.rel (%p35) target = $region8
    $region5: #{_lambda_.8} parent=1 // loop_body
      %s39 = ssub.s32 %s34, 1
      %s40 = ssub.s32 %s34, 2
      %s41 = sadd.s32 %s34, 1
      %s42 = ssub.s32 %s34, %s41
      %p43 = scmp.eq.s32.totalorder %s42, 0
      %s45 = sadd.s32 %s44, 1
      %s46 = scalar_select %p43, %s44, %s45
      %p49 = pneg %p43
      %p50 = scmp.eq.s32.totalorder %s34, 1
      %p51 = por %p49, %p50
      %p52 = scmp.ne.s32.totalorder %s44, %s47
      %p53 = scmp.eq.s32.totalorder %s34, 0
      %p54 = por %p52, %p53
      %p55 = scmp.ne.s32.totalorder %s44, %s47
      %p56 = scmp.eq.s32.totalorder %s39, 1
      %p57 = por %p55, %p56
      %p58 = scmp.ne.s32.totalorder %s47, %s48
      %p59 = scmp.eq.s32.totalorder %s39, 0
      %p60 = por %p58, %p59
      %p61 = scmp.ne.s32.totalorder %s47, %s48
      %p62 = scmp.eq.s32.totalorder %s40, 1
      %p63 = por %p61, %p62
      %p65 = scmp.ne.s32.totalorder %s48, %s64
      %p66 = scmp.eq.s32.totalorder %s40, 0
      %p67 = por %p65, %p66
      %s69 = sadd.s32 %s68, 1
      %p72 = scmp.eq.s32.totalorder %s34, 1
      %p73 = scmp.ne.s32.totalorder %s68, %s70
      %p74 = scmp.eq.s32.totalorder %s34, 0
      %p75 = por %p73, %p74
      %p76 = scmp.ne.s32.totalorder %s68, %s70
      %p77 = scmp.eq.s32.totalorder %s39, 1
      %p78 = por %p76, %p77
      %p79 = scmp.ne.s32.totalorder %s70, %s71
      %p80 = scmp.eq.s32.totalorder %s39, 0
      %p81 = por %p79, %p80
      %p82 = scmp.ne.s32.totalorder %s70, %s71
      %p83 = scmp.eq.s32.totalorder %s40, 1
      %p84 = por %p82, %p83
      %p86 = scmp.ne.s32.totalorder %s71, %s85
      %p87 = scmp.eq.s32.totalorder %s40, 0
      %p88 = por %p86, %p87
      %s90 = sadd.s32 %s89, 1
      %p93 = scmp.eq.s32.totalorder %s34, 1
      %p94 = scmp.ne.s32.totalorder %s89, %s91
      %p95 = scmp.eq.s32.totalorder %s34, 0
      %p96 = por %p94, %p95
      %p97 = scmp.ne.s32.totalorder %s89, %s91
      %p98 = scmp.eq.s32.totalorder %s39, 1
      %p99 = por %p97, %p98
      %p100 = scmp.ne.s32.totalorder %s91, %s92
      %p101 = scmp.eq.s32.totalorder %s39, 0
      %p102 = por %p100, %p101
      %p103 = scmp.ne.s32.totalorder %s91, %s92
      %p104 = scmp.eq.s32.totalorder %s40, 1
      %p105 = por %p103, %p104
      %p107 = scmp.ne.s32.totalorder %s92, %s106
      %p108 = scmp.eq.s32.totalorder %s40, 0
      %p109 = por %p107, %p108
      %s111 = sadd.s32 %s110, 1
      %p114 = scmp.eq.s32.totalorder %s34, 1
      %p115 = scmp.ne.s32.totalorder %s110, %s112
      %p116 = scmp.eq.s32.totalorder %s34, 0
      %p117 = por %p115, %p116
      %p118 = scmp.ne.s32.totalorder %s110, %s112
      %p119 = scmp.eq.s32.totalorder %s39, 1
      %p120 = por %p118, %p119
      %p121 = scmp.ne.s32.totalorder %s112, %s113
      %p122 = scmp.eq.s32.totalorder %s39, 0
      %p123 = por %p121, %p122
      %p124 = scmp.ne.s32.totalorder %s112, %s113
      %p125 = scmp.eq.s32.totalorder %s40, 1
      %p126 = por %p124, %p125
      %p128 = scmp.ne.s32.totalorder %s113, %s127
      %p129 = scmp.eq.s32.totalorder %s40, 0
      %p130 = por %p128, %p129
      %s132 = sadd.s32 %s131, 1
      %p135 = scmp.eq.s32.totalorder %s34, 1
      %p136 = scmp.ne.s32.totalorder %s131, %s133
      %p137 = scmp.eq.s32.totalorder %s34, 0
      %p138 = por %p136, %p137
      %p139 = scmp.ne.s32.totalorder %s131, %s133
      %p140 = scmp.eq.s32.totalorder %s39, 1
      %p141 = por %p139, %p140
      %p142 = scmp.ne.s32.totalorder %s133, %s134
      %p143 = scmp.eq.s32.totalorder %s39, 0
      %p144 = por %p142, %p143
      %p145 = scmp.ne.s32.totalorder %s133, %s134
      %p146 = scmp.eq.s32.totalorder %s40, 1
      %p147 = por %p145, %p146
      %p149 = scmp.ne.s32.totalorder %s134, %s148
      %p150 = scmp.eq.s32.totalorder %s40, 0
      %p151 = por %p149, %p150
      %s153 = sadd.s32 %s152, 1
      %p156 = scmp.eq.s32.totalorder %s34, 1
      %p157 = scmp.ne.s32.totalorder %s152, %s154
      %p158 = scmp.eq.s32.totalorder %s34, 0
      %p159 = por %p157, %p158
      %p160 = scmp.ne.s32.totalorder %s152, %s154
      %p161 = scmp.eq.s32.totalorder %s39, 1
      %p162 = por %p160, %p161
      %p163 = scmp.ne.s32.totalorder %s154, %s155
      %p164 = scmp.eq.s32.totalorder %s39, 0
      %p165 = por %p163, %p164
      %p166 = scmp.ne.s32.totalorder %s154, %s155
      %p167 = scmp.eq.s32.totalorder %s40, 1
      %p168 = por %p166, %p167
      %p170 = scmp.ne.s32.totalorder %s155, %s169
      %p171 = scmp.eq.s32.totalorder %s40, 0
      %p172 = por %p170, %p171
      %s174 = sadd.s32 %s173, 1
      %p177 = scmp.eq.s32.totalorder %s34, 1
      %p178 = scmp.ne.s32.totalorder %s173, %s175
      %p179 = scmp.eq.s32.totalorder %s34, 0
      %p180 = por %p178, %p179
      %p181 = scmp.ne.s32.totalorder %s173, %s175
      %p182 = scmp.eq.s32.totalorder %s39, 1
      %p183 = por %p181, %p182
      %p184 = scmp.ne.s32.totalorder %s175, %s176
      %p185 = scmp.eq.s32.totalorder %s39, 0
      %p186 = por %p184, %p185
      %p187 = scmp.ne.s32.totalorder %s175, %s176
      %p188 = scmp.eq.s32.totalorder %s40, 1
      %p189 = por %p187, %p188
      %p191 = scmp.ne.s32.totalorder %s176, %s190
      %p192 = scmp.eq.s32.totalorder %s40, 0
      %p193 = por %p191, %p192
      %s195 = sadd.s32 %s194, 1
      %p198 = scmp.eq.s32.totalorder %s34, 1
      %p199 = scmp.ne.s32.totalorder %s194, %s196
      %p200 = scmp.eq.s32.totalorder %s34, 0
      %p201 = por %p199, %p200
      %p202 = scmp.ne.s32.totalorder %s194, %s196
      %p203 = scmp.eq.s32.totalorder %s39, 1
      %p204 = por %p202, %p203
      %p205 = scmp.ne.s32.totalorder %s196, %s197
      %p206 = scmp.eq.s32.totalorder %s39, 0
      %p207 = por %p205, %p206
      %p208 = scmp.ne.s32.totalorder %s196, %s197
      %p209 = scmp.eq.s32.totalorder %s40, 1
      %p210 = por %p208, %p209
      %p212 = scmp.ne.s32.totalorder %s197, %s211
      %p213 = scmp.eq.s32.totalorder %s40, 0
      %p214 = por %p212, %p213
      %s216 = sadd.s32 %s215, 1
      %p219 = scmp.eq.s32.totalorder %s34, 1
      %p220 = scmp.ne.s32.totalorder %s215, %s217
      %p221 = scmp.eq.s32.totalorder %s34, 0
      %p222 = por %p220, %p221
      %p223 = scmp.ne.s32.totalorder %s215, %s217
      %p224 = scmp.eq.s32.totalorder %s39, 1
      %p225 = por %p223, %p224
      %p226 = scmp.ne.s32.totalorder %s217, %s218
      %p227 = scmp.eq.s32.totalorder %s39, 0
      %p228 = por %p226, %p227
      %p229 = scmp.ne.s32.totalorder %s217, %s218
      %p230 = scmp.eq.s32.totalorder %s40, 1
      %p231 = por %p229, %p230
      %p233 = scmp.ne.s32.totalorder %s218, %s232
      %p234 = scmp.eq.s32.totalorder %s40, 0
      %p235 = por %p233, %p234
      %s237 = sadd.s32 %s236, 1
      %p240 = scmp.eq.s32.totalorder %s34, 1
      %p241 = scmp.ne.s32.totalorder %s236, %s238
      %p242 = scmp.eq.s32.totalorder %s34, 0
      %p243 = por %p241, %p242
      %p244 = scmp.ne.s32.totalorder %s236, %s238
      %p245 = scmp.eq.s32.totalorder %s39, 1
      %p246 = por %p244, %p245
      %p247 = scmp.ne.s32.totalorder %s238, %s239
      %p248 = scmp.eq.s32.totalorder %s39, 0
      %p249 = por %p247, %p248
      %p250 = scmp.ne.s32.totalorder %s238, %s239
      %p251 = scmp.eq.s32.totalorder %s40, 1
      %p252 = por %p250, %p251
      %p254 = scmp.ne.s32.totalorder %s239, %s253
      %p255 = scmp.eq.s32.totalorder %s40, 0
      %p256 = por %p254, %p255
      %s258 = sadd.s32 %s257, 1
      %p261 = scmp.eq.s32.totalorder %s34, 1
      %p262 = scmp.ne.s32.totalorder %s257, %s259
      %p263 = scmp.eq.s32.totalorder %s34, 0
      %p264 = por %p262, %p263
      %p265 = scmp.ne.s32.totalorder %s257, %s259
      %p266 = scmp.eq.s32.totalorder %s39, 1
      %p267 = por %p265, %p266
      %p268 = scmp.ne.s32.totalorder %s259, %s260
      %p269 = scmp.eq.s32.totalorder %s39, 0
      %p270 = por %p268, %p269
      %p271 = scmp.ne.s32.totalorder %s259, %s260
      %p272 = scmp.eq.s32.totalorder %s40, 1
      %p273 = por %p271, %p272
      %p275 = scmp.ne.s32.totalorder %s260, %s274
      %p276 = scmp.eq.s32.totalorder %s40, 0
      %p277 = por %p275, %p276
      %s279 = sadd.s32 %s278, 1
      %p282 = scmp.eq.s32.totalorder %s34, 1
      %p283 = scmp.ne.s32.totalorder %s278, %s280
      %p284 = scmp.eq.s32.totalorder %s34, 0
      %p285 = por %p283, %p284
      %p286 = scmp.ne.s32.totalorder %s278, %s280
      %p287 = scmp.eq.s32.totalorder %s39, 1
      %p288 = por %p286, %p287
      %p289 = scmp.ne.s32.totalorder %s280, %s281
      %p290 = scmp.eq.s32.totalorder %s39, 0
      %p291 = por %p289, %p290
      %p292 = scmp.ne.s32.totalorder %s280, %s281
      %p293 = scmp.eq.s32.totalorder %s40, 1
      %p294 = por %p292, %p293
      %p296 = scmp.ne.s32.totalorder %s281, %s295
      %p297 = scmp.eq.s32.totalorder %s40, 0
      %p298 = por %p296, %p297
      %s300 = sadd.s32 %s299, 1
      %p303 = scmp.eq.s32.totalorder %s34, 1
      %p304 = scmp.ne.s32.totalorder %s299, %s301
      %p305 = scmp.eq.s32.totalorder %s34, 0
      %p306 = por %p304, %p305
      %p307 = scmp.ne.s32.totalorder %s299, %s301
      %p308 = scmp.eq.s32.totalorder %s39, 1
      %p309 = por %p307, %p308
      %p310 = scmp.ne.s32.totalorder %s301, %s302
      %p311 = scmp.eq.s32.totalorder %s39, 0
      %p312 = por %p310, %p311
      %p313 = scmp.ne.s32.totalorder %s301, %s302
      %p314 = scmp.eq.s32.totalorder %s40, 1
      %p315 = por %p313, %p314
      %p317 = scmp.ne.s32.totalorder %s302, %s316
      %p318 = scmp.eq.s32.totalorder %s40, 0
      %p319 = por %p317, %p318
      %s321 = sadd.s32 %s320, 1
      %p324 = scmp.eq.s32.totalorder %s34, 1
      %p325 = scmp.ne.s32.totalorder %s320, %s322
      %p326 = scmp.eq.s32.totalorder %s34, 0
      %p327 = por %p325, %p326
      %p328 = scmp.ne.s32.totalorder %s320, %s322
      %p329 = scmp.eq.s32.totalorder %s39, 1
      %p330 = por %p328, %p329
      %p331 = scmp.ne.s32.totalorder %s322, %s323
      %p332 = scmp.eq.s32.totalorder %s39, 0
      %p333 = por %p331, %p332
      %p334 = scmp.ne.s32.totalorder %s322, %s323
      %p335 = scmp.eq.s32.totalorder %s40, 1
      %p336 = por %p334, %p335
      %p338 = scmp.ne.s32.totalorder %s323, %s337
      %p339 = scmp.eq.s32.totalorder %s40, 0
      %p340 = por %p338, %p339
      %s341 = ssub.s32 %s34, %s41
      %p342 = scmp.eq.s32.totalorder %s341, 0
      %s344 = sadd.s32 %s343, 1
      %s345 = scalar_select %p342, %s343, %s344
      %p348 = pneg %p342
      %p349 = scmp.eq.s32.totalorder %s34, 1
      %p350 = por %p348, %p349
      %p351 = scmp.ne.s32.totalorder %s343, %s346
      %p352 = scmp.eq.s32.totalorder %s34, 0
      %p353 = por %p351, %p352
      %p354 = scmp.ne.s32.totalorder %s343, %s346
      %p355 = scmp.eq.s32.totalorder %s39, 1
      %p356 = por %p354, %p355
      %p357 = scmp.ne.s32.totalorder %s346, %s347
      %p358 = scmp.eq.s32.totalorder %s39, 0
      %p359 = por %p357, %p358
      %p360 = scmp.ne.s32.totalorder %s346, %s347
      %p361 = scmp.eq.s32.totalorder %s40, 1
      %p362 = por %p360, %p361
      %p364 = scmp.ne.s32.totalorder %s347, %s363
      %p365 = scmp.eq.s32.totalorder %s40, 0
      %p366 = por %p364, %p365
      %s367 = ssub.s32 %s34, %s41
      %p368 = scmp.eq.s32.totalorder %s367, 0
      %s370 = sadd.s32 %s369, 1
      %s371 = scalar_select %p368, %s369, %s370
      %p374 = pneg %p368
      %p375 = scmp.eq.s32.totalorder %s34, 1
      %p376 = por %p374, %p375
      %p377 = scmp.ne.s32.totalorder %s369, %s372
      %p378 = scmp.eq.s32.totalorder %s34, 0
      %p379 = por %p377, %p378
      %p380 = scmp.ne.s32.totalorder %s369, %s372
      %p381 = scmp.eq.s32.totalorder %s39, 1
      %p382 = por %p380, %p381
      %p383 = scmp.ne.s32.totalorder %s372, %s373
      %p384 = scmp.eq.s32.totalorder %s39, 0
      %p385 = por %p383, %p384
      %p386 = scmp.ne.s32.totalorder %s372, %s373
      %p387 = scmp.eq.s32.totalorder %s40, 1
      %p388 = por %p386, %p387
      %p390 = scmp.ne.s32.totalorder %s373, %s389
      %p391 = scmp.eq.s32.totalorder %s40, 0
      %p392 = por %p390, %p391
      %s393 = ssub.s32 %s34, %s41
      %p394 = scmp.eq.s32.totalorder %s393, 0
      %s396 = sadd.s32 %s395, 1
      %s397 = scalar_select %p394, %s395, %s396
      %p400 = pneg %p394
      %p401 = scmp.eq.s32.totalorder %s34, 1
      %p402 = por %p400, %p401
      %p403 = scmp.ne.s32.totalorder %s395, %s398
      %p404 = scmp.eq.s32.totalorder %s34, 0
      %p405 = por %p403, %p404
      %p406 = scmp.ne.s32.totalorder %s395, %s398
      %p407 = scmp.eq.s32.totalorder %s39, 1
      %p408 = por %p406, %p407
      %p409 = scmp.ne.s32.totalorder %s398, %s399
      %p410 = scmp.eq.s32.totalorder %s39, 0
      %p411 = por %p409, %p410
      %p412 = scmp.ne.s32.totalorder %s398, %s399
      %p413 = scmp.eq.s32.totalorder %s40, 1
      %p414 = por %p412, %p413
      %p416 = scmp.ne.s32.totalorder %s399, %s415
      %p417 = scmp.eq.s32.totalorder %s40, 0
      %p418 = por %p416, %p417
      %s419 = ssub.s32 %s34, %s41
      %p420 = scmp.eq.s32.totalorder %s419, 0
      %s422 = sadd.s32 %s421, 1
      %s423 = scalar_select %p420, %s421, %s422
      %p426 = pneg %p420
      %p427 = scmp.eq.s32.totalorder %s34, 1
      %p428 = por %p426, %p427
      %p429 = scmp.ne.s32.totalorder %s421, %s424
      %p430 = scmp.eq.s32.totalorder %s34, 0
      %p431 = por %p429, %p430
      %p432 = scmp.ne.s32.totalorder %s421, %s424
      %p433 = scmp.eq.s32.totalorder %s39, 1
      %p434 = por %p432, %p433
      %p435 = scmp.ne.s32.totalorder %s424, %s425
      %p436 = scmp.eq.s32.totalorder %s39, 0
      %p437 = por %p435, %p436
      %p438 = scmp.ne.s32.totalorder %s424, %s425
      %p439 = scmp.eq.s32.totalorder %s40, 1
      %p440 = por %p438, %p439
      %p442 = scmp.ne.s32.totalorder %s425, %s441
      %p443 = scmp.eq.s32.totalorder %s40, 0
      %p444 = por %p442, %p443
      %p445 = scmp.le.s32.totalorder 1, %s34
      %p446 = scmp.lt.s32.totalorder %s34, 3
      %p447 = pnand %p445, %p446
      %p448 = pneg %p447
      // Predicated region
      $region9: #{_lambda_.8} parent=5 // pred_check
        _
      $region10: #{_lambda_.8} parent=5 // pred_check_branch
        %450 = sbr.rel (%p447) target = $region12
      $region11: #{_lambda_.8} parent=5 // pred_region
        %s451 = ssub.s32 %s34, 1
        // Predicated region
        $region13: #{_lambda_.8} parent=11 // pred_check
          %p452 = pneg %p81
        $region14: #{_lambda_.8} parent=11 // pred_check_branch
          %454 = sbr.rel (%p452) target = $region16
        $region15: #{_lambda_.8} parent=11 // pred_region
          _
        $region16: #{_lambda_.8} parent=11 // pred_fallthru
          _
        // Predicated region
        $region17: #{_lambda_.8} parent=11 // pred_check
          %p455 = pneg %p102
        $region18: #{_lambda_.8} parent=11 // pred_check_branch
          %457 = sbr.rel (%p455) target = $region20
        $region19: #{_lambda_.8} parent=11 // pred_region
          _
        $region20: #{_lambda_.8} parent=11 // pred_fallthru
          _
        // Predicated region
        $region21: #{_lambda_.8} parent=11 // pred_check
          %p458 = pneg %p123
        $region22: #{_lambda_.8} parent=11 // pred_check_branch
          %460 = sbr.rel (%p458) target = $region24
        $region23: #{_lambda_.8} parent=11 // pred_region
          _
        $region24: #{_lambda_.8} parent=11 // pred_fallthru
          _
        // Predicated region
        $region25: #{_lambda_.8} parent=11 // pred_check
          %p461 = pneg %p144
        $region26: #{_lambda_.8} parent=11 // pred_check_branch
          %463 = sbr.rel (%p461) target = $region28
        $region27: #{_lambda_.8} parent=11 // pred_region
          %465 = vsyncadd [#allocation4], 0
          %s466 = sshll.u32 %s4, 4
          %s467 = int_to_ptr.hbm [resolvable:$true] %s466
          %s468 = sshll.u32 [#allocation3], 4
          %s469 = int_to_ptr.vmem [resolvable:$true] %s468
          %474 = dma.hbm_to_vmem [thread:$0]  %s467, 512, %s469, [#allocation4], 128, 128, 8
        $region28: #{_lambda_.8} parent=11 // pred_fallthru
          _
        // Predicated region
        $region29: #{_lambda_.8} parent=11 // pred_check
          %p475 = pneg %p165
        $region30: #{_lambda_.8} parent=11 // pred_check_branch
          %477 = sbr.rel (%p475) target = $region32
        $region31: #{_lambda_.8} parent=11 // pred_region
          _
        $region32: #{_lambda_.8} parent=11 // pred_fallthru
          _
        // Predicated region
        $region33: #{_lambda_.8} parent=11 // pred_check
          %p478 = pneg %p186
        $region34: #{_lambda_.8} parent=11 // pred_check_branch
          %480 = sbr.rel (%p478) target = $region36
        $region35: #{_lambda_.8} parent=11 // pred_region
          %482 = vsyncadd [#allocation7], 0
          %s483 = sshll.u32 %s6, 4
          %s484 = int_to_ptr.hbm [resolvable:$true] %s483
          %s485 = sshll.u32 [#allocation6], 4
          %s486 = int_to_ptr.vmem [resolvable:$true] %s485
          %491 = dma.hbm_to_vmem [thread:$0]  %s484, 512, %s486, [#allocation7], 128, 128, 8
        $region36: #{_lambda_.8} parent=11 // pred_fallthru
          _
        // Predicated region
        $region37: #{_lambda_.8} parent=11 // pred_check
          %p492 = pneg %p207
        $region38: #{_lambda_.8} parent=11 // pred_check_branch
          %494 = sbr.rel (%p492) target = $region40
        $region39: #{_lambda_.8} parent=11 // pred_region
          _
        $region40: #{_lambda_.8} parent=11 // pred_fallthru
          _
        // Predicated region
        $region41: #{_lambda_.8} parent=11 // pred_check
          %p495 = pneg %p228
        $region42: #{_lambda_.8} parent=11 // pred_check_branch
          %497 = sbr.rel (%p495) target = $region44
        $region43: #{_lambda_.8} parent=11 // pred_region
          %499 = vsyncadd [#allocation7], 0
          %s500 = sshll.u32 %s8, 4
          %s501 = int_to_ptr.hbm [resolvable:$true] %s500
          %s502 = sshll.u32 [#allocation8], 4
          %s503 = int_to_ptr.vmem [resolvable:$true] %s502
          %508 = dma.hbm_to_vmem [thread:$0]  %s501, 512, %s503, [#allocation7], 128, 128, 8
        $region44: #{_lambda_.8} parent=11 // pred_fallthru
          _
        // Predicated region
        $region45: #{_lambda_.8} parent=11 // pred_check
          %p509 = pneg %p249
        $region46: #{_lambda_.8} parent=11 // pred_check_branch
          %511 = sbr.rel (%p509) target = $region48
        $region47: #{_lambda_.8} parent=11 // pred_region
          _
        $region48: #{_lambda_.8} parent=11 // pred_fallthru
          _
        // Predicated region
        $region49: #{_lambda_.8} parent=11 // pred_check
          %p512 = pneg %p270
        $region50: #{_lambda_.8} parent=11 // pred_check_branch
          %514 = sbr.rel (%p512) target = $region52
        $region51: #{_lambda_.8} parent=11 // pred_region
          _
        $region52: #{_lambda_.8} parent=11 // pred_fallthru
          _
        // Predicated region
        $region53: #{_lambda_.8} parent=11 // pred_check
          %p515 = pneg %p291
        $region54: #{_lambda_.8} parent=11 // pred_check_branch
          %517 = sbr.rel (%p515) target = $region56
        $region55: #{_lambda_.8} parent=11 // pred_region
          %519 = vsyncadd [#allocation10], 0
          %s521 = sshll.u32 %s11, 4
          %s522 = int_to_ptr.hbm [resolvable:$true] %s521
          %s523 = sshll.u32 [#allocation9], 4
          %s524 = int_to_ptr.vmem [resolvable:$true] %s523
          %526 = dma.hbm_to_vmem [thread:$0]  %s522, 16, %s524, [#allocation10]
        $region56: #{_lambda_.8} parent=11 // pred_fallthru
          _
        // Predicated region
        $region57: #{_lambda_.8} parent=11 // pred_check
          %p527 = pneg %p312
        $region58: #{_lambda_.8} parent=11 // pred_check_branch
          %529 = sbr.rel (%p527) target = $region60
        $region59: #{_lambda_.8} parent=11 // pred_region
          %531 = vsyncadd [#allocation10], 0
          %s533 = sshll.u32 %s12, 4
          %s534 = int_to_ptr.hbm [resolvable:$true] %s533
          %s535 = sshll.u32 [#allocation11], 4
          %s536 = int_to_ptr.vmem [resolvable:$true] %s535
          %538 = dma.hbm_to_vmem [thread:$0]  %s534, 16, %s536, [#allocation10]
        $region60: #{_lambda_.8} parent=11 // pred_fallthru
          _
        // Predicated region
        $region61: #{_lambda_.8} parent=11 // pred_check
          %p539 = pneg %p333
        $region62: #{_lambda_.8} parent=11 // pred_check_branch
          %541 = sbr.rel (%p539) target = $region64
        $region63: #{_lambda_.8} parent=11 // pred_region
          %543 = vsyncadd [#allocation13], 0
          %s545 = sshll.u32 %s13, 4
          %s546 = int_to_ptr.hbm [resolvable:$true] %s545
          %s547 = sshll.u32 [#allocation12], 4
          %s548 = int_to_ptr.vmem [resolvable:$true] %s547
          %550 = dma.hbm_to_vmem [thread:$0]  %s546, 16, %s548, [#allocation13]
        $region64: #{_lambda_.8} parent=11 // pred_fallthru
          _
      $region12: #{_lambda_.8} parent=5 // pred_fallthru
        _
      %p551 = scmp.lt.s32.totalorder %s34, 2
      // Predicated region
      $region65: #{_lambda_.8} parent=5 // pred_check
        %p552 = pneg %p551
      $region66: #{_lambda_.8} parent=5 // pred_check_branch
        %554 = sbr.rel (%p552) target = $region68
      $region67: #{_lambda_.8} parent=5 // pred_region
        // Predicated region
        $region69: #{_lambda_.8} parent=67 // pred_check
          %p555 = pneg %p54
        $region70: #{_lambda_.8} parent=67 // pred_check_branch
          %557 = sbr.rel (%p555) target = $region72
        $region71: #{_lambda_.8} parent=67 // pred_region
          %p558 = scmp.lt.s32.totalorder %s34, 1
          %s559 = scalar_select %p558, %s34, 1
          %s560 = smul.addr %s559, 8
          %s561 = scalar_lea.vmem %s0, %s560
        $region72: #{_lambda_.8} parent=67 // pred_fallthru
          _
      $region68: #{_lambda_.8} parent=5 // pred_fallthru
        _
      %p562 = scmp.le.s32.totalorder 1, %s34
      %p563 = scmp.lt.s32.totalorder %s34, 3
      %p564 = pnand %p562, %p563
      %p565 = pneg %p564
      // Predicated region
      $region73: #{_lambda_.8} parent=5 // pred_check
        _
      $region74: #{_lambda_.8} parent=5 // pred_check_branch
        %567 = sbr.rel (%p564) target = $region76
      $region75: #{_lambda_.8} parent=5 // pred_region
        %s568 = ssub.s32 %s34, 1
        // Predicated region
        $region77: #{_lambda_.8} parent=75 // pred_check
          %p569 = pneg %p144
        $region78: #{_lambda_.8} parent=75 // pred_check_branch
          %571 = sbr.rel (%p569) target = $region80
        $region79: #{_lambda_.8} parent=75 // pred_region
          %573 = dma.done [#allocation4], 512
        $region80: #{_lambda_.8} parent=75 // pred_fallthru
          _
        // Predicated region
        $region81: #{_lambda_.8} parent=75 // pred_check
          %p574 = pneg %p186
        $region82: #{_lambda_.8} parent=75 // pred_check_branch
          %576 = sbr.rel (%p574) target = $region84
        $region83: #{_lambda_.8} parent=75 // pred_region
          %578 = dma.done [#allocation7], 512
        $region84: #{_lambda_.8} parent=75 // pred_fallthru
          _
        // Predicated region
        $region85: #{_lambda_.8} parent=75 // pred_check
          %p579 = pneg %p228
        $region86: #{_lambda_.8} parent=75 // pred_check_branch
          %581 = sbr.rel (%p579) target = $region88
        $region87: #{_lambda_.8} parent=75 // pred_region
          %583 = dma.done [#allocation7], 512
        $region88: #{_lambda_.8} parent=75 // pred_fallthru
          _
        // Predicated region
        $region89: #{_lambda_.8} parent=75 // pred_check
          %p584 = pneg %p291
        $region90: #{_lambda_.8} parent=75 // pred_check_branch
          %586 = sbr.rel (%p584) target = $region92
        $region91: #{_lambda_.8} parent=75 // pred_region
          %588 = dma.done [#allocation10], 16
        $region92: #{_lambda_.8} parent=75 // pred_fallthru
          _
        // Predicated region
        $region93: #{_lambda_.8} parent=75 // pred_check
          %p589 = pneg %p312
        $region94: #{_lambda_.8} parent=75 // pred_check_branch
          %591 = sbr.rel (%p589) target = $region96
        $region95: #{_lambda_.8} parent=75 // pred_region
          %593 = dma.done [#allocation10], 16
        $region96: #{_lambda_.8} parent=75 // pred_fallthru
          _
        // Predicated region
        $region97: #{_lambda_.8} parent=75 // pred_check
          %p594 = pneg %p333
        $region98: #{_lambda_.8} parent=75 // pred_check_branch
          %596 = sbr.rel (%p594) target = $region100
        $region99: #{_lambda_.8} parent=75 // pred_region
          %598 = dma.done [#allocation13], 16
        $region100: #{_lambda_.8} parent=75 // pred_fallthru
          _
        %p599 = scmp.lt.s32.totalorder %s39, 1
        %s600 = scalar_select %p599, %s39, 1
        %s601 = smul.addr %s600, 8
        %s602 = scalar_lea.vmem %s0, %s601
        %p603 = pneg %p60
        %p604 = pneg %p57
        %p605 = pneg %p81
        %p606 = pneg %p78
        %p607 = pneg %p102
        %p608 = pneg %p99
        %p609 = pneg %p123
        %p610 = pneg %p120
        %p611 = pneg %p144
        %p612 = pneg %p141
        %p613 = pneg %p165
        %p614 = pneg %p162
        %p615 = pneg %p186
        %p616 = pneg %p183
        %p617 = pneg %p207
        %p618 = pneg %p204
        %p619 = pneg %p228
        %p620 = pneg %p225
        %p621 = pneg %p249
        %p622 = pneg %p246
        %p623 = pneg %p270
        %p624 = pneg %p267
        %p625 = pneg %p291
        %p626 = pneg %p288
        %p627 = pneg %p312
        %p628 = pneg %p309
        %p629 = pneg %p333
        %p630 = pneg %p330
        %p631 = pneg %p359
        %p632 = pneg %p356
        %p633 = scmp.lt.s32.totalorder %s39, 1
        %s634 = scalar_select %p633, %s39, 1
        %s635 = smul.addr %s634, 8
        %s636 = scalar_lea.vmem %s14, %s635
        %p637 = pneg %p385
        %p638 = pneg %p382
        %s639 = sand.u32 %s372, 1
        %s640 = scalar_lea.sflag [#allocation5], %s639
        %s641 = sand.u32 %s372, 1
        %s642 = smul.addr %s641, 32
        %s643 = scalar_lea.vmem [#allocation14], %s642
        %p644 = pneg %p411
        %p645 = pneg %p408
        %s646 = sand.u32 %s398, 1
        %s647 = scalar_lea.sflag [#allocation16], %s646
        %s648 = sand.u32 %s398, 1
        %s649 = smul.addr %s648, 32
        %s650 = scalar_lea.vmem [#allocation15], %s649
        %p651 = pneg %p437
        %p652 = pneg %p434
        %p653 = scmp.lt.s32.totalorder %s39, 1
        %s654 = scalar_select %p653, %s39, 1
        %s655 = smul.addr %s654, 4
        %s656 = smul.addr %s655, 8
        %s657 = scalar_lea.vmem %s17, %s656
        %p658 = scmp.lt.s32.totalorder %s39, 1
        %s659 = scalar_select %p658, %s39, 1
        %s660 = smul.addr %s659, 8
        %s661 = scalar_lea.vmem %s0, %s660
        %p662 = scmp.lt.s32.totalorder %s39, 1
        %s663 = scalar_select %p662, %s39, 1
        %s664 = smul.addr %s663, 8
        %s665 = scalar_lea.vmem %s14, %s664
        %p666 = scmp.lt.s32.totalorder %s39, 1
        %s667 = scalar_select %p666, %s39, 1
        %s668 = smul.addr %s667, 4
        %s669 = smul.addr %s668, 8
        %s670 = scalar_lea.vmem %s17, %s669
        %v672 = vld [vmem:[%s661] sm:$0xff]
        %v673 = vld [vmem:[%s1] sm:$0xff]
        %v674 = vld [vmem:[%s2] sm:$0xff]
        %v675 = vld [vmem:[%s2 + $0x8] sm:$0xff]
        %v676 = vld [vmem:[%s2 + $0x10] sm:$0xff]
        %v677 = vld [vmem:[%s2 + $0x18] sm:$0xff]
        %v678 = vpack.c.bf16 %v672, %v672
        %v679 = vpack.c.bf16 %v675, %v674
        %v680 = vpack.c.bf16 %v677, %v676
        %v681 = vld [vmem:[%s3] sm:$0x1]
        %v683 = vperm.slane %v681, 0
        %vm685 = vcmask 261120
        %v687 = vsel %vm685, %v678, 0
        %689 = vmatpush.bf16.msra.mxu0 0
        %690 = vmatpush.bf16.msra.mxu0 0
        %691 = vmatpush.bf16.msra.mxu0 0
        %692 = vmatpush.bf16.msra.mxu0 0
        %693 = vmatpush.bf16.msra.mxu0 0
        %694 = vmatpush.bf16.msra.mxu0 0
        %695 = vmatpush.bf16.msra.mxu0 %v680
        %696 = vmatpush.bf16.msra.mxu0 %v679
        %697 = vmatmul.bf16.gmra.mxu0 %v687
        %v698 = vpop.f32.mrf.mxu0
        %v699 = vadd.f32 %v683, %v698
        %v700 = vpop.f32.mrf.mxu0
        %701 = vdwg.mxu0
        %v702 = vpack.c.bf16 %v699, %v699
        %704 = vrot.lane.b32.xlu0 %v702, 96
        %v705 = vpop.permute.xlu0 %704
        %vm706 = vcmask 64512
        %v708 = vsel %vm706, %v702, 0
        %v711 = vsel %vm706, %v705, 0
        %713 = vmatpush.bf16.xpose.msra.mxu0 0
        %714 = vmatpush.bf16.xpose.msra.mxu0 0
        %715 = vmatpush.bf16.xpose.msra.mxu0 0
        %716 = vmatpush.bf16.xpose.msra.mxu0 0
        %717 = vmatpush.bf16.xpose.msra.mxu0 0
        %718 = vmatpush.bf16.xpose.msra.mxu0 0
        %719 = vmatpush.bf16.xpose.msra.mxu0 0
        %720 = vmatpush.bf16.xpose.msra.mxu0 %v711
        %721 = vmatmul.bf16.gmra.mxu0 %v708
        %v722 = vpop.f32.mrf.mxu0
        %v723 = vadd.f32 0.0, %v722
        %v724 = vpop.f32.mrf.mxu0
        %725 = vdwg.mxu0
        %v726 = vmul.f32 %v723, 0.35355338
        %v727 = vsel %vm706, %v726, -inf
        %728 = vmax.xlane.f32.xlu0 %v727
        %v729 = vpop.xlane.xlu0 %728
        %v730 = vsub.f32 %v726, %v729
        %v731 = vmul.f32 %v730, 1.442695
        %v732 = vpow.pop %v731
        %v733 = vsel %vm706, %v732, 0.0
        %734 = vadd.xlane.f32.xlu0 %v733
        %v735 = vpop.xlane.xlu0 %734
        %v736 = vrcp.pop %v735
        %v737 = vmul.f32 %v732, %v736
        %v738 = vmul.f32 %v699, 5.0
        %v739 = vxor.u32 %v738, 2147483648
        %v740 = vmul.f32 %v739, 1.442695
        %v741 = vpow.pop %v740
        %v742 = vadd.f32 %v741, 1.0
        %v743 = vrcp.pop %v742
        %v744 = vmul.f32 %v742, %v743
        %v745 = vsub.f32 1.0, %v744
        %v746 = vmul.f32 %v743, %v745
        %v747 = vadd.f32 %v743, %v746
        %vm748 = vweird.f32 %v742
        %vm749 = vweird.f32 %v743
        %vm750 = vmor %vm748, %vm749
        %v751 = vsel %vm750, %v743, %v747
        %v752 = vand.u32 2147483647, %v742
        %vm753 = vcmp.eq.f32.partialorder %v752, 8.507059e+37
        %v754 = vand.u32 %v742, 2147483648
        %v755 = vor.u32 1.1754944e-38, %v754
        %v756 = vsel %vm753, %v755, %v751
        %v757 = vmul.f32 1.0, %v756
        %v758 = vadd.f32 %v757, 1e-05
        %v759 = vmul.f32 %v758, 1.0986123
        %v760 = vmul.f32 %v759, 1.442695
        %v761 = vpow.pop %v760
        %v762 = vsub.f32 %v761, 1.0
        %v763 = vrcp.pop %v762
        %v764 = vmul.f32 %v763, 0.3989423
        %v765 = vmul.f32 %v673, %v673
        %v766 = vsub.f32 0.0, %v765
        %v767 = vmul.f32 %v763, 0.5
        %v768 = vmul.f32 %v767, %v763
        %770 = vset.pattern.permute.xlu0 96
        %771 = vperm.xlu0 %770, %v768
        %v772 = vpop.permute.xlu0 %771
        %v774 = vmul.f32 %v766, %v772
        %v775 = vmul.f32 %v774, 1.442695
        %v776 = vpow.pop %v775
        %778 = vset.pattern.permute.xlu0 96
        %779 = vperm.xlu0 %778, %v764
        %v780 = vpop.permute.xlu0 %779
        %v782 = vmul.f32 %v780, %v776
        %v783 = vpack.c.bf16 %v737, %v737
        %784 = vrot.lane.b32.xlu0 %v702, 64
        %v785 = vpop.permute.xlu0 %784
        %v787 = vsel %vm706, %v783, 0
        %vm789 = vcmask 1043456
        %v791 = vsel %vm789, %v785, 0
        %793 = vmatpush.bf16.msra.mxu0 0
        %794 = vmatpush.bf16.msra.mxu0 0
        %795 = vmatpush.bf16.msra.mxu0 0
        %796 = vmatpush.bf16.msra.mxu0 0
        %797 = vmatpush.bf16.msra.mxu0 0
        %798 = vmatpush.bf16.msra.mxu0 0
        %799 = vmatpush.bf16.msra.mxu0 0
        %800 = vmatpush.bf16.msra.mxu0 %v791
        %801 = vmatmul.bf16.gmra.mxu0 %v787
        %v802 = vpop.f32.mrf.mxu0
        %v803 = vadd.f32 0.0, %v802
        %v804 = vpop.f32.mrf.mxu0
        %805 = vdwg.mxu0
        %806 = vst.msk [vmem:[#allocation2] sm:$0xff] %vm706, %v803
        %807 = vst.msk [vmem:[%s643] sm:$0xff] %vm706, %v737
        %808 = vst.msk [vmem:[%s650] sm:$0xff] %vm706, %v782
        %810 = vrot.lane.b32.xlu0 %v762, 32
        %v811 = vpop.permute.xlu0 %810
        %vm813 = vcmask 7168
        %814 = vst.msk [vmem:[%s670] sm:$0xff] %vm813, %v811
        %815 = vrot.lane.b32.xlu0 %v702, 120
        %v816 = vpop.permute.xlu0 %815
        %817 = vrot.lane.b32.xlu0 %v702, 88
        %v818 = vpop.permute.xlu0 %817
        %v820 = vsel %vm706, %v816, 0
        %v823 = vsel %vm706, %v818, 0
        %825 = vmatpush.bf16.xpose.msra.mxu0 0
        %826 = vmatpush.bf16.xpose.msra.mxu0 0
        %827 = vmatpush.bf16.xpose.msra.mxu0 0
        %828 = vmatpush.bf16.xpose.msra.mxu0 0
        %829 = vmatpush.bf16.xpose.msra.mxu0 0
        %830 = vmatpush.bf16.xpose.msra.mxu0 0
        %831 = vmatpush.bf16.xpose.msra.mxu0 0
        %832 = vmatpush.bf16.xpose.msra.mxu0 %v823
        %833 = vmatmul.bf16.gmra.mxu0 %v820
        %v834 = vpop.f32.mrf.mxu0
        %v835 = vadd.f32 0.0, %v834
        %v836 = vpop.f32.mrf.mxu0
        %837 = vdwg.mxu0
        %v838 = vmul.f32 %v835, 0.35355338
        %v839 = vsel %vm706, %v838, -inf
        %840 = vmax.xlane.f32.xlu0 %v839
        %v841 = vpop.xlane.xlu0 %840
        %v842 = vsub.f32 %v838, %v841
        %v843 = vmul.f32 %v842, 1.442695
        %v844 = vpow.pop %v843
        %v845 = vsel %vm706, %v844, 0.0
        %846 = vadd.xlane.f32.xlu0 %v845
        %v847 = vpop.xlane.xlu0 %846
        %v848 = vrcp.pop %v847
        %v849 = vmul.f32 %v844, %v848
        %850 = vset.pattern.permute.xlu0 97
        %851 = vperm.xlu0 %850, %v768
        %v852 = vpop.permute.xlu0 %851
        %v854 = vmul.f32 %v766, %v852
        %v855 = vmul.f32 %v854, 1.442695
        %v856 = vpow.pop %v855
        %857 = vset.pattern.permute.xlu0 97
        %858 = vperm.xlu0 %857, %v764
        %v859 = vpop.permute.xlu0 %858
        %v861 = vmul.f32 %v859, %v856
        %v862 = vpack.c.bf16 %v849, %v849
        %863 = vrot.lane.b32.xlu0 %v702, 56
        %v864 = vpop.permute.xlu0 %863
        %v866 = vsel %vm706, %v862, 0
        %v869 = vsel %vm789, %v864, 0
        %871 = vmatpush.bf16.msra.mxu0 0
        %872 = vmatpush.bf16.msra.mxu0 0
        %873 = vmatpush.bf16.msra.mxu0 0
        %874 = vmatpush.bf16.msra.mxu0 0
        %875 = vmatpush.bf16.msra.mxu0 0
        %876 = vmatpush.bf16.msra.mxu0 0
        %877 = vmatpush.bf16.msra.mxu0 0
        %878 = vmatpush.bf16.msra.mxu0 %v869
        %879 = vmatmul.bf16.gmra.mxu0 %v866
        %v880 = vpop.f32.mrf.mxu0
        %v881 = vadd.f32 0.0, %v880
        %v882 = vpop.f32.mrf.mxu0
        %883 = vdwg.mxu0
        %885 = vrot.lane.b32.xlu0 %v881, 8
        %v886 = vpop.permute.xlu0 %885
        %vm888 = vcmask 130112
        %889 = vst.msk [vmem:[#allocation2] sm:$0xff] %vm888, %v886
        %s890 = scalar_lea.vmem %s643, 8 [#allocation14]
        %891 = vst.msk [vmem:[%s890] sm:$0xff] %vm706, %v849
        %s892 = scalar_lea.vmem %s650, 8 [#allocation15]
        %893 = vst.msk [vmem:[%s892] sm:$0xff] %vm706, %v861
        %894 = vrot.lane.b32.xlu0 %v762, 31
        %v895 = vpop.permute.xlu0 %894
        %s897 = scalar_lea.vmem %s670, 8
        %898 = vst.msk [vmem:[%s897] sm:$0xff] %vm813, %v895
        %899 = vrot.lane.b32.xlu0 %v702, 112
        %v900 = vpop.permute.xlu0 %899
        %901 = vrot.lane.b32.xlu0 %v702, 80
        %v902 = vpop.permute.xlu0 %901
        %v904 = vsel %vm706, %v900, 0
        %v907 = vsel %vm706, %v902, 0
        %909 = vmatpush.bf16.xpose.msra.mxu0 0
        %910 = vmatpush.bf16.xpose.msra.mxu0 0
        %911 = vmatpush.bf16.xpose.msra.mxu0 0
        %912 = vmatpush.bf16.xpose.msra.mxu0 0
        %913 = vmatpush.bf16.xpose.msra.mxu0 0
        %914 = vmatpush.bf16.xpose.msra.mxu0 0
        %915 = vmatpush.bf16.xpose.msra.mxu0 0
        %916 = vmatpush.bf16.xpose.msra.mxu0 %v907
        %917 = vmatmul.bf16.gmra.mxu0 %v904
        %v918 = vpop.f32.mrf.mxu0
        %v919 = vadd.f32 0.0, %v918
        %v920 = vpop.f32.mrf.mxu0
        %921 = vdwg.mxu0
        %v922 = vmul.f32 %v919, 0.35355338
        %v923 = vsel %vm706, %v922, -inf
        %924 = vmax.xlane.f32.xlu0 %v923
        %v925 = vpop.xlane.xlu0 %924
        %v926 = vsub.f32 %v922, %v925
        %v927 = vmul.f32 %v926, 1.442695
        %v928 = vpow.pop %v927
        %v929 = vsel %vm706, %v928, 0.0
        %930 = vadd.xlane.f32.xlu0 %v929
        %v931 = vpop.xlane.xlu0 %930
        %v932 = vrcp.pop %v931
        %v933 = vmul.f32 %v928, %v932
        %934 = vset.pattern.permute.xlu0 98
        %935 = vperm.xlu0 %934, %v768
        %v936 = vpop.permute.xlu0 %935
        %v938 = vmul.f32 %v766, %v936
        %v939 = vmul.f32 %v938, 1.442695
        %v940 = vpow.pop %v939
        %941 = vset.pattern.permute.xlu0 98
        %942 = vperm.xlu0 %941, %v764
        %v943 = vpop.permute.xlu0 %942
        %v945 = vmul.f32 %v943, %v940
        %v946 = vpack.c.bf16 %v933, %v933
        %947 = vrot.lane.b32.xlu0 %v702, 48
        %v948 = vpop.permute.xlu0 %947
        %v950 = vsel %vm706, %v946, 0
        %v953 = vsel %vm789, %v948, 0
        %955 = vmatpush.bf16.msra.mxu0 0
        %956 = vmatpush.bf16.msra.mxu0 0
        %957 = vmatpush.bf16.msra.mxu0 0
        %958 = vmatpush.bf16.msra.mxu0 0
        %959 = vmatpush.bf16.msra.mxu0 0
        %960 = vmatpush.bf16.msra.mxu0 0
        %961 = vmatpush.bf16.msra.mxu0 0
        %962 = vmatpush.bf16.msra.mxu0 %v953
        %963 = vmatmul.bf16.gmra.mxu0 %v950
        %v964 = vpop.f32.mrf.mxu0
        %v965 = vadd.f32 0.0, %v964
        %v966 = vpop.f32.mrf.mxu0
        %967 = vdwg.mxu0
        %969 = vrot.lane.b32.xlu0 %v965, 16
        %v970 = vpop.permute.xlu0 %969
        %vm972 = vcmask 195712
        %973 = vst.msk [vmem:[#allocation2] sm:$0xff] %vm972, %v970
        %s974 = scalar_lea.vmem %s643, 16 [#allocation14]
        %975 = vst.msk [vmem:[%s974] sm:$0xff] %vm706, %v933
        %s976 = scalar_lea.vmem %s650, 16 [#allocation15]
        %977 = vst.msk [vmem:[%s976] sm:$0xff] %vm706, %v945
        %978 = vrot.lane.b32.xlu0 %v762, 30
        %v979 = vpop.permute.xlu0 %978
        %s981 = scalar_lea.vmem %s670, 16
        %982 = vst.msk [vmem:[%s981] sm:$0xff] %vm813, %v979
        %983 = vrot.lane.b32.xlu0 %v702, 104
        %v984 = vpop.permute.xlu0 %983
        %985 = vrot.lane.b32.xlu0 %v702, 72
        %v986 = vpop.permute.xlu0 %985
        %v988 = vsel %vm706, %v984, 0
        %v991 = vsel %vm706, %v986, 0
        %993 = vmatpush.bf16.xpose.msra.mxu0 0
        %994 = vmatpush.bf16.xpose.msra.mxu0 0
        %995 = vmatpush.bf16.xpose.msra.mxu0 0
        %996 = vmatpush.bf16.xpose.msra.mxu0 0
        %997 = vmatpush.bf16.xpose.msra.mxu0 0
        %998 = vmatpush.bf16.xpose.msra.mxu0 0
        %999 = vmatpush.bf16.xpose.msra.mxu0 0
        %1000 = vmatpush.bf16.xpose.msra.mxu0 %v991
        %1001 = vmatmul.bf16.gmra.mxu0 %v988
        %v1002 = vpop.f32.mrf.mxu0
        %v1003 = vadd.f32 0.0, %v1002
        %v1004 = vpop.f32.mrf.mxu0
        %1005 = vdwg.mxu0
        %v1006 = vmul.f32 %v1003, 0.35355338
        %v1007 = vsel %vm706, %v1006, -inf
        %1008 = vmax.xlane.f32.xlu0 %v1007
        %v1009 = vpop.xlane.xlu0 %1008
        %v1010 = vsub.f32 %v1006, %v1009
        %v1011 = vmul.f32 %v1010, 1.442695
        %v1012 = vpow.pop %v1011
        %v1013 = vsel %vm706, %v1012, 0.0
        %1014 = vadd.xlane.f32.xlu0 %v1013
        %v1015 = vpop.xlane.xlu0 %1014
        %v1016 = vrcp.pop %v1015
        %v1017 = vmul.f32 %v1012, %v1016
        %1018 = vset.pattern.permute.xlu0 99
        %1019 = vperm.xlu0 %1018, %v768
        %v1020 = vpop.permute.xlu0 %1019
        %v1022 = vmul.f32 %v766, %v1020
        %v1023 = vmul.f32 %v1022, 1.442695
        %v1024 = vpow.pop %v1023
        %1025 = vset.pattern.permute.xlu0 99
        %1026 = vperm.xlu0 %1025, %v764
        %v1027 = vpop.permute.xlu0 %1026
        %v1029 = vmul.f32 %v1027, %v1024
        %v1030 = vpack.c.bf16 %v1017, %v1017
        %1031 = vrot.lane.b32.xlu0 %v702, 40
        %v1032 = vpop.permute.xlu0 %1031
        %v1034 = vsel %vm706, %v1030, 0
        %v1037 = vsel %vm789, %v1032, 0
        %1039 = vmatpush.bf16.msra.mxu0 0
        %1040 = vmatpush.bf16.msra.mxu0 0
        %1041 = vmatpush.bf16.msra.mxu0 0
        %1042 = vmatpush.bf16.msra.mxu0 0
        %1043 = vmatpush.bf16.msra.mxu0 0
        %1044 = vmatpush.bf16.msra.mxu0 0
        %1045 = vmatpush.bf16.msra.mxu0 0
        %1046 = vmatpush.bf16.msra.mxu0 %v1037
        %1047 = vmatmul.bf16.gmra.mxu0 %v1034
        %v1048 = vpop.f32.mrf.mxu0
        %v1049 = vadd.f32 0.0, %v1048
        %v1050 = vpop.f32.mrf.mxu0
        %1051 = vdwg.mxu0
        %1053 = vrot.lane.b32.xlu0 %v1049, 24
        %v1054 = vpop.permute.xlu0 %1053
        %vm1056 = vcmask 261312
        %1057 = vst.msk [vmem:[#allocation2] sm:$0xff] %vm1056, %v1054
        %s1058 = scalar_lea.vmem %s643, 24 [#allocation14]
        %1059 = vst.msk [vmem:[%s1058] sm:$0xff] %vm706, %v1017
        %s1060 = scalar_lea.vmem %s650, 24 [#allocation15]
        %1061 = vst.msk [vmem:[%s1060] sm:$0xff] %vm706, %v1029
        %1062 = vrot.lane.b32.xlu0 %v762, 29
        %v1063 = vpop.permute.xlu0 %1062
        %s1065 = scalar_lea.vmem %s670, 24
        %1066 = vst.msk [vmem:[%s1065] sm:$0xff] %vm813, %v1063
        %v1067 = vld [vmem:[#allocation2] sm:$0xff]
        %v1068 = vld [vmem:[#allocation3] sm:$0xff]
        %v1069 = vld [vmem:[#allocation3 + $0x8] sm:$0xff]
        %v1070 = vld [vmem:[#allocation3 + $0x10] sm:$0xff]
        %v1071 = vld [vmem:[#allocation3 + $0x18] sm:$0xff]
        %v1072 = vpack.c.bf16 %v1067, %v1067
        %v1073 = vpack.c.bf16 %v1069, %v1068
        %v1074 = vpack.c.bf16 %v1071, %v1070
        %v1075 = vld [vmem:[%s5] sm:$0x1]
        %v1077 = vperm.slane %v1075, 0
        %v1080 = vsel %vm685, %v1072, 0
        %1082 = vmatpush.bf16.msra.mxu0 0
        %1083 = vmatpush.bf16.msra.mxu0 0
        %1084 = vmatpush.bf16.msra.mxu0 0
        %1085 = vmatpush.bf16.msra.mxu0 0
        %1086 = vmatpush.bf16.msra.mxu0 0
        %1087 = vmatpush.bf16.msra.mxu0 0
        %1088 = vmatpush.bf16.msra.mxu0 %v1074
        %1089 = vmatpush.bf16.msra.mxu0 %v1073
        %1090 = vmatmul.bf16.gmra.mxu0 %v1080
        %v1091 = vpop.f32.mrf.mxu0
        %v1092 = vadd.f32 %v1077, %v1091
        %v1093 = vpop.f32.mrf.mxu0
        %1094 = vdwg.mxu0
        %v1095 = vadd.f32 %v672, %v1092
        %v1096 = vld [vmem:[%s10] sm:$0x1]
        %v1097 = vld [vmem:[#allocation9] sm:$0x1]
        %v1098 = vsel %vm685, %v1095, 0.0
        %1099 = vadd.xlane.f32.xlu0 %v1098
        %v1100 = vpop.xlane.xlu0 %1099
        %v1101 = vrcp.pop 32.0
        %v1102 = vmul.f32 32.0, %v1101
        %v1103 = vsub.f32 1.0, %v1102
        %v1104 = vmul.f32 %v1101, %v1103
        %v1105 = vadd.f32 %v1101, %v1104
        %vm1106 = vweird.f32 %v1101
        %v1107 = vsel %vm1106, %v1101, %v1105
        %v1108 = vmul.f32 %v1100, %v1107
        %v1109 = vsub.f32 %v1095, %v1108
        %v1110 = vmul.f32 %v1109, %v1109
        %v1111 = vsel %vm685, %v1110, 0.0
        %1112 = vadd.xlane.f32.xlu0 %v1111
        %v1113 = vpop.xlane.xlu0 %1112
        %v1114 = vmul.f32 %v1113, %v1107
        %v1115 = vadd.f32 %v1114, 1e-05
        %v1116 = vrsqrt.pop %v1115
        %v1117 = vmul.f32 %v1116, %v1115
        %v1118 = vmul.f32 %v1117, %v1116
        %v1119 = vmul.f32 0.5, %v1118
        %v1120 = vsub.f32 1.5, %v1119
        %v1121 = vmul.f32 %v1116, %v1120
        %vm1122 = vweird.f32 %v1115
        %vm1123 = vweird.f32 %v1116
        %vm1124 = vmor %vm1122, %vm1123
        %v1125 = vsel %vm1124, %v1116, %v1121
        %v1126 = vmul.f32 %v1109, %v1125
        %v1128 = vperm.slane %v1096, 0
        %v1130 = vmul.f32 %v1126, %v1128
        %v1132 = vperm.slane %v1097, 0
        %v1134 = vadd.f32 %v1130, %v1132
        %v1135 = vld [vmem:[#allocation6] sm:$0xff]
        %v1136 = vld [vmem:[#allocation6 + $0x8] sm:$0xff]
        %v1137 = vld [vmem:[#allocation6 + $0x10] sm:$0xff]
        %v1138 = vld [vmem:[#allocation6 + $0x18] sm:$0xff]
        %v1139 = vpack.c.bf16 %v1134, %v1134
        %v1140 = vpack.c.bf16 %v1136, %v1135
        %v1141 = vpack.c.bf16 %v1138, %v1137
        %v1142 = vld [vmem:[%s7] sm:$0x1]
        %v1144 = vperm.slane %v1142, 0
        %v1147 = vsel %vm685, %v1139, 0
        %1149 = vmatpush.bf16.msra.mxu0 0
        %1150 = vmatpush.bf16.msra.mxu0 0
        %1151 = vmatpush.bf16.msra.mxu0 0
        %1152 = vmatpush.bf16.msra.mxu0 0
        %1153 = vmatpush.bf16.msra.mxu0 0
        %1154 = vmatpush.bf16.msra.mxu0 0
        %1155 = vmatpush.bf16.msra.mxu0 %v1141
        %1156 = vmatpush.bf16.msra.mxu0 %v1140
        %1157 = vmatmul.bf16.gmra.mxu0 %v1147
        %v1158 = vpop.f32.mrf.mxu0
        %v1159 = vadd.f32 %v1144, %v1158
        %v1160 = vpop.f32.mrf.mxu0
        %1161 = vdwg.mxu0
        %v1162 = vmul.f32 %v1159, %v1159
        %v1163 = vmul.f32 %v1159, %v1162
        %v1164 = vmul.f32 %v1163, 0.044715
        %v1165 = vadd.f32 %v1159, %v1164
        %v1166 = vmul.f32 %v1165, 0.7978846
        %v1167 = vtanh.pop %v1166
        %v1168 = vadd.f32 %v1167, 1.0
        %v1169 = vmul.f32 %v1168, 0.5
        %v1170 = vmul.f32 %v1159, %v1169
        %v1171 = vld [vmem:[#allocation8] sm:$0xff]
        %v1172 = vld [vmem:[#allocation8 + $0x8] sm:$0xff]
        %v1173 = vld [vmem:[#allocation8 + $0x10] sm:$0xff]
        %v1174 = vld [vmem:[#allocation8 + $0x18] sm:$0xff]
        %v1175 = vpack.c.bf16 %v1170, %v1170
        %v1176 = vpack.c.bf16 %v1172, %v1171
        %v1177 = vpack.c.bf16 %v1174, %v1173
        %v1178 = vld [vmem:[%s9] sm:$0x1]
        %v1180 = vperm.slane %v1178, 0
        %v1183 = vsel %vm685, %v1175, 0
        %1185 = vmatpush.bf16.msra.mxu0 0
        %1186 = vmatpush.bf16.msra.mxu0 0
        %1187 = vmatpush.bf16.msra.mxu0 0
        %1188 = vmatpush.bf16.msra.mxu0 0
        %1189 = vmatpush.bf16.msra.mxu0 0
        %1190 = vmatpush.bf16.msra.mxu0 0
        %1191 = vmatpush.bf16.msra.mxu0 %v1177
        %1192 = vmatpush.bf16.msra.mxu0 %v1176
        %1193 = vmatmul.bf16.gmra.mxu0 %v1183
        %v1194 = vpop.f32.mrf.mxu0
        %v1195 = vadd.f32 %v1180, %v1194
        %v1196 = vpop.f32.mrf.mxu0
        %1197 = vdwg.mxu0
        %v1198 = vadd.f32 %v1134, %v1195
        %v1199 = vld [vmem:[#allocation11] sm:$0x1]
        %v1200 = vld [vmem:[#allocation12] sm:$0x1]
        %v1201 = vsel %vm685, %v1198, 0.0
        %1202 = vadd.xlane.f32.xlu0 %v1201
        %v1203 = vpop.xlane.xlu0 %1202
        %v1204 = vmul.f32 %v1203, %v1107
        %v1205 = vsub.f32 %v1198, %v1204
        %v1206 = vmul.f32 %v1205, %v1205
        %v1207 = vsel %vm685, %v1206, 0.0
        %1208 = vadd.xlane.f32.xlu0 %v1207
        %v1209 = vpop.xlane.xlu0 %1208
        %v1210 = vmul.f32 %v1209, %v1107
        %v1211 = vadd.f32 %v1210, 1e-05
        %v1212 = vrsqrt.pop %v1211
        %v1213 = vmul.f32 %v1212, %v1211
        %v1214 = vmul.f32 %v1213, %v1212
        %v1215 = vmul.f32 0.5, %v1214
        %v1216 = vsub.f32 1.5, %v1215
        %v1217 = vmul.f32 %v1212, %v1216
        %vm1218 = vweird.f32 %v1211
        %vm1219 = vweird.f32 %v1212
        %vm1220 = vmor %vm1218, %vm1219
        %v1221 = vsel %vm1220, %v1212, %v1217
        %v1222 = vmul.f32 %v1205, %v1221
        %v1224 = vperm.slane %v1199, 0
        %v1226 = vmul.f32 %v1222, %v1224
        %v1228 = vperm.slane %v1200, 0
        %v1230 = vadd.f32 %v1226, %v1228
        %1231 = vst.msk [vmem:[%s665] sm:$0xff] %vm685, %v1230
        %p1232 = scmp.lt.s32.totalorder %s39, 1
        %s1233 = scalar_select %p1232, %s39, 1
        %s1234 = smul.addr %s1233, 8
        %s1235 = scalar_lea.vmem %s14, %s1234
        %s1236 = sand.u32 %s372, 1
        %s1237 = scalar_lea.sflag [#allocation5], %s1236
        %s1238 = sand.u32 %s372, 1
        %s1239 = smul.addr %s1238, 32
        %s1240 = scalar_lea.vmem [#allocation14], %s1239
        %s1241 = sand.u32 %s398, 1
        %s1242 = scalar_lea.sflag [#allocation16], %s1241
        %s1243 = sand.u32 %s398, 1
        %s1244 = smul.addr %s1243, 32
        %s1245 = scalar_lea.vmem [#allocation15], %s1244
        %p1246 = scmp.lt.s32.totalorder %s39, 1
        %s1247 = scalar_select %p1246, %s39, 1
        %s1248 = smul.addr %s1247, 4
        %s1249 = smul.addr %s1248, 8
        %s1250 = scalar_lea.vmem %s17, %s1249
        // Predicated region
        $region101: #{_lambda_.8} parent=75 // pred_check
          %p1251 = pneg %p356
        $region102: #{_lambda_.8} parent=75 // pred_check_branch
          %1253 = sbr.rel (%p1251) target = $region104
        $region103: #{_lambda_.8} parent=75 // pred_region
          _
        $region104: #{_lambda_.8} parent=75 // pred_fallthru
          _
        // Predicated region
        $region105: #{_lambda_.8} parent=75 // pred_check
          %p1254 = pneg %p382
        $region106: #{_lambda_.8} parent=75 // pred_check_branch
          %1256 = sbr.rel (%p1254) target = $region108
        $region107: #{_lambda_.8} parent=75 // pred_region
          %1258 = vsyncadd %s1237, 0
          %s1259 = smul.addr %s39, 4
          %s1260 = smul.addr %s1259, 8
          %s1261 = scalar_lea.hbm %s15, %s1260
          %s1262 = sshll.u32 %s1240, 4
          %s1263 = int_to_ptr.vmem [resolvable:$true] %s1262
          %s1264 = sshll.u32 %s1261, 4
          %s1265 = int_to_ptr.hbm [resolvable:$true] %s1264
          %1270 = dma.vmem_to_hbm [thread:$0]  %s1263, 512, %s1265, %s1237, 128, 128, 8
        $region108: #{_lambda_.8} parent=75 // pred_fallthru
          _
        // Predicated region
        $region109: #{_lambda_.8} parent=75 // pred_check
          %p1271 = pneg %p408
        $region110: #{_lambda_.8} parent=75 // pred_check_branch
          %1273 = sbr.rel (%p1271) target = $region112
        $region111: #{_lambda_.8} parent=75 // pred_region
          %1275 = vsyncadd %s1242, 0
          %s1276 = smul.addr %s39, 4
          %s1277 = smul.addr %s1276, 8
          %s1278 = scalar_lea.hbm %s16, %s1277
          %s1279 = sshll.u32 %s1245, 4
          %s1280 = int_to_ptr.vmem [resolvable:$true] %s1279
          %s1281 = sshll.u32 %s1278, 4
          %s1282 = int_to_ptr.hbm [resolvable:$true] %s1281
          %1287 = dma.vmem_to_hbm [thread:$0]  %s1280, 512, %s1282, %s1242, 128, 128, 8
        $region112: #{_lambda_.8} parent=75 // pred_fallthru
          _
        // Predicated region
        $region113: #{_lambda_.8} parent=75 // pred_check
          %p1288 = pneg %p434
        $region114: #{_lambda_.8} parent=75 // pred_check_branch
          %1290 = sbr.rel (%p1288) target = $region116
        $region115: #{_lambda_.8} parent=75 // pred_region
          _
        $region116: #{_lambda_.8} parent=75 // pred_fallthru
          _
      $region76: #{_lambda_.8} parent=5 // pred_fallthru
        _
      %p1291 = scmp.le.s32.totalorder 2, %s34
      // Predicated region
      $region117: #{_lambda_.8} parent=5 // pred_check
        %p1292 = pneg %p1291
      $region118: #{_lambda_.8} parent=5 // pred_check_branch
        %1294 = sbr.rel (%p1292) target = $region120
      $region119: #{_lambda_.8} parent=5 // pred_region
        %s1295 = ssub.s32 %s34, 2
        // Predicated region
        $region121: #{_lambda_.8} parent=119 // pred_check
          %p1296 = pneg %p362
        $region122: #{_lambda_.8} parent=119 // pred_check_branch
          %1298 = sbr.rel (%p1296) target = $region124
        $region123: #{_lambda_.8} parent=119 // pred_region
          %p1299 = scmp.lt.s32.totalorder %s40, 1
          %s1300 = scalar_select %p1299, %s40, 1
          %s1301 = smul.addr %s1300, 8
          %s1302 = scalar_lea.vmem %s14, %s1301
        $region124: #{_lambda_.8} parent=119 // pred_fallthru
          _
        // Predicated region
        $region125: #{_lambda_.8} parent=119 // pred_check
          %p1303 = pneg %p388
        $region126: #{_lambda_.8} parent=119 // pred_check_branch
          %1305 = sbr.rel (%p1303) target = $region128
        $region127: #{_lambda_.8} parent=119 // pred_region
          %s1306 = sand.u32 %s373, 1
          %s1307 = scalar_lea.sflag [#allocation5], %s1306
          %s1308 = sand.u32 %s373, 1
          %s1309 = smul.addr %s1308, 32
          %s1310 = scalar_lea.vmem [#allocation14], %s1309
          %1312 = dma.done %s1307, 512
        $region128: #{_lambda_.8} parent=119 // pred_fallthru
          _
        // Predicated region
        $region129: #{_lambda_.8} parent=119 // pred_check
          %p1313 = pneg %p414
        $region130: #{_lambda_.8} parent=119 // pred_check_branch
          %1315 = sbr.rel (%p1313) target = $region132
        $region131: #{_lambda_.8} parent=119 // pred_region
          %s1316 = sand.u32 %s399, 1
          %s1317 = scalar_lea.sflag [#allocation16], %s1316
          %s1318 = sand.u32 %s399, 1
          %s1319 = smul.addr %s1318, 32
          %s1320 = scalar_lea.vmem [#allocation15], %s1319
          %1322 = dma.done %s1317, 512
        $region132: #{_lambda_.8} parent=119 // pred_fallthru
          _
        // Predicated region
        $region133: #{_lambda_.8} parent=119 // pred_check
          %p1323 = pneg %p440
        $region134: #{_lambda_.8} parent=119 // pred_check_branch
          %1325 = sbr.rel (%p1323) target = $region136
        $region135: #{_lambda_.8} parent=119 // pred_region
          %p1326 = scmp.lt.s32.totalorder %s40, 1
          %s1327 = scalar_select %p1326, %s40, 1
          %s1328 = smul.addr %s1327, 4
          %s1329 = smul.addr %s1328, 8
          %s1330 = scalar_lea.vmem %s17, %s1329
        $region136: #{_lambda_.8} parent=119 // pred_fallthru
          _
      $region120: #{_lambda_.8} parent=5 // pred_fallthru
        _
    $region6: #{_lambda_.8} parent=1 // loop_footer
      %s38 = sadd.s32 1, %s34
    $region7: #{_lambda_.8} parent=1 // loop_footer_branch
      %33 = sbr.rel target = $region3
    $region8: #{_lambda_.8} parent=1 // loop_exit
      _
    %1331 = vsyncpa [#allocation4], 1
    %s1332 = scalar_lea.sflag [#allocation4], 1
    %1333 = vsyncpa %s1332, 1
    %1334 = vsyncpa [#allocation7], 1
    %1335 = vsyncpa [#allocation10], 1
    %1336 = vsyncpa [#allocation13], 1
    %1337 = vsyncpa [#allocation5], 1
    %s1338 = scalar_lea.sflag [#allocation5], 1
    %1339 = vsyncpa %s1338, 1
    %1340 = vsyncpa [#allocation16], 1
    %s1341 = scalar_lea.sflag [#allocation16], 1
    %1342 = vsyncpa %s1341, 1

// kernel: _lambda_.10
$region0: #{_lambda_.10}
  #allocation0 [shape = 'u32[]', space=smem, size = 0x4, offset = 0x4, fixed_abs, tag = 'smem constant byte address 0x4 - core index']
  #allocation1 [shape = 'u32[72,128]{1,0:T(1,128)}', space=vmem, size = 0x9000, scoped, tag = 'internal scratch']
  %s0 = inlined_call_operand.vmem [shape: f32[2,8,4], index: 0, kind: input, shape index: {}]
  %s1 = inlined_call_operand.vmem [shape: f32[4,16], index: 1, kind: input, shape index: {}]
  %s2 = inlined_call_operand.vmem [shape: f32[1,16], index: 2, kind: input, shape index: {}]
  %s3 = inlined_call_operand.vmem [shape: f32[16,4], index: 3, kind: input, shape index: {}]
  %s4 = inlined_call_operand.vmem [shape: f32[1,4], index: 4, kind: input, shape index: {}]
  %s5 = inlined_call_operand.vmem [shape: f32[2,8,4], index: 5, kind: output, shape index: {0}]
  %s6 = inlined_call_operand.vmem [shape: f32[2,8,8], index: 6, kind: output, shape index: {1}]
  %7 = xla_tuple %s5, %s6
  %s8 = sld [smem:[#allocation0]]
  $region61: #{_lambda_.10} parent=0
    _
  %s10 = ssub.s32 1, %s8
  %s11 = scalar_select 0, %s10, %s8
  loop: start=0, step=1, limit=4
  $region2: #{_lambda_.10} parent=0 // loop_pre_header
    _
  $region3: #{_lambda_.10} parent=0 // loop_header
    %s13 = sphi 0, %s17
    %p14 = scmp.ge.s32.totalorder %s13, 4
    %s23 = sphi 0, %s25
    %s26 = sphi 0, %s23
    %s27 = sphi 0, %s26
    %s43 = sphi 0, %s27
    %s47 = sphi 0, %s47
    %s49 = sphi 0, %s47
    %s50 = sphi 0, %s49
    %s64 = sphi 0, %s50
    %s68 = sphi 0, %s68
    %s70 = sphi 0, %s68
    %s71 = sphi 0, %s70
    %s85 = sphi 0, %s71
    %s89 = sphi 0, %s89
    %s91 = sphi 0, %s89
    %s92 = sphi 0, %s91
    %s106 = sphi 0, %s92
    %s110 = sphi 0, %s110
    %s112 = sphi 0, %s110
    %s113 = sphi 0, %s112
    %s127 = sphi 0, %s113
    %s133 = sphi 0, %s135
    %s136 = sphi 0, %s133
    %s137 = sphi 0, %s136
    %s153 = sphi 0, %s137
    %s159 = sphi 0, %s161
    %s162 = sphi 0, %s159
    %s163 = sphi 0, %s162
    %s179 = sphi 0, %s163
  $region4: #{_lambda_.10} parent=0 // loop_header_branch
    %16 = sbr.rel (%p14) target = $region8
  $region5: #{_lambda_.10} parent=0 // loop_body
    %s18 = ssub.s32 %s13, 1
    %s19 = ssub.s32 %s13, 2
    %s20 = sadd.s32 %s13, 1
    %s21 = ssub.s32 %s13, %s20
    %p22 = scmp.eq.s32.totalorder %s21, 0
    %s24 = sadd.s32 %s23, 1
    %s25 = scalar_select %p22, %s23, %s24
    %p28 = pneg %p22
    %p29 = scmp.eq.s32.totalorder %s13, 1
    %p30 = por %p28, %p29
    %p31 = scmp.ne.s32.totalorder %s23, %s26
    %p32 = scmp.eq.s32.totalorder %s13, 0
    %p33 = por %p31, %p32
    %p34 = scmp.ne.s32.totalorder %s23, %s26
    %p35 = scmp.eq.s32.totalorder %s18, 1
    %p36 = por %p34, %p35
    %p37 = scmp.ne.s32.totalorder %s26, %s27
    %p38 = scmp.eq.s32.totalorder %s18, 0
    %p39 = por %p37, %p38
    %p40 = scmp.ne.s32.totalorder %s26, %s27
    %p41 = scmp.eq.s32.totalorder %s19, 1
    %p42 = por %p40, %p41
    %p44 = scmp.ne.s32.totalorder %s27, %s43
    %p45 = scmp.eq.s32.totalorder %s19, 0
    %p46 = por %p44, %p45
    %s48 = sadd.s32 %s47, 1
    %p51 = scmp.eq.s32.totalorder %s13, 1
    %p52 = scmp.ne.s32.totalorder %s47, %s49
    %p53 = scmp.eq.s32.totalorder %s13, 0
    %p54 = por %p52, %p53
    %p55 = scmp.ne.s32.totalorder %s47, %s49
    %p56 = scmp.eq.s32.totalorder %s18, 1
    %p57 = por %p55, %p56
    %p58 = scmp.ne.s32.totalorder %s49, %s50
    %p59 = scmp.eq.s32.totalorder %s18, 0
    %p60 = por %p58, %p59
    %p61 = scmp.ne.s32.totalorder %s49, %s50
    %p62 = scmp.eq.s32.totalorder %s19, 1
    %p63 = por %p61, %p62
    %p65 = scmp.ne.s32.totalorder %s50, %s64
    %p66 = scmp.eq.s32.totalorder %s19, 0
    %p67 = por %p65, %p66
    %s69 = sadd.s32 %s68, 1
    %p72 = scmp.eq.s32.totalorder %s13, 1
    %p73 = scmp.ne.s32.totalorder %s68, %s70
    %p74 = scmp.eq.s32.totalorder %s13, 0
    %p75 = por %p73, %p74
    %p76 = scmp.ne.s32.totalorder %s68, %s70
    %p77 = scmp.eq.s32.totalorder %s18, 1
    %p78 = por %p76, %p77
    %p79 = scmp.ne.s32.totalorder %s70, %s71
    %p80 = scmp.eq.s32.totalorder %s18, 0
    %p81 = por %p79, %p80
    %p82 = scmp.ne.s32.totalorder %s70, %s71
    %p83 = scmp.eq.s32.totalorder %s19, 1
    %p84 = por %p82, %p83
    %p86 = scmp.ne.s32.totalorder %s71, %s85
    %p87 = scmp.eq.s32.totalorder %s19, 0
    %p88 = por %p86, %p87
    %s90 = sadd.s32 %s89, 1
    %p93 = scmp.eq.s32.totalorder %s13, 1
    %p94 = scmp.ne.s32.totalorder %s89, %s91
    %p95 = scmp.eq.s32.totalorder %s13, 0
    %p96 = por %p94, %p95
    %p97 = scmp.ne.s32.totalorder %s89, %s91
    %p98 = scmp.eq.s32.totalorder %s18, 1
    %p99 = por %p97, %p98
    %p100 = scmp.ne.s32.totalorder %s91, %s92
    %p101 = scmp.eq.s32.totalorder %s18, 0
    %p102 = por %p100, %p101
    %p103 = scmp.ne.s32.totalorder %s91, %s92
    %p104 = scmp.eq.s32.totalorder %s19, 1
    %p105 = por %p103, %p104
    %p107 = scmp.ne.s32.totalorder %s92, %s106
    %p108 = scmp.eq.s32.totalorder %s19, 0
    %p109 = por %p107, %p108
    %s111 = sadd.s32 %s110, 1
    %p114 = scmp.eq.s32.totalorder %s13, 1
    %p115 = scmp.ne.s32.totalorder %s110, %s112
    %p116 = scmp.eq.s32.totalorder %s13, 0
    %p117 = por %p115, %p116
    %p118 = scmp.ne.s32.totalorder %s110, %s112
    %p119 = scmp.eq.s32.totalorder %s18, 1
    %p120 = por %p118, %p119
    %p121 = scmp.ne.s32.totalorder %s112, %s113
    %p122 = scmp.eq.s32.totalorder %s18, 0
    %p123 = por %p121, %p122
    %p124 = scmp.ne.s32.totalorder %s112, %s113
    %p125 = scmp.eq.s32.totalorder %s19, 1
    %p126 = por %p124, %p125
    %p128 = scmp.ne.s32.totalorder %s113, %s127
    %p129 = scmp.eq.s32.totalorder %s19, 0
    %p130 = por %p128, %p129
    %s131 = ssub.s32 %s13, %s20
    %p132 = scmp.eq.s32.totalorder %s131, 0
    %s134 = sadd.s32 %s133, 1
    %s135 = scalar_select %p132, %s133, %s134
    %p138 = pneg %p132
    %p139 = scmp.eq.s32.totalorder %s13, 1
    %p140 = por %p138, %p139
    %p141 = scmp.ne.s32.totalorder %s133, %s136
    %p142 = scmp.eq.s32.totalorder %s13, 0
    %p143 = por %p141, %p142
    %p144 = scmp.ne.s32.totalorder %s133, %s136
    %p145 = scmp.eq.s32.totalorder %s18, 1
    %p146 = por %p144, %p145
    %p147 = scmp.ne.s32.totalorder %s136, %s137
    %p148 = scmp.eq.s32.totalorder %s18, 0
    %p149 = por %p147, %p148
    %p150 = scmp.ne.s32.totalorder %s136, %s137
    %p151 = scmp.eq.s32.totalorder %s19, 1
    %p152 = por %p150, %p151
    %p154 = scmp.ne.s32.totalorder %s137, %s153
    %p155 = scmp.eq.s32.totalorder %s19, 0
    %p156 = por %p154, %p155
    %s157 = ssub.s32 %s13, %s20
    %p158 = scmp.eq.s32.totalorder %s157, 0
    %s160 = sadd.s32 %s159, 1
    %s161 = scalar_select %p158, %s159, %s160
    %p164 = pneg %p158
    %p165 = scmp.eq.s32.totalorder %s13, 1
    %p166 = por %p164, %p165
    %p167 = scmp.ne.s32.totalorder %s159, %s162
    %p168 = scmp.eq.s32.totalorder %s13, 0
    %p169 = por %p167, %p168
    %p170 = scmp.ne.s32.totalorder %s159, %s162
    %p171 = scmp.eq.s32.totalorder %s18, 1
    %p172 = por %p170, %p171
    %p173 = scmp.ne.s32.totalorder %s162, %s163
    %p174 = scmp.eq.s32.totalorder %s18, 0
    %p175 = por %p173, %p174
    %p176 = scmp.ne.s32.totalorder %s162, %s163
    %p177 = scmp.eq.s32.totalorder %s19, 1
    %p178 = por %p176, %p177
    %p180 = scmp.ne.s32.totalorder %s163, %s179
    %p181 = scmp.eq.s32.totalorder %s19, 0
    %p182 = por %p180, %p181
    %p183 = scmp.le.s32.totalorder 1, %s13
    %p184 = scmp.lt.s32.totalorder %s13, 3
    %p185 = pnand %p183, %p184
    %p186 = pneg %p185
    // Predicated region
    $region9: #{_lambda_.10} parent=5 // pred_check
      _
    $region10: #{_lambda_.10} parent=5 // pred_check_branch
      %188 = sbr.rel (%p185) target = $region12
    $region11: #{_lambda_.10} parent=5 // pred_region
      %s189 = ssub.s32 %s13, 1
      // Predicated region
      $region13: #{_lambda_.10} parent=11 // pred_check
        %p190 = pneg %p60
      $region14: #{_lambda_.10} parent=11 // pred_check_branch
        %192 = sbr.rel (%p190) target = $region16
      $region15: #{_lambda_.10} parent=11 // pred_region
        _
      $region16: #{_lambda_.10} parent=11 // pred_fallthru
        _
      // Predicated region
      $region17: #{_lambda_.10} parent=11 // pred_check
        %p193 = pneg %p81
      $region18: #{_lambda_.10} parent=11 // pred_check_branch
        %195 = sbr.rel (%p193) target = $region20
      $region19: #{_lambda_.10} parent=11 // pred_region
        _
      $region20: #{_lambda_.10} parent=11 // pred_fallthru
        _
      // Predicated region
      $region21: #{_lambda_.10} parent=11 // pred_check
        %p196 = pneg %p102
      $region22: #{_lambda_.10} parent=11 // pred_check_branch
        %198 = sbr.rel (%p196) target = $region24
      $region23: #{_lambda_.10} parent=11 // pred_region
        _
      $region24: #{_lambda_.10} parent=11 // pred_fallthru
        _
      // Predicated region
      $region25: #{_lambda_.10} parent=11 // pred_check
        %p199 = pneg %p123
      $region26: #{_lambda_.10} parent=11 // pred_check_branch
        %201 = sbr.rel (%p199) target = $region28
      $region27: #{_lambda_.10} parent=11 // pred_region
        _
      $region28: #{_lambda_.10} parent=11 // pred_fallthru
        _
    $region12: #{_lambda_.10} parent=5 // pred_fallthru
      _
    %p202 = scmp.lt.s32.totalorder %s13, 2
    // Predicated region
    $region29: #{_lambda_.10} parent=5 // pred_check
      %p203 = pneg %p202
    $region30: #{_lambda_.10} parent=5 // pred_check_branch
      %205 = sbr.rel (%p203) target = $region32
    $region31: #{_lambda_.10} parent=5 // pred_region
      // Predicated region
      $region33: #{_lambda_.10} parent=31 // pred_check
        %p206 = pneg %p33
      $region34: #{_lambda_.10} parent=31 // pred_check_branch
        %208 = sbr.rel (%p206) target = $region36
      $region35: #{_lambda_.10} parent=31 // pred_region
        %p209 = scmp.lt.s32.totalorder %s13, 1
        %s210 = scalar_select %p209, %s13, 1
        %s211 = smul.addr %s210, 8
        %s212 = scalar_lea.vmem %s0, %s211
      $region36: #{_lambda_.10} parent=31 // pred_fallthru
        _
    $region32: #{_lambda_.10} parent=5 // pred_fallthru
      _
    %p213 = scmp.le.s32.totalorder 1, %s13
    %p214 = scmp.lt.s32.totalorder %s13, 3
    %p215 = pnand %p213, %p214
    %p216 = pneg %p215
    // Predicated region
    $region37: #{_lambda_.10} parent=5 // pred_check
      _
    $region38: #{_lambda_.10} parent=5 // pred_check_branch
      %218 = sbr.rel (%p215) target = $region40
    $region39: #{_lambda_.10} parent=5 // pred_region
      %s219 = ssub.s32 %s13, 1
      %p220 = scmp.lt.s32.totalorder %s18, 1
      %s221 = scalar_select %p220, %s18, 1
      %s222 = smul.addr %s221, 8
      %s223 = scalar_lea.vmem %s0, %s222
      %p224 = pneg %p39
      %p225 = pneg %p36
      %p226 = pneg %p60
      %p227 = pneg %p57
      %p228 = pneg %p81
      %p229 = pneg %p78
      %p230 = pneg %p102
      %p231 = pneg %p99
      %p232 = pneg %p123
      %p233 = pneg %p120
      %p234 = pneg %p149
      %p235 = pneg %p146
      %p236 = scmp.lt.s32.totalorder %s18, 1
      %s237 = scalar_select %p236, %s18, 1
      %s238 = smul.addr %s237, 8
      %s239 = scalar_lea.vmem %s5, %s238
      %p240 = pneg %p175
      %p241 = pneg %p172
      %p242 = scmp.lt.s32.totalorder %s18, 1
      %s243 = scalar_select %p242, %s18, 1
      %s244 = smul.addr %s243, 8
      %s245 = scalar_lea.vmem %s6, %s244
      %p246 = scmp.lt.s32.totalorder %s18, 1
      %s247 = scalar_select %p246, %s18, 1
      %s248 = smul.addr %s247, 8
      %s249 = scalar_lea.vmem %s0, %s248
      %p250 = scmp.lt.s32.totalorder %s18, 1
      %s251 = scalar_select %p250, %s18, 1
      %s252 = smul.addr %s251, 8
      %s253 = scalar_lea.vmem %s5, %s252
      %p254 = scmp.lt.s32.totalorder %s18, 1
      %s255 = scalar_select %p254, %s18, 1
      %s256 = smul.addr %s255, 8
      %s257 = scalar_lea.vmem %s6, %s256
      %v259 = vld [vmem:[%s249] sm:$0xff]
      %vm260 = vcmask 31744
      %v262 = vsel %vm260, %v259, 0
      %264 = vmatpush.xpose.msra.mxu0 0.0
      %265 = vmatpush.xpose.msra.mxu0 0.0
      %266 = vmatpush.xpose.msra.mxu0 0.0
      %267 = vmatpush.xpose.msra.mxu0 0.0
      %268 = vmatpush.xpose.msra.mxu0 0.0
      %269 = vmatpush.xpose.msra.mxu0 0.0
      %270 = vmatpush.xpose.msra.mxu0 0.0
      %271 = vmatpush.xpose.msra.mxu0 0.0
      %272 = vmatpush.xpose.msra.mxu0 0.0
      %273 = vmatpush.xpose.msra.mxu0 0.0
      %274 = vmatpush.xpose.msra.mxu0 0.0
      %275 = vmatpush.xpose.msra.mxu0 0.0
      %276 = vmatpush.xpose.msra.mxu0 0.0
      %277 = vmatpush.xpose.msra.mxu0 0.0
      %278 = vmatpush.xpose.msra.mxu0 0.0
      %279 = vmatpush.xpose.msra.mxu0 %v262
      %280 = vmatmul.f32.gmra.mxu0 %v262
      %v281 = vpop.f32.mrf.mxu0
      %v282 = vadd.f32 0.0, %v281
      %283 = vdwg.mxu0
      %v284 = vmul.f32 %v259, %v259
      %v285 = vsel %vm260, %v284, 0.0
      %286 = vadd.xlane.f32.xlu0 %v285
      %v287 = vpop.xlane.xlu0 %286
      %vm288 = vcmask 7168
      %v290 = vsel %vm288, 1.0, 0
      %v293 = vsel %vm288, %v287, 0
      %295 = vmatpush.xpose.msra.mxu0 0.0
      %296 = vmatpush.xpose.msra.mxu0 0.0
      %297 = vmatpush.xpose.msra.mxu0 0.0
      %298 = vmatpush.xpose.msra.mxu0 0.0
      %299 = vmatpush.xpose.msra.mxu0 0.0
      %300 = vmatpush.xpose.msra.mxu0 0.0
      %301 = vmatpush.xpose.msra.mxu0 0.0
      %302 = vmatpush.xpose.msra.mxu0 0.0
      %303 = vmatpush.xpose.msra.mxu0 0.0
      %304 = vmatpush.xpose.msra.mxu0 0.0
      %305 = vmatpush.xpose.msra.mxu0 0.0
      %306 = vmatpush.xpose.msra.mxu0 0.0
      %307 = vmatpush.xpose.msra.mxu0 0.0
      %308 = vmatpush.xpose.msra.mxu0 0.0
      %309 = vmatpush.xpose.msra.mxu0 0.0
      %310 = vmatpush.xpose.msra.mxu0 %v293
      %311 = vmatmul.f32.gmra.mxu0 %v290
      %v312 = vpop.f32.mrf.mxu0
      %v313 = vadd.f32 0.0, %v312
      %314 = vdwg.mxu0
      %v315 = vadd.f32 %v287, %v313
      %v316 = vmul.f32 %v282, 2.0
      %v317 = vsub.f32 %v315, %v316
      %v318 = vmax.f32 %v317, 0.0
      %v319 = vlaneseq
      %v320 = vshrl.u32 %v319, 7
      %v321 = vlaneseq
      %v322 = vand.u32 %v321, 127
      %vm323 = vcmp.eq.s32.totalorder %v320, %v322
      %v324 = vsel %vm323, 1, 0
      %v325 = vcvt.s32.f32 %v324
      %v326 = vmul.f32 %v325, 1e+09
      %v327 = vadd.f32 %v318, %v326
      %vm328 = vcmask 64512
      %v329 = vsel %vm328, %v327, inf
      %330 = vmin.xlane.f32.xlu0 %v329
      %v331 = vpop.xlane.xlu0 %330
      %vm332 = vcmp.le.f32.partialorder %v327, %v331
      %v333 = vsel %vm332, 1e+09, %v327
      %v334 = vsel %vm328, %v333, inf
      %335 = vmin.xlane.f32.xlu0 %v334
      %v336 = vpop.xlane.xlu0 %335
      %vm337 = vcmp.le.f32.partialorder %v333, %v336
      %v338 = vsel %vm337, 1e+09, %v333
      %v339 = vsel %vm328, %v338, inf
      %340 = vmin.xlane.f32.xlu0 %v339
      %v341 = vpop.xlane.xlu0 %340
      %vm342 = vcmp.le.f32.partialorder %v327, %v341
      %v343 = vsub.f32 0.0, %v327
      %v344 = vmul.f32 %v343, 1.442695
      %v345 = vpow.pop %v344
      %v346 = vsel %vm342, %v345, 0.0
      %v348 = vsel %vm328, %v325, 0
      %v351 = vsel %vm328, %v346, 0
      %353 = vmatpush.xpose.msra.mxu0 0.0
      %354 = vmatpush.xpose.msra.mxu0 0.0
      %355 = vmatpush.xpose.msra.mxu0 0.0
      %356 = vmatpush.xpose.msra.mxu0 0.0
      %357 = vmatpush.xpose.msra.mxu0 0.0
      %358 = vmatpush.xpose.msra.mxu0 0.0
      %359 = vmatpush.xpose.msra.mxu0 0.0
      %360 = vmatpush.xpose.msra.mxu0 0.0
      %361 = vmatpush.xpose.msra.mxu0 0.0
      %362 = vmatpush.xpose.msra.mxu0 0.0
      %363 = vmatpush.xpose.msra.mxu0 0.0
      %364 = vmatpush.xpose.msra.mxu0 0.0
      %365 = vmatpush.xpose.msra.mxu0 0.0
      %366 = vmatpush.xpose.msra.mxu0 0.0
      %367 = vmatpush.xpose.msra.mxu0 0.0
      %368 = vmatpush.xpose.msra.mxu0 %v351
      %369 = vmatmul.f32.gmra.mxu0 %v348
      %v370 = vpop.f32.mrf.mxu0
      %v371 = vadd.f32 0.0, %v370
      %372 = vdwg.mxu0
      %v373 = vmax.f32 %v346, %v371
      %v374 = vadd.f32 %v373, %v325
      %v375 = vsel %vm328, %v374, 0.0
      %376 = vadd.xlane.f32.xlu0 %v375
      %v377 = vpop.xlane.xlu0 %376
      %v378 = vrsqrt.pop %v377
      %v379 = vmul.f32 %v378, %v377
      %v380 = vmul.f32 %v379, %v378
      %v381 = vmul.f32 0.5, %v380
      %v382 = vsub.f32 1.5, %v381
      %v383 = vmul.f32 %v378, %v382
      %vm384 = vweird.f32 %v377
      %vm385 = vweird.f32 %v378
      %vm386 = vmor %vm384, %vm385
      %v387 = vsel %vm386, %v378, %v383
      %v389 = vsel %vm288, %v387, 0
      %391 = vmatpush.xpose.msra.mxu0 0.0
      %392 = vmatpush.xpose.msra.mxu0 0.0
      %393 = vmatpush.xpose.msra.mxu0 0.0
      %394 = vmatpush.xpose.msra.mxu0 0.0
      %395 = vmatpush.xpose.msra.mxu0 0.0
      %396 = vmatpush.xpose.msra.mxu0 0.0
      %397 = vmatpush.xpose.msra.mxu0 0.0
      %398 = vmatpush.xpose.msra.mxu0 0.0
      %399 = vmatpush.xpose.msra.mxu0 0.0
      %400 = vmatpush.xpose.msra.mxu0 0.0
      %401 = vmatpush.xpose.msra.mxu0 0.0
      %402 = vmatpush.xpose.msra.mxu0 0.0
      %403 = vmatpush.xpose.msra.mxu0 0.0
      %404 = vmatpush.xpose.msra.mxu0 0.0
      %405 = vmatpush.xpose.msra.mxu0 0.0
      %406 = vmatpush.xpose.msra.mxu0 %v389
      %407 = vmatmul.f32.gmra.mxu0 %v290
      %v408 = vpop.f32.mrf.mxu0
      %v409 = vadd.f32 0.0, %v408
      %410 = vdwg.mxu0
      %v411 = vmul.f32 %v374, %v387
      %v412 = vmul.f32 %v411, %v409
      %v413 = vpack.c.bf16 %v412, %v412
      %v414 = vld [vmem:[%s1] sm:$0xf]
      %v415 = vld [vmem:[%s2] sm:$0x1]
      %v416 = vpack.c.bf16 %v259, %v259
      %v417 = vpack.c.bf16 %v414, %v414
      %v419 = vsel %vm260, %v416, 0
      %vm421 = vcmask 1041408
      %v423 = vsel %vm421, %v417, 0
      %425 = vmatpush.bf16.msra.mxu0 0
      %426 = vmatpush.bf16.msra.mxu0 0
      %427 = vmatpush.bf16.msra.mxu0 0
      %428 = vmatpush.bf16.msra.mxu0 0
      %429 = vmatpush.bf16.msra.mxu0 0
      %430 = vmatpush.bf16.msra.mxu0 0
      %431 = vmatpush.bf16.msra.mxu0 0
      %432 = vmatpush.bf16.msra.mxu0 %v423
      %433 = vmatmul.bf16.gmra.mxu0 %v419
      %v434 = vpop.f32.mrf.mxu0
      %v435 = vadd.f32 0.0, %v434
      %v436 = vpop.f32.mrf.mxu0
      %437 = vdwg.mxu0
      %v438 = vpack.c.bf16 %v435, %v435
      %v440 = vperm.slane %v415, 0
      %v443 = vsel %vm328, %v413, 0
      %vm445 = vcmask 1043456
      %v447 = vsel %vm445, %v438, 0
      %449 = vmatpush.bf16.msra.mxu0 0
      %450 = vmatpush.bf16.msra.mxu0 0
      %451 = vmatpush.bf16.msra.mxu0 0
      %452 = vmatpush.bf16.msra.mxu0 0
      %453 = vmatpush.bf16.msra.mxu0 0
      %454 = vmatpush.bf16.msra.mxu0 0
      %455 = vmatpush.bf16.msra.mxu0 0
      %456 = vmatpush.bf16.msra.mxu0 %v447
      %457 = vmatmul.bf16.gmra.mxu0 %v443
      %v458 = vpop.f32.mrf.mxu0
      %v459 = vadd.f32 %v440, %v458
      %v460 = vpop.f32.mrf.mxu0
      %461 = vdwg.mxu0
      %v462 = vmax.f32 %v459, 0.0
      %v463 = vld [vmem:[%s3] sm:$0xff]
      %v464 = vld [vmem:[%s3 + $0x8] sm:$0xff]
      %v465 = vld [vmem:[%s4] sm:$0x1]
      %v466 = vpack.c.bf16 %v462, %v462
      %v467 = vpack.c.bf16 %v464, %v463
      %vm468 = vcmask 130048
      %v470 = vsel %vm468, %v466, 0
      %472 = vmatpush.bf16.msra.mxu0 0
      %473 = vmatpush.bf16.msra.mxu0 0
      %474 = vmatpush.bf16.msra.mxu0 0
      %475 = vmatpush.bf16.msra.mxu0 0
      %476 = vmatpush.bf16.msra.mxu0 0
      %477 = vmatpush.bf16.msra.mxu0 0
      %478 = vmatpush.bf16.msra.mxu0 0
      %479 = vmatpush.bf16.msra.mxu0 %v467
      %480 = vmatmul.bf16.gmra.mxu0 %v470
      %v481 = vpop.f32.mrf.mxu0
      %v482 = vadd.f32 0.0, %v481
      %v483 = vpop.f32.mrf.mxu0
      %484 = vdwg.mxu0
      %v485 = vpack.c.bf16 %v482, %v482
      %v487 = vperm.slane %v465, 0
      %v490 = vsel %vm445, %v485, 0
      %492 = vmatpush.bf16.msra.mxu0 0
      %493 = vmatpush.bf16.msra.mxu0 0
      %494 = vmatpush.bf16.msra.mxu0 0
      %495 = vmatpush.bf16.msra.mxu0 0
      %496 = vmatpush.bf16.msra.mxu0 0
      %497 = vmatpush.bf16.msra.mxu0 0
      %498 = vmatpush.bf16.msra.mxu0 0
      %499 = vmatpush.bf16.msra.mxu0 %v490
      %500 = vmatmul.bf16.gmra.mxu0 %v443
      %v501 = vpop.f32.mrf.mxu0
      %v502 = vadd.f32 %v487, %v501
      %v503 = vpop.f32.mrf.mxu0
      %504 = vdwg.mxu0
      %505 = vst.msk [vmem:[%s253] sm:$0xff] %vm260, %v502
      %506 = vst.msk [vmem:[%s257] sm:$0xff] %vm328, %v343
      %p507 = scmp.lt.s32.totalorder %s18, 1
      %s508 = scalar_select %p507, %s18, 1
      %s509 = smul.addr %s508, 8
      %s510 = scalar_lea.vmem %s5, %s509
      %p511 = scmp.lt.s32.totalorder %s18, 1
      %s512 = scalar_select %p511, %s18, 1
      %s513 = smul.addr %s512, 8
      %s514 = scalar_lea.vmem %s6, %s513
      // Predicated region
      $region41: #{_lambda_.10} parent=39 // pred_check
        %p515 = pneg %p146
      $region42: #{_lambda_.10} parent=39 // pred_check_branch
        %517 = sbr.rel (%p515) target = $region44
      $region43: #{_lambda_.10} parent=39 // pred_region
        _
      $region44: #{_lambda_.10} parent=39 // pred_fallthru
        _
      // Predicated region
      $region45: #{_lambda_.10} parent=39 // pred_check
        %p518 = pneg %p172
      $region46: #{_lambda_.10} parent=39 // pred_check_branch
        %520 = sbr.rel (%p518) target = $region48
      $region47: #{_lambda_.10} parent=39 // pred_region
        _
      $region48: #{_lambda_.10} parent=39 // pred_fallthru
        _
    $region40: #{_lambda_.10} parent=5 // pred_fallthru
      _
    %p521 = scmp.le.s32.totalorder 2, %s13
    // Predicated region
    $region49: #{_lambda_.10} parent=5 // pred_check
      %p522 = pneg %p521
    $region50: #{_lambda_.10} parent=5 // pred_check_branch
      %524 = sbr.rel (%p522) target = $region52
    $region51: #{_lambda_.10} parent=5 // pred_region
      %s525 = ssub.s32 %s13, 2
      // Predicated region
      $region53: #{_lambda_.10} parent=51 // pred_check
        %p526 = pneg %p152
      $region54: #{_lambda_.10} parent=51 // pred_check_branch
        %528 = sbr.rel (%p526) target = $region56
      $region55: #{_lambda_.10} parent=51 // pred_region
        %p529 = scmp.lt.s32.totalorder %s19, 1
        %s530 = scalar_select %p529, %s19, 1
        %s531 = smul.addr %s530, 8
        %s532 = scalar_lea.vmem %s5, %s531
      $region56: #{_lambda_.10} parent=51 // pred_fallthru
        _
      // Predicated region
      $region57: #{_lambda_.10} parent=51 // pred_check
        %p533 = pneg %p178
      $region58: #{_lambda_.10} parent=51 // pred_check_branch
        %535 = sbr.rel (%p533) target = $region60
      $region59: #{_lambda_.10} parent=51 // pred_region
        %p536 = scmp.lt.s32.totalorder %s19, 1
        %s537 = scalar_select %p536, %s19, 1
        %s538 = smul.addr %s537, 8
        %s539 = scalar_lea.vmem %s6, %s538
      $region60: #{_lambda_.10} parent=51 // pred_fallthru
        _
    $region52: #{_lambda_.10} parent=5 // pred_fallthru
      _
  $region6: #{_lambda_.10} parent=0 // loop_footer
    %s17 = sadd.s32 1, %s13
  $region7: #{_lambda_.10} parent=0 // loop_footer_branch
    %12 = sbr.rel target = $region3
  $region8: #{_lambda_.10} parent=0 // loop_exit
    _

// kernel: _lambda_.11
$region0: #{_lambda_.11}
  #allocation0 [shape = 'u32[]', space=smem, size = 0x4, offset = 0x4, fixed_abs, tag = 'smem constant byte address 0x4 - core index']
  #allocation1 [shape = 'u32[72,128]{1,0:T(1,128)}', space=vmem, size = 0x9000, scoped, tag = 'internal scratch']
  #allocation2 [shape = 'f32[1,1]{1,0:T(1,128)S(1)}', space=vmem, size = 0x200, scoped, tag = 'scoped memory for _lambda_.11']
  %s0 = inlined_call_operand.vmem [shape: f32[2,8,8], index: 0, kind: input, shape index: {}]
  %s1 = inlined_call_operand.vmem [shape: f32[8,4], index: 1, kind: input, shape index: {}]
  %s2 = inlined_call_operand.vmem [shape: f32[1,4], index: 2, kind: input, shape index: {}]
  %s3 = inlined_call_operand.vmem [shape: f32[4,2], index: 3, kind: input, shape index: {}]
  %s4 = inlined_call_operand.vmem [shape: f32[1,2], index: 4, kind: input, shape index: {}]
  %s5 = inlined_call_operand.vmem [shape: f32[2,1], index: 5, kind: input, shape index: {}]
  %s6 = inlined_call_operand.<no memory space> [shape: f32[1,1], index: 6, kind: input, shape index: {}]
  %s7 = inlined_call_operand.vmem [shape: f32[2,8,4], index: 7, kind: output, shape index: {0}]
  %s8 = inlined_call_operand.vmem [shape: f32[2,8,1], index: 8, kind: output, shape index: {1}]
  %9 = xla_tuple %s7, %s8
  %s10 = sld [smem:[#allocation0]]
  $region69: #{_lambda_.11} parent=0
    _
  %s12 = ssub.s32 1, %s10
  %s13 = scalar_select 0, %s12, %s10
  %v14 = vstv %s6
  %15 = vst [vmem:[#allocation2] sm:$0x1] %v14
  loop: start=0, step=1, limit=4
  $region2: #{_lambda_.11} parent=0 // loop_pre_header
    _
  $region3: #{_lambda_.11} parent=0 // loop_header
    %s17 = sphi 0, %s21
    %p18 = scmp.ge.s32.totalorder %s17, 4
    %s27 = sphi 0, %s29
    %s30 = sphi 0, %s27
    %s31 = sphi 0, %s30
    %s47 = sphi 0, %s31
    %s51 = sphi 0, %s51
    %s53 = sphi 0, %s51
    %s54 = sphi 0, %s53
    %s68 = sphi 0, %s54
    %s72 = sphi 0, %s72
    %s74 = sphi 0, %s72
    %s75 = sphi 0, %s74
    %s89 = sphi 0, %s75
    %s93 = sphi 0, %s93
    %s95 = sphi 0, %s93
    %s96 = sphi 0, %s95
    %s110 = sphi 0, %s96
    %s114 = sphi 0, %s114
    %s116 = sphi 0, %s114
    %s117 = sphi 0, %s116
    %s131 = sphi 0, %s117
    %s135 = sphi 0, %s135
    %s137 = sphi 0, %s135
    %s138 = sphi 0, %s137
    %s152 = sphi 0, %s138
    %s156 = sphi 0, %s156
    %s158 = sphi 0, %s156
    %s159 = sphi 0, %s158
    %s173 = sphi 0, %s159
    %s179 = sphi 0, %s181
    %s182 = sphi 0, %s179
    %s183 = sphi 0, %s182
    %s199 = sphi 0, %s183
    %s205 = sphi 0, %s207
    %s208 = sphi 0, %s205
    %s209 = sphi 0, %s208
    %s225 = sphi 0, %s209
  $region4: #{_lambda_.11} parent=0 // loop_header_branch
    %20 = sbr.rel (%p18) target = $region8
  $region5: #{_lambda_.11} parent=0 // loop_body
    %s22 = ssub.s32 %s17, 1
    %s23 = ssub.s32 %s17, 2
    %s24 = sadd.s32 %s17, 1
    %s25 = ssub.s32 %s17, %s24
    %p26 = scmp.eq.s32.totalorder %s25, 0
    %s28 = sadd.s32 %s27, 1
    %s29 = scalar_select %p26, %s27, %s28
    %p32 = pneg %p26
    %p33 = scmp.eq.s32.totalorder %s17, 1
    %p34 = por %p32, %p33
    %p35 = scmp.ne.s32.totalorder %s27, %s30
    %p36 = scmp.eq.s32.totalorder %s17, 0
    %p37 = por %p35, %p36
    %p38 = scmp.ne.s32.totalorder %s27, %s30
    %p39 = scmp.eq.s32.totalorder %s22, 1
    %p40 = por %p38, %p39
    %p41 = scmp.ne.s32.totalorder %s30, %s31
    %p42 = scmp.eq.s32.totalorder %s22, 0
    %p43 = por %p41, %p42
    %p44 = scmp.ne.s32.totalorder %s30, %s31
    %p45 = scmp.eq.s32.totalorder %s23, 1
    %p46 = por %p44, %p45
    %p48 = scmp.ne.s32.totalorder %s31, %s47
    %p49 = scmp.eq.s32.totalorder %s23, 0
    %p50 = por %p48, %p49
    %s52 = sadd.s32 %s51, 1
    %p55 = scmp.eq.s32.totalorder %s17, 1
    %p56 = scmp.ne.s32.totalorder %s51, %s53
    %p57 = scmp.eq.s32.totalorder %s17, 0
    %p58 = por %p56, %p57
    %p59 = scmp.ne.s32.totalorder %s51, %s53
    %p60 = scmp.eq.s32.totalorder %s22, 1
    %p61 = por %p59, %p60
    %p62 = scmp.ne.s32.totalorder %s53, %s54
    %p63 = scmp.eq.s32.totalorder %s22, 0
    %p64 = por %p62, %p63
    %p65 = scmp.ne.s32.totalorder %s53, %s54
    %p66 = scmp.eq.s32.totalorder %s23, 1
    %p67 = por %p65, %p66
    %p69 = scmp.ne.s32.totalorder %s54, %s68
    %p70 = scmp.eq.s32.totalorder %s23, 0
    %p71 = por %p69, %p70
    %s73 = sadd.s32 %s72, 1
    %p76 = scmp.eq.s32.totalorder %s17, 1
    %p77 = scmp.ne.s32.totalorder %s72, %s74
    %p78 = scmp.eq.s32.totalorder %s17, 0
    %p79 = por %p77, %p78
    %p80 = scmp.ne.s32.totalorder %s72, %s74
    %p81 = scmp.eq.s32.totalorder %s22, 1
    %p82 = por %p80, %p81
    %p83 = scmp.ne.s32.totalorder %s74, %s75
    %p84 = scmp.eq.s32.totalorder %s22, 0
    %p85 = por %p83, %p84
    %p86 = scmp.ne.s32.totalorder %s74, %s75
    %p87 = scmp.eq.s32.totalorder %s23, 1
    %p88 = por %p86, %p87
    %p90 = scmp.ne.s32.totalorder %s75, %s89
    %p91 = scmp.eq.s32.totalorder %s23, 0
    %p92 = por %p90, %p91
    %s94 = sadd.s32 %s93, 1
    %p97 = scmp.eq.s32.totalorder %s17, 1
    %p98 = scmp.ne.s32.totalorder %s93, %s95
    %p99 = scmp.eq.s32.totalorder %s17, 0
    %p100 = por %p98, %p99
    %p101 = scmp.ne.s32.totalorder %s93, %s95
    %p102 = scmp.eq.s32.totalorder %s22, 1
    %p103 = por %p101, %p102
    %p104 = scmp.ne.s32.totalorder %s95, %s96
    %p105 = scmp.eq.s32.totalorder %s22, 0
    %p106 = por %p104, %p105
    %p107 = scmp.ne.s32.totalorder %s95, %s96
    %p108 = scmp.eq.s32.totalorder %s23, 1
    %p109 = por %p107, %p108
    %p111 = scmp.ne.s32.totalorder %s96, %s110
    %p112 = scmp.eq.s32.totalorder %s23, 0
    %p113 = por %p111, %p112
    %s115 = sadd.s32 %s114, 1
    %p118 = scmp.eq.s32.totalorder %s17, 1
    %p119 = scmp.ne.s32.totalorder %s114, %s116
    %p120 = scmp.eq.s32.totalorder %s17, 0
    %p121 = por %p119, %p120
    %p122 = scmp.ne.s32.totalorder %s114, %s116
    %p123 = scmp.eq.s32.totalorder %s22, 1
    %p124 = por %p122, %p123
    %p125 = scmp.ne.s32.totalorder %s116, %s117
    %p126 = scmp.eq.s32.totalorder %s22, 0
    %p127 = por %p125, %p126
    %p128 = scmp.ne.s32.totalorder %s116, %s117
    %p129 = scmp.eq.s32.totalorder %s23, 1
    %p130 = por %p128, %p129
    %p132 = scmp.ne.s32.totalorder %s117, %s131
    %p133 = scmp.eq.s32.totalorder %s23, 0
    %p134 = por %p132, %p133
    %s136 = sadd.s32 %s135, 1
    %p139 = scmp.eq.s32.totalorder %s17, 1
    %p140 = scmp.ne.s32.totalorder %s135, %s137
    %p141 = scmp.eq.s32.totalorder %s17, 0
    %p142 = por %p140, %p141
    %p143 = scmp.ne.s32.totalorder %s135, %s137
    %p144 = scmp.eq.s32.totalorder %s22, 1
    %p145 = por %p143, %p144
    %p146 = scmp.ne.s32.totalorder %s137, %s138
    %p147 = scmp.eq.s32.totalorder %s22, 0
    %p148 = por %p146, %p147
    %p149 = scmp.ne.s32.totalorder %s137, %s138
    %p150 = scmp.eq.s32.totalorder %s23, 1
    %p151 = por %p149, %p150
    %p153 = scmp.ne.s32.totalorder %s138, %s152
    %p154 = scmp.eq.s32.totalorder %s23, 0
    %p155 = por %p153, %p154
    %s157 = sadd.s32 %s156, 1
    %p160 = scmp.eq.s32.totalorder %s17, 1
    %p161 = scmp.ne.s32.totalorder %s156, %s158
    %p162 = scmp.eq.s32.totalorder %s17, 0
    %p163 = por %p161, %p162
    %p164 = scmp.ne.s32.totalorder %s156, %s158
    %p165 = scmp.eq.s32.totalorder %s22, 1
    %p166 = por %p164, %p165
    %p167 = scmp.ne.s32.totalorder %s158, %s159
    %p168 = scmp.eq.s32.totalorder %s22, 0
    %p169 = por %p167, %p168
    %p170 = scmp.ne.s32.totalorder %s158, %s159
    %p171 = scmp.eq.s32.totalorder %s23, 1
    %p172 = por %p170, %p171
    %p174 = scmp.ne.s32.totalorder %s159, %s173
    %p175 = scmp.eq.s32.totalorder %s23, 0
    %p176 = por %p174, %p175
    %s177 = ssub.s32 %s17, %s24
    %p178 = scmp.eq.s32.totalorder %s177, 0
    %s180 = sadd.s32 %s179, 1
    %s181 = scalar_select %p178, %s179, %s180
    %p184 = pneg %p178
    %p185 = scmp.eq.s32.totalorder %s17, 1
    %p186 = por %p184, %p185
    %p187 = scmp.ne.s32.totalorder %s179, %s182
    %p188 = scmp.eq.s32.totalorder %s17, 0
    %p189 = por %p187, %p188
    %p190 = scmp.ne.s32.totalorder %s179, %s182
    %p191 = scmp.eq.s32.totalorder %s22, 1
    %p192 = por %p190, %p191
    %p193 = scmp.ne.s32.totalorder %s182, %s183
    %p194 = scmp.eq.s32.totalorder %s22, 0
    %p195 = por %p193, %p194
    %p196 = scmp.ne.s32.totalorder %s182, %s183
    %p197 = scmp.eq.s32.totalorder %s23, 1
    %p198 = por %p196, %p197
    %p200 = scmp.ne.s32.totalorder %s183, %s199
    %p201 = scmp.eq.s32.totalorder %s23, 0
    %p202 = por %p200, %p201
    %s203 = ssub.s32 %s17, %s24
    %p204 = scmp.eq.s32.totalorder %s203, 0
    %s206 = sadd.s32 %s205, 1
    %s207 = scalar_select %p204, %s205, %s206
    %p210 = pneg %p204
    %p211 = scmp.eq.s32.totalorder %s17, 1
    %p212 = por %p210, %p211
    %p213 = scmp.ne.s32.totalorder %s205, %s208
    %p214 = scmp.eq.s32.totalorder %s17, 0
    %p215 = por %p213, %p214
    %p216 = scmp.ne.s32.totalorder %s205, %s208
    %p217 = scmp.eq.s32.totalorder %s22, 1
    %p218 = por %p216, %p217
    %p219 = scmp.ne.s32.totalorder %s208, %s209
    %p220 = scmp.eq.s32.totalorder %s22, 0
    %p221 = por %p219, %p220
    %p222 = scmp.ne.s32.totalorder %s208, %s209
    %p223 = scmp.eq.s32.totalorder %s23, 1
    %p224 = por %p222, %p223
    %p226 = scmp.ne.s32.totalorder %s209, %s225
    %p227 = scmp.eq.s32.totalorder %s23, 0
    %p228 = por %p226, %p227
    %p229 = scmp.le.s32.totalorder 1, %s17
    %p230 = scmp.lt.s32.totalorder %s17, 3
    %p231 = pnand %p229, %p230
    %p232 = pneg %p231
    // Predicated region
    $region9: #{_lambda_.11} parent=5 // pred_check
      _
    $region10: #{_lambda_.11} parent=5 // pred_check_branch
      %234 = sbr.rel (%p231) target = $region12
    $region11: #{_lambda_.11} parent=5 // pred_region
      %s235 = ssub.s32 %s17, 1
      // Predicated region
      $region13: #{_lambda_.11} parent=11 // pred_check
        %p236 = pneg %p64
      $region14: #{_lambda_.11} parent=11 // pred_check_branch
        %238 = sbr.rel (%p236) target = $region16
      $region15: #{_lambda_.11} parent=11 // pred_region
        _
      $region16: #{_lambda_.11} parent=11 // pred_fallthru
        _
      // Predicated region
      $region17: #{_lambda_.11} parent=11 // pred_check
        %p239 = pneg %p85
      $region18: #{_lambda_.11} parent=11 // pred_check_branch
        %241 = sbr.rel (%p239) target = $region20
      $region19: #{_lambda_.11} parent=11 // pred_region
        _
      $region20: #{_lambda_.11} parent=11 // pred_fallthru
        _
      // Predicated region
      $region21: #{_lambda_.11} parent=11 // pred_check
        %p242 = pneg %p106
      $region22: #{_lambda_.11} parent=11 // pred_check_branch
        %244 = sbr.rel (%p242) target = $region24
      $region23: #{_lambda_.11} parent=11 // pred_region
        _
      $region24: #{_lambda_.11} parent=11 // pred_fallthru
        _
      // Predicated region
      $region25: #{_lambda_.11} parent=11 // pred_check
        %p245 = pneg %p127
      $region26: #{_lambda_.11} parent=11 // pred_check_branch
        %247 = sbr.rel (%p245) target = $region28
      $region27: #{_lambda_.11} parent=11 // pred_region
        _
      $region28: #{_lambda_.11} parent=11 // pred_fallthru
        _
      // Predicated region
      $region29: #{_lambda_.11} parent=11 // pred_check
        %p248 = pneg %p148
      $region30: #{_lambda_.11} parent=11 // pred_check_branch
        %250 = sbr.rel (%p248) target = $region32
      $region31: #{_lambda_.11} parent=11 // pred_region
        _
      $region32: #{_lambda_.11} parent=11 // pred_fallthru
        _
      // Predicated region
      $region33: #{_lambda_.11} parent=11 // pred_check
        %p251 = pneg %p169
      $region34: #{_lambda_.11} parent=11 // pred_check_branch
        %253 = sbr.rel (%p251) target = $region36
      $region35: #{_lambda_.11} parent=11 // pred_region
        _
      $region36: #{_lambda_.11} parent=11 // pred_fallthru
        _
    $region12: #{_lambda_.11} parent=5 // pred_fallthru
      _
    %p254 = scmp.lt.s32.totalorder %s17, 2
    // Predicated region
    $region37: #{_lambda_.11} parent=5 // pred_check
      %p255 = pneg %p254
    $region38: #{_lambda_.11} parent=5 // pred_check_branch
      %257 = sbr.rel (%p255) target = $region40
    $region39: #{_lambda_.11} parent=5 // pred_region
      // Predicated region
      $region41: #{_lambda_.11} parent=39 // pred_check
        %p258 = pneg %p37
      $region42: #{_lambda_.11} parent=39 // pred_check_branch
        %260 = sbr.rel (%p258) target = $region44
      $region43: #{_lambda_.11} parent=39 // pred_region
        %p261 = scmp.lt.s32.totalorder %s17, 1
        %s262 = scalar_select %p261, %s17, 1
        %s263 = smul.addr %s262, 8
        %s264 = scalar_lea.vmem %s0, %s263
      $region44: #{_lambda_.11} parent=39 // pred_fallthru
        _
    $region40: #{_lambda_.11} parent=5 // pred_fallthru
      _
    %p265 = scmp.le.s32.totalorder 1, %s17
    %p266 = scmp.lt.s32.totalorder %s17, 3
    %p267 = pnand %p265, %p266
    %p268 = pneg %p267
    // Predicated region
    $region45: #{_lambda_.11} parent=5 // pred_check
      _
    $region46: #{_lambda_.11} parent=5 // pred_check_branch
      %270 = sbr.rel (%p267) target = $region48
    $region47: #{_lambda_.11} parent=5 // pred_region
      %s271 = ssub.s32 %s17, 1
      %p272 = scmp.lt.s32.totalorder %s22, 1
      %s273 = scalar_select %p272, %s22, 1
      %s274 = smul.addr %s273, 8
      %s275 = scalar_lea.vmem %s0, %s274
      %p276 = pneg %p43
      %p277 = pneg %p40
      %p278 = pneg %p64
      %p279 = pneg %p61
      %p280 = pneg %p85
      %p281 = pneg %p82
      %p282 = pneg %p106
      %p283 = pneg %p103
      %p284 = pneg %p127
      %p285 = pneg %p124
      %p286 = pneg %p148
      %p287 = pneg %p145
      %p288 = pneg %p169
      %p289 = pneg %p166
      %p290 = pneg %p195
      %p291 = pneg %p192
      %p292 = scmp.lt.s32.totalorder %s22, 1
      %s293 = scalar_select %p292, %s22, 1
      %s294 = smul.addr %s293, 8
      %s295 = scalar_lea.vmem %s7, %s294
      %p296 = pneg %p221
      %p297 = pneg %p218
      %p298 = scmp.lt.s32.totalorder %s22, 1
      %s299 = scalar_select %p298, %s22, 1
      %s300 = smul.addr %s299, 8
      %s301 = scalar_lea.vmem %s8, %s300
      %p302 = scmp.lt.s32.totalorder %s22, 1
      %s303 = scalar_select %p302, %s22, 1
      %s304 = smul.addr %s303, 8
      %s305 = scalar_lea.vmem %s0, %s304
      %p306 = scmp.lt.s32.totalorder %s22, 1
      %s307 = scalar_select %p306, %s22, 1
      %s308 = smul.addr %s307, 8
      %s309 = scalar_lea.vmem %s7, %s308
      %p310 = scmp.lt.s32.totalorder %s22, 1
      %s311 = scalar_select %p310, %s22, 1
      %s312 = smul.addr %s311, 8
      %s313 = scalar_lea.vmem %s8, %s312
      %v315 = vld [vmem:[%s305] sm:$0xff]
      %v316 = vld [vmem:[%s1] sm:$0xff]
      %v317 = vpack.c.bf16 %v315, %v315
      %v318 = vpack.c.bf16 %v316, %v316
      %v319 = vld [vmem:[%s2] sm:$0x1]
      %v321 = vperm.slane %v319, 0
      %vm323 = vcmask 64512
      %v325 = vsel %vm323, %v317, 0
      %vm327 = vcmask 1043456
      %v329 = vsel %vm327, %v318, 0
      %331 = vmatpush.bf16.msra.mxu0 0
      %332 = vmatpush.bf16.msra.mxu0 0
      %333 = vmatpush.bf16.msra.mxu0 0
      %334 = vmatpush.bf16.msra.mxu0 0
      %335 = vmatpush.bf16.msra.mxu0 0
      %336 = vmatpush.bf16.msra.mxu0 0
      %337 = vmatpush.bf16.msra.mxu0 0
      %338 = vmatpush.bf16.msra.mxu0 %v329
      %339 = vmatmul.bf16.gmra.mxu0 %v325
      %v340 = vpop.f32.mrf.mxu0
      %v341 = vadd.f32 %v321, %v340
      %v342 = vpop.f32.mrf.mxu0
      %343 = vdwg.mxu0
      %v344 = vld [vmem:[%s3] sm:$0xf]
      %v345 = vpack.c.bf16 %v341, %v341
      %v346 = vpack.c.bf16 %v344, %v344
      %v347 = vld [vmem:[%s4] sm:$0x1]
      %v349 = vperm.slane %v347, 0
      %vm351 = vcmask 31744
      %v353 = vsel %vm351, %v345, 0
      %vm355 = vcmask 1041408
      %v357 = vsel %vm355, %v346, 0
      %359 = vmatpush.bf16.msra.mxu0 0
      %360 = vmatpush.bf16.msra.mxu0 0
      %361 = vmatpush.bf16.msra.mxu0 0
      %362 = vmatpush.bf16.msra.mxu0 0
      %363 = vmatpush.bf16.msra.mxu0 0
      %364 = vmatpush.bf16.msra.mxu0 0
      %365 = vmatpush.bf16.msra.mxu0 0
      %366 = vmatpush.bf16.msra.mxu0 %v357
      %367 = vmatmul.bf16.gmra.mxu0 %v353
      %v368 = vpop.f32.mrf.mxu0
      %v369 = vadd.f32 %v349, %v368
      %v370 = vpop.f32.mrf.mxu0
      %371 = vdwg.mxu0
      %v372 = vmax.f32 %v369, 0.0
      %v373 = vld [vmem:[%s5] sm:$0x3]
      %v374 = vpack.c.bf16 %v372, %v372
      %v375 = vpack.c.bf16 %v373, %v373
      %v376 = vld [vmem:[#allocation2] sm:$0x1]
      %v378 = vperm.slane %v376, 0
      %vm380 = vcmask 15360
      %v382 = vsel %vm380, %v374, 0
      %vm384 = vcmask 1040384
      %v386 = vsel %vm384, %v375, 0
      %388 = vmatpush.bf16.msra.mxu0 0
      %389 = vmatpush.bf16.msra.mxu0 0
      %390 = vmatpush.bf16.msra.mxu0 0
      %391 = vmatpush.bf16.msra.mxu0 0
      %392 = vmatpush.bf16.msra.mxu0 0
      %393 = vmatpush.bf16.msra.mxu0 0
      %394 = vmatpush.bf16.msra.mxu0 0
      %395 = vmatpush.bf16.msra.mxu0 %v386
      %396 = vmatmul.bf16.gmra.mxu0 %v382
      %v397 = vpop.f32.mrf.mxu0
      %v398 = vadd.f32 %v378, %v397
      %v399 = vpop.f32.mrf.mxu0
      %400 = vdwg.mxu0
      %vm401 = vcmask 7168
      %402 = vst.msk [vmem:[%s313] sm:$0xff] %vm401, %v398
      %403 = vst.msk [vmem:[%s309] sm:$0xff] %vm351, %v341
      %p404 = scmp.lt.s32.totalorder %s22, 1
      %s405 = scalar_select %p404, %s22, 1
      %s406 = smul.addr %s405, 8
      %s407 = scalar_lea.vmem %s7, %s406
      %p408 = scmp.lt.s32.totalorder %s22, 1
      %s409 = scalar_select %p408, %s22, 1
      %s410 = smul.addr %s409, 8
      %s411 = scalar_lea.vmem %s8, %s410
      // Predicated region
      $region49: #{_lambda_.11} parent=47 // pred_check
        %p412 = pneg %p192
      $region50: #{_lambda_.11} parent=47 // pred_check_branch
        %414 = sbr.rel (%p412) target = $region52
      $region51: #{_lambda_.11} parent=47 // pred_region
        _
      $region52: #{_lambda_.11} parent=47 // pred_fallthru
        _
      // Predicated region
      $region53: #{_lambda_.11} parent=47 // pred_check
        %p415 = pneg %p218
      $region54: #{_lambda_.11} parent=47 // pred_check_branch
        %417 = sbr.rel (%p415) target = $region56
      $region55: #{_lambda_.11} parent=47 // pred_region
        _
      $region56: #{_lambda_.11} parent=47 // pred_fallthru
        _
    $region48: #{_lambda_.11} parent=5 // pred_fallthru
      _
    %p418 = scmp.le.s32.totalorder 2, %s17
    // Predicated region
    $region57: #{_lambda_.11} parent=5 // pred_check
      %p419 = pneg %p418
    $region58: #{_lambda_.11} parent=5 // pred_check_branch
      %421 = sbr.rel (%p419) target = $region60
    $region59: #{_lambda_.11} parent=5 // pred_region
      %s422 = ssub.s32 %s17, 2
      // Predicated region
      $region61: #{_lambda_.11} parent=59 // pred_check
        %p423 = pneg %p198
      $region62: #{_lambda_.11} parent=59 // pred_check_branch
        %425 = sbr.rel (%p423) target = $region64
      $region63: #{_lambda_.11} parent=59 // pred_region
        %p426 = scmp.lt.s32.totalorder %s23, 1
        %s427 = scalar_select %p426, %s23, 1
        %s428 = smul.addr %s427, 8
        %s429 = scalar_lea.vmem %s7, %s428
      $region64: #{_lambda_.11} parent=59 // pred_fallthru
        _
      // Predicated region
      $region65: #{_lambda_.11} parent=59 // pred_check
        %p430 = pneg %p224
      $region66: #{_lambda_.11} parent=59 // pred_check_branch
        %432 = sbr.rel (%p430) target = $region68
      $region67: #{_lambda_.11} parent=59 // pred_region
        %p433 = scmp.lt.s32.totalorder %s23, 1
        %s434 = scalar_select %p433, %s23, 1
        %s435 = smul.addr %s434, 8
        %s436 = scalar_lea.vmem %s8, %s435
      $region68: #{_lambda_.11} parent=59 // pred_fallthru
        _
    $region60: #{_lambda_.11} parent=5 // pred_fallthru
      _
  $region6: #{_lambda_.11} parent=0 // loop_footer
    %s21 = sadd.s32 1, %s17
  $region7: #{_lambda_.11} parent=0 // loop_footer_branch
    %16 = sbr.rel target = $region3
  $region8: #{_lambda_.11} parent=0 // loop_exit
    _

</llo_original>
